<compile_context>
chip_gen: v7x
topology: tpu7x:2x2x1
jax: 0.10.0
libtpu: 0.0.40
codegen_flags: <defaults>
</compile_context>

<pallas_src>
import numpy as np
import jax
import jax.numpy as jnp
from jax.experimental import pallas as pl
from jax.experimental.pallas import tpu as pltpu


def _round_up(n, m):
    return ((n + m - 1) // m) * m


# ----------------------------------------------------------------------------
# Fused decoder kernel: everything in one pallas_call, weights resident in VMEM,
# intermediate activations never leave the chip.
# ----------------------------------------------------------------------------
def decoder_fused_kernel(x_ref, w1_ref, b1_ref, w2_ref, b2_ref,
                         m1_ref, o1_ref, m2_ref, o2_ref, m3_ref, o3_ref,
                         out_ref):
    # Layer 1: Linear(enc -> 128) + ReLU   (tiny weight, kept f32)
    h = jnp.dot(x_ref[...], w1_ref[...], preferred_element_type=jnp.float32)
    h = jnp.maximum(h + b1_ref[...], 0.0)

    # Layer 2: Linear(128 -> 288 [padded 384]) + ReLU
    h = jnp.dot(h.astype(jnp.bfloat16), w2_ref[...],
                preferred_element_type=jnp.float32)
    h = jnp.maximum(h + b2_ref[...], 0.0)

    # Layer 3: ConvTranspose2d(32->16, 3, s=2) as dense matmul; BN scale folded
    # into columns, BN shift + conv bias folded into offset; then ReLU.
    h = jnp.dot(h.astype(jnp.bfloat16), m1_ref[...],
                preferred_element_type=jnp.float32)
    h = jnp.maximum(h + o1_ref[...], 0.0)

    # Layer 4: ConvTranspose2d(16->8, 3, s=2, p=1, op=1) + BN + ReLU
    h = jnp.dot(h.astype(jnp.bfloat16), m2_ref[...],
                preferred_element_type=jnp.float32)
    h = jnp.maximum(h + o2_ref[...], 0.0)

    # Layer 5: ConvTranspose2d(8->1, 3, s=2, p=1, op=1) + tanh
    h = jnp.dot(h.astype(jnp.bfloat16), m3_ref[...],
                preferred_element_type=jnp.float32)
    out_ref[...] = jnp.tanh(h + o3_ref[...])


def fused_decoder_call(x_pad, operands, n_out_padded):
    Bp = x_pad.shape[0]
    vmem = pl.BlockSpec(memory_space=pltpu.MemorySpace.VMEM)
    return pl.pallas_call(
        decoder_fused_kernel,
        out_shape=jax.ShapeDtypeStruct((Bp, n_out_padded), jnp.float32),
        in_specs=[vmem] * (1 + len(operands)),
        out_specs=vmem,
        compiler_params=pltpu.CompilerParams(vmem_limit_bytes=32 * 1024 * 1024),
    )(x_pad, *operands)


# ----------------------------------------------------------------------------
# ConvTranspose2d -> dense matrix (flattened NCHW in -> flattened NCHW out)
# Built once on the host; >95% zeros but streamed as bf16 and fused (see notes).
# ----------------------------------------------------------------------------
def convT_matrix(weight, stride, padding, output_padding, IH, IW):
    """weight: (Cin, Cout, KH, KW) numpy array (PyTorch ConvTranspose2d layout)."""
    Cin, Cout, KH, KW = weight.shape
    OH = (IH - 1) * stride - 2 * padding + KH + output_padding
    OW = (IW - 1) * stride - 2 * padding + KW + output_padding
    M = np.zeros((Cin * IH * IW, Cout * OH * OW), dtype=np.float32)
    for ci in range(Cin):
        for iy in range(IH):
            for ix in range(IW):
                row = (ci * IH + iy) * IW + ix
                for co in range(Cout):
                    for ky in range(KH):
                        oy = iy * stride - padding + ky
                        if oy < 0 or oy >= OH:
                            continue
                        for kx in range(KW):
                            ox = ix * stride - padding + kx
                            if ox < 0 or ox >= OW:
                                continue
                            col = (co * OH + oy) * OW + ox
                            M[row, col] += weight[ci, co, ky, kx]
    return M, OH, OW


# ----------------------------------------------------------------------------
# Parameter init (deterministic, synthetic)
# ----------------------------------------------------------------------------
def init_params(encoded_space_dim, key):
    ks = jax.random.split(key, 12)
    p = {}
    p["lin1_w"] = 0.1 * jax.random.normal(ks[0], (128, encoded_space_dim), jnp.float32)
    p["lin1_b"] = 0.1 * jax.random.normal(ks[1], (128,), jnp.float32)
    p["lin2_w"] = 0.1 * jax.random.normal(ks[2], (3 * 3 * 32, 128), jnp.float32)
    p["lin2_b"] = 0.1 * jax.random.normal(ks[3], (3 * 3 * 32,), jnp.float32)
    p["ct1_w"] = 0.1 * jax.random.normal(ks[4], (32, 16, 3, 3), jnp.float32)
    p["ct1_b"] = 0.1 * jax.random.normal(ks[5], (16,), jnp.float32)
    p["bn1_g"] = 1.0 + 0.1 * jax.random.normal(ks[6], (16,), jnp.float32)
    p["bn1_b"] = 0.1 * jax.random.normal(ks[7], (16,), jnp.float32)
    p["ct2_w"] = 0.1 * jax.random.normal(ks[8], (16, 8, 3, 3), jnp.float32)
    p["ct2_b"] = 0.1 * jax.random.normal(ks[9], (8,), jnp.float32)
    p["bn2_g"] = 1.0 + 0.1 * jax.random.normal(ks[10], (8,), jnp.float32)
    p["bn2_b"] = 0.1 * jax.random.normal(ks[11], (8,), jnp.float32)
    p["ct3_w"] = 0.1 * jax.random.normal(jax.random.PRNGKey(100), (8, 1, 3, 3), jnp.float32)
    p["ct3_b"] = 0.1 * jax.random.normal(jax.random.PRNGKey(101), (1,), jnp.float32)
    # BatchNorm running stats (eval mode, fresh module defaults)
    p["bn1_mean"] = jnp.zeros((16,), jnp.float32)
    p["bn1_var"] = jnp.ones((16,), jnp.float32)
    p["bn2_mean"] = jnp.zeros((8,), jnp.float32)
    p["bn2_var"] = jnp.ones((8,), jnp.float32)
    return p


# ----------------------------------------------------------------------------
# Build forward fn: fold BN into matrices, pad to lane/sublane multiples, bf16.
# ----------------------------------------------------------------------------
def build_decoder(params):
    eps = 1e-5

    # Linear layers: x @ weight.T + bias
    w1 = np.asarray(params["lin1_w"]).T.astype(np.float32)       # (enc, 128)
    b1 = np.asarray(params["lin1_b"]).astype(np.float32)         # (128,)
    w2 = np.asarray(params["lin2_w"]).T.astype(np.float32)       # (128, 288)
    b2 = np.asarray(params["lin2_b"]).astype(np.float32)         # (288,)

    # ConvTranspose scatter matrices (flattened NCHW -> flattened NCHW)
    M1, oh1, ow1 = convT_matrix(np.asarray(params["ct1_w"]), 2, 0, 0, 3, 3)      # 3x3  -> 7x7
    M2, oh2, ow2 = convT_matrix(np.asarray(params["ct2_w"]), 2, 1, 1, oh1, ow1)  # 7x7  -> 14x14
    M3, oh3, ow3 = convT_matrix(np.asarray(params["ct3_w"]), 2, 1, 1, oh2, ow2)  # 14x14-> 28x28

    # Fold eval-mode BatchNorm scale into columns, BN shift + conv bias into offset.
    def fold_bn(M, conv_b, gamma, beta, mean, var, OH, OW):
        a = np.asarray(gamma) / np.sqrt(np.asarray(var) + eps)              # per-channel scale
        c = np.asarray(beta) - np.asarray(mean) * a + np.asarray(conv_b) * a
        scale_cols = np.repeat(a, OH * OW).astype(np.float32)
        offset = np.repeat(c, OH * OW).astype(np.float32)
        return (M * scale_cols[None, :]).astype(np.float32), offset

    M1s, o1 = fold_bn(M1, params["ct1_b"], params["bn1_g"], params["bn1_b"],
                      params["bn1_mean"], params["bn1_var"], oh1, ow1)
    M2s, o2 = fold_bn(M2, params["ct2_b"], params["bn2_g"], params["bn2_b"],
                      params["bn2_mean"], params["bn2_var"], oh2, ow2)
    M3s = M3.astype(np.float32)                                   # no BN on last conv
    o3 = np.repeat(np.asarray(params["ct3_b"]).astype(np.float32), oh3 * ow3)

    # Padded lane dims (multiples of 128); K of the next layer padded with zero rows.
    n2, n3, n4, n5 = 288, 16 * oh1 * ow1, 8 * oh2 * ow2, 1 * oh3 * ow3
    n2p, n3p, n4p, n5p = (_round_up(n, 128) for n in (n2, n3, n4, n5))

    def pad2d(a, rows, cols):
        out = np.zeros((rows, cols), np.float32)
        out[:a.shape[0], :a.shape[1]] = a
        return out

    def pad1d(a, n):
        out = np.zeros((n,), np.float32)
        out[:a.shape[0]] = a
        return out

    operands = (
        jnp.asarray(w1),                                                  # f32 (enc,128)
        jnp.asarray(b1).reshape(1, -1),                                   # f32 (1,128)
        jnp.asarray(pad2d(w2, 128, n2p), dtype=jnp.bfloat16),             # bf16 (128,384)
        jnp.asarray(pad1d(b2, n2p)).reshape(1, -1),                       # f32 (1,384)
        jnp.asarray(pad2d(M1s, n2p, n3p), dtype=jnp.bfloat16),            # bf16 (384,896)
        jnp.asarray(pad1d(o1, n3p)).reshape(1, -1),                       # f32 (1,896)
        jnp.asarray(pad2d(M2s, n3p, n4p), dtype=jnp.bfloat16),            # bf16 (896,1664)
        jnp.asarray(pad1d(o2, n4p)).reshape(1, -1),                       # f32 (1,1664)
        jnp.asarray(pad2d(M3s, n4p, n5p), dtype=jnp.bfloat16),            # bf16 (1664,896)
        jnp.asarray(pad1d(o3, n5p)).reshape(1, -1),                       # f32 (1,896)
    )

    @jax.jit
    def forward(x):
        B = x.shape[0]
        Bp = _round_up(max(B, 8), 8)                 # pad batch to f32 sublane multiple
        x_pad = jnp.zeros((Bp, x.shape[1]), jnp.float32).at[:B].set(x.astype(jnp.float32))
        y = fused_decoder_call(x_pad, operands, n5p)  # (Bp, 896)
        y = y[:B, :n5]                                # drop batch / lane padding
        return y.reshape(B, 1, oh3, ow3)              # NCHW output (B,1,28,28)

    return forward


if __name__ == "__main__":
    encoded_space_dim = 4
    batch = 2
    key = jax.random.PRNGKey(0)
    k_param, k_x = jax.random.split(key)

    params = init_params(encoded_space_dim, k_param)
    forward = build_decoder(params)

    x = jax.random.normal(k_x, (batch, encoded_space_dim), dtype=jnp.float32)
    out = forward(x)
    out = jax.block_until_ready(out)

    assert out.shape == (batch, 1, 28, 28), out.shape
    assert bool(jnp.all(jnp.isfinite(out)))
    assert bool(jnp.all(jnp.abs(out) <= 1.0 + 1e-6))   # tanh range sanity
    print("KERNEL_OK")
</pallas_src>

<mosaic_0001>
module attributes {stable_mosaic.version = 11 : i64} {
  func.func @decoder_fused_kernel(%arg0: memref<8x4xf32, #tpu.memory_space<vmem>>, %arg1: memref<4x128xf32, #tpu.memory_space<vmem>>, %arg2: memref<1x128xf32, #tpu.memory_space<vmem>>, %arg3: memref<128x384xbf16, #tpu.memory_space<vmem>>, %arg4: memref<1x384xf32, #tpu.memory_space<vmem>>, %arg5: memref<384x896xbf16, #tpu.memory_space<vmem>>, %arg6: memref<1x896xf32, #tpu.memory_space<vmem>>, %arg7: memref<896x1664xbf16, #tpu.memory_space<vmem>>, %arg8: memref<1x1664xf32, #tpu.memory_space<vmem>>, %arg9: memref<1664x896xbf16, #tpu.memory_space<vmem>>, %arg10: memref<1x896xf32, #tpu.memory_space<vmem>>, %arg11: memref<8x896xf32, #tpu.memory_space<vmem>>) attributes {dimension_semantics = [], scalar_prefetch = 0 : i64, scratch_operands = 0 : i64, tpu.core_type = #tpu.core_type<tc>} {
    %c0 = arith.constant 0 : index
    %c0_0 = arith.constant 0 : index
    %0 = vector.load %arg0[%c0, %c0_0] : memref<8x4xf32, #tpu.memory_space<vmem>>, vector<8x4xf32>
    %c0_1 = arith.constant 0 : index
    %c0_2 = arith.constant 0 : index
    %1 = vector.load %arg1[%c0_1, %c0_2] : memref<4x128xf32, #tpu.memory_space<vmem>>, vector<4x128xf32>
    %cst = arith.constant dense<0.000000e+00> : vector<8x128xf32>
    %2 = tpu.matmul %0, %1, %cst {dimension_numbers = #tpu.dot_dimension_numbers<[1], [0], [0], [1], [0, 0, 1, 1], [], []>} : vector<8x4xf32>, vector<4x128xf32>, vector<8x128xf32> -> vector<8x128xf32>
    %c0_3 = arith.constant 0 : index
    %c0_4 = arith.constant 0 : index
    %3 = vector.load %arg2[%c0_3, %c0_4] : memref<1x128xf32, #tpu.memory_space<vmem>>, vector<1x128xf32>
    %4 = vector.broadcast %3 : vector<1x128xf32> to vector<8x128xf32>
    %5 = arith.addf %2, %4 : vector<8x128xf32>
    %cst_5 = arith.constant 0.000000e+00 : f32
    %6 = vector.broadcast %cst_5 : f32 to vector<8x128xf32>
    %7 = arith.maximumf %5, %6 : vector<8x128xf32>
    %8 = arith.truncf %7 : vector<8x128xf32> to vector<8x128xbf16>
    %c0_6 = arith.constant 0 : index
    %c0_7 = arith.constant 0 : index
    %9 = vector.load %arg3[%c0_6, %c0_7] : memref<128x384xbf16, #tpu.memory_space<vmem>>, vector<128x384xbf16>
    %cst_8 = arith.constant dense<0.000000e+00> : vector<8x384xf32>
    %10 = tpu.matmul %8, %9, %cst_8 {dimension_numbers = #tpu.dot_dimension_numbers<[1], [0], [0], [1], [0, 0, 1, 1], [], []>} : vector<8x128xbf16>, vector<128x384xbf16>, vector<8x384xf32> -> vector<8x384xf32>
    %c0_9 = arith.constant 0 : index
    %c0_10 = arith.constant 0 : index
    %11 = vector.load %arg4[%c0_9, %c0_10] : memref<1x384xf32, #tpu.memory_space<vmem>>, vector<1x384xf32>
    %12 = vector.broadcast %11 : vector<1x384xf32> to vector<8x384xf32>
    %13 = arith.addf %10, %12 : vector<8x384xf32>
    %cst_11 = arith.constant 0.000000e+00 : f32
    %14 = vector.broadcast %cst_11 : f32 to vector<8x384xf32>
    %15 = arith.maximumf %13, %14 : vector<8x384xf32>
    %16 = arith.truncf %15 : vector<8x384xf32> to vector<8x384xbf16>
    %c0_12 = arith.constant 0 : index
    %c0_13 = arith.constant 0 : index
    %17 = vector.load %arg5[%c0_12, %c0_13] : memref<384x896xbf16, #tpu.memory_space<vmem>>, vector<384x896xbf16>
    %cst_14 = arith.constant dense<0.000000e+00> : vector<8x896xf32>
    %18 = tpu.matmul %16, %17, %cst_14 {dimension_numbers = #tpu.dot_dimension_numbers<[1], [0], [0], [1], [0, 0, 1, 1], [], []>} : vector<8x384xbf16>, vector<384x896xbf16>, vector<8x896xf32> -> vector<8x896xf32>
    %c0_15 = arith.constant 0 : index
    %c0_16 = arith.constant 0 : index
    %19 = vector.load %arg6[%c0_15, %c0_16] : memref<1x896xf32, #tpu.memory_space<vmem>>, vector<1x896xf32>
    %20 = vector.broadcast %19 : vector<1x896xf32> to vector<8x896xf32>
    %21 = arith.addf %18, %20 : vector<8x896xf32>
    %cst_17 = arith.constant 0.000000e+00 : f32
    %22 = vector.broadcast %cst_17 : f32 to vector<8x896xf32>
    %23 = arith.maximumf %21, %22 : vector<8x896xf32>
    %24 = arith.truncf %23 : vector<8x896xf32> to vector<8x896xbf16>
    %c0_18 = arith.constant 0 : index
    %c0_19 = arith.constant 0 : index
    %25 = vector.load %arg7[%c0_18, %c0_19] : memref<896x1664xbf16, #tpu.memory_space<vmem>>, vector<896x1664xbf16>
    %cst_20 = arith.constant dense<0.000000e+00> : vector<8x1664xf32>
    %26 = tpu.matmul %24, %25, %cst_20 {dimension_numbers = #tpu.dot_dimension_numbers<[1], [0], [0], [1], [0, 0, 1, 1], [], []>} : vector<8x896xbf16>, vector<896x1664xbf16>, vector<8x1664xf32> -> vector<8x1664xf32>
    %c0_21 = arith.constant 0 : index
    %c0_22 = arith.constant 0 : index
    %27 = vector.load %arg8[%c0_21, %c0_22] : memref<1x1664xf32, #tpu.memory_space<vmem>>, vector<1x1664xf32>
    %28 = vector.broadcast %27 : vector<1x1664xf32> to vector<8x1664xf32>
    %29 = arith.addf %26, %28 : vector<8x1664xf32>
    %cst_23 = arith.constant 0.000000e+00 : f32
    %30 = vector.broadcast %cst_23 : f32 to vector<8x1664xf32>
    %31 = arith.maximumf %29, %30 : vector<8x1664xf32>
    %32 = arith.truncf %31 : vector<8x1664xf32> to vector<8x1664xbf16>
    %c0_24 = arith.constant 0 : index
    %c0_25 = arith.constant 0 : index
    %33 = vector.load %arg9[%c0_24, %c0_25] : memref<1664x896xbf16, #tpu.memory_space<vmem>>, vector<1664x896xbf16>
    %cst_26 = arith.constant dense<0.000000e+00> : vector<8x896xf32>
    %34 = tpu.matmul %32, %33, %cst_26 {dimension_numbers = #tpu.dot_dimension_numbers<[1], [0], [0], [1], [0, 0, 1, 1], [], []>} : vector<8x1664xbf16>, vector<1664x896xbf16>, vector<8x896xf32> -> vector<8x896xf32>
    %c0_27 = arith.constant 0 : index
    %c0_28 = arith.constant 0 : index
    %35 = vector.load %arg10[%c0_27, %c0_28] : memref<1x896xf32, #tpu.memory_space<vmem>>, vector<1x896xf32>
    %36 = vector.broadcast %35 : vector<1x896xf32> to vector<8x896xf32>
    %37 = arith.addf %34, %36 : vector<8x896xf32>
    %38 = math.tanh %37 : vector<8x896xf32>
    %c0_29 = arith.constant 0 : index
    %c0_30 = arith.constant 0 : index
    %39 = vector.load %arg11[%c0_29, %c0_30] : memref<8x896xf32, #tpu.memory_space<vmem>>, vector<8x896xf32>
    tpu.vector_store %arg11[%c0_29, %c0_30], %38 {strides = array<i32>} : memref<8x896xf32, #tpu.memory_space<vmem>>, vector<8x896xf32>,
    return
  }
}

</mosaic_0001>

<llo_original>
// kernel: forward.1
$region0: #{forward.1}
  #allocation0 [shape = 'u32[]', space=smem, size = 0x4, offset = 0x4, fixed_abs, tag = 'smem constant byte address 0x4 - core index']
  #allocation1 [shape = 'u32[144,128]{1,0:T(1,128)}', space=vmem, size = 0x12000, scoped, tag = 'internal scratch']
  %s0 = inlined_call_operand.vmem [shape: f32[8,4], index: 0, kind: input, shape index: {}]
  %s1 = inlined_call_operand.vmem [shape: f32[4,128], index: 1, kind: input, shape index: {}]
  %s2 = inlined_call_operand.vmem [shape: f32[1,128], index: 2, kind: input, shape index: {}]
  %s3 = inlined_call_operand.vmem [shape: bf16[128,384], index: 3, kind: input, shape index: {}]
  %s4 = inlined_call_operand.vmem [shape: f32[1,384], index: 4, kind: input, shape index: {}]
  %s5 = inlined_call_operand.vmem [shape: bf16[384,896], index: 5, kind: input, shape index: {}]
  %s6 = inlined_call_operand.vmem [shape: f32[1,896], index: 6, kind: input, shape index: {}]
  %s7 = inlined_call_operand.vmem [shape: bf16[896,1664], index: 7, kind: input, shape index: {}]
  %s8 = inlined_call_operand.vmem [shape: f32[1,1664], index: 8, kind: input, shape index: {}]
  %s9 = inlined_call_operand.vmem [shape: bf16[1664,896], index: 9, kind: input, shape index: {}]
  %s10 = inlined_call_operand.vmem [shape: f32[1,896], index: 10, kind: input, shape index: {}]
  %s11 = inlined_call_operand.vmem [shape: f32[8,896], index: 11, kind: output, shape index: {}]
  %s12 = sld [smem:[#allocation0]]
  $region54: #{forward.1} parent=0
    _
  %s14 = ssub.s32 1, %s12
  %s15 = scalar_select 0, %s14, %s12
  // Predicated region
  $region2: #{forward.1} parent=0 // pred_check
    _
  $region3: #{forward.1} parent=0 // pred_check_branch
    %17 = sbr.rel (0) target = $region5
  $region4: #{forward.1} parent=0 // pred_region
    _
  $region5: #{forward.1} parent=0 // pred_fallthru
    _
  // Predicated region
  $region6: #{forward.1} parent=0 // pred_check
    _
  $region7: #{forward.1} parent=0 // pred_check_branch
    %19 = sbr.rel (0) target = $region9
  $region8: #{forward.1} parent=0 // pred_region
    _
  $region9: #{forward.1} parent=0 // pred_fallthru
    _
  // Predicated region
  $region10: #{forward.1} parent=0 // pred_check
    _
  $region11: #{forward.1} parent=0 // pred_check_branch
    %21 = sbr.rel (0) target = $region13
  $region12: #{forward.1} parent=0 // pred_region
    _
  $region13: #{forward.1} parent=0 // pred_fallthru
    _
  // Predicated region
  $region14: #{forward.1} parent=0 // pred_check
    _
  $region15: #{forward.1} parent=0 // pred_check_branch
    %23 = sbr.rel (0) target = $region17
  $region16: #{forward.1} parent=0 // pred_region
    _
  $region17: #{forward.1} parent=0 // pred_fallthru
    _
  // Predicated region
  $region18: #{forward.1} parent=0 // pred_check
    _
  $region19: #{forward.1} parent=0 // pred_check_branch
    %25 = sbr.rel (0) target = $region21
  $region20: #{forward.1} parent=0 // pred_region
    _
  $region21: #{forward.1} parent=0 // pred_fallthru
    _
  // Predicated region
  $region22: #{forward.1} parent=0 // pred_check
    _
  $region23: #{forward.1} parent=0 // pred_check_branch
    %27 = sbr.rel (0) target = $region25
  $region24: #{forward.1} parent=0 // pred_region
    _
  $region25: #{forward.1} parent=0 // pred_fallthru
    _
  // Predicated region
  $region26: #{forward.1} parent=0 // pred_check
    _
  $region27: #{forward.1} parent=0 // pred_check_branch
    %29 = sbr.rel (0) target = $region29
  $region28: #{forward.1} parent=0 // pred_region
    _
  $region29: #{forward.1} parent=0 // pred_fallthru
    _
  // Predicated region
  $region30: #{forward.1} parent=0 // pred_check
    _
  $region31: #{forward.1} parent=0 // pred_check_branch
    %31 = sbr.rel (0) target = $region33
  $region32: #{forward.1} parent=0 // pred_region
    _
  $region33: #{forward.1} parent=0 // pred_fallthru
    _
  // Predicated region
  $region34: #{forward.1} parent=0 // pred_check
    _
  $region35: #{forward.1} parent=0 // pred_check_branch
    %33 = sbr.rel (0) target = $region37
  $region36: #{forward.1} parent=0 // pred_region
    _
  $region37: #{forward.1} parent=0 // pred_fallthru
    _
  // Predicated region
  $region38: #{forward.1} parent=0 // pred_check
    _
  $region39: #{forward.1} parent=0 // pred_check_branch
    %35 = sbr.rel (0) target = $region41
  $region40: #{forward.1} parent=0 // pred_region
    _
  $region41: #{forward.1} parent=0 // pred_fallthru
    _
  // Predicated region
  $region42: #{forward.1} parent=0 // pred_check
    _
  $region43: #{forward.1} parent=0 // pred_check_branch
    %37 = sbr.rel (0) target = $region45
  $region44: #{forward.1} parent=0 // pred_region
    _
  $region45: #{forward.1} parent=0 // pred_fallthru
    _
  %v39 = vld [vmem:[%s0] sm:$0xff]
  %v40 = vld [vmem:[%s1] sm:$0xf]
  %v41 = vld [vmem:[%s2] sm:$0x1]
  %v43 = vlaneseq
  %v44 = vshrl.u32 %v43, 7
  %v45 = vsub.s32 0, %v44
  %v46 = vrot.slane %v41, %v45
  %vm48 = vcmask 31744
  %v50 = vsel %vm48, %v39, 0
  %vm52 = vcmask 1043456
  %v54 = vsel %vm52, %v40, 0
  %56 = vmatprep.subr.mxu0 0.0
  %57 = vmatpush1.msra.mxu0 %v54
  %58 = vmatprep.subr.mxu0 0.0
  %59 = vmatpush1.msra.mxu0 0.0
  %60 = vmatprep.subr.mxu0 0.0
  %61 = vmatpush1.msra.mxu0 0.0
  %62 = vmatprep.subr.mxu0 0.0
  %63 = vmatpush1.msra.mxu0 0.0
  %64 = vmatprep.subr.mxu0 0.0
  %65 = vmatpush1.msra.mxu0 0.0
  %66 = vmatprep.subr.mxu0 0.0
  %67 = vmatpush1.msra.mxu0 0.0
  %68 = vmatprep.subr.mxu0 0.0
  %69 = vmatpush1.msra.mxu0 0.0
  %70 = vmatprep.subr.mxu0 0.0
  %71 = vmatpush1.msra.mxu0 0.0
  %72 = vmatprep.subr.mxu0 0.0
  %73 = vmatpush1.msra.mxu0 0.0
  %74 = vmatprep.subr.mxu0 0.0
  %75 = vmatpush1.msra.mxu0 0.0
  %76 = vmatprep.subr.mxu0 0.0
  %77 = vmatpush1.msra.mxu0 0.0
  %78 = vmatprep.subr.mxu0 0.0
  %79 = vmatpush1.msra.mxu0 0.0
  %80 = vmatprep.subr.mxu0 0.0
  %81 = vmatpush1.msra.mxu0 0.0
  %82 = vmatprep.subr.mxu0 0.0
  %83 = vmatpush1.msra.mxu0 0.0
  %84 = vmatprep.subr.mxu0 0.0
  %85 = vmatpush1.msra.mxu0 0.0
  %86 = vmatprep.subr.mxu0 0.0
  %87 = vmatpush1.msra.mxu0 0.0
  %88 = vmatprep.subr.mxu0 0.0
  %89 = vmatpush1.msra.mxu0 0.0
  %90 = vmatprep.subr.mxu0 0.0
  %91 = vmatpush1.msra.mxu0 0.0
  %92 = vmatprep.subr.mxu0 0.0
  %93 = vmatpush1.msra.mxu0 0.0
  %94 = vmatprep.subr.mxu0 0.0
  %95 = vmatpush1.msra.mxu0 0.0
  %96 = vmatprep.subr.mxu0 0.0
  %97 = vmatpush1.msra.mxu0 0.0
  %98 = vmatprep.subr.mxu0 0.0
  %99 = vmatpush1.msra.mxu0 0.0
  %100 = vmatprep.subr.mxu0 0.0
  %101 = vmatpush1.msra.mxu0 0.0
  %102 = vmatprep.subr.mxu0 0.0
  %103 = vmatpush1.msra.mxu0 0.0
  %104 = vmatprep.subr.mxu0 0.0
  %105 = vmatpush1.msra.mxu0 0.0
  %106 = vmatprep.subr.mxu0 0.0
  %107 = vmatpush1.msra.mxu0 0.0
  %108 = vmatprep.subr.mxu0 0.0
  %109 = vmatpush1.msra.mxu0 0.0
  %110 = vmatprep.subr.mxu0 0.0
  %111 = vmatpush1.msra.mxu0 0.0
  %112 = vmatprep.subr.mxu0 0.0
  %113 = vmatpush1.msra.mxu0 0.0
  %114 = vmatprep.subr.mxu0 0.0
  %115 = vmatpush1.msra.mxu0 0.0
  %116 = vmatprep.subr.mxu0 0.0
  %117 = vmatpush1.msra.mxu0 0.0
  %118 = vmatprep.subr.mxu0 0.0
  %119 = vmatpush1.msra.mxu0 0.0
  %120 = vmatprep.mubr.f32.mxu0 0.0
  %121 = vmatmul.mubr.f32.gmra.mrb[0].mxu0 %v50
  %v122 = vpop.f32.mrb[0].mxu0
  %v123 = vadd.f32 %v46, %v122
  %v124 = vpop.f32.mrb[0].mxu0
  %125 = vdwg.mxu0
  %v126 = vmax.f32 %v123, 0.0
  %v127 = vpack.c.bf16 %v126, %v126
  %v128 = vld [vmem:[%s3] sm:$0xff]
  %v129 = vld [vmem:[%s3 + $0x8] sm:$0xf]
  %v130 = vld [vmem:[%s3 + $0xc] sm:$0xff]
  %v131 = vld [vmem:[%s3 + $0x14] sm:$0xf]
  %v132 = vld [vmem:[%s3 + $0x18] sm:$0xff]
  %v133 = vld [vmem:[%s3 + $0x20] sm:$0xf]
  %v134 = vld [vmem:[%s3 + $0x24] sm:$0xff]
  %v135 = vld [vmem:[%s3 + $0x2c] sm:$0xf]
  %v136 = vld [vmem:[%s3 + $0x30] sm:$0xff]
  %v137 = vld [vmem:[%s3 + $0x38] sm:$0xf]
  %v138 = vld [vmem:[%s3 + $0x3c] sm:$0xff]
  %v139 = vld [vmem:[%s3 + $0x44] sm:$0xf]
  %v140 = vld [vmem:[%s3 + $0x48] sm:$0xff]
  %v141 = vld [vmem:[%s3 + $0x50] sm:$0xf]
  %v142 = vld [vmem:[%s3 + $0x54] sm:$0xff]
  %v143 = vld [vmem:[%s3 + $0x5c] sm:$0xf]
  %v144 = vld [vmem:[%s3 + $0x60] sm:$0xff]
  %v145 = vld [vmem:[%s3 + $0x68] sm:$0xf]
  %v146 = vld [vmem:[%s3 + $0x6c] sm:$0xff]
  %v147 = vld [vmem:[%s3 + $0x74] sm:$0xf]
  %v148 = vld [vmem:[%s3 + $0x78] sm:$0xff]
  %v149 = vld [vmem:[%s3 + $0x80] sm:$0xf]
  %v150 = vld [vmem:[%s3 + $0x84] sm:$0xff]
  %v151 = vld [vmem:[%s3 + $0x8c] sm:$0xf]
  %v152 = vld [vmem:[%s3 + $0x90] sm:$0xff]
  %v153 = vld [vmem:[%s3 + $0x98] sm:$0xf]
  %v154 = vld [vmem:[%s3 + $0x9c] sm:$0xff]
  %v155 = vld [vmem:[%s3 + $0xa4] sm:$0xf]
  %v156 = vld [vmem:[%s3 + $0xa8] sm:$0xff]
  %v157 = vld [vmem:[%s3 + $0xb0] sm:$0xf]
  %v158 = vld [vmem:[%s3 + $0xb4] sm:$0xff]
  %v159 = vld [vmem:[%s3 + $0xbc] sm:$0xf]
  %v160 = vld [vmem:[%s4] sm:$0x7]
  %v162 = vlaneseq
  %v163 = vshrl.u32 %v162, 7
  %v164 = vsub.s32 0, %v163
  %v165 = vrot.slane %v160, %v164
  %v166 = vlaneseq
  %v167 = vshrl.u32 %v166, 7
  %v168 = vsub.s32 1, %v167
  %v169 = vrot.slane %v160, %v168
  %v170 = vlaneseq
  %v171 = vshrl.u32 %v170, 7
  %v172 = vsub.s32 2, %v171
  %v173 = vrot.slane %v160, %v172
  %v209 = vunpack.c.l.b16 %v128
  %v210 = vunpack.c.h.b16 %v128
  %v211 = vunpack.c.l.b16 %v129
  %v212 = vunpack.c.l.b16 %v130
  %v213 = vunpack.c.h.b16 %v130
  %v214 = vunpack.c.l.b16 %v131
  %v215 = vunpack.c.l.b16 %v132
  %v216 = vunpack.c.h.b16 %v132
  %v217 = vunpack.c.l.b16 %v133
  %v218 = vunpack.c.l.b16 %v134
  %v219 = vunpack.c.h.b16 %v134
  %v220 = vunpack.c.l.b16 %v135
  %v221 = vunpack.c.l.b16 %v136
  %v222 = vunpack.c.h.b16 %v136
  %v223 = vunpack.c.l.b16 %v137
  %v224 = vunpack.c.l.b16 %v138
  %v225 = vunpack.c.h.b16 %v138
  %v226 = vunpack.c.l.b16 %v139
  %v227 = vunpack.c.l.b16 %v140
  %v228 = vunpack.c.h.b16 %v140
  %v229 = vunpack.c.l.b16 %v141
  %v230 = vunpack.c.l.b16 %v142
  %v231 = vunpack.c.h.b16 %v142
  %v232 = vunpack.c.l.b16 %v143
  %v233 = vunpack.c.l.b16 %v144
  %v234 = vunpack.c.h.b16 %v144
  %v235 = vunpack.c.l.b16 %v145
  %v236 = vunpack.c.l.b16 %v146
  %v237 = vunpack.c.h.b16 %v146
  %v238 = vunpack.c.l.b16 %v147
  %v239 = vunpack.c.l.b16 %v148
  %v240 = vunpack.c.h.b16 %v148
  %v241 = vunpack.c.l.b16 %v149
  %v242 = vunpack.c.l.b16 %v150
  %v243 = vunpack.c.h.b16 %v150
  %v244 = vunpack.c.l.b16 %v151
  %v245 = vunpack.c.l.b16 %v152
  %v246 = vunpack.c.h.b16 %v152
  %v247 = vunpack.c.l.b16 %v153
  %v248 = vunpack.c.l.b16 %v154
  %v249 = vunpack.c.h.b16 %v154
  %v250 = vunpack.c.l.b16 %v155
  %v251 = vunpack.c.l.b16 %v156
  %v252 = vunpack.c.h.b16 %v156
  %v253 = vunpack.c.l.b16 %v157
  %v254 = vunpack.c.l.b16 %v158
  %v255 = vunpack.c.h.b16 %v158
  %v256 = vunpack.c.l.b16 %v159
  %v257 = vpack.c.b16 %v212, %v209
  %v258 = vpack.c.b16 %v213, %v210
  %v259 = vpack.c.b16 %v214, %v211
  %v260 = vpack.c.b16 %v218, %v215
  %v261 = vpack.c.b16 %v219, %v216
  %v262 = vpack.c.b16 %v220, %v217
  %v263 = vpack.c.b16 %v224, %v221
  %v264 = vpack.c.b16 %v225, %v222
  %v265 = vpack.c.b16 %v226, %v223
  %v266 = vpack.c.b16 %v230, %v227
  %v267 = vpack.c.b16 %v231, %v228
  %v268 = vpack.c.b16 %v232, %v229
  %v269 = vpack.c.b16 %v236, %v233
  %v270 = vpack.c.b16 %v237, %v234
  %v271 = vpack.c.b16 %v238, %v235
  %v272 = vpack.c.b16 %v242, %v239
  %v273 = vpack.c.b16 %v243, %v240
  %v274 = vpack.c.b16 %v244, %v241
  %v275 = vpack.c.b16 %v248, %v245
  %v276 = vpack.c.b16 %v249, %v246
  %v277 = vpack.c.b16 %v250, %v247
  %v278 = vpack.c.b16 %v254, %v251
  %v279 = vpack.c.b16 %v255, %v252
  %v280 = vpack.c.b16 %v256, %v253
  %305 = vmatprep.subr.bf16.mxu0 %v258
  %306 = vmatpush1.bf16.msra.mxu0 %v257
  %307 = vmatprep.subr.bf16.mxu0 %v261
  %308 = vmatpush1.bf16.msra.mxu0 %v260
  %309 = vmatprep.subr.bf16.mxu0 %v264
  %310 = vmatpush1.bf16.msra.mxu0 %v263
  %311 = vmatprep.subr.bf16.mxu0 %v267
  %312 = vmatpush1.bf16.msra.mxu0 %v266
  %313 = vmatprep.subr.bf16.mxu0 %v270
  %314 = vmatpush1.bf16.msra.mxu0 %v269
  %315 = vmatprep.subr.bf16.mxu0 %v273
  %316 = vmatpush1.bf16.msra.mxu0 %v272
  %317 = vmatprep.subr.bf16.mxu0 %v276
  %318 = vmatpush1.bf16.msra.mxu0 %v275
  %319 = vmatprep.subr.bf16.mxu0 %v279
  %320 = vmatpush1.bf16.msra.mxu0 %v278
  %321 = vmatprep.subr.bf16.mxu0 0
  %322 = vmatpush1.bf16.msra.mxu0 0
  %323 = vmatprep.subr.bf16.mxu0 0
  %324 = vmatpush1.bf16.msra.mxu0 0
  %325 = vmatprep.subr.bf16.mxu0 0
  %326 = vmatpush1.bf16.msra.mxu0 0
  %327 = vmatprep.subr.bf16.mxu0 0
  %328 = vmatpush1.bf16.msra.mxu0 0
  %329 = vmatprep.subr.bf16.mxu0 0
  %330 = vmatpush1.bf16.msra.mxu0 0
  %331 = vmatprep.subr.bf16.mxu0 0
  %332 = vmatpush1.bf16.msra.mxu0 0
  %333 = vmatprep.subr.bf16.mxu0 0
  %334 = vmatpush1.bf16.msra.mxu0 0
  %335 = vmatprep.subr.bf16.mxu0 0
  %336 = vmatpush1.bf16.msra.mxu0 0
  %337 = vmatprep.mubr.bf16.mxu0 0
  %338 = vmatmul.mubr.bf16.gmra.mrb[0].mxu0 %v127
  %v339 = vpop.f32.mrb[0].mxu0
  %v340 = vadd.f32 %v165, %v339
  %v341 = vpop.f32.mrb[0].mxu0
  %v342 = vadd.f32 %v169, %v341
  %v343 = vpop.f32.mrb[0].mxu0
  %v344 = vpop.f32.mrb[0].mxu0
  %345 = vdwg.mxu0
  %346 = vmatprep.subr.bf16.mxu0 0
  %347 = vmatpush1.bf16.msra.mxu0 %v259
  %348 = vmatprep.subr.bf16.mxu0 0
  %349 = vmatpush1.bf16.msra.mxu0 %v262
  %350 = vmatprep.subr.bf16.mxu0 0
  %351 = vmatpush1.bf16.msra.mxu0 %v265
  %352 = vmatprep.subr.bf16.mxu0 0
  %353 = vmatpush1.bf16.msra.mxu0 %v268
  %354 = vmatprep.subr.bf16.mxu0 0
  %355 = vmatpush1.bf16.msra.mxu0 %v271
  %356 = vmatprep.subr.bf16.mxu0 0
  %357 = vmatpush1.bf16.msra.mxu0 %v274
  %358 = vmatprep.subr.bf16.mxu0 0
  %359 = vmatpush1.bf16.msra.mxu0 %v277
  %360 = vmatprep.subr.bf16.mxu0 0
  %361 = vmatpush1.bf16.msra.mxu0 %v280
  %362 = vmatprep.subr.bf16.mxu0 0
  %363 = vmatpush1.bf16.msra.mxu0 0
  %364 = vmatprep.subr.bf16.mxu0 0
  %365 = vmatpush1.bf16.msra.mxu0 0
  %366 = vmatprep.subr.bf16.mxu0 0
  %367 = vmatpush1.bf16.msra.mxu0 0
  %368 = vmatprep.subr.bf16.mxu0 0
  %369 = vmatpush1.bf16.msra.mxu0 0
  %370 = vmatprep.subr.bf16.mxu0 0
  %371 = vmatpush1.bf16.msra.mxu0 0
  %372 = vmatprep.subr.bf16.mxu0 0
  %373 = vmatpush1.bf16.msra.mxu0 0
  %374 = vmatprep.subr.bf16.mxu0 0
  %375 = vmatpush1.bf16.msra.mxu0 0
  %376 = vmatprep.subr.bf16.mxu0 0
  %377 = vmatpush1.bf16.msra.mxu0 0
  %378 = vmatprep.mubr.bf16.mxu0 0
  %379 = vmatmul.mubr.bf16.gmra.mrb[0].mxu0 %v127
  %v380 = vpop.f32.mrb[0].mxu0
  %v381 = vadd.f32 %v173, %v380
  %v382 = vpop.f32.mrb[0].mxu0
  %v383 = vpop.f32.mrb[0].mxu0
  %v384 = vpop.f32.mrb[0].mxu0
  %385 = vdwg.mxu0
  %v386 = vmax.f32 %v340, 0.0
  %v387 = vmax.f32 %v342, 0.0
  %v388 = vmax.f32 %v381, 0.0
  %v389 = vpack.c.bf16 %v386, %v386
  %v390 = vpack.c.bf16 %v387, %v387
  %v391 = vpack.c.bf16 %v388, %v388
  %v392 = vld [vmem:[%s5] sm:$0xff]
  %v393 = vld [vmem:[%s5 + $0x8] sm:$0xff]
  %v394 = vld [vmem:[%s5 + $0x10] sm:$0xff]
  %v395 = vld [vmem:[%s5 + $0x18] sm:$0xf]
  %v396 = vld [vmem:[%s5 + $0x1c] sm:$0xff]
  %v397 = vld [vmem:[%s5 + $0x24] sm:$0xff]
  %v398 = vld [vmem:[%s5 + $0x2c] sm:$0xff]
  %v399 = vld [vmem:[%s5 + $0x34] sm:$0xf]
  %v400 = vld [vmem:[%s5 + $0x38] sm:$0xff]
  %v401 = vld [vmem:[%s5 + $0x40] sm:$0xff]
  %v402 = vld [vmem:[%s5 + $0x48] sm:$0xff]
  %v403 = vld [vmem:[%s5 + $0x50] sm:$0xf]
  %v404 = vld [vmem:[%s5 + $0x54] sm:$0xff]
  %v405 = vld [vmem:[%s5 + $0x5c] sm:$0xff]
  %v406 = vld [vmem:[%s5 + $0x64] sm:$0xff]
  %v407 = vld [vmem:[%s5 + $0x6c] sm:$0xf]
  %v408 = vld [vmem:[%s5 + $0x70] sm:$0xff]
  %v409 = vld [vmem:[%s5 + $0x78] sm:$0xff]
  %v410 = vld [vmem:[%s5 + $0x80] sm:$0xff]
  %v411 = vld [vmem:[%s5 + $0x88] sm:$0xf]
  %v412 = vld [vmem:[%s5 + $0x8c] sm:$0xff]
  %v413 = vld [vmem:[%s5 + $0x94] sm:$0xff]
  %v414 = vld [vmem:[%s5 + $0x9c] sm:$0xff]
  %v415 = vld [vmem:[%s5 + $0xa4] sm:$0xf]
  %v416 = vld [vmem:[%s5 + $0xa8] sm:$0xff]
  %v417 = vld [vmem:[%s5 + $0xb0] sm:$0xff]
  %v418 = vld [vmem:[%s5 + $0xb8] sm:$0xff]
  %v419 = vld [vmem:[%s5 + $0xc0] sm:$0xf]
  %v420 = vld [vmem:[%s5 + $0xc4] sm:$0xff]
  %v421 = vld [vmem:[%s5 + $0xcc] sm:$0xff]
  %v422 = vld [vmem:[%s5 + $0xd4] sm:$0xff]
  %v423 = vld [vmem:[%s5 + $0xdc] sm:$0xf]
  %v424 = vld [vmem:[%s5 + $0xe0] sm:$0xff]
  %v425 = vld [vmem:[%s5 + $0xe8] sm:$0xff]
  %v426 = vld [vmem:[%s5 + $0xf0] sm:$0xff]
  %v427 = vld [vmem:[%s5 + $0xf8] sm:$0xf]
  %v428 = vld [vmem:[%s5 + $0xfc] sm:$0xff]
  %v429 = vld [vmem:[%s5 + $0x104] sm:$0xff]
  %v430 = vld [vmem:[%s5 + $0x10c] sm:$0xff]
  %v431 = vld [vmem:[%s5 + $0x114] sm:$0xf]
  %v432 = vld [vmem:[%s5 + $0x118] sm:$0xff]
  %v433 = vld [vmem:[%s5 + $0x120] sm:$0xff]
  %v434 = vld [vmem:[%s5 + $0x128] sm:$0xff]
  %v435 = vld [vmem:[%s5 + $0x130] sm:$0xf]
  %v436 = vld [vmem:[%s5 + $0x134] sm:$0xff]
  %v437 = vld [vmem:[%s5 + $0x13c] sm:$0xff]
  %v438 = vld [vmem:[%s5 + $0x144] sm:$0xff]
  %v439 = vld [vmem:[%s5 + $0x14c] sm:$0xf]
  %v440 = vld [vmem:[%s5 + $0x150] sm:$0xff]
  %v441 = vld [vmem:[%s5 + $0x158] sm:$0xff]
  %v442 = vld [vmem:[%s5 + $0x160] sm:$0xff]
  %v443 = vld [vmem:[%s5 + $0x168] sm:$0xf]
  %v444 = vld [vmem:[%s5 + $0x16c] sm:$0xff]
  %v445 = vld [vmem:[%s5 + $0x174] sm:$0xff]
  %v446 = vld [vmem:[%s5 + $0x17c] sm:$0xff]
  %v447 = vld [vmem:[%s5 + $0x184] sm:$0xf]
  %v448 = vld [vmem:[%s5 + $0x188] sm:$0xff]
  %v449 = vld [vmem:[%s5 + $0x190] sm:$0xff]
  %v450 = vld [vmem:[%s5 + $0x198] sm:$0xff]
  %v451 = vld [vmem:[%s5 + $0x1a0] sm:$0xf]
  %v452 = vld [vmem:[%s5 + $0x1a4] sm:$0xff]
  %v453 = vld [vmem:[%s5 + $0x1ac] sm:$0xff]
  %v454 = vld [vmem:[%s5 + $0x1b4] sm:$0xff]
  %v455 = vld [vmem:[%s5 + $0x1bc] sm:$0xf]
  %v456 = vld [vmem:[%s5 + $0x1c0] sm:$0xff]
  %v457 = vld [vmem:[%s5 + $0x1c8] sm:$0xff]
  %v458 = vld [vmem:[%s5 + $0x1d0] sm:$0xff]
  %v459 = vld [vmem:[%s5 + $0x1d8] sm:$0xf]
  %v460 = vld [vmem:[%s5 + $0x1dc] sm:$0xff]
  %v461 = vld [vmem:[%s5 + $0x1e4] sm:$0xff]
  %v462 = vld [vmem:[%s5 + $0x1ec] sm:$0xff]
  %v463 = vld [vmem:[%s5 + $0x1f4] sm:$0xf]
  %v464 = vld [vmem:[%s5 + $0x1f8] sm:$0xff]
  %v465 = vld [vmem:[%s5 + $0x200] sm:$0xff]
  %v466 = vld [vmem:[%s5 + $0x208] sm:$0xff]
  %v467 = vld [vmem:[%s5 + $0x210] sm:$0xf]
  %v468 = vld [vmem:[%s5 + $0x214] sm:$0xff]
  %v469 = vld [vmem:[%s5 + $0x21c] sm:$0xff]
  %v470 = vld [vmem:[%s5 + $0x224] sm:$0xff]
  %v471 = vld [vmem:[%s5 + $0x22c] sm:$0xf]
  %v472 = vld [vmem:[%s5 + $0x230] sm:$0xff]
  %v473 = vld [vmem:[%s5 + $0x238] sm:$0xff]
  %v474 = vld [vmem:[%s5 + $0x240] sm:$0xff]
  %v475 = vld [vmem:[%s5 + $0x248] sm:$0xf]
  %v476 = vld [vmem:[%s5 + $0x24c] sm:$0xff]
  %v477 = vld [vmem:[%s5 + $0x254] sm:$0xff]
  %v478 = vld [vmem:[%s5 + $0x25c] sm:$0xff]
  %v479 = vld [vmem:[%s5 + $0x264] sm:$0xf]
  %v480 = vld [vmem:[%s5 + $0x268] sm:$0xff]
  %v481 = vld [vmem:[%s5 + $0x270] sm:$0xff]
  %v482 = vld [vmem:[%s5 + $0x278] sm:$0xff]
  %v483 = vld [vmem:[%s5 + $0x280] sm:$0xf]
  %v484 = vld [vmem:[%s5 + $0x284] sm:$0xff]
  %v485 = vld [vmem:[%s5 + $0x28c] sm:$0xff]
  %v486 = vld [vmem:[%s5 + $0x294] sm:$0xff]
  %v487 = vld [vmem:[%s5 + $0x29c] sm:$0xf]
  %v488 = vld [vmem:[%s5 + $0x2a0] sm:$0xff]
  %v489 = vld [vmem:[%s5 + $0x2a8] sm:$0xff]
  %v490 = vld [vmem:[%s5 + $0x2b0] sm:$0xff]
  %v491 = vld [vmem:[%s5 + $0x2b8] sm:$0xf]
  %v492 = vld [vmem:[%s5 + $0x2bc] sm:$0xff]
  %v493 = vld [vmem:[%s5 + $0x2c4] sm:$0xff]
  %v494 = vld [vmem:[%s5 + $0x2cc] sm:$0xff]
  %v495 = vld [vmem:[%s5 + $0x2d4] sm:$0xf]
  %v496 = vld [vmem:[%s5 + $0x2d8] sm:$0xff]
  %v497 = vld [vmem:[%s5 + $0x2e0] sm:$0xff]
  %v498 = vld [vmem:[%s5 + $0x2e8] sm:$0xff]
  %v499 = vld [vmem:[%s5 + $0x2f0] sm:$0xf]
  %v500 = vld [vmem:[%s5 + $0x2f4] sm:$0xff]
  %v501 = vld [vmem:[%s5 + $0x2fc] sm:$0xff]
  %v502 = vld [vmem:[%s5 + $0x304] sm:$0xff]
  %v503 = vld [vmem:[%s5 + $0x30c] sm:$0xf]
  %v504 = vld [vmem:[%s5 + $0x310] sm:$0xff]
  %v505 = vld [vmem:[%s5 + $0x318] sm:$0xff]
  %v506 = vld [vmem:[%s5 + $0x320] sm:$0xff]
  %v507 = vld [vmem:[%s5 + $0x328] sm:$0xf]
  %v508 = vld [vmem:[%s5 + $0x32c] sm:$0xff]
  %v509 = vld [vmem:[%s5 + $0x334] sm:$0xff]
  %v510 = vld [vmem:[%s5 + $0x33c] sm:$0xff]
  %v511 = vld [vmem:[%s5 + $0x344] sm:$0xf]
  %v512 = vld [vmem:[%s5 + $0x348] sm:$0xff]
  %v513 = vld [vmem:[%s5 + $0x350] sm:$0xff]
  %v514 = vld [vmem:[%s5 + $0x358] sm:$0xff]
  %v515 = vld [vmem:[%s5 + $0x360] sm:$0xf]
  %v516 = vld [vmem:[%s5 + $0x364] sm:$0xff]
  %v517 = vld [vmem:[%s5 + $0x36c] sm:$0xff]
  %v518 = vld [vmem:[%s5 + $0x374] sm:$0xff]
  %v519 = vld [vmem:[%s5 + $0x37c] sm:$0xf]
  %v520 = vld [vmem:[%s5 + $0x380] sm:$0xff]
  %v521 = vld [vmem:[%s5 + $0x388] sm:$0xff]
  %v522 = vld [vmem:[%s5 + $0x390] sm:$0xff]
  %v523 = vld [vmem:[%s5 + $0x398] sm:$0xf]
  %v524 = vld [vmem:[%s5 + $0x39c] sm:$0xff]
  %v525 = vld [vmem:[%s5 + $0x3a4] sm:$0xff]
  %v526 = vld [vmem:[%s5 + $0x3ac] sm:$0xff]
  %v527 = vld [vmem:[%s5 + $0x3b4] sm:$0xf]
  %v528 = vld [vmem:[%s5 + $0x3b8] sm:$0xff]
  %v529 = vld [vmem:[%s5 + $0x3c0] sm:$0xff]
  %v530 = vld [vmem:[%s5 + $0x3c8] sm:$0xff]
  %v531 = vld [vmem:[%s5 + $0x3d0] sm:$0xf]
  %v532 = vld [vmem:[%s5 + $0x3d4] sm:$0xff]
  %v533 = vld [vmem:[%s5 + $0x3dc] sm:$0xff]
  %v534 = vld [vmem:[%s5 + $0x3e4] sm:$0xff]
  %v535 = vld [vmem:[%s5 + $0x3ec] sm:$0xf]
  %v536 = vld [vmem:[%s5 + $0x3f0] sm:$0xff]
  %v537 = vld [vmem:[%s5 + $0x3f8] sm:$0xff]
  %v538 = vld [vmem:[%s5 + $0x400] sm:$0xff]
  %v539 = vld [vmem:[%s5 + $0x408] sm:$0xf]
  %v540 = vld [vmem:[%s5 + $0x40c] sm:$0xff]
  %v541 = vld [vmem:[%s5 + $0x414] sm:$0xff]
  %v542 = vld [vmem:[%s5 + $0x41c] sm:$0xff]
  %v543 = vld [vmem:[%s5 + $0x424] sm:$0xf]
  %v544 = vld [vmem:[%s5 + $0x428] sm:$0xff]
  %v545 = vld [vmem:[%s5 + $0x430] sm:$0xff]
  %v546 = vld [vmem:[%s5 + $0x438] sm:$0xff]
  %v547 = vld [vmem:[%s5 + $0x440] sm:$0xf]
  %v548 = vld [vmem:[%s5 + $0x444] sm:$0xff]
  %v549 = vld [vmem:[%s5 + $0x44c] sm:$0xff]
  %v550 = vld [vmem:[%s5 + $0x454] sm:$0xff]
  %v551 = vld [vmem:[%s5 + $0x45c] sm:$0xf]
  %v552 = vld [vmem:[%s5 + $0x460] sm:$0xff]
  %v553 = vld [vmem:[%s5 + $0x468] sm:$0xff]
  %v554 = vld [vmem:[%s5 + $0x470] sm:$0xff]
  %v555 = vld [vmem:[%s5 + $0x478] sm:$0xf]
  %v556 = vld [vmem:[%s5 + $0x47c] sm:$0xff]
  %v557 = vld [vmem:[%s5 + $0x484] sm:$0xff]
  %v558 = vld [vmem:[%s5 + $0x48c] sm:$0xff]
  %v559 = vld [vmem:[%s5 + $0x494] sm:$0xf]
  %v560 = vld [vmem:[%s5 + $0x498] sm:$0xff]
  %v561 = vld [vmem:[%s5 + $0x4a0] sm:$0xff]
  %v562 = vld [vmem:[%s5 + $0x4a8] sm:$0xff]
  %v563 = vld [vmem:[%s5 + $0x4b0] sm:$0xf]
  %v564 = vld [vmem:[%s5 + $0x4b4] sm:$0xff]
  %v565 = vld [vmem:[%s5 + $0x4bc] sm:$0xff]
  %v566 = vld [vmem:[%s5 + $0x4c4] sm:$0xff]
  %v567 = vld [vmem:[%s5 + $0x4cc] sm:$0xf]
  %v568 = vld [vmem:[%s5 + $0x4d0] sm:$0xff]
  %v569 = vld [vmem:[%s5 + $0x4d8] sm:$0xff]
  %v570 = vld [vmem:[%s5 + $0x4e0] sm:$0xff]
  %v571 = vld [vmem:[%s5 + $0x4e8] sm:$0xf]
  %v572 = vld [vmem:[%s5 + $0x4ec] sm:$0xff]
  %v573 = vld [vmem:[%s5 + $0x4f4] sm:$0xff]
  %v574 = vld [vmem:[%s5 + $0x4fc] sm:$0xff]
  %v575 = vld [vmem:[%s5 + $0x504] sm:$0xf]
  %v576 = vld [vmem:[%s5 + $0x508] sm:$0xff]
  %v577 = vld [vmem:[%s5 + $0x510] sm:$0xff]
  %v578 = vld [vmem:[%s5 + $0x518] sm:$0xff]
  %v579 = vld [vmem:[%s5 + $0x520] sm:$0xf]
  %v580 = vld [vmem:[%s5 + $0x524] sm:$0xff]
  %v581 = vld [vmem:[%s5 + $0x52c] sm:$0xff]
  %v582 = vld [vmem:[%s5 + $0x534] sm:$0xff]
  %v583 = vld [vmem:[%s5 + $0x53c] sm:$0xf]
  %v584 = vld [vmem:[%s6] sm:$0xff]
  %v586 = vlaneseq
  %v587 = vshrl.u32 %v586, 7
  %v588 = vsub.s32 0, %v587
  %v589 = vrot.slane %v584, %v588
  %v590 = vlaneseq
  %v591 = vshrl.u32 %v590, 7
  %v592 = vsub.s32 1, %v591
  %v593 = vrot.slane %v584, %v592
  %v594 = vlaneseq
  %v595 = vshrl.u32 %v594, 7
  %v596 = vsub.s32 2, %v595
  %v597 = vrot.slane %v584, %v596
  %v598 = vlaneseq
  %v599 = vshrl.u32 %v598, 7
  %v600 = vsub.s32 3, %v599
  %v601 = vrot.slane %v584, %v600
  %v602 = vlaneseq
  %v603 = vshrl.u32 %v602, 7
  %v604 = vsub.s32 4, %v603
  %v605 = vrot.slane %v584, %v604
  %v606 = vlaneseq
  %v607 = vshrl.u32 %v606, 7
  %v608 = vsub.s32 5, %v607
  %v609 = vrot.slane %v584, %v608
  %v610 = vlaneseq
  %v611 = vshrl.u32 %v610, 7
  %v612 = vsub.s32 6, %v611
  %v613 = vrot.slane %v584, %v612
  %v813 = vunpack.c.l.b16 %v392
  %v814 = vunpack.c.h.b16 %v392
  %v815 = vunpack.c.l.b16 %v393
  %v816 = vunpack.c.h.b16 %v393
  %v817 = vunpack.c.l.b16 %v394
  %v818 = vunpack.c.h.b16 %v394
  %v819 = vunpack.c.l.b16 %v395
  %v820 = vunpack.c.l.b16 %v396
  %v821 = vunpack.c.h.b16 %v396
  %v822 = vunpack.c.l.b16 %v397
  %v823 = vunpack.c.h.b16 %v397
  %v824 = vunpack.c.l.b16 %v398
  %v825 = vunpack.c.h.b16 %v398
  %v826 = vunpack.c.l.b16 %v399
  %v827 = vunpack.c.l.b16 %v400
  %v828 = vunpack.c.h.b16 %v400
  %v829 = vunpack.c.l.b16 %v401
  %v830 = vunpack.c.h.b16 %v401
  %v831 = vunpack.c.l.b16 %v402
  %v832 = vunpack.c.h.b16 %v402
  %v833 = vunpack.c.l.b16 %v403
  %v834 = vunpack.c.l.b16 %v404
  %v835 = vunpack.c.h.b16 %v404
  %v836 = vunpack.c.l.b16 %v405
  %v837 = vunpack.c.h.b16 %v405
  %v838 = vunpack.c.l.b16 %v406
  %v839 = vunpack.c.h.b16 %v406
  %v840 = vunpack.c.l.b16 %v407
  %v841 = vunpack.c.l.b16 %v408
  %v842 = vunpack.c.h.b16 %v408
  %v843 = vunpack.c.l.b16 %v409
  %v844 = vunpack.c.h.b16 %v409
  %v845 = vunpack.c.l.b16 %v410
  %v846 = vunpack.c.h.b16 %v410
  %v847 = vunpack.c.l.b16 %v411
  %v848 = vunpack.c.l.b16 %v412
  %v849 = vunpack.c.h.b16 %v412
  %v850 = vunpack.c.l.b16 %v413
  %v851 = vunpack.c.h.b16 %v413
  %v852 = vunpack.c.l.b16 %v414
  %v853 = vunpack.c.h.b16 %v414
  %v854 = vunpack.c.l.b16 %v415
  %v855 = vunpack.c.l.b16 %v416
  %v856 = vunpack.c.h.b16 %v416
  %v857 = vunpack.c.l.b16 %v417
  %v858 = vunpack.c.h.b16 %v417
  %v859 = vunpack.c.l.b16 %v418
  %v860 = vunpack.c.h.b16 %v418
  %v861 = vunpack.c.l.b16 %v419
  %v862 = vunpack.c.l.b16 %v420
  %v863 = vunpack.c.h.b16 %v420
  %v864 = vunpack.c.l.b16 %v421
  %v865 = vunpack.c.h.b16 %v421
  %v866 = vunpack.c.l.b16 %v422
  %v867 = vunpack.c.h.b16 %v422
  %v868 = vunpack.c.l.b16 %v423
  %v869 = vunpack.c.l.b16 %v424
  %v870 = vunpack.c.h.b16 %v424
  %v871 = vunpack.c.l.b16 %v425
  %v872 = vunpack.c.h.b16 %v425
  %v873 = vunpack.c.l.b16 %v426
  %v874 = vunpack.c.h.b16 %v426
  %v875 = vunpack.c.l.b16 %v427
  %v876 = vunpack.c.l.b16 %v428
  %v877 = vunpack.c.h.b16 %v428
  %v878 = vunpack.c.l.b16 %v429
  %v879 = vunpack.c.h.b16 %v429
  %v880 = vunpack.c.l.b16 %v430
  %v881 = vunpack.c.h.b16 %v430
  %v882 = vunpack.c.l.b16 %v431
  %v883 = vunpack.c.l.b16 %v432
  %v884 = vunpack.c.h.b16 %v432
  %v885 = vunpack.c.l.b16 %v433
  %v886 = vunpack.c.h.b16 %v433
  %v887 = vunpack.c.l.b16 %v434
  %v888 = vunpack.c.h.b16 %v434
  %v889 = vunpack.c.l.b16 %v435
  %v890 = vunpack.c.l.b16 %v436
  %v891 = vunpack.c.h.b16 %v436
  %v892 = vunpack.c.l.b16 %v437
  %v893 = vunpack.c.h.b16 %v437
  %v894 = vunpack.c.l.b16 %v438
  %v895 = vunpack.c.h.b16 %v438
  %v896 = vunpack.c.l.b16 %v439
  %v897 = vunpack.c.l.b16 %v440
  %v898 = vunpack.c.h.b16 %v440
  %v899 = vunpack.c.l.b16 %v441
  %v900 = vunpack.c.h.b16 %v441
  %v901 = vunpack.c.l.b16 %v442
  %v902 = vunpack.c.h.b16 %v442
  %v903 = vunpack.c.l.b16 %v443
  %v904 = vunpack.c.l.b16 %v444
  %v905 = vunpack.c.h.b16 %v444
  %v906 = vunpack.c.l.b16 %v445
  %v907 = vunpack.c.h.b16 %v445
  %v908 = vunpack.c.l.b16 %v446
  %v909 = vunpack.c.h.b16 %v446
  %v910 = vunpack.c.l.b16 %v447
  %v911 = vunpack.c.l.b16 %v448
  %v912 = vunpack.c.h.b16 %v448
  %v913 = vunpack.c.l.b16 %v449
  %v914 = vunpack.c.h.b16 %v449
  %v915 = vunpack.c.l.b16 %v450
  %v916 = vunpack.c.h.b16 %v450
  %v917 = vunpack.c.l.b16 %v451
  %v918 = vunpack.c.l.b16 %v452
  %v919 = vunpack.c.h.b16 %v452
  %v920 = vunpack.c.l.b16 %v453
  %v921 = vunpack.c.h.b16 %v453
  %v922 = vunpack.c.l.b16 %v454
  %v923 = vunpack.c.h.b16 %v454
  %v924 = vunpack.c.l.b16 %v455
  %v925 = vunpack.c.l.b16 %v456
  %v926 = vunpack.c.h.b16 %v456
  %v927 = vunpack.c.l.b16 %v457
  %v928 = vunpack.c.h.b16 %v457
  %v929 = vunpack.c.l.b16 %v458
  %v930 = vunpack.c.h.b16 %v458
  %v931 = vunpack.c.l.b16 %v459
  %v932 = vunpack.c.l.b16 %v460
  %v933 = vunpack.c.h.b16 %v460
  %v934 = vunpack.c.l.b16 %v461
  %v935 = vunpack.c.h.b16 %v461
  %v936 = vunpack.c.l.b16 %v462
  %v937 = vunpack.c.h.b16 %v462
  %v938 = vunpack.c.l.b16 %v463
  %v939 = vunpack.c.l.b16 %v464
  %v940 = vunpack.c.h.b16 %v464
  %v941 = vunpack.c.l.b16 %v465
  %v942 = vunpack.c.h.b16 %v465
  %v943 = vunpack.c.l.b16 %v466
  %v944 = vunpack.c.h.b16 %v466
  %v945 = vunpack.c.l.b16 %v467
  %v946 = vunpack.c.l.b16 %v468
  %v947 = vunpack.c.h.b16 %v468
  %v948 = vunpack.c.l.b16 %v469
  %v949 = vunpack.c.h.b16 %v469
  %v950 = vunpack.c.l.b16 %v470
  %v951 = vunpack.c.h.b16 %v470
  %v952 = vunpack.c.l.b16 %v471
  %v953 = vunpack.c.l.b16 %v472
  %v954 = vunpack.c.h.b16 %v472
  %v955 = vunpack.c.l.b16 %v473
  %v956 = vunpack.c.h.b16 %v473
  %v957 = vunpack.c.l.b16 %v474
  %v958 = vunpack.c.h.b16 %v474
  %v959 = vunpack.c.l.b16 %v475
  %v960 = vunpack.c.l.b16 %v476
  %v961 = vunpack.c.h.b16 %v476
  %v962 = vunpack.c.l.b16 %v477
  %v963 = vunpack.c.h.b16 %v477
  %v964 = vunpack.c.l.b16 %v478
  %v965 = vunpack.c.h.b16 %v478
  %v966 = vunpack.c.l.b16 %v479
  %v967 = vunpack.c.l.b16 %v480
  %v968 = vunpack.c.h.b16 %v480
  %v969 = vunpack.c.l.b16 %v481
  %v970 = vunpack.c.h.b16 %v481
  %v971 = vunpack.c.l.b16 %v482
  %v972 = vunpack.c.h.b16 %v482
  %v973 = vunpack.c.l.b16 %v483
  %v974 = vunpack.c.l.b16 %v484
  %v975 = vunpack.c.h.b16 %v484
  %v976 = vunpack.c.l.b16 %v485
  %v977 = vunpack.c.h.b16 %v485
  %v978 = vunpack.c.l.b16 %v486
  %v979 = vunpack.c.h.b16 %v486
  %v980 = vunpack.c.l.b16 %v487
  %v981 = vunpack.c.l.b16 %v488
  %v982 = vunpack.c.h.b16 %v488
  %v983 = vunpack.c.l.b16 %v489
  %v984 = vunpack.c.h.b16 %v489
  %v985 = vunpack.c.l.b16 %v490
  %v986 = vunpack.c.h.b16 %v490
  %v987 = vunpack.c.l.b16 %v491
  %v988 = vunpack.c.l.b16 %v492
  %v989 = vunpack.c.h.b16 %v492
  %v990 = vunpack.c.l.b16 %v493
  %v991 = vunpack.c.h.b16 %v493
  %v992 = vunpack.c.l.b16 %v494
  %v993 = vunpack.c.h.b16 %v494
  %v994 = vunpack.c.l.b16 %v495
  %v995 = vunpack.c.l.b16 %v496
  %v996 = vunpack.c.h.b16 %v496
  %v997 = vunpack.c.l.b16 %v497
  %v998 = vunpack.c.h.b16 %v497
  %v999 = vunpack.c.l.b16 %v498
  %v1000 = vunpack.c.h.b16 %v498
  %v1001 = vunpack.c.l.b16 %v499
  %v1002 = vunpack.c.l.b16 %v500
  %v1003 = vunpack.c.h.b16 %v500
  %v1004 = vunpack.c.l.b16 %v501
  %v1005 = vunpack.c.h.b16 %v501
  %v1006 = vunpack.c.l.b16 %v502
  %v1007 = vunpack.c.h.b16 %v502
  %v1008 = vunpack.c.l.b16 %v503
  %v1009 = vunpack.c.l.b16 %v504
  %v1010 = vunpack.c.h.b16 %v504
  %v1011 = vunpack.c.l.b16 %v505
  %v1012 = vunpack.c.h.b16 %v505
  %v1013 = vunpack.c.l.b16 %v506
  %v1014 = vunpack.c.h.b16 %v506
  %v1015 = vunpack.c.l.b16 %v507
  %v1016 = vunpack.c.l.b16 %v508
  %v1017 = vunpack.c.h.b16 %v508
  %v1018 = vunpack.c.l.b16 %v509
  %v1019 = vunpack.c.h.b16 %v509
  %v1020 = vunpack.c.l.b16 %v510
  %v1021 = vunpack.c.h.b16 %v510
  %v1022 = vunpack.c.l.b16 %v511
  %v1023 = vunpack.c.l.b16 %v512
  %v1024 = vunpack.c.h.b16 %v512
  %v1025 = vunpack.c.l.b16 %v513
  %v1026 = vunpack.c.h.b16 %v513
  %v1027 = vunpack.c.l.b16 %v514
  %v1028 = vunpack.c.h.b16 %v514
  %v1029 = vunpack.c.l.b16 %v515
  %v1030 = vunpack.c.l.b16 %v516
  %v1031 = vunpack.c.h.b16 %v516
  %v1032 = vunpack.c.l.b16 %v517
  %v1033 = vunpack.c.h.b16 %v517
  %v1034 = vunpack.c.l.b16 %v518
  %v1035 = vunpack.c.h.b16 %v518
  %v1036 = vunpack.c.l.b16 %v519
  %v1037 = vunpack.c.l.b16 %v520
  %v1038 = vunpack.c.h.b16 %v520
  %v1039 = vunpack.c.l.b16 %v521
  %v1040 = vunpack.c.h.b16 %v521
  %v1041 = vunpack.c.l.b16 %v522
  %v1042 = vunpack.c.h.b16 %v522
  %v1043 = vunpack.c.l.b16 %v523
  %v1044 = vunpack.c.l.b16 %v524
  %v1045 = vunpack.c.h.b16 %v524
  %v1046 = vunpack.c.l.b16 %v525
  %v1047 = vunpack.c.h.b16 %v525
  %v1048 = vunpack.c.l.b16 %v526
  %v1049 = vunpack.c.h.b16 %v526
  %v1050 = vunpack.c.l.b16 %v527
  %v1051 = vunpack.c.l.b16 %v528
  %v1052 = vunpack.c.h.b16 %v528
  %v1053 = vunpack.c.l.b16 %v529
  %v1054 = vunpack.c.h.b16 %v529
  %v1055 = vunpack.c.l.b16 %v530
  %v1056 = vunpack.c.h.b16 %v530
  %v1057 = vunpack.c.l.b16 %v531
  %v1058 = vunpack.c.l.b16 %v532
  %v1059 = vunpack.c.h.b16 %v532
  %v1060 = vunpack.c.l.b16 %v533
  %v1061 = vunpack.c.h.b16 %v533
  %v1062 = vunpack.c.l.b16 %v534
  %v1063 = vunpack.c.h.b16 %v534
  %v1064 = vunpack.c.l.b16 %v535
  %v1065 = vunpack.c.l.b16 %v536
  %v1066 = vunpack.c.h.b16 %v536
  %v1067 = vunpack.c.l.b16 %v537
  %v1068 = vunpack.c.h.b16 %v537
  %v1069 = vunpack.c.l.b16 %v538
  %v1070 = vunpack.c.h.b16 %v538
  %v1071 = vunpack.c.l.b16 %v539
  %v1072 = vunpack.c.l.b16 %v540
  %v1073 = vunpack.c.h.b16 %v540
  %v1074 = vunpack.c.l.b16 %v541
  %v1075 = vunpack.c.h.b16 %v541
  %v1076 = vunpack.c.l.b16 %v542
  %v1077 = vunpack.c.h.b16 %v542
  %v1078 = vunpack.c.l.b16 %v543
  %v1079 = vunpack.c.l.b16 %v544
  %v1080 = vunpack.c.h.b16 %v544
  %v1081 = vunpack.c.l.b16 %v545
  %v1082 = vunpack.c.h.b16 %v545
  %v1083 = vunpack.c.l.b16 %v546
  %v1084 = vunpack.c.h.b16 %v546
  %v1085 = vunpack.c.l.b16 %v547
  %v1086 = vunpack.c.l.b16 %v548
  %v1087 = vunpack.c.h.b16 %v548
  %v1088 = vunpack.c.l.b16 %v549
  %v1089 = vunpack.c.h.b16 %v549
  %v1090 = vunpack.c.l.b16 %v550
  %v1091 = vunpack.c.h.b16 %v550
  %v1092 = vunpack.c.l.b16 %v551
  %v1093 = vunpack.c.l.b16 %v552
  %v1094 = vunpack.c.h.b16 %v552
  %v1095 = vunpack.c.l.b16 %v553
  %v1096 = vunpack.c.h.b16 %v553
  %v1097 = vunpack.c.l.b16 %v554
  %v1098 = vunpack.c.h.b16 %v554
  %v1099 = vunpack.c.l.b16 %v555
  %v1100 = vunpack.c.l.b16 %v556
  %v1101 = vunpack.c.h.b16 %v556
  %v1102 = vunpack.c.l.b16 %v557
  %v1103 = vunpack.c.h.b16 %v557
  %v1104 = vunpack.c.l.b16 %v558
  %v1105 = vunpack.c.h.b16 %v558
  %v1106 = vunpack.c.l.b16 %v559
  %v1107 = vunpack.c.l.b16 %v560
  %v1108 = vunpack.c.h.b16 %v560
  %v1109 = vunpack.c.l.b16 %v561
  %v1110 = vunpack.c.h.b16 %v561
  %v1111 = vunpack.c.l.b16 %v562
  %v1112 = vunpack.c.h.b16 %v562
  %v1113 = vunpack.c.l.b16 %v563
  %v1114 = vunpack.c.l.b16 %v564
  %v1115 = vunpack.c.h.b16 %v564
  %v1116 = vunpack.c.l.b16 %v565
  %v1117 = vunpack.c.h.b16 %v565
  %v1118 = vunpack.c.l.b16 %v566
  %v1119 = vunpack.c.h.b16 %v566
  %v1120 = vunpack.c.l.b16 %v567
  %v1121 = vunpack.c.l.b16 %v568
  %v1122 = vunpack.c.h.b16 %v568
  %v1123 = vunpack.c.l.b16 %v569
  %v1124 = vunpack.c.h.b16 %v569
  %v1125 = vunpack.c.l.b16 %v570
  %v1126 = vunpack.c.h.b16 %v570
  %v1127 = vunpack.c.l.b16 %v571
  %v1128 = vunpack.c.l.b16 %v572
  %v1129 = vunpack.c.h.b16 %v572
  %v1130 = vunpack.c.l.b16 %v573
  %v1131 = vunpack.c.h.b16 %v573
  %v1132 = vunpack.c.l.b16 %v574
  %v1133 = vunpack.c.h.b16 %v574
  %v1134 = vunpack.c.l.b16 %v575
  %v1135 = vunpack.c.l.b16 %v576
  %v1136 = vunpack.c.h.b16 %v576
  %v1137 = vunpack.c.l.b16 %v577
  %v1138 = vunpack.c.h.b16 %v577
  %v1139 = vunpack.c.l.b16 %v578
  %v1140 = vunpack.c.h.b16 %v578
  %v1141 = vunpack.c.l.b16 %v579
  %v1142 = vunpack.c.l.b16 %v580
  %v1143 = vunpack.c.h.b16 %v580
  %v1144 = vunpack.c.l.b16 %v581
  %v1145 = vunpack.c.h.b16 %v581
  %v1146 = vunpack.c.l.b16 %v582
  %v1147 = vunpack.c.h.b16 %v582
  %v1148 = vunpack.c.l.b16 %v583
  %v1149 = vpack.c.b16 %v820, %v813
  %v1150 = vpack.c.b16 %v821, %v814
  %v1151 = vpack.c.b16 %v822, %v815
  %v1152 = vpack.c.b16 %v823, %v816
  %v1153 = vpack.c.b16 %v824, %v817
  %v1154 = vpack.c.b16 %v825, %v818
  %v1155 = vpack.c.b16 %v826, %v819
  %v1156 = vpack.c.b16 %v834, %v827
  %v1157 = vpack.c.b16 %v835, %v828
  %v1158 = vpack.c.b16 %v836, %v829
  %v1159 = vpack.c.b16 %v837, %v830
  %v1160 = vpack.c.b16 %v838, %v831
  %v1161 = vpack.c.b16 %v839, %v832
  %v1162 = vpack.c.b16 %v840, %v833
  %v1163 = vpack.c.b16 %v848, %v841
  %v1164 = vpack.c.b16 %v849, %v842
  %v1165 = vpack.c.b16 %v850, %v843
  %v1166 = vpack.c.b16 %v851, %v844
  %v1167 = vpack.c.b16 %v852, %v845
  %v1168 = vpack.c.b16 %v853, %v846
  %v1169 = vpack.c.b16 %v854, %v847
  %v1170 = vpack.c.b16 %v862, %v855
  %v1171 = vpack.c.b16 %v863, %v856
  %v1172 = vpack.c.b16 %v864, %v857
  %v1173 = vpack.c.b16 %v865, %v858
  %v1174 = vpack.c.b16 %v866, %v859
  %v1175 = vpack.c.b16 %v867, %v860
  %v1176 = vpack.c.b16 %v868, %v861
  %v1177 = vpack.c.b16 %v876, %v869
  %v1178 = vpack.c.b16 %v877, %v870
  %v1179 = vpack.c.b16 %v878, %v871
  %v1180 = vpack.c.b16 %v879, %v872
  %v1181 = vpack.c.b16 %v880, %v873
  %v1182 = vpack.c.b16 %v881, %v874
  %v1183 = vpack.c.b16 %v882, %v875
  %v1184 = vpack.c.b16 %v890, %v883
  %v1185 = vpack.c.b16 %v891, %v884
  %v1186 = vpack.c.b16 %v892, %v885
  %v1187 = vpack.c.b16 %v893, %v886
  %v1188 = vpack.c.b16 %v894, %v887
  %v1189 = vpack.c.b16 %v895, %v888
  %v1190 = vpack.c.b16 %v896, %v889
  %v1191 = vpack.c.b16 %v904, %v897
  %v1192 = vpack.c.b16 %v905, %v898
  %v1193 = vpack.c.b16 %v906, %v899
  %v1194 = vpack.c.b16 %v907, %v900
  %v1195 = vpack.c.b16 %v908, %v901
  %v1196 = vpack.c.b16 %v909, %v902
  %v1197 = vpack.c.b16 %v910, %v903
  %v1198 = vpack.c.b16 %v918, %v911
  %v1199 = vpack.c.b16 %v919, %v912
  %v1200 = vpack.c.b16 %v920, %v913
  %v1201 = vpack.c.b16 %v921, %v914
  %v1202 = vpack.c.b16 %v922, %v915
  %v1203 = vpack.c.b16 %v923, %v916
  %v1204 = vpack.c.b16 %v924, %v917
  %v1205 = vpack.c.b16 %v932, %v925
  %v1206 = vpack.c.b16 %v933, %v926
  %v1207 = vpack.c.b16 %v934, %v927
  %v1208 = vpack.c.b16 %v935, %v928
  %v1209 = vpack.c.b16 %v936, %v929
  %v1210 = vpack.c.b16 %v937, %v930
  %v1211 = vpack.c.b16 %v938, %v931
  %v1212 = vpack.c.b16 %v946, %v939
  %v1213 = vpack.c.b16 %v947, %v940
  %v1214 = vpack.c.b16 %v948, %v941
  %v1215 = vpack.c.b16 %v949, %v942
  %v1216 = vpack.c.b16 %v950, %v943
  %v1217 = vpack.c.b16 %v951, %v944
  %v1218 = vpack.c.b16 %v952, %v945
  %v1219 = vpack.c.b16 %v960, %v953
  %v1220 = vpack.c.b16 %v961, %v954
  %v1221 = vpack.c.b16 %v962, %v955
  %v1222 = vpack.c.b16 %v963, %v956
  %v1223 = vpack.c.b16 %v964, %v957
  %v1224 = vpack.c.b16 %v965, %v958
  %v1225 = vpack.c.b16 %v966, %v959
  %v1226 = vpack.c.b16 %v974, %v967
  %v1227 = vpack.c.b16 %v975, %v968
  %v1228 = vpack.c.b16 %v976, %v969
  %v1229 = vpack.c.b16 %v977, %v970
  %v1230 = vpack.c.b16 %v978, %v971
  %v1231 = vpack.c.b16 %v979, %v972
  %v1232 = vpack.c.b16 %v980, %v973
  %v1233 = vpack.c.b16 %v988, %v981
  %v1234 = vpack.c.b16 %v989, %v982
  %v1235 = vpack.c.b16 %v990, %v983
  %v1236 = vpack.c.b16 %v991, %v984
  %v1237 = vpack.c.b16 %v992, %v985
  %v1238 = vpack.c.b16 %v993, %v986
  %v1239 = vpack.c.b16 %v994, %v987
  %v1240 = vpack.c.b16 %v1002, %v995
  %v1241 = vpack.c.b16 %v1003, %v996
  %v1242 = vpack.c.b16 %v1004, %v997
  %v1243 = vpack.c.b16 %v1005, %v998
  %v1244 = vpack.c.b16 %v1006, %v999
  %v1245 = vpack.c.b16 %v1007, %v1000
  %v1246 = vpack.c.b16 %v1008, %v1001
  %v1247 = vpack.c.b16 %v1016, %v1009
  %v1248 = vpack.c.b16 %v1017, %v1010
  %v1249 = vpack.c.b16 %v1018, %v1011
  %v1250 = vpack.c.b16 %v1019, %v1012
  %v1251 = vpack.c.b16 %v1020, %v1013
  %v1252 = vpack.c.b16 %v1021, %v1014
  %v1253 = vpack.c.b16 %v1022, %v1015
  %v1254 = vpack.c.b16 %v1030, %v1023
  %v1255 = vpack.c.b16 %v1031, %v1024
  %v1256 = vpack.c.b16 %v1032, %v1025
  %v1257 = vpack.c.b16 %v1033, %v1026
  %v1258 = vpack.c.b16 %v1034, %v1027
  %v1259 = vpack.c.b16 %v1035, %v1028
  %v1260 = vpack.c.b16 %v1036, %v1029
  %v1261 = vpack.c.b16 %v1044, %v1037
  %v1262 = vpack.c.b16 %v1045, %v1038
  %v1263 = vpack.c.b16 %v1046, %v1039
  %v1264 = vpack.c.b16 %v1047, %v1040
  %v1265 = vpack.c.b16 %v1048, %v1041
  %v1266 = vpack.c.b16 %v1049, %v1042
  %v1267 = vpack.c.b16 %v1050, %v1043
  %v1268 = vpack.c.b16 %v1058, %v1051
  %v1269 = vpack.c.b16 %v1059, %v1052
  %v1270 = vpack.c.b16 %v1060, %v1053
  %v1271 = vpack.c.b16 %v1061, %v1054
  %v1272 = vpack.c.b16 %v1062, %v1055
  %v1273 = vpack.c.b16 %v1063, %v1056
  %v1274 = vpack.c.b16 %v1064, %v1057
  %v1275 = vpack.c.b16 %v1072, %v1065
  %v1276 = vpack.c.b16 %v1073, %v1066
  %v1277 = vpack.c.b16 %v1074, %v1067
  %v1278 = vpack.c.b16 %v1075, %v1068
  %v1279 = vpack.c.b16 %v1076, %v1069
  %v1280 = vpack.c.b16 %v1077, %v1070
  %v1281 = vpack.c.b16 %v1078, %v1071
  %v1282 = vpack.c.b16 %v1086, %v1079
  %v1283 = vpack.c.b16 %v1087, %v1080
  %v1284 = vpack.c.b16 %v1088, %v1081
  %v1285 = vpack.c.b16 %v1089, %v1082
  %v1286 = vpack.c.b16 %v1090, %v1083
  %v1287 = vpack.c.b16 %v1091, %v1084
  %v1288 = vpack.c.b16 %v1092, %v1085
  %v1289 = vpack.c.b16 %v1100, %v1093
  %v1290 = vpack.c.b16 %v1101, %v1094
  %v1291 = vpack.c.b16 %v1102, %v1095
  %v1292 = vpack.c.b16 %v1103, %v1096
  %v1293 = vpack.c.b16 %v1104, %v1097
  %v1294 = vpack.c.b16 %v1105, %v1098
  %v1295 = vpack.c.b16 %v1106, %v1099
  %v1296 = vpack.c.b16 %v1114, %v1107
  %v1297 = vpack.c.b16 %v1115, %v1108
  %v1298 = vpack.c.b16 %v1116, %v1109
  %v1299 = vpack.c.b16 %v1117, %v1110
  %v1300 = vpack.c.b16 %v1118, %v1111
  %v1301 = vpack.c.b16 %v1119, %v1112
  %v1302 = vpack.c.b16 %v1120, %v1113
  %v1303 = vpack.c.b16 %v1128, %v1121
  %v1304 = vpack.c.b16 %v1129, %v1122
  %v1305 = vpack.c.b16 %v1130, %v1123
  %v1306 = vpack.c.b16 %v1131, %v1124
  %v1307 = vpack.c.b16 %v1132, %v1125
  %v1308 = vpack.c.b16 %v1133, %v1126
  %v1309 = vpack.c.b16 %v1134, %v1127
  %v1310 = vpack.c.b16 %v1142, %v1135
  %v1311 = vpack.c.b16 %v1143, %v1136
  %v1312 = vpack.c.b16 %v1144, %v1137
  %v1313 = vpack.c.b16 %v1145, %v1138
  %v1314 = vpack.c.b16 %v1146, %v1139
  %v1315 = vpack.c.b16 %v1147, %v1140
  %v1316 = vpack.c.b16 %v1148, %v1141
  %1485 = vmatprep.subr.bf16.mxu0 %v1150
  %1486 = vmatpush1.bf16.msra.mxu0 %v1149
  %1487 = vmatprep.subr.bf16.mxu0 %v1157
  %1488 = vmatpush1.bf16.msra.mxu0 %v1156
  %1489 = vmatprep.subr.bf16.mxu0 %v1164
  %1490 = vmatpush1.bf16.msra.mxu0 %v1163
  %1491 = vmatprep.subr.bf16.mxu0 %v1171
  %1492 = vmatpush1.bf16.msra.mxu0 %v1170
  %1493 = vmatprep.subr.bf16.mxu0 %v1178
  %1494 = vmatpush1.bf16.msra.mxu0 %v1177
  %1495 = vmatprep.subr.bf16.mxu0 %v1185
  %1496 = vmatpush1.bf16.msra.mxu0 %v1184
  %1497 = vmatprep.subr.bf16.mxu0 %v1192
  %1498 = vmatpush1.bf16.msra.mxu0 %v1191
  %1499 = vmatprep.subr.bf16.mxu0 %v1199
  %1500 = vmatpush1.bf16.msra.mxu0 %v1198
  %1501 = vmatprep.subr.bf16.mxu0 %v1206
  %1502 = vmatpush1.bf16.msra.mxu0 %v1205
  %1503 = vmatprep.subr.bf16.mxu0 %v1213
  %1504 = vmatpush1.bf16.msra.mxu0 %v1212
  %1505 = vmatprep.subr.bf16.mxu0 %v1220
  %1506 = vmatpush1.bf16.msra.mxu0 %v1219
  %1507 = vmatprep.subr.bf16.mxu0 %v1227
  %1508 = vmatpush1.bf16.msra.mxu0 %v1226
  %1509 = vmatprep.subr.bf16.mxu0 %v1234
  %1510 = vmatpush1.bf16.msra.mxu0 %v1233
  %1511 = vmatprep.subr.bf16.mxu0 %v1241
  %1512 = vmatpush1.bf16.msra.mxu0 %v1240
  %1513 = vmatprep.subr.bf16.mxu0 %v1248
  %1514 = vmatpush1.bf16.msra.mxu0 %v1247
  %1515 = vmatprep.subr.bf16.mxu0 %v1255
  %1516 = vmatpush1.bf16.msra.mxu0 %v1254
  %1517 = vmatprep.mubr.bf16.mxu0 %v390
  %1518 = vmatmul.mubr.bf16.gmra.mrb[0].mxu0 %v389
  %v1519 = vpop.f32.mrb[0].mxu0
  %v1520 = vadd.f32 %v589, %v1519
  %v1521 = vpop.f32.mrb[0].mxu0
  %v1522 = vadd.f32 %v593, %v1521
  %v1523 = vpop.f32.mrb[0].mxu0
  %v1524 = vpop.f32.mrb[0].mxu0
  %1525 = vdwg.mxu0
  %1526 = vmatprep.subr.bf16.mxu0 %v1262
  %1527 = vmatpush1.bf16.msra.mxu0 %v1261
  %1528 = vmatprep.subr.bf16.mxu0 %v1269
  %1529 = vmatpush1.bf16.msra.mxu0 %v1268
  %1530 = vmatprep.subr.bf16.mxu0 %v1276
  %1531 = vmatpush1.bf16.msra.mxu0 %v1275
  %1532 = vmatprep.subr.bf16.mxu0 %v1283
  %1533 = vmatpush1.bf16.msra.mxu0 %v1282
  %1534 = vmatprep.subr.bf16.mxu0 %v1290
  %1535 = vmatpush1.bf16.msra.mxu0 %v1289
  %1536 = vmatprep.subr.bf16.mxu0 %v1297
  %1537 = vmatpush1.bf16.msra.mxu0 %v1296
  %1538 = vmatprep.subr.bf16.mxu0 %v1304
  %1539 = vmatpush1.bf16.msra.mxu0 %v1303
  %1540 = vmatprep.subr.bf16.mxu0 %v1311
  %1541 = vmatpush1.bf16.msra.mxu0 %v1310
  %1542 = vmatprep.subr.bf16.mxu0 0
  %1543 = vmatpush1.bf16.msra.mxu0 0
  %1544 = vmatprep.subr.bf16.mxu0 0
  %1545 = vmatpush1.bf16.msra.mxu0 0
  %1546 = vmatprep.subr.bf16.mxu0 0
  %1547 = vmatpush1.bf16.msra.mxu0 0
  %1548 = vmatprep.subr.bf16.mxu0 0
  %1549 = vmatpush1.bf16.msra.mxu0 0
  %1550 = vmatprep.subr.bf16.mxu0 0
  %1551 = vmatpush1.bf16.msra.mxu0 0
  %1552 = vmatprep.subr.bf16.mxu0 0
  %1553 = vmatpush1.bf16.msra.mxu0 0
  %1554 = vmatprep.subr.bf16.mxu0 0
  %1555 = vmatpush1.bf16.msra.mxu0 0
  %1556 = vmatprep.subr.bf16.mxu0 0
  %1557 = vmatpush1.bf16.msra.mxu0 0
  %1558 = vmatprep.mubr.bf16.mxu0 0
  %1559 = vmatmul.mubr.bf16.gmra.mrb[0].mxu0 %v391
  %v1560 = vpop.f32.mrb[0].mxu0
  %v1561 = vadd.f32 %v1520, %v1560
  %v1562 = vpop.f32.mrb[0].mxu0
  %v1563 = vadd.f32 %v1522, %v1562
  %v1564 = vpop.f32.mrb[0].mxu0
  %v1565 = vpop.f32.mrb[0].mxu0
  %1566 = vdwg.mxu0
  %1567 = vmatprep.subr.bf16.mxu0 %v1152
  %1568 = vmatpush1.bf16.msra.mxu0 %v1151
  %1569 = vmatprep.subr.bf16.mxu0 %v1159
  %1570 = vmatpush1.bf16.msra.mxu0 %v1158
  %1571 = vmatprep.subr.bf16.mxu0 %v1166
  %1572 = vmatpush1.bf16.msra.mxu0 %v1165
  %1573 = vmatprep.subr.bf16.mxu0 %v1173
  %1574 = vmatpush1.bf16.msra.mxu0 %v1172
  %1575 = vmatprep.subr.bf16.mxu0 %v1180
  %1576 = vmatpush1.bf16.msra.mxu0 %v1179
  %1577 = vmatprep.subr.bf16.mxu0 %v1187
  %1578 = vmatpush1.bf16.msra.mxu0 %v1186
  %1579 = vmatprep.subr.bf16.mxu0 %v1194
  %1580 = vmatpush1.bf16.msra.mxu0 %v1193
  %1581 = vmatprep.subr.bf16.mxu0 %v1201
  %1582 = vmatpush1.bf16.msra.mxu0 %v1200
  %1583 = vmatprep.subr.bf16.mxu0 %v1208
  %1584 = vmatpush1.bf16.msra.mxu0 %v1207
  %1585 = vmatprep.subr.bf16.mxu0 %v1215
  %1586 = vmatpush1.bf16.msra.mxu0 %v1214
  %1587 = vmatprep.subr.bf16.mxu0 %v1222
  %1588 = vmatpush1.bf16.msra.mxu0 %v1221
  %1589 = vmatprep.subr.bf16.mxu0 %v1229
  %1590 = vmatpush1.bf16.msra.mxu0 %v1228
  %1591 = vmatprep.subr.bf16.mxu0 %v1236
  %1592 = vmatpush1.bf16.msra.mxu0 %v1235
  %1593 = vmatprep.subr.bf16.mxu0 %v1243
  %1594 = vmatpush1.bf16.msra.mxu0 %v1242
  %1595 = vmatprep.subr.bf16.mxu0 %v1250
  %1596 = vmatpush1.bf16.msra.mxu0 %v1249
  %1597 = vmatprep.subr.bf16.mxu0 %v1257
  %1598 = vmatpush1.bf16.msra.mxu0 %v1256
  %1599 = vmatprep.mubr.bf16.mxu0 %v390
  %1600 = vmatmul.mubr.bf16.gmra.mrb[0].mxu0 %v389
  %v1601 = vpop.f32.mrb[0].mxu0
  %v1602 = vadd.f32 %v597, %v1601
  %v1603 = vpop.f32.mrb[0].mxu0
  %v1604 = vadd.f32 %v601, %v1603
  %v1605 = vpop.f32.mrb[0].mxu0
  %v1606 = vpop.f32.mrb[0].mxu0
  %1607 = vdwg.mxu0
  %1608 = vmatprep.subr.bf16.mxu0 %v1264
  %1609 = vmatpush1.bf16.msra.mxu0 %v1263
  %1610 = vmatprep.subr.bf16.mxu0 %v1271
  %1611 = vmatpush1.bf16.msra.mxu0 %v1270
  %1612 = vmatprep.subr.bf16.mxu0 %v1278
  %1613 = vmatpush1.bf16.msra.mxu0 %v1277
  %1614 = vmatprep.subr.bf16.mxu0 %v1285
  %1615 = vmatpush1.bf16.msra.mxu0 %v1284
  %1616 = vmatprep.subr.bf16.mxu0 %v1292
  %1617 = vmatpush1.bf16.msra.mxu0 %v1291
  %1618 = vmatprep.subr.bf16.mxu0 %v1299
  %1619 = vmatpush1.bf16.msra.mxu0 %v1298
  %1620 = vmatprep.subr.bf16.mxu0 %v1306
  %1621 = vmatpush1.bf16.msra.mxu0 %v1305
  %1622 = vmatprep.subr.bf16.mxu0 %v1313
  %1623 = vmatpush1.bf16.msra.mxu0 %v1312
  %1624 = vmatprep.subr.bf16.mxu0 0
  %1625 = vmatpush1.bf16.msra.mxu0 0
  %1626 = vmatprep.subr.bf16.mxu0 0
  %1627 = vmatpush1.bf16.msra.mxu0 0
  %1628 = vmatprep.subr.bf16.mxu0 0
  %1629 = vmatpush1.bf16.msra.mxu0 0
  %1630 = vmatprep.subr.bf16.mxu0 0
  %1631 = vmatpush1.bf16.msra.mxu0 0
  %1632 = vmatprep.subr.bf16.mxu0 0
  %1633 = vmatpush1.bf16.msra.mxu0 0
  %1634 = vmatprep.subr.bf16.mxu0 0
  %1635 = vmatpush1.bf16.msra.mxu0 0
  %1636 = vmatprep.subr.bf16.mxu0 0
  %1637 = vmatpush1.bf16.msra.mxu0 0
  %1638 = vmatprep.subr.bf16.mxu0 0
  %1639 = vmatpush1.bf16.msra.mxu0 0
  %1640 = vmatprep.mubr.bf16.mxu0 0
  %1641 = vmatmul.mubr.bf16.gmra.mrb[0].mxu0 %v391
  %v1642 = vpop.f32.mrb[0].mxu0
  %v1643 = vadd.f32 %v1602, %v1642
  %v1644 = vpop.f32.mrb[0].mxu0
  %v1645 = vadd.f32 %v1604, %v1644
  %v1646 = vpop.f32.mrb[0].mxu0
  %v1647 = vpop.f32.mrb[0].mxu0
  %1648 = vdwg.mxu0
  %1649 = vmatprep.subr.bf16.mxu0 %v1154
  %1650 = vmatpush1.bf16.msra.mxu0 %v1153
  %1651 = vmatprep.subr.bf16.mxu0 %v1161
  %1652 = vmatpush1.bf16.msra.mxu0 %v1160
  %1653 = vmatprep.subr.bf16.mxu0 %v1168
  %1654 = vmatpush1.bf16.msra.mxu0 %v1167
  %1655 = vmatprep.subr.bf16.mxu0 %v1175
  %1656 = vmatpush1.bf16.msra.mxu0 %v1174
  %1657 = vmatprep.subr.bf16.mxu0 %v1182
  %1658 = vmatpush1.bf16.msra.mxu0 %v1181
  %1659 = vmatprep.subr.bf16.mxu0 %v1189
  %1660 = vmatpush1.bf16.msra.mxu0 %v1188
  %1661 = vmatprep.subr.bf16.mxu0 %v1196
  %1662 = vmatpush1.bf16.msra.mxu0 %v1195
  %1663 = vmatprep.subr.bf16.mxu0 %v1203
  %1664 = vmatpush1.bf16.msra.mxu0 %v1202
  %1665 = vmatprep.subr.bf16.mxu0 %v1210
  %1666 = vmatpush1.bf16.msra.mxu0 %v1209
  %1667 = vmatprep.subr.bf16.mxu0 %v1217
  %1668 = vmatpush1.bf16.msra.mxu0 %v1216
  %1669 = vmatprep.subr.bf16.mxu0 %v1224
  %1670 = vmatpush1.bf16.msra.mxu0 %v1223
  %1671 = vmatprep.subr.bf16.mxu0 %v1231
  %1672 = vmatpush1.bf16.msra.mxu0 %v1230
  %1673 = vmatprep.subr.bf16.mxu0 %v1238
  %1674 = vmatpush1.bf16.msra.mxu0 %v1237
  %1675 = vmatprep.subr.bf16.mxu0 %v1245
  %1676 = vmatpush1.bf16.msra.mxu0 %v1244
  %1677 = vmatprep.subr.bf16.mxu0 %v1252
  %1678 = vmatpush1.bf16.msra.mxu0 %v1251
  %1679 = vmatprep.subr.bf16.mxu0 %v1259
  %1680 = vmatpush1.bf16.msra.mxu0 %v1258
  %1681 = vmatprep.mubr.bf16.mxu0 %v390
  %1682 = vmatmul.mubr.bf16.gmra.mrb[0].mxu0 %v389
  %v1683 = vpop.f32.mrb[0].mxu0
  %v1684 = vadd.f32 %v605, %v1683
  %v1685 = vpop.f32.mrb[0].mxu0
  %v1686 = vadd.f32 %v609, %v1685
  %v1687 = vpop.f32.mrb[0].mxu0
  %v1688 = vpop.f32.mrb[0].mxu0
  %1689 = vdwg.mxu0
  %1690 = vmatprep.subr.bf16.mxu0 %v1266
  %1691 = vmatpush1.bf16.msra.mxu0 %v1265
  %1692 = vmatprep.subr.bf16.mxu0 %v1273
  %1693 = vmatpush1.bf16.msra.mxu0 %v1272
  %1694 = vmatprep.subr.bf16.mxu0 %v1280
  %1695 = vmatpush1.bf16.msra.mxu0 %v1279
  %1696 = vmatprep.subr.bf16.mxu0 %v1287
  %1697 = vmatpush1.bf16.msra.mxu0 %v1286
  %1698 = vmatprep.subr.bf16.mxu0 %v1294
  %1699 = vmatpush1.bf16.msra.mxu0 %v1293
  %1700 = vmatprep.subr.bf16.mxu0 %v1301
  %1701 = vmatpush1.bf16.msra.mxu0 %v1300
  %1702 = vmatprep.subr.bf16.mxu0 %v1308
  %1703 = vmatpush1.bf16.msra.mxu0 %v1307
  %1704 = vmatprep.subr.bf16.mxu0 %v1315
  %1705 = vmatpush1.bf16.msra.mxu0 %v1314
  %1706 = vmatprep.subr.bf16.mxu0 0
  %1707 = vmatpush1.bf16.msra.mxu0 0
  %1708 = vmatprep.subr.bf16.mxu0 0
  %1709 = vmatpush1.bf16.msra.mxu0 0
  %1710 = vmatprep.subr.bf16.mxu0 0
  %1711 = vmatpush1.bf16.msra.mxu0 0
  %1712 = vmatprep.subr.bf16.mxu0 0
  %1713 = vmatpush1.bf16.msra.mxu0 0
  %1714 = vmatprep.subr.bf16.mxu0 0
  %1715 = vmatpush1.bf16.msra.mxu0 0
  %1716 = vmatprep.subr.bf16.mxu0 0
  %1717 = vmatpush1.bf16.msra.mxu0 0
  %1718 = vmatprep.subr.bf16.mxu0 0
  %1719 = vmatpush1.bf16.msra.mxu0 0
  %1720 = vmatprep.subr.bf16.mxu0 0
  %1721 = vmatpush1.bf16.msra.mxu0 0
  %1722 = vmatprep.mubr.bf16.mxu0 0
  %1723 = vmatmul.mubr.bf16.gmra.mrb[0].mxu0 %v391
  %v1724 = vpop.f32.mrb[0].mxu0
  %v1725 = vadd.f32 %v1684, %v1724
  %v1726 = vpop.f32.mrb[0].mxu0
  %v1727 = vadd.f32 %v1686, %v1726
  %v1728 = vpop.f32.mrb[0].mxu0
  %v1729 = vpop.f32.mrb[0].mxu0
  %1730 = vdwg.mxu0
  %1731 = vmatprep.subr.bf16.mxu0 0
  %1732 = vmatpush1.bf16.msra.mxu0 %v1155
  %1733 = vmatprep.subr.bf16.mxu0 0
  %1734 = vmatpush1.bf16.msra.mxu0 %v1162
  %1735 = vmatprep.subr.bf16.mxu0 0
  %1736 = vmatpush1.bf16.msra.mxu0 %v1169
  %1737 = vmatprep.subr.bf16.mxu0 0
  %1738 = vmatpush1.bf16.msra.mxu0 %v1176
  %1739 = vmatprep.subr.bf16.mxu0 0
  %1740 = vmatpush1.bf16.msra.mxu0 %v1183
  %1741 = vmatprep.subr.bf16.mxu0 0
  %1742 = vmatpush1.bf16.msra.mxu0 %v1190
  %1743 = vmatprep.subr.bf16.mxu0 0
  %1744 = vmatpush1.bf16.msra.mxu0 %v1197
  %1745 = vmatprep.subr.bf16.mxu0 0
  %1746 = vmatpush1.bf16.msra.mxu0 %v1204
  %1747 = vmatprep.subr.bf16.mxu0 0
  %1748 = vmatpush1.bf16.msra.mxu0 %v1211
  %1749 = vmatprep.subr.bf16.mxu0 0
  %1750 = vmatpush1.bf16.msra.mxu0 %v1218
  %1751 = vmatprep.subr.bf16.mxu0 0
  %1752 = vmatpush1.bf16.msra.mxu0 %v1225
  %1753 = vmatprep.subr.bf16.mxu0 0
  %1754 = vmatpush1.bf16.msra.mxu0 %v1232
  %1755 = vmatprep.subr.bf16.mxu0 0
  %1756 = vmatpush1.bf16.msra.mxu0 %v1239
  %1757 = vmatprep.subr.bf16.mxu0 0
  %1758 = vmatpush1.bf16.msra.mxu0 %v1246
  %1759 = vmatprep.subr.bf16.mxu0 0
  %1760 = vmatpush1.bf16.msra.mxu0 %v1253
  %1761 = vmatprep.subr.bf16.mxu0 0
  %1762 = vmatpush1.bf16.msra.mxu0 %v1260
  %1763 = vmatprep.mubr.bf16.mxu0 %v390
  %1764 = vmatmul.mubr.bf16.gmra.mrb[0].mxu0 %v389
  %v1765 = vpop.f32.mrb[0].mxu0
  %v1766 = vadd.f32 %v613, %v1765
  %v1767 = vpop.f32.mrb[0].mxu0
  %v1768 = vpop.f32.mrb[0].mxu0
  %v1769 = vpop.f32.mrb[0].mxu0
  %1770 = vdwg.mxu0
  %1771 = vmatprep.subr.bf16.mxu0 0
  %1772 = vmatpush1.bf16.msra.mxu0 %v1267
  %1773 = vmatprep.subr.bf16.mxu0 0
  %1774 = vmatpush1.bf16.msra.mxu0 %v1274
  %1775 = vmatprep.subr.bf16.mxu0 0
  %1776 = vmatpush1.bf16.msra.mxu0 %v1281
  %1777 = vmatprep.subr.bf16.mxu0 0
  %1778 = vmatpush1.bf16.msra.mxu0 %v1288
  %1779 = vmatprep.subr.bf16.mxu0 0
  %1780 = vmatpush1.bf16.msra.mxu0 %v1295
  %1781 = vmatprep.subr.bf16.mxu0 0
  %1782 = vmatpush1.bf16.msra.mxu0 %v1302
  %1783 = vmatprep.subr.bf16.mxu0 0
  %1784 = vmatpush1.bf16.msra.mxu0 %v1309
  %1785 = vmatprep.subr.bf16.mxu0 0
  %1786 = vmatpush1.bf16.msra.mxu0 %v1316
  %1787 = vmatprep.subr.bf16.mxu0 0
  %1788 = vmatpush1.bf16.msra.mxu0 0
  %1789 = vmatprep.subr.bf16.mxu0 0
  %1790 = vmatpush1.bf16.msra.mxu0 0
  %1791 = vmatprep.subr.bf16.mxu0 0
  %1792 = vmatpush1.bf16.msra.mxu0 0
  %1793 = vmatprep.subr.bf16.mxu0 0
  %1794 = vmatpush1.bf16.msra.mxu0 0
  %1795 = vmatprep.subr.bf16.mxu0 0
  %1796 = vmatpush1.bf16.msra.mxu0 0
  %1797 = vmatprep.subr.bf16.mxu0 0
  %1798 = vmatpush1.bf16.msra.mxu0 0
  %1799 = vmatprep.subr.bf16.mxu0 0
  %1800 = vmatpush1.bf16.msra.mxu0 0
  %1801 = vmatprep.subr.bf16.mxu0 0
  %1802 = vmatpush1.bf16.msra.mxu0 0
  %1803 = vmatprep.mubr.bf16.mxu0 0
  %1804 = vmatmul.mubr.bf16.gmra.mrb[0].mxu0 %v391
  %v1805 = vpop.f32.mrb[0].mxu0
  %v1806 = vadd.f32 %v1766, %v1805
  %v1807 = vpop.f32.mrb[0].mxu0
  %v1808 = vpop.f32.mrb[0].mxu0
  %v1809 = vpop.f32.mrb[0].mxu0
  %1810 = vdwg.mxu0
  %v1811 = vmax.f32 %v1561, 0.0
  %v1812 = vmax.f32 %v1563, 0.0
  %v1813 = vmax.f32 %v1643, 0.0
  %v1814 = vmax.f32 %v1645, 0.0
  %v1815 = vmax.f32 %v1725, 0.0
  %v1816 = vmax.f32 %v1727, 0.0
  %v1817 = vmax.f32 %v1806, 0.0
  %v1818 = vpack.c.bf16 %v1811, %v1811
  %v1819 = vpack.c.bf16 %v1812, %v1812
  %v1820 = vpack.c.bf16 %v1813, %v1813
  %v1821 = vpack.c.bf16 %v1814, %v1814
  %v1822 = vpack.c.bf16 %v1815, %v1815
  %v1823 = vpack.c.bf16 %v1816, %v1816
  %v1824 = vpack.c.bf16 %v1817, %v1817
  %v1825 = vld [vmem:[%s7] sm:$0xff]
  %v1826 = vld [vmem:[%s7 + $0x8] sm:$0xff]
  %v1827 = vld [vmem:[%s7 + $0x10] sm:$0xff]
  %v1828 = vld [vmem:[%s7 + $0x18] sm:$0xff]
  %v1829 = vld [vmem:[%s7 + $0x20] sm:$0xff]
  %v1830 = vld [vmem:[%s7 + $0x28] sm:$0xff]
  %v1831 = vld [vmem:[%s7 + $0x30] sm:$0xf]
  %v1832 = vld [vmem:[%s7 + $0x34] sm:$0xff]
  %v1833 = vld [vmem:[%s7 + $0x3c] sm:$0xff]
  %v1834 = vld [vmem:[%s7 + $0x44] sm:$0xff]
  %v1835 = vld [vmem:[%s7 + $0x4c] sm:$0xff]
  %v1836 = vld [vmem:[%s7 + $0x54] sm:$0xff]
  %v1837 = vld [vmem:[%s7 + $0x5c] sm:$0xff]
  %v1838 = vld [vmem:[%s7 + $0x64] sm:$0xf]
  %v1839 = vld [vmem:[%s7 + $0x68] sm:$0xff]
  %v1840 = vld [vmem:[%s7 + $0x70] sm:$0xff]
  %v1841 = vld [vmem:[%s7 + $0x78] sm:$0xff]
  %v1842 = vld [vmem:[%s7 + $0x80] sm:$0xff]
  %v1843 = vld [vmem:[%s7 + $0x88] sm:$0xff]
  %v1844 = vld [vmem:[%s7 + $0x90] sm:$0xff]
  %v1845 = vld [vmem:[%s7 + $0x98] sm:$0xf]
  %v1846 = vld [vmem:[%s7 + $0x9c] sm:$0xff]
  %v1847 = vld [vmem:[%s7 + $0xa4] sm:$0xff]
  %v1848 = vld [vmem:[%s7 + $0xac] sm:$0xff]
  %v1849 = vld [vmem:[%s7 + $0xb4] sm:$0xff]
  %v1850 = vld [vmem:[%s7 + $0xbc] sm:$0xff]
  %v1851 = vld [vmem:[%s7 + $0xc4] sm:$0xff]
  %v1852 = vld [vmem:[%s7 + $0xcc] sm:$0xf]
  %v1853 = vld [vmem:[%s7 + $0xd0] sm:$0xff]
  %v1854 = vld [vmem:[%s7 + $0xd8] sm:$0xff]
  %v1855 = vld [vmem:[%s7 + $0xe0] sm:$0xff]
  %v1856 = vld [vmem:[%s7 + $0xe8] sm:$0xff]
  %v1857 = vld [vmem:[%s7 + $0xf0] sm:$0xff]
  %v1858 = vld [vmem:[%s7 + $0xf8] sm:$0xff]
  %v1859 = vld [vmem:[%s7 + $0x100] sm:$0xf]
  %v1860 = vld [vmem:[%s7 + $0x104] sm:$0xff]
  %v1861 = vld [vmem:[%s7 + $0x10c] sm:$0xff]
  %v1862 = vld [vmem:[%s7 + $0x114] sm:$0xff]
  %v1863 = vld [vmem:[%s7 + $0x11c] sm:$0xff]
  %v1864 = vld [vmem:[%s7 + $0x124] sm:$0xff]
  %v1865 = vld [vmem:[%s7 + $0x12c] sm:$0xff]
  %v1866 = vld [vmem:[%s7 + $0x134] sm:$0xf]
  %v1867 = vld [vmem:[%s7 + $0x138] sm:$0xff]
  %v1868 = vld [vmem:[%s7 + $0x140] sm:$0xff]
  %v1869 = vld [vmem:[%s7 + $0x148] sm:$0xff]
  %v1870 = vld [vmem:[%s7 + $0x150] sm:$0xff]
  %v1871 = vld [vmem:[%s7 + $0x158] sm:$0xff]
  %v1872 = vld [vmem:[%s7 + $0x160] sm:$0xff]
  %v1873 = vld [vmem:[%s7 + $0x168] sm:$0xf]
  %v1874 = vld [vmem:[%s7 + $0x16c] sm:$0xff]
  %v1875 = vld [vmem:[%s7 + $0x174] sm:$0xff]
  %v1876 = vld [vmem:[%s7 + $0x17c] sm:$0xff]
  %v1877 = vld [vmem:[%s7 + $0x184] sm:$0xff]
  %v1878 = vld [vmem:[%s7 + $0x18c] sm:$0xff]
  %v1879 = vld [vmem:[%s7 + $0x194] sm:$0xff]
  %v1880 = vld [vmem:[%s7 + $0x19c] sm:$0xf]
  %v1881 = vld [vmem:[%s7 + $0x1a0] sm:$0xff]
  %v1882 = vld [vmem:[%s7 + $0x1a8] sm:$0xff]
  %v1883 = vld [vmem:[%s7 + $0x1b0] sm:$0xff]
  %v1884 = vld [vmem:[%s7 + $0x1b8] sm:$0xff]
  %v1885 = vld [vmem:[%s7 + $0x1c0] sm:$0xff]
  %v1886 = vld [vmem:[%s7 + $0x1c8] sm:$0xff]
  %v1887 = vld [vmem:[%s7 + $0x1d0] sm:$0xf]
  %v1888 = vld [vmem:[%s7 + $0x1d4] sm:$0xff]
  %v1889 = vld [vmem:[%s7 + $0x1dc] sm:$0xff]
  %v1890 = vld [vmem:[%s7 + $0x1e4] sm:$0xff]
  %v1891 = vld [vmem:[%s7 + $0x1ec] sm:$0xff]
  %v1892 = vld [vmem:[%s7 + $0x1f4] sm:$0xff]
  %v1893 = vld [vmem:[%s7 + $0x1fc] sm:$0xff]
  %v1894 = vld [vmem:[%s7 + $0x204] sm:$0xf]
  %v1895 = vld [vmem:[%s7 + $0x208] sm:$0xff]
  %v1896 = vld [vmem:[%s7 + $0x210] sm:$0xff]
  %v1897 = vld [vmem:[%s7 + $0x218] sm:$0xff]
  %v1898 = vld [vmem:[%s7 + $0x220] sm:$0xff]
  %v1899 = vld [vmem:[%s7 + $0x228] sm:$0xff]
  %v1900 = vld [vmem:[%s7 + $0x230] sm:$0xff]
  %v1901 = vld [vmem:[%s7 + $0x238] sm:$0xf]
  %v1902 = vld [vmem:[%s7 + $0x23c] sm:$0xff]
  %v1903 = vld [vmem:[%s7 + $0x244] sm:$0xff]
  %v1904 = vld [vmem:[%s7 + $0x24c] sm:$0xff]
  %v1905 = vld [vmem:[%s7 + $0x254] sm:$0xff]
  %v1906 = vld [vmem:[%s7 + $0x25c] sm:$0xff]
  %v1907 = vld [vmem:[%s7 + $0x264] sm:$0xff]
  %v1908 = vld [vmem:[%s7 + $0x26c] sm:$0xf]
  %v1909 = vld [vmem:[%s7 + $0x270] sm:$0xff]
  %v1910 = vld [vmem:[%s7 + $0x278] sm:$0xff]
  %v1911 = vld [vmem:[%s7 + $0x280] sm:$0xff]
  %v1912 = vld [vmem:[%s7 + $0x288] sm:$0xff]
  %v1913 = vld [vmem:[%s7 + $0x290] sm:$0xff]
  %v1914 = vld [vmem:[%s7 + $0x298] sm:$0xff]
  %v1915 = vld [vmem:[%s7 + $0x2a0] sm:$0xf]
  %v1916 = vld [vmem:[%s7 + $0x2a4] sm:$0xff]
  %v1917 = vld [vmem:[%s7 + $0x2ac] sm:$0xff]
  %v1918 = vld [vmem:[%s7 + $0x2b4] sm:$0xff]
  %v1919 = vld [vmem:[%s7 + $0x2bc] sm:$0xff]
  %v1920 = vld [vmem:[%s7 + $0x2c4] sm:$0xff]
  %v1921 = vld [vmem:[%s7 + $0x2cc] sm:$0xff]
  %v1922 = vld [vmem:[%s7 + $0x2d4] sm:$0xf]
  %v1923 = vld [vmem:[%s7 + $0x2d8] sm:$0xff]
  %v1924 = vld [vmem:[%s7 + $0x2e0] sm:$0xff]
  %v1925 = vld [vmem:[%s7 + $0x2e8] sm:$0xff]
  %v1926 = vld [vmem:[%s7 + $0x2f0] sm:$0xff]
  %v1927 = vld [vmem:[%s7 + $0x2f8] sm:$0xff]
  %v1928 = vld [vmem:[%s7 + $0x300] sm:$0xff]
  %v1929 = vld [vmem:[%s7 + $0x308] sm:$0xf]
  %v1930 = vld [vmem:[%s7 + $0x30c] sm:$0xff]
  %v1931 = vld [vmem:[%s7 + $0x314] sm:$0xff]
  %v1932 = vld [vmem:[%s7 + $0x31c] sm:$0xff]
  %v1933 = vld [vmem:[%s7 + $0x324] sm:$0xff]
  %v1934 = vld [vmem:[%s7 + $0x32c] sm:$0xff]
  %v1935 = vld [vmem:[%s7 + $0x334] sm:$0xff]
  %v1936 = vld [vmem:[%s7 + $0x33c] sm:$0xf]
  %v1937 = vld [vmem:[%s7 + $0x340] sm:$0xff]
  %v1938 = vld [vmem:[%s7 + $0x348] sm:$0xff]
  %v1939 = vld [vmem:[%s7 + $0x350] sm:$0xff]
  %v1940 = vld [vmem:[%s7 + $0x358] sm:$0xff]
  %v1941 = vld [vmem:[%s7 + $0x360] sm:$0xff]
  %v1942 = vld [vmem:[%s7 + $0x368] sm:$0xff]
  %v1943 = vld [vmem:[%s7 + $0x370] sm:$0xf]
  %v1944 = vld [vmem:[%s7 + $0x374] sm:$0xff]
  %v1945 = vld [vmem:[%s7 + $0x37c] sm:$0xff]
  %v1946 = vld [vmem:[%s7 + $0x384] sm:$0xff]
  %v1947 = vld [vmem:[%s7 + $0x38c] sm:$0xff]
  %v1948 = vld [vmem:[%s7 + $0x394] sm:$0xff]
  %v1949 = vld [vmem:[%s7 + $0x39c] sm:$0xff]
  %v1950 = vld [vmem:[%s7 + $0x3a4] sm:$0xf]
  %v1951 = vld [vmem:[%s7 + $0x3a8] sm:$0xff]
  %v1952 = vld [vmem:[%s7 + $0x3b0] sm:$0xff]
  %v1953 = vld [vmem:[%s7 + $0x3b8] sm:$0xff]
  %v1954 = vld [vmem:[%s7 + $0x3c0] sm:$0xff]
  %v1955 = vld [vmem:[%s7 + $0x3c8] sm:$0xff]
  %v1956 = vld [vmem:[%s7 + $0x3d0] sm:$0xff]
  %v1957 = vld [vmem:[%s7 + $0x3d8] sm:$0xf]
  %v1958 = vld [vmem:[%s7 + $0x3dc] sm:$0xff]
  %v1959 = vld [vmem:[%s7 + $0x3e4] sm:$0xff]
  %v1960 = vld [vmem:[%s7 + $0x3ec] sm:$0xff]
  %v1961 = vld [vmem:[%s7 + $0x3f4] sm:$0xff]
  %v1962 = vld [vmem:[%s7 + $0x3fc] sm:$0xff]
  %v1963 = vld [vmem:[%s7 + $0x404] sm:$0xff]
  %v1964 = vld [vmem:[%s7 + $0x40c] sm:$0xf]
  %v1965 = vld [vmem:[%s7 + $0x410] sm:$0xff]
  %v1966 = vld [vmem:[%s7 + $0x418] sm:$0xff]
  %v1967 = vld [vmem:[%s7 + $0x420] sm:$0xff]
  %v1968 = vld [vmem:[%s7 + $0x428] sm:$0xff]
  %v1969 = vld [vmem:[%s7 + $0x430] sm:$0xff]
  %v1970 = vld [vmem:[%s7 + $0x438] sm:$0xff]
  %v1971 = vld [vmem:[%s7 + $0x440] sm:$0xf]
  %v1972 = vld [vmem:[%s7 + $0x444] sm:$0xff]
  %v1973 = vld [vmem:[%s7 + $0x44c] sm:$0xff]
  %v1974 = vld [vmem:[%s7 + $0x454] sm:$0xff]
  %v1975 = vld [vmem:[%s7 + $0x45c] sm:$0xff]
  %v1976 = vld [vmem:[%s7 + $0x464] sm:$0xff]
  %v1977 = vld [vmem:[%s7 + $0x46c] sm:$0xff]
  %v1978 = vld [vmem:[%s7 + $0x474] sm:$0xf]
  %v1979 = vld [vmem:[%s7 + $0x478] sm:$0xff]
  %v1980 = vld [vmem:[%s7 + $0x480] sm:$0xff]
  %v1981 = vld [vmem:[%s7 + $0x488] sm:$0xff]
  %v1982 = vld [vmem:[%s7 + $0x490] sm:$0xff]
  %v1983 = vld [vmem:[%s7 + $0x498] sm:$0xff]
  %v1984 = vld [vmem:[%s7 + $0x4a0] sm:$0xff]
  %v1985 = vld [vmem:[%s7 + $0x4a8] sm:$0xf]
  %v1986 = vld [vmem:[%s7 + $0x4ac] sm:$0xff]
  %v1987 = vld [vmem:[%s7 + $0x4b4] sm:$0xff]
  %v1988 = vld [vmem:[%s7 + $0x4bc] sm:$0xff]
  %v1989 = vld [vmem:[%s7 + $0x4c4] sm:$0xff]
  %v1990 = vld [vmem:[%s7 + $0x4cc] sm:$0xff]
  %v1991 = vld [vmem:[%s7 + $0x4d4] sm:$0xff]
  %v1992 = vld [vmem:[%s7 + $0x4dc] sm:$0xf]
  %v1993 = vld [vmem:[%s7 + $0x4e0] sm:$0xff]
  %v1994 = vld [vmem:[%s7 + $0x4e8] sm:$0xff]
  %v1995 = vld [vmem:[%s7 + $0x4f0] sm:$0xff]
  %v1996 = vld [vmem:[%s7 + $0x4f8] sm:$0xff]
  %v1997 = vld [vmem:[%s7 + $0x500] sm:$0xff]
  %v1998 = vld [vmem:[%s7 + $0x508] sm:$0xff]
  %v1999 = vld [vmem:[%s7 + $0x510] sm:$0xf]
  %v2000 = vld [vmem:[%s7 + $0x514] sm:$0xff]
  %v2001 = vld [vmem:[%s7 + $0x51c] sm:$0xff]
  %v2002 = vld [vmem:[%s7 + $0x524] sm:$0xff]
  %v2003 = vld [vmem:[%s7 + $0x52c] sm:$0xff]
  %v2004 = vld [vmem:[%s7 + $0x534] sm:$0xff]
  %v2005 = vld [vmem:[%s7 + $0x53c] sm:$0xff]
  %v2006 = vld [vmem:[%s7 + $0x544] sm:$0xf]
  %v2007 = vld [vmem:[%s7 + $0x548] sm:$0xff]
  %v2008 = vld [vmem:[%s7 + $0x550] sm:$0xff]
  %v2009 = vld [vmem:[%s7 + $0x558] sm:$0xff]
  %v2010 = vld [vmem:[%s7 + $0x560] sm:$0xff]
  %v2011 = vld [vmem:[%s7 + $0x568] sm:$0xff]
  %v2012 = vld [vmem:[%s7 + $0x570] sm:$0xff]
  %v2013 = vld [vmem:[%s7 + $0x578] sm:$0xf]
  %v2014 = vld [vmem:[%s7 + $0x57c] sm:$0xff]
  %v2015 = vld [vmem:[%s7 + $0x584] sm:$0xff]
  %v2016 = vld [vmem:[%s7 + $0x58c] sm:$0xff]
  %v2017 = vld [vmem:[%s7 + $0x594] sm:$0xff]
  %v2018 = vld [vmem:[%s7 + $0x59c] sm:$0xff]
  %v2019 = vld [vmem:[%s7 + $0x5a4] sm:$0xff]
  %v2020 = vld [vmem:[%s7 + $0x5ac] sm:$0xf]
  %v2021 = vld [vmem:[%s7 + $0x5b0] sm:$0xff]
  %v2022 = vld [vmem:[%s7 + $0x5b8] sm:$0xff]
  %v2023 = vld [vmem:[%s7 + $0x5c0] sm:$0xff]
  %v2024 = vld [vmem:[%s7 + $0x5c8] sm:$0xff]
  %v2025 = vld [vmem:[%s7 + $0x5d0] sm:$0xff]
  %v2026 = vld [vmem:[%s7 + $0x5d8] sm:$0xff]
  %v2027 = vld [vmem:[%s7 + $0x5e0] sm:$0xf]
  %v2028 = vld [vmem:[%s7 + $0x5e4] sm:$0xff]
  %v2029 = vld [vmem:[%s7 + $0x5ec] sm:$0xff]
  %v2030 = vld [vmem:[%s7 + $0x5f4] sm:$0xff]
  %v2031 = vld [vmem:[%s7 + $0x5fc] sm:$0xff]
  %v2032 = vld [vmem:[%s7 + $0x604] sm:$0xff]
  %v2033 = vld [vmem:[%s7 + $0x60c] sm:$0xff]
  %v2034 = vld [vmem:[%s7 + $0x614] sm:$0xf]
  %v2035 = vld [vmem:[%s7 + $0x618] sm:$0xff]
  %v2036 = vld [vmem:[%s7 + $0x620] sm:$0xff]
  %v2037 = vld [vmem:[%s7 + $0x628] sm:$0xff]
  %v2038 = vld [vmem:[%s7 + $0x630] sm:$0xff]
  %v2039 = vld [vmem:[%s7 + $0x638] sm:$0xff]
  %v2040 = vld [vmem:[%s7 + $0x640] sm:$0xff]
  %v2041 = vld [vmem:[%s7 + $0x648] sm:$0xf]
  %v2042 = vld [vmem:[%s7 + $0x64c] sm:$0xff]
  %v2043 = vld [vmem:[%s7 + $0x654] sm:$0xff]
  %v2044 = vld [vmem:[%s7 + $0x65c] sm:$0xff]
  %v2045 = vld [vmem:[%s7 + $0x664] sm:$0xff]
  %v2046 = vld [vmem:[%s7 + $0x66c] sm:$0xff]
  %v2047 = vld [vmem:[%s7 + $0x674] sm:$0xff]
  %v2048 = vld [vmem:[%s7 + $0x67c] sm:$0xf]
  %v2049 = vld [vmem:[%s7 + $0x680] sm:$0xff]
  %v2050 = vld [vmem:[%s7 + $0x688] sm:$0xff]
  %v2051 = vld [vmem:[%s7 + $0x690] sm:$0xff]
  %v2052 = vld [vmem:[%s7 + $0x698] sm:$0xff]
  %v2053 = vld [vmem:[%s7 + $0x6a0] sm:$0xff]
  %v2054 = vld [vmem:[%s7 + $0x6a8] sm:$0xff]
  %v2055 = vld [vmem:[%s7 + $0x6b0] sm:$0xf]
  %v2056 = vld [vmem:[%s7 + $0x6b4] sm:$0xff]
  %v2057 = vld [vmem:[%s7 + $0x6bc] sm:$0xff]
  %v2058 = vld [vmem:[%s7 + $0x6c4] sm:$0xff]
  %v2059 = vld [vmem:[%s7 + $0x6cc] sm:$0xff]
  %v2060 = vld [vmem:[%s7 + $0x6d4] sm:$0xff]
  %v2061 = vld [vmem:[%s7 + $0x6dc] sm:$0xff]
  %v2062 = vld [vmem:[%s7 + $0x6e4] sm:$0xf]
  %v2063 = vld [vmem:[%s7 + $0x6e8] sm:$0xff]
  %v2064 = vld [vmem:[%s7 + $0x6f0] sm:$0xff]
  %v2065 = vld [vmem:[%s7 + $0x6f8] sm:$0xff]
  %v2066 = vld [vmem:[%s7 + $0x700] sm:$0xff]
  %v2067 = vld [vmem:[%s7 + $0x708] sm:$0xff]
  %v2068 = vld [vmem:[%s7 + $0x710] sm:$0xff]
  %v2069 = vld [vmem:[%s7 + $0x718] sm:$0xf]
  %v2070 = vld [vmem:[%s7 + $0x71c] sm:$0xff]
  %v2071 = vld [vmem:[%s7 + $0x724] sm:$0xff]
  %v2072 = vld [vmem:[%s7 + $0x72c] sm:$0xff]
  %v2073 = vld [vmem:[%s7 + $0x734] sm:$0xff]
  %v2074 = vld [vmem:[%s7 + $0x73c] sm:$0xff]
  %v2075 = vld [vmem:[%s7 + $0x744] sm:$0xff]
  %v2076 = vld [vmem:[%s7 + $0x74c] sm:$0xf]
  %v2077 = vld [vmem:[%s7 + $0x750] sm:$0xff]
  %v2078 = vld [vmem:[%s7 + $0x758] sm:$0xff]
  %v2079 = vld [vmem:[%s7 + $0x760] sm:$0xff]
  %v2080 = vld [vmem:[%s7 + $0x768] sm:$0xff]
  %v2081 = vld [vmem:[%s7 + $0x770] sm:$0xff]
  %v2082 = vld [vmem:[%s7 + $0x778] sm:$0xff]
  %v2083 = vld [vmem:[%s7 + $0x780] sm:$0xf]
  %v2084 = vld [vmem:[%s7 + $0x784] sm:$0xff]
  %v2085 = vld [vmem:[%s7 + $0x78c] sm:$0xff]
  %v2086 = vld [vmem:[%s7 + $0x794] sm:$0xff]
  %v2087 = vld [vmem:[%s7 + $0x79c] sm:$0xff]
  %v2088 = vld [vmem:[%s7 + $0x7a4] sm:$0xff]
  %v2089 = vld [vmem:[%s7 + $0x7ac] sm:$0xff]
  %v2090 = vld [vmem:[%s7 + $0x7b4] sm:$0xf]
  %v2091 = vld [vmem:[%s7 + $0x7b8] sm:$0xff]
  %v2092 = vld [vmem:[%s7 + $0x7c0] sm:$0xff]
  %v2093 = vld [vmem:[%s7 + $0x7c8] sm:$0xff]
  %v2094 = vld [vmem:[%s7 + $0x7d0] sm:$0xff]
  %v2095 = vld [vmem:[%s7 + $0x7d8] sm:$0xff]
  %v2096 = vld [vmem:[%s7 + $0x7e0] sm:$0xff]
  %v2097 = vld [vmem:[%s7 + $0x7e8] sm:$0xf]
  %v2098 = vld [vmem:[%s7 + $0x7ec] sm:$0xff]
  %v2099 = vld [vmem:[%s7 + $0x7f4] sm:$0xff]
  %v2100 = vld [vmem:[%s7 + $0x7fc] sm:$0xff]
  %v2101 = vld [vmem:[%s7 + $0x804] sm:$0xff]
  %v2102 = vld [vmem:[%s7 + $0x80c] sm:$0xff]
  %v2103 = vld [vmem:[%s7 + $0x814] sm:$0xff]
  %v2104 = vld [vmem:[%s7 + $0x81c] sm:$0xf]
  %v2105 = vld [vmem:[%s7 + $0x820] sm:$0xff]
  %v2106 = vld [vmem:[%s7 + $0x828] sm:$0xff]
  %v2107 = vld [vmem:[%s7 + $0x830] sm:$0xff]
  %v2108 = vld [vmem:[%s7 + $0x838] sm:$0xff]
  %v2109 = vld [vmem:[%s7 + $0x840] sm:$0xff]
  %v2110 = vld [vmem:[%s7 + $0x848] sm:$0xff]
  %v2111 = vld [vmem:[%s7 + $0x850] sm:$0xf]
  %v2112 = vld [vmem:[%s7 + $0x854] sm:$0xff]
  %v2113 = vld [vmem:[%s7 + $0x85c] sm:$0xff]
  %v2114 = vld [vmem:[%s7 + $0x864] sm:$0xff]
  %v2115 = vld [vmem:[%s7 + $0x86c] sm:$0xff]
  %v2116 = vld [vmem:[%s7 + $0x874] sm:$0xff]
  %v2117 = vld [vmem:[%s7 + $0x87c] sm:$0xff]
  %v2118 = vld [vmem:[%s7 + $0x884] sm:$0xf]
  %v2119 = vld [vmem:[%s7 + $0x888] sm:$0xff]
  %v2120 = vld [vmem:[%s7 + $0x890] sm:$0xff]
  %v2121 = vld [vmem:[%s7 + $0x898] sm:$0xff]
  %v2122 = vld [vmem:[%s7 + $0x8a0] sm:$0xff]
  %v2123 = vld [vmem:[%s7 + $0x8a8] sm:$0xff]
  %v2124 = vld [vmem:[%s7 + $0x8b0] sm:$0xff]
  %v2125 = vld [vmem:[%s7 + $0x8b8] sm:$0xf]
  %v2126 = vld [vmem:[%s7 + $0x8bc] sm:$0xff]
  %v2127 = vld [vmem:[%s7 + $0x8c4] sm:$0xff]
  %v2128 = vld [vmem:[%s7 + $0x8cc] sm:$0xff]
  %v2129 = vld [vmem:[%s7 + $0x8d4] sm:$0xff]
  %v2130 = vld [vmem:[%s7 + $0x8dc] sm:$0xff]
  %v2131 = vld [vmem:[%s7 + $0x8e4] sm:$0xff]
  %v2132 = vld [vmem:[%s7 + $0x8ec] sm:$0xf]
  %v2133 = vld [vmem:[%s7 + $0x8f0] sm:$0xff]
  %v2134 = vld [vmem:[%s7 + $0x8f8] sm:$0xff]
  %v2135 = vld [vmem:[%s7 + $0x900] sm:$0xff]
  %v2136 = vld [vmem:[%s7 + $0x908] sm:$0xff]
  %v2137 = vld [vmem:[%s7 + $0x910] sm:$0xff]
  %v2138 = vld [vmem:[%s7 + $0x918] sm:$0xff]
  %v2139 = vld [vmem:[%s7 + $0x920] sm:$0xf]
  %v2140 = vld [vmem:[%s7 + $0x924] sm:$0xff]
  %v2141 = vld [vmem:[%s7 + $0x92c] sm:$0xff]
  %v2142 = vld [vmem:[%s7 + $0x934] sm:$0xff]
  %v2143 = vld [vmem:[%s7 + $0x93c] sm:$0xff]
  %v2144 = vld [vmem:[%s7 + $0x944] sm:$0xff]
  %v2145 = vld [vmem:[%s7 + $0x94c] sm:$0xff]
  %v2146 = vld [vmem:[%s7 + $0x954] sm:$0xf]
  %v2147 = vld [vmem:[%s7 + $0x958] sm:$0xff]
  %v2148 = vld [vmem:[%s7 + $0x960] sm:$0xff]
  %v2149 = vld [vmem:[%s7 + $0x968] sm:$0xff]
  %v2150 = vld [vmem:[%s7 + $0x970] sm:$0xff]
  %v2151 = vld [vmem:[%s7 + $0x978] sm:$0xff]
  %v2152 = vld [vmem:[%s7 + $0x980] sm:$0xff]
  %v2153 = vld [vmem:[%s7 + $0x988] sm:$0xf]
  %v2154 = vld [vmem:[%s7 + $0x98c] sm:$0xff]
  %v2155 = vld [vmem:[%s7 + $0x994] sm:$0xff]
  %v2156 = vld [vmem:[%s7 + $0x99c] sm:$0xff]
  %v2157 = vld [vmem:[%s7 + $0x9a4] sm:$0xff]
  %v2158 = vld [vmem:[%s7 + $0x9ac] sm:$0xff]
  %v2159 = vld [vmem:[%s7 + $0x9b4] sm:$0xff]
  %v2160 = vld [vmem:[%s7 + $0x9bc] sm:$0xf]
  %v2161 = vld [vmem:[%s7 + $0x9c0] sm:$0xff]
  %v2162 = vld [vmem:[%s7 + $0x9c8] sm:$0xff]
  %v2163 = vld [vmem:[%s7 + $0x9d0] sm:$0xff]
  %v2164 = vld [vmem:[%s7 + $0x9d8] sm:$0xff]
  %v2165 = vld [vmem:[%s7 + $0x9e0] sm:$0xff]
  %v2166 = vld [vmem:[%s7 + $0x9e8] sm:$0xff]
  %v2167 = vld [vmem:[%s7 + $0x9f0] sm:$0xf]
  %v2168 = vld [vmem:[%s7 + $0x9f4] sm:$0xff]
  %v2169 = vld [vmem:[%s7 + $0x9fc] sm:$0xff]
  %v2170 = vld [vmem:[%s7 + $0xa04] sm:$0xff]
  %v2171 = vld [vmem:[%s7 + $0xa0c] sm:$0xff]
  %v2172 = vld [vmem:[%s7 + $0xa14] sm:$0xff]
  %v2173 = vld [vmem:[%s7 + $0xa1c] sm:$0xff]
  %v2174 = vld [vmem:[%s7 + $0xa24] sm:$0xf]
  %v2175 = vld [vmem:[%s7 + $0xa28] sm:$0xff]
  %v2176 = vld [vmem:[%s7 + $0xa30] sm:$0xff]
  %v2177 = vld [vmem:[%s7 + $0xa38] sm:$0xff]
  %v2178 = vld [vmem:[%s7 + $0xa40] sm:$0xff]
  %v2179 = vld [vmem:[%s7 + $0xa48] sm:$0xff]
  %v2180 = vld [vmem:[%s7 + $0xa50] sm:$0xff]
  %v2181 = vld [vmem:[%s7 + $0xa58] sm:$0xf]
  %v2182 = vld [vmem:[%s7 + $0xa5c] sm:$0xff]
  %v2183 = vld [vmem:[%s7 + $0xa64] sm:$0xff]
  %v2184 = vld [vmem:[%s7 + $0xa6c] sm:$0xff]
  %v2185 = vld [vmem:[%s7 + $0xa74] sm:$0xff]
  %v2186 = vld [vmem:[%s7 + $0xa7c] sm:$0xff]
  %v2187 = vld [vmem:[%s7 + $0xa84] sm:$0xff]
  %v2188 = vld [vmem:[%s7 + $0xa8c] sm:$0xf]
  %v2189 = vld [vmem:[%s7 + $0xa90] sm:$0xff]
  %v2190 = vld [vmem:[%s7 + $0xa98] sm:$0xff]
  %v2191 = vld [vmem:[%s7 + $0xaa0] sm:$0xff]
  %v2192 = vld [vmem:[%s7 + $0xaa8] sm:$0xff]
  %v2193 = vld [vmem:[%s7 + $0xab0] sm:$0xff]
  %v2194 = vld [vmem:[%s7 + $0xab8] sm:$0xff]
  %v2195 = vld [vmem:[%s7 + $0xac0] sm:$0xf]
  %v2196 = vld [vmem:[%s7 + $0xac4] sm:$0xff]
  %v2197 = vld [vmem:[%s7 + $0xacc] sm:$0xff]
  %v2198 = vld [vmem:[%s7 + $0xad4] sm:$0xff]
  %v2199 = vld [vmem:[%s7 + $0xadc] sm:$0xff]
  %v2200 = vld [vmem:[%s7 + $0xae4] sm:$0xff]
  %v2201 = vld [vmem:[%s7 + $0xaec] sm:$0xff]
  %v2202 = vld [vmem:[%s7 + $0xaf4] sm:$0xf]
  %v2203 = vld [vmem:[%s7 + $0xaf8] sm:$0xff]
  %v2204 = vld [vmem:[%s7 + $0xb00] sm:$0xff]
  %v2205 = vld [vmem:[%s7 + $0xb08] sm:$0xff]
  %v2206 = vld [vmem:[%s7 + $0xb10] sm:$0xff]
  %v2207 = vld [vmem:[%s7 + $0xb18] sm:$0xff]
  %v2208 = vld [vmem:[%s7 + $0xb20] sm:$0xff]
  %v2209 = vld [vmem:[%s7 + $0xb28] sm:$0xf]
  %v2210 = vld [vmem:[%s7 + $0xb2c] sm:$0xff]
  %v2211 = vld [vmem:[%s7 + $0xb34] sm:$0xff]
  %v2212 = vld [vmem:[%s7 + $0xb3c] sm:$0xff]
  %v2213 = vld [vmem:[%s7 + $0xb44] sm:$0xff]
  %v2214 = vld [vmem:[%s7 + $0xb4c] sm:$0xff]
  %v2215 = vld [vmem:[%s7 + $0xb54] sm:$0xff]
  %v2216 = vld [vmem:[%s7 + $0xb5c] sm:$0xf]
  %v2217 = vld [vmem:[%s7 + $0xb60] sm:$0xff]
  %v2218 = vld [vmem:[%s7 + $0xb68] sm:$0xff]
  %v2219 = vld [vmem:[%s7 + $0xb70] sm:$0xff]
  %v2220 = vld [vmem:[%s7 + $0xb78] sm:$0xff]
  %v2221 = vld [vmem:[%s7 + $0xb80] sm:$0xff]
  %v2222 = vld [vmem:[%s7 + $0xb88] sm:$0xff]
  %v2223 = vld [vmem:[%s7 + $0xb90] sm:$0xf]
  %v2224 = vld [vmem:[%s7 + $0xb94] sm:$0xff]
  %v2225 = vld [vmem:[%s7 + $0xb9c] sm:$0xff]
  %v2226 = vld [vmem:[%s7 + $0xba4] sm:$0xff]
  %v2227 = vld [vmem:[%s7 + $0xbac] sm:$0xff]
  %v2228 = vld [vmem:[%s7 + $0xbb4] sm:$0xff]
  %v2229 = vld [vmem:[%s7 + $0xbbc] sm:$0xff]
  %v2230 = vld [vmem:[%s7 + $0xbc4] sm:$0xf]
  %v2231 = vld [vmem:[%s7 + $0xbc8] sm:$0xff]
  %v2232 = vld [vmem:[%s7 + $0xbd0] sm:$0xff]
  %v2233 = vld [vmem:[%s7 + $0xbd8] sm:$0xff]
  %v2234 = vld [vmem:[%s7 + $0xbe0] sm:$0xff]
  %v2235 = vld [vmem:[%s7 + $0xbe8] sm:$0xff]
  %v2236 = vld [vmem:[%s7 + $0xbf0] sm:$0xff]
  %v2237 = vld [vmem:[%s7 + $0xbf8] sm:$0xf]
  %v2238 = vld [vmem:[%s7 + $0xbfc] sm:$0xff]
  %v2239 = vld [vmem:[%s7 + $0xc04] sm:$0xff]
  %v2240 = vld [vmem:[%s7 + $0xc0c] sm:$0xff]
  %v2241 = vld [vmem:[%s7 + $0xc14] sm:$0xff]
  %v2242 = vld [vmem:[%s7 + $0xc1c] sm:$0xff]
  %v2243 = vld [vmem:[%s7 + $0xc24] sm:$0xff]
  %v2244 = vld [vmem:[%s7 + $0xc2c] sm:$0xf]
  %v2245 = vld [vmem:[%s7 + $0xc30] sm:$0xff]
  %v2246 = vld [vmem:[%s7 + $0xc38] sm:$0xff]
  %v2247 = vld [vmem:[%s7 + $0xc40] sm:$0xff]
  %v2248 = vld [vmem:[%s7 + $0xc48] sm:$0xff]
  %v2249 = vld [vmem:[%s7 + $0xc50] sm:$0xff]
  %v2250 = vld [vmem:[%s7 + $0xc58] sm:$0xff]
  %v2251 = vld [vmem:[%s7 + $0xc60] sm:$0xf]
  %v2252 = vld [vmem:[%s7 + $0xc64] sm:$0xff]
  %v2253 = vld [vmem:[%s7 + $0xc6c] sm:$0xff]
  %v2254 = vld [vmem:[%s7 + $0xc74] sm:$0xff]
  %v2255 = vld [vmem:[%s7 + $0xc7c] sm:$0xff]
  %v2256 = vld [vmem:[%s7 + $0xc84] sm:$0xff]
  %v2257 = vld [vmem:[%s7 + $0xc8c] sm:$0xff]
  %v2258 = vld [vmem:[%s7 + $0xc94] sm:$0xf]
  %v2259 = vld [vmem:[%s7 + $0xc98] sm:$0xff]
  %v2260 = vld [vmem:[%s7 + $0xca0] sm:$0xff]
  %v2261 = vld [vmem:[%s7 + $0xca8] sm:$0xff]
  %v2262 = vld [vmem:[%s7 + $0xcb0] sm:$0xff]
  %v2263 = vld [vmem:[%s7 + $0xcb8] sm:$0xff]
  %v2264 = vld [vmem:[%s7 + $0xcc0] sm:$0xff]
  %v2265 = vld [vmem:[%s7 + $0xcc8] sm:$0xf]
  %v2266 = vld [vmem:[%s7 + $0xccc] sm:$0xff]
  %v2267 = vld [vmem:[%s7 + $0xcd4] sm:$0xff]
  %v2268 = vld [vmem:[%s7 + $0xcdc] sm:$0xff]
  %v2269 = vld [vmem:[%s7 + $0xce4] sm:$0xff]
  %v2270 = vld [vmem:[%s7 + $0xcec] sm:$0xff]
  %v2271 = vld [vmem:[%s7 + $0xcf4] sm:$0xff]
  %v2272 = vld [vmem:[%s7 + $0xcfc] sm:$0xf]
  %v2273 = vld [vmem:[%s7 + $0xd00] sm:$0xff]
  %v2274 = vld [vmem:[%s7 + $0xd08] sm:$0xff]
  %v2275 = vld [vmem:[%s7 + $0xd10] sm:$0xff]
  %v2276 = vld [vmem:[%s7 + $0xd18] sm:$0xff]
  %v2277 = vld [vmem:[%s7 + $0xd20] sm:$0xff]
  %v2278 = vld [vmem:[%s7 + $0xd28] sm:$0xff]
  %v2279 = vld [vmem:[%s7 + $0xd30] sm:$0xf]
  %v2280 = vld [vmem:[%s7 + $0xd34] sm:$0xff]
  %v2281 = vld [vmem:[%s7 + $0xd3c] sm:$0xff]
  %v2282 = vld [vmem:[%s7 + $0xd44] sm:$0xff]
  %v2283 = vld [vmem:[%s7 + $0xd4c] sm:$0xff]
  %v2284 = vld [vmem:[%s7 + $0xd54] sm:$0xff]
  %v2285 = vld [vmem:[%s7 + $0xd5c] sm:$0xff]
  %v2286 = vld [vmem:[%s7 + $0xd64] sm:$0xf]
  %v2287 = vld [vmem:[%s7 + $0xd68] sm:$0xff]
  %v2288 = vld [vmem:[%s7 + $0xd70] sm:$0xff]
  %v2289 = vld [vmem:[%s7 + $0xd78] sm:$0xff]
  %v2290 = vld [vmem:[%s7 + $0xd80] sm:$0xff]
  %v2291 = vld [vmem:[%s7 + $0xd88] sm:$0xff]
  %v2292 = vld [vmem:[%s7 + $0xd90] sm:$0xff]
  %v2293 = vld [vmem:[%s7 + $0xd98] sm:$0xf]
  %v2294 = vld [vmem:[%s7 + $0xd9c] sm:$0xff]
  %v2295 = vld [vmem:[%s7 + $0xda4] sm:$0xff]
  %v2296 = vld [vmem:[%s7 + $0xdac] sm:$0xff]
  %v2297 = vld [vmem:[%s7 + $0xdb4] sm:$0xff]
  %v2298 = vld [vmem:[%s7 + $0xdbc] sm:$0xff]
  %v2299 = vld [vmem:[%s7 + $0xdc4] sm:$0xff]
  %v2300 = vld [vmem:[%s7 + $0xdcc] sm:$0xf]
  %v2301 = vld [vmem:[%s7 + $0xdd0] sm:$0xff]
  %v2302 = vld [vmem:[%s7 + $0xdd8] sm:$0xff]
  %v2303 = vld [vmem:[%s7 + $0xde0] sm:$0xff]
  %v2304 = vld [vmem:[%s7 + $0xde8] sm:$0xff]
  %v2305 = vld [vmem:[%s7 + $0xdf0] sm:$0xff]
  %v2306 = vld [vmem:[%s7 + $0xdf8] sm:$0xff]
  %v2307 = vld [vmem:[%s7 + $0xe00] sm:$0xf]
  %v2308 = vld [vmem:[%s7 + $0xe04] sm:$0xff]
  %v2309 = vld [vmem:[%s7 + $0xe0c] sm:$0xff]
  %v2310 = vld [vmem:[%s7 + $0xe14] sm:$0xff]
  %v2311 = vld [vmem:[%s7 + $0xe1c] sm:$0xff]
  %v2312 = vld [vmem:[%s7 + $0xe24] sm:$0xff]
  %v2313 = vld [vmem:[%s7 + $0xe2c] sm:$0xff]
  %v2314 = vld [vmem:[%s7 + $0xe34] sm:$0xf]
  %v2315 = vld [vmem:[%s7 + $0xe38] sm:$0xff]
  %v2316 = vld [vmem:[%s7 + $0xe40] sm:$0xff]
  %v2317 = vld [vmem:[%s7 + $0xe48] sm:$0xff]
  %v2318 = vld [vmem:[%s7 + $0xe50] sm:$0xff]
  %v2319 = vld [vmem:[%s7 + $0xe58] sm:$0xff]
  %v2320 = vld [vmem:[%s7 + $0xe60] sm:$0xff]
  %v2321 = vld [vmem:[%s7 + $0xe68] sm:$0xf]
  %v2322 = vld [vmem:[%s7 + $0xe6c] sm:$0xff]
  %v2323 = vld [vmem:[%s7 + $0xe74] sm:$0xff]
  %v2324 = vld [vmem:[%s7 + $0xe7c] sm:$0xff]
  %v2325 = vld [vmem:[%s7 + $0xe84] sm:$0xff]
  %v2326 = vld [vmem:[%s7 + $0xe8c] sm:$0xff]
  %v2327 = vld [vmem:[%s7 + $0xe94] sm:$0xff]
  %v2328 = vld [vmem:[%s7 + $0xe9c] sm:$0xf]
  %v2329 = vld [vmem:[%s7 + $0xea0] sm:$0xff]
  %v2330 = vld [vmem:[%s7 + $0xea8] sm:$0xff]
  %v2331 = vld [vmem:[%s7 + $0xeb0] sm:$0xff]
  %v2332 = vld [vmem:[%s7 + $0xeb8] sm:$0xff]
  %v2333 = vld [vmem:[%s7 + $0xec0] sm:$0xff]
  %v2334 = vld [vmem:[%s7 + $0xec8] sm:$0xff]
  %v2335 = vld [vmem:[%s7 + $0xed0] sm:$0xf]
  %v2336 = vld [vmem:[%s7 + $0xed4] sm:$0xff]
  %v2337 = vld [vmem:[%s7 + $0xedc] sm:$0xff]
  %v2338 = vld [vmem:[%s7 + $0xee4] sm:$0xff]
  %v2339 = vld [vmem:[%s7 + $0xeec] sm:$0xff]
  %v2340 = vld [vmem:[%s7 + $0xef4] sm:$0xff]
  %v2341 = vld [vmem:[%s7 + $0xefc] sm:$0xff]
  %v2342 = vld [vmem:[%s7 + $0xf04] sm:$0xf]
  %v2343 = vld [vmem:[%s7 + $0xf08] sm:$0xff]
  %v2344 = vld [vmem:[%s7 + $0xf10] sm:$0xff]
  %v2345 = vld [vmem:[%s7 + $0xf18] sm:$0xff]
  %v2346 = vld [vmem:[%s7 + $0xf20] sm:$0xff]
  %v2347 = vld [vmem:[%s7 + $0xf28] sm:$0xff]
  %v2348 = vld [vmem:[%s7 + $0xf30] sm:$0xff]
  %v2349 = vld [vmem:[%s7 + $0xf38] sm:$0xf]
  %v2350 = vld [vmem:[%s7 + $0xf3c] sm:$0xff]
  %v2351 = vld [vmem:[%s7 + $0xf44] sm:$0xff]
  %v2352 = vld [vmem:[%s7 + $0xf4c] sm:$0xff]
  %v2353 = vld [vmem:[%s7 + $0xf54] sm:$0xff]
  %v2354 = vld [vmem:[%s7 + $0xf5c] sm:$0xff]
  %v2355 = vld [vmem:[%s7 + $0xf64] sm:$0xff]
  %v2356 = vld [vmem:[%s7 + $0xf6c] sm:$0xf]
  %v2357 = vld [vmem:[%s7 + $0xf70] sm:$0xff]
  %v2358 = vld [vmem:[%s7 + $0xf78] sm:$0xff]
  %v2359 = vld [vmem:[%s7 + $0xf80] sm:$0xff]
  %v2360 = vld [vmem:[%s7 + $0xf88] sm:$0xff]
  %v2361 = vld [vmem:[%s7 + $0xf90] sm:$0xff]
  %v2362 = vld [vmem:[%s7 + $0xf98] sm:$0xff]
  %v2363 = vld [vmem:[%s7 + $0xfa0] sm:$0xf]
  %v2364 = vld [vmem:[%s7 + $0xfa4] sm:$0xff]
  %v2365 = vld [vmem:[%s7 + $0xfac] sm:$0xff]
  %v2366 = vld [vmem:[%s7 + $0xfb4] sm:$0xff]
  %v2367 = vld [vmem:[%s7 + $0xfbc] sm:$0xff]
  %v2368 = vld [vmem:[%s7 + $0xfc4] sm:$0xff]
  %v2369 = vld [vmem:[%s7 + $0xfcc] sm:$0xff]
  %v2370 = vld [vmem:[%s7 + $0xfd4] sm:$0xf]
  %v2371 = vld [vmem:[%s7 + $0xfd8] sm:$0xff]
  %v2372 = vld [vmem:[%s7 + $0xfe0] sm:$0xff]
  %v2373 = vld [vmem:[%s7 + $0xfe8] sm:$0xff]
  %v2374 = vld [vmem:[%s7 + $0xff0] sm:$0xff]
  %v2375 = vld [vmem:[%s7 + $0xff8] sm:$0xff]
  %v2376 = vld [vmem:[%s7 + $0x1000] sm:$0xff]
  %v2377 = vld [vmem:[%s7 + $0x1008] sm:$0xf]
  %v2378 = vld [vmem:[%s7 + $0x100c] sm:$0xff]
  %v2379 = vld [vmem:[%s7 + $0x1014] sm:$0xff]
  %v2380 = vld [vmem:[%s7 + $0x101c] sm:$0xff]
  %v2381 = vld [vmem:[%s7 + $0x1024] sm:$0xff]
  %v2382 = vld [vmem:[%s7 + $0x102c] sm:$0xff]
  %v2383 = vld [vmem:[%s7 + $0x1034] sm:$0xff]
  %v2384 = vld [vmem:[%s7 + $0x103c] sm:$0xf]
  %v2385 = vld [vmem:[%s7 + $0x1040] sm:$0xff]
  %v2386 = vld [vmem:[%s7 + $0x1048] sm:$0xff]
  %v2387 = vld [vmem:[%s7 + $0x1050] sm:$0xff]
  %v2388 = vld [vmem:[%s7 + $0x1058] sm:$0xff]
  %v2389 = vld [vmem:[%s7 + $0x1060] sm:$0xff]
  %v2390 = vld [vmem:[%s7 + $0x1068] sm:$0xff]
  %v2391 = vld [vmem:[%s7 + $0x1070] sm:$0xf]
  %v2392 = vld [vmem:[%s7 + $0x1074] sm:$0xff]
  %v2393 = vld [vmem:[%s7 + $0x107c] sm:$0xff]
  %v2394 = vld [vmem:[%s7 + $0x1084] sm:$0xff]
  %v2395 = vld [vmem:[%s7 + $0x108c] sm:$0xff]
  %v2396 = vld [vmem:[%s7 + $0x1094] sm:$0xff]
  %v2397 = vld [vmem:[%s7 + $0x109c] sm:$0xff]
  %v2398 = vld [vmem:[%s7 + $0x10a4] sm:$0xf]
  %v2399 = vld [vmem:[%s7 + $0x10a8] sm:$0xff]
  %v2400 = vld [vmem:[%s7 + $0x10b0] sm:$0xff]
  %v2401 = vld [vmem:[%s7 + $0x10b8] sm:$0xff]
  %v2402 = vld [vmem:[%s7 + $0x10c0] sm:$0xff]
  %v2403 = vld [vmem:[%s7 + $0x10c8] sm:$0xff]
  %v2404 = vld [vmem:[%s7 + $0x10d0] sm:$0xff]
  %v2405 = vld [vmem:[%s7 + $0x10d8] sm:$0xf]
  %v2406 = vld [vmem:[%s7 + $0x10dc] sm:$0xff]
  %v2407 = vld [vmem:[%s7 + $0x10e4] sm:$0xff]
  %v2408 = vld [vmem:[%s7 + $0x10ec] sm:$0xff]
  %v2409 = vld [vmem:[%s7 + $0x10f4] sm:$0xff]
  %v2410 = vld [vmem:[%s7 + $0x10fc] sm:$0xff]
  %v2411 = vld [vmem:[%s7 + $0x1104] sm:$0xff]
  %v2412 = vld [vmem:[%s7 + $0x110c] sm:$0xf]
  %v2413 = vld [vmem:[%s7 + $0x1110] sm:$0xff]
  %v2414 = vld [vmem:[%s7 + $0x1118] sm:$0xff]
  %v2415 = vld [vmem:[%s7 + $0x1120] sm:$0xff]
  %v2416 = vld [vmem:[%s7 + $0x1128] sm:$0xff]
  %v2417 = vld [vmem:[%s7 + $0x1130] sm:$0xff]
  %v2418 = vld [vmem:[%s7 + $0x1138] sm:$0xff]
  %v2419 = vld [vmem:[%s7 + $0x1140] sm:$0xf]
  %v2420 = vld [vmem:[%s7 + $0x1144] sm:$0xff]
  %v2421 = vld [vmem:[%s7 + $0x114c] sm:$0xff]
  %v2422 = vld [vmem:[%s7 + $0x1154] sm:$0xff]
  %v2423 = vld [vmem:[%s7 + $0x115c] sm:$0xff]
  %v2424 = vld [vmem:[%s7 + $0x1164] sm:$0xff]
  %v2425 = vld [vmem:[%s7 + $0x116c] sm:$0xff]
  %v2426 = vld [vmem:[%s7 + $0x1174] sm:$0xf]
  %v2427 = vld [vmem:[%s7 + $0x1178] sm:$0xff]
  %v2428 = vld [vmem:[%s7 + $0x1180] sm:$0xff]
  %v2429 = vld [vmem:[%s7 + $0x1188] sm:$0xff]
  %v2430 = vld [vmem:[%s7 + $0x1190] sm:$0xff]
  %v2431 = vld [vmem:[%s7 + $0x1198] sm:$0xff]
  %v2432 = vld [vmem:[%s7 + $0x11a0] sm:$0xff]
  %v2433 = vld [vmem:[%s7 + $0x11a8] sm:$0xf]
  %v2434 = vld [vmem:[%s7 + $0x11ac] sm:$0xff]
  %v2435 = vld [vmem:[%s7 + $0x11b4] sm:$0xff]
  %v2436 = vld [vmem:[%s7 + $0x11bc] sm:$0xff]
  %v2437 = vld [vmem:[%s7 + $0x11c4] sm:$0xff]
  %v2438 = vld [vmem:[%s7 + $0x11cc] sm:$0xff]
  %v2439 = vld [vmem:[%s7 + $0x11d4] sm:$0xff]
  %v2440 = vld [vmem:[%s7 + $0x11dc] sm:$0xf]
  %v2441 = vld [vmem:[%s7 + $0x11e0] sm:$0xff]
  %v2442 = vld [vmem:[%s7 + $0x11e8] sm:$0xff]
  %v2443 = vld [vmem:[%s7 + $0x11f0] sm:$0xff]
  %v2444 = vld [vmem:[%s7 + $0x11f8] sm:$0xff]
  %v2445 = vld [vmem:[%s7 + $0x1200] sm:$0xff]
  %v2446 = vld [vmem:[%s7 + $0x1208] sm:$0xff]
  %v2447 = vld [vmem:[%s7 + $0x1210] sm:$0xf]
  %v2448 = vld [vmem:[%s7 + $0x1214] sm:$0xff]
  %v2449 = vld [vmem:[%s7 + $0x121c] sm:$0xff]
  %v2450 = vld [vmem:[%s7 + $0x1224] sm:$0xff]
  %v2451 = vld [vmem:[%s7 + $0x122c] sm:$0xff]
  %v2452 = vld [vmem:[%s7 + $0x1234] sm:$0xff]
  %v2453 = vld [vmem:[%s7 + $0x123c] sm:$0xff]
  %v2454 = vld [vmem:[%s7 + $0x1244] sm:$0xf]
  %v2455 = vld [vmem:[%s7 + $0x1248] sm:$0xff]
  %v2456 = vld [vmem:[%s7 + $0x1250] sm:$0xff]
  %v2457 = vld [vmem:[%s7 + $0x1258] sm:$0xff]
  %v2458 = vld [vmem:[%s7 + $0x1260] sm:$0xff]
  %v2459 = vld [vmem:[%s7 + $0x1268] sm:$0xff]
  %v2460 = vld [vmem:[%s7 + $0x1270] sm:$0xff]
  %v2461 = vld [vmem:[%s7 + $0x1278] sm:$0xf]
  %v2462 = vld [vmem:[%s7 + $0x127c] sm:$0xff]
  %v2463 = vld [vmem:[%s7 + $0x1284] sm:$0xff]
  %v2464 = vld [vmem:[%s7 + $0x128c] sm:$0xff]
  %v2465 = vld [vmem:[%s7 + $0x1294] sm:$0xff]
  %v2466 = vld [vmem:[%s7 + $0x129c] sm:$0xff]
  %v2467 = vld [vmem:[%s7 + $0x12a4] sm:$0xff]
  %v2468 = vld [vmem:[%s7 + $0x12ac] sm:$0xf]
  %v2469 = vld [vmem:[%s7 + $0x12b0] sm:$0xff]
  %v2470 = vld [vmem:[%s7 + $0x12b8] sm:$0xff]
  %v2471 = vld [vmem:[%s7 + $0x12c0] sm:$0xff]
  %v2472 = vld [vmem:[%s7 + $0x12c8] sm:$0xff]
  %v2473 = vld [vmem:[%s7 + $0x12d0] sm:$0xff]
  %v2474 = vld [vmem:[%s7 + $0x12d8] sm:$0xff]
  %v2475 = vld [vmem:[%s7 + $0x12e0] sm:$0xf]
  %v2476 = vld [vmem:[%s7 + $0x12e4] sm:$0xff]
  %v2477 = vld [vmem:[%s7 + $0x12ec] sm:$0xff]
  %v2478 = vld [vmem:[%s7 + $0x12f4] sm:$0xff]
  %v2479 = vld [vmem:[%s7 + $0x12fc] sm:$0xff]
  %v2480 = vld [vmem:[%s7 + $0x1304] sm:$0xff]
  %v2481 = vld [vmem:[%s7 + $0x130c] sm:$0xff]
  %v2482 = vld [vmem:[%s7 + $0x1314] sm:$0xf]
  %v2483 = vld [vmem:[%s7 + $0x1318] sm:$0xff]
  %v2484 = vld [vmem:[%s7 + $0x1320] sm:$0xff]
  %v2485 = vld [vmem:[%s7 + $0x1328] sm:$0xff]
  %v2486 = vld [vmem:[%s7 + $0x1330] sm:$0xff]
  %v2487 = vld [vmem:[%s7 + $0x1338] sm:$0xff]
  %v2488 = vld [vmem:[%s7 + $0x1340] sm:$0xff]
  %v2489 = vld [vmem:[%s7 + $0x1348] sm:$0xf]
  %v2490 = vld [vmem:[%s7 + $0x134c] sm:$0xff]
  %v2491 = vld [vmem:[%s7 + $0x1354] sm:$0xff]
  %v2492 = vld [vmem:[%s7 + $0x135c] sm:$0xff]
  %v2493 = vld [vmem:[%s7 + $0x1364] sm:$0xff]
  %v2494 = vld [vmem:[%s7 + $0x136c] sm:$0xff]
  %v2495 = vld [vmem:[%s7 + $0x1374] sm:$0xff]
  %v2496 = vld [vmem:[%s7 + $0x137c] sm:$0xf]
  %v2497 = vld [vmem:[%s7 + $0x1380] sm:$0xff]
  %v2498 = vld [vmem:[%s7 + $0x1388] sm:$0xff]
  %v2499 = vld [vmem:[%s7 + $0x1390] sm:$0xff]
  %v2500 = vld [vmem:[%s7 + $0x1398] sm:$0xff]
  %v2501 = vld [vmem:[%s7 + $0x13a0] sm:$0xff]
  %v2502 = vld [vmem:[%s7 + $0x13a8] sm:$0xff]
  %v2503 = vld [vmem:[%s7 + $0x13b0] sm:$0xf]
  %v2504 = vld [vmem:[%s7 + $0x13b4] sm:$0xff]
  %v2505 = vld [vmem:[%s7 + $0x13bc] sm:$0xff]
  %v2506 = vld [vmem:[%s7 + $0x13c4] sm:$0xff]
  %v2507 = vld [vmem:[%s7 + $0x13cc] sm:$0xff]
  %v2508 = vld [vmem:[%s7 + $0x13d4] sm:$0xff]
  %v2509 = vld [vmem:[%s7 + $0x13dc] sm:$0xff]
  %v2510 = vld [vmem:[%s7 + $0x13e4] sm:$0xf]
  %v2511 = vld [vmem:[%s7 + $0x13e8] sm:$0xff]
  %v2512 = vld [vmem:[%s7 + $0x13f0] sm:$0xff]
  %v2513 = vld [vmem:[%s7 + $0x13f8] sm:$0xff]
  %v2514 = vld [vmem:[%s7 + $0x1400] sm:$0xff]
  %v2515 = vld [vmem:[%s7 + $0x1408] sm:$0xff]
  %v2516 = vld [vmem:[%s7 + $0x1410] sm:$0xff]
  %v2517 = vld [vmem:[%s7 + $0x1418] sm:$0xf]
  %v2518 = vld [vmem:[%s7 + $0x141c] sm:$0xff]
  %v2519 = vld [vmem:[%s7 + $0x1424] sm:$0xff]
  %v2520 = vld [vmem:[%s7 + $0x142c] sm:$0xff]
  %v2521 = vld [vmem:[%s7 + $0x1434] sm:$0xff]
  %v2522 = vld [vmem:[%s7 + $0x143c] sm:$0xff]
  %v2523 = vld [vmem:[%s7 + $0x1444] sm:$0xff]
  %v2524 = vld [vmem:[%s7 + $0x144c] sm:$0xf]
  %v2525 = vld [vmem:[%s7 + $0x1450] sm:$0xff]
  %v2526 = vld [vmem:[%s7 + $0x1458] sm:$0xff]
  %v2527 = vld [vmem:[%s7 + $0x1460] sm:$0xff]
  %v2528 = vld [vmem:[%s7 + $0x1468] sm:$0xff]
  %v2529 = vld [vmem:[%s7 + $0x1470] sm:$0xff]
  %v2530 = vld [vmem:[%s7 + $0x1478] sm:$0xff]
  %v2531 = vld [vmem:[%s7 + $0x1480] sm:$0xf]
  %v2532 = vld [vmem:[%s7 + $0x1484] sm:$0xff]
  %v2533 = vld [vmem:[%s7 + $0x148c] sm:$0xff]
  %v2534 = vld [vmem:[%s7 + $0x1494] sm:$0xff]
  %v2535 = vld [vmem:[%s7 + $0x149c] sm:$0xff]
  %v2536 = vld [vmem:[%s7 + $0x14a4] sm:$0xff]
  %v2537 = vld [vmem:[%s7 + $0x14ac] sm:$0xff]
  %v2538 = vld [vmem:[%s7 + $0x14b4] sm:$0xf]
  %v2539 = vld [vmem:[%s7 + $0x14b8] sm:$0xff]
  %v2540 = vld [vmem:[%s7 + $0x14c0] sm:$0xff]
  %v2541 = vld [vmem:[%s7 + $0x14c8] sm:$0xff]
  %v2542 = vld [vmem:[%s7 + $0x14d0] sm:$0xff]
  %v2543 = vld [vmem:[%s7 + $0x14d8] sm:$0xff]
  %v2544 = vld [vmem:[%s7 + $0x14e0] sm:$0xff]
  %v2545 = vld [vmem:[%s7 + $0x14e8] sm:$0xf]
  %v2546 = vld [vmem:[%s7 + $0x14ec] sm:$0xff]
  %v2547 = vld [vmem:[%s7 + $0x14f4] sm:$0xff]
  %v2548 = vld [vmem:[%s7 + $0x14fc] sm:$0xff]
  %v2549 = vld [vmem:[%s7 + $0x1504] sm:$0xff]
  %v2550 = vld [vmem:[%s7 + $0x150c] sm:$0xff]
  %v2551 = vld [vmem:[%s7 + $0x1514] sm:$0xff]
  %v2552 = vld [vmem:[%s7 + $0x151c] sm:$0xf]
  %v2553 = vld [vmem:[%s7 + $0x1520] sm:$0xff]
  %v2554 = vld [vmem:[%s7 + $0x1528] sm:$0xff]
  %v2555 = vld [vmem:[%s7 + $0x1530] sm:$0xff]
  %v2556 = vld [vmem:[%s7 + $0x1538] sm:$0xff]
  %v2557 = vld [vmem:[%s7 + $0x1540] sm:$0xff]
  %v2558 = vld [vmem:[%s7 + $0x1548] sm:$0xff]
  %v2559 = vld [vmem:[%s7 + $0x1550] sm:$0xf]
  %v2560 = vld [vmem:[%s7 + $0x1554] sm:$0xff]
  %v2561 = vld [vmem:[%s7 + $0x155c] sm:$0xff]
  %v2562 = vld [vmem:[%s7 + $0x1564] sm:$0xff]
  %v2563 = vld [vmem:[%s7 + $0x156c] sm:$0xff]
  %v2564 = vld [vmem:[%s7 + $0x1574] sm:$0xff]
  %v2565 = vld [vmem:[%s7 + $0x157c] sm:$0xff]
  %v2566 = vld [vmem:[%s7 + $0x1584] sm:$0xf]
  %v2567 = vld [vmem:[%s7 + $0x1588] sm:$0xff]
  %v2568 = vld [vmem:[%s7 + $0x1590] sm:$0xff]
  %v2569 = vld [vmem:[%s7 + $0x1598] sm:$0xff]
  %v2570 = vld [vmem:[%s7 + $0x15a0] sm:$0xff]
  %v2571 = vld [vmem:[%s7 + $0x15a8] sm:$0xff]
  %v2572 = vld [vmem:[%s7 + $0x15b0] sm:$0xff]
  %v2573 = vld [vmem:[%s7 + $0x15b8] sm:$0xf]
  %v2574 = vld [vmem:[%s7 + $0x15bc] sm:$0xff]
  %v2575 = vld [vmem:[%s7 + $0x15c4] sm:$0xff]
  %v2576 = vld [vmem:[%s7 + $0x15cc] sm:$0xff]
  %v2577 = vld [vmem:[%s7 + $0x15d4] sm:$0xff]
  %v2578 = vld [vmem:[%s7 + $0x15dc] sm:$0xff]
  %v2579 = vld [vmem:[%s7 + $0x15e4] sm:$0xff]
  %v2580 = vld [vmem:[%s7 + $0x15ec] sm:$0xf]
  %v2581 = vld [vmem:[%s7 + $0x15f0] sm:$0xff]
  %v2582 = vld [vmem:[%s7 + $0x15f8] sm:$0xff]
  %v2583 = vld [vmem:[%s7 + $0x1600] sm:$0xff]
  %v2584 = vld [vmem:[%s7 + $0x1608] sm:$0xff]
  %v2585 = vld [vmem:[%s7 + $0x1610] sm:$0xff]
  %v2586 = vld [vmem:[%s7 + $0x1618] sm:$0xff]
  %v2587 = vld [vmem:[%s7 + $0x1620] sm:$0xf]
  %v2588 = vld [vmem:[%s7 + $0x1624] sm:$0xff]
  %v2589 = vld [vmem:[%s7 + $0x162c] sm:$0xff]
  %v2590 = vld [vmem:[%s7 + $0x1634] sm:$0xff]
  %v2591 = vld [vmem:[%s7 + $0x163c] sm:$0xff]
  %v2592 = vld [vmem:[%s7 + $0x1644] sm:$0xff]
  %v2593 = vld [vmem:[%s7 + $0x164c] sm:$0xff]
  %v2594 = vld [vmem:[%s7 + $0x1654] sm:$0xf]
  %v2595 = vld [vmem:[%s7 + $0x1658] sm:$0xff]
  %v2596 = vld [vmem:[%s7 + $0x1660] sm:$0xff]
  %v2597 = vld [vmem:[%s7 + $0x1668] sm:$0xff]
  %v2598 = vld [vmem:[%s7 + $0x1670] sm:$0xff]
  %v2599 = vld [vmem:[%s7 + $0x1678] sm:$0xff]
  %v2600 = vld [vmem:[%s7 + $0x1680] sm:$0xff]
  %v2601 = vld [vmem:[%s7 + $0x1688] sm:$0xf]
  %v2602 = vld [vmem:[%s7 + $0x168c] sm:$0xff]
  %v2603 = vld [vmem:[%s7 + $0x1694] sm:$0xff]
  %v2604 = vld [vmem:[%s7 + $0x169c] sm:$0xff]
  %v2605 = vld [vmem:[%s7 + $0x16a4] sm:$0xff]
  %v2606 = vld [vmem:[%s7 + $0x16ac] sm:$0xff]
  %v2607 = vld [vmem:[%s7 + $0x16b4] sm:$0xff]
  %v2608 = vld [vmem:[%s7 + $0x16bc] sm:$0xf]
  %v2609 = vld [vmem:[%s8] sm:$0xff]
  %v2610 = vld [vmem:[%s8 + $0x8] sm:$0x1f]
  %v2613 = vlaneseq
  %v2614 = vshrl.u32 %v2613, 7
  %v2615 = vsub.s32 0, %v2614
  %v2616 = vrot.slane %v2609, %v2615
  %v2617 = vlaneseq
  %v2618 = vshrl.u32 %v2617, 7
  %v2619 = vsub.s32 1, %v2618
  %v2620 = vrot.slane %v2609, %v2619
  %v2621 = vlaneseq
  %v2622 = vshrl.u32 %v2621, 7
  %v2623 = vsub.s32 2, %v2622
  %v2624 = vrot.slane %v2609, %v2623
  %v2625 = vlaneseq
  %v2626 = vshrl.u32 %v2625, 7
  %v2627 = vsub.s32 3, %v2626
  %v2628 = vrot.slane %v2609, %v2627
  %v2629 = vlaneseq
  %v2630 = vshrl.u32 %v2629, 7
  %v2631 = vsub.s32 4, %v2630
  %v2632 = vrot.slane %v2609, %v2631
  %v2633 = vlaneseq
  %v2634 = vshrl.u32 %v2633, 7
  %v2635 = vsub.s32 5, %v2634
  %v2636 = vrot.slane %v2609, %v2635
  %v2637 = vlaneseq
  %v2638 = vshrl.u32 %v2637, 7
  %v2639 = vsub.s32 6, %v2638
  %v2640 = vrot.slane %v2609, %v2639
  %v2641 = vlaneseq
  %v2642 = vshrl.u32 %v2641, 7
  %v2643 = vsub.s32 7, %v2642
  %v2644 = vrot.slane %v2609, %v2643
  %v2645 = vlaneseq
  %v2646 = vshrl.u32 %v2645, 7
  %v2647 = vsub.s32 0, %v2646
  %v2648 = vrot.slane %v2610, %v2647
  %v2649 = vlaneseq
  %v2650 = vshrl.u32 %v2649, 7
  %v2651 = vsub.s32 1, %v2650
  %v2652 = vrot.slane %v2610, %v2651
  %v2653 = vlaneseq
  %v2654 = vshrl.u32 %v2653, 7
  %v2655 = vsub.s32 2, %v2654
  %v2656 = vrot.slane %v2610, %v2655
  %v2657 = vlaneseq
  %v2658 = vshrl.u32 %v2657, 7
  %v2659 = vsub.s32 3, %v2658
  %v2660 = vrot.slane %v2610, %v2659
  %v2661 = vlaneseq
  %v2662 = vshrl.u32 %v2661, 7
  %v2663 = vsub.s32 4, %v2662
  %v2664 = vrot.slane %v2610, %v2663
  %v3462 = vunpack.c.l.b16 %v1825
  %v3463 = vunpack.c.h.b16 %v1825
  %v3464 = vunpack.c.l.b16 %v1826
  %v3465 = vunpack.c.h.b16 %v1826
  %v3466 = vunpack.c.l.b16 %v1827
  %v3467 = vunpack.c.h.b16 %v1827
  %v3468 = vunpack.c.l.b16 %v1828
  %v3469 = vunpack.c.h.b16 %v1828
  %v3470 = vunpack.c.l.b16 %v1829
  %v3471 = vunpack.c.h.b16 %v1829
  %v3472 = vunpack.c.l.b16 %v1830
  %v3473 = vunpack.c.h.b16 %v1830
  %v3474 = vunpack.c.l.b16 %v1831
  %v3475 = vunpack.c.l.b16 %v1832
  %v3476 = vunpack.c.h.b16 %v1832
  %v3477 = vunpack.c.l.b16 %v1833
  %v3478 = vunpack.c.h.b16 %v1833
  %v3479 = vunpack.c.l.b16 %v1834
  %v3480 = vunpack.c.h.b16 %v1834
  %v3481 = vunpack.c.l.b16 %v1835
  %v3482 = vunpack.c.h.b16 %v1835
  %v3483 = vunpack.c.l.b16 %v1836
  %v3484 = vunpack.c.h.b16 %v1836
  %v3485 = vunpack.c.l.b16 %v1837
  %v3486 = vunpack.c.h.b16 %v1837
  %v3487 = vunpack.c.l.b16 %v1838
  %v3488 = vunpack.c.l.b16 %v1839
  %v3489 = vunpack.c.h.b16 %v1839
  %v3490 = vunpack.c.l.b16 %v1840
  %v3491 = vunpack.c.h.b16 %v1840
  %v3492 = vunpack.c.l.b16 %v1841
  %v3493 = vunpack.c.h.b16 %v1841
  %v3494 = vunpack.c.l.b16 %v1842
  %v3495 = vunpack.c.h.b16 %v1842
  %v3496 = vunpack.c.l.b16 %v1843
  %v3497 = vunpack.c.h.b16 %v1843
  %v3498 = vunpack.c.l.b16 %v1844
  %v3499 = vunpack.c.h.b16 %v1844
  %v3500 = vunpack.c.l.b16 %v1845
  %v3501 = vunpack.c.l.b16 %v1846
  %v3502 = vunpack.c.h.b16 %v1846
  %v3503 = vunpack.c.l.b16 %v1847
  %v3504 = vunpack.c.h.b16 %v1847
  %v3505 = vunpack.c.l.b16 %v1848
  %v3506 = vunpack.c.h.b16 %v1848
  %v3507 = vunpack.c.l.b16 %v1849
  %v3508 = vunpack.c.h.b16 %v1849
  %v3509 = vunpack.c.l.b16 %v1850
  %v3510 = vunpack.c.h.b16 %v1850
  %v3511 = vunpack.c.l.b16 %v1851
  %v3512 = vunpack.c.h.b16 %v1851
  %v3513 = vunpack.c.l.b16 %v1852
  %v3514 = vunpack.c.l.b16 %v1853
  %v3515 = vunpack.c.h.b16 %v1853
  %v3516 = vunpack.c.l.b16 %v1854
  %v3517 = vunpack.c.h.b16 %v1854
  %v3518 = vunpack.c.l.b16 %v1855
  %v3519 = vunpack.c.h.b16 %v1855
  %v3520 = vunpack.c.l.b16 %v1856
  %v3521 = vunpack.c.h.b16 %v1856
  %v3522 = vunpack.c.l.b16 %v1857
  %v3523 = vunpack.c.h.b16 %v1857
  %v3524 = vunpack.c.l.b16 %v1858
  %v3525 = vunpack.c.h.b16 %v1858
  %v3526 = vunpack.c.l.b16 %v1859
  %v3527 = vunpack.c.l.b16 %v1860
  %v3528 = vunpack.c.h.b16 %v1860
  %v3529 = vunpack.c.l.b16 %v1861
  %v3530 = vunpack.c.h.b16 %v1861
  %v3531 = vunpack.c.l.b16 %v1862
  %v3532 = vunpack.c.h.b16 %v1862
  %v3533 = vunpack.c.l.b16 %v1863
  %v3534 = vunpack.c.h.b16 %v1863
  %v3535 = vunpack.c.l.b16 %v1864
  %v3536 = vunpack.c.h.b16 %v1864
  %v3537 = vunpack.c.l.b16 %v1865
  %v3538 = vunpack.c.h.b16 %v1865
  %v3539 = vunpack.c.l.b16 %v1866
  %v3540 = vunpack.c.l.b16 %v1867
  %v3541 = vunpack.c.h.b16 %v1867
  %v3542 = vunpack.c.l.b16 %v1868
  %v3543 = vunpack.c.h.b16 %v1868
  %v3544 = vunpack.c.l.b16 %v1869
  %v3545 = vunpack.c.h.b16 %v1869
  %v3546 = vunpack.c.l.b16 %v1870
  %v3547 = vunpack.c.h.b16 %v1870
  %v3548 = vunpack.c.l.b16 %v1871
  %v3549 = vunpack.c.h.b16 %v1871
  %v3550 = vunpack.c.l.b16 %v1872
  %v3551 = vunpack.c.h.b16 %v1872
  %v3552 = vunpack.c.l.b16 %v1873
  %v3553 = vunpack.c.l.b16 %v1874
  %v3554 = vunpack.c.h.b16 %v1874
  %v3555 = vunpack.c.l.b16 %v1875
  %v3556 = vunpack.c.h.b16 %v1875
  %v3557 = vunpack.c.l.b16 %v1876
  %v3558 = vunpack.c.h.b16 %v1876
  %v3559 = vunpack.c.l.b16 %v1877
  %v3560 = vunpack.c.h.b16 %v1877
  %v3561 = vunpack.c.l.b16 %v1878
  %v3562 = vunpack.c.h.b16 %v1878
  %v3563 = vunpack.c.l.b16 %v1879
  %v3564 = vunpack.c.h.b16 %v1879
  %v3565 = vunpack.c.l.b16 %v1880
  %v3566 = vunpack.c.l.b16 %v1881
  %v3567 = vunpack.c.h.b16 %v1881
  %v3568 = vunpack.c.l.b16 %v1882
  %v3569 = vunpack.c.h.b16 %v1882
  %v3570 = vunpack.c.l.b16 %v1883
  %v3571 = vunpack.c.h.b16 %v1883
  %v3572 = vunpack.c.l.b16 %v1884
  %v3573 = vunpack.c.h.b16 %v1884
  %v3574 = vunpack.c.l.b16 %v1885
  %v3575 = vunpack.c.h.b16 %v1885
  %v3576 = vunpack.c.l.b16 %v1886
  %v3577 = vunpack.c.h.b16 %v1886
  %v3578 = vunpack.c.l.b16 %v1887
  %v3579 = vunpack.c.l.b16 %v1888
  %v3580 = vunpack.c.h.b16 %v1888
  %v3581 = vunpack.c.l.b16 %v1889
  %v3582 = vunpack.c.h.b16 %v1889
  %v3583 = vunpack.c.l.b16 %v1890
  %v3584 = vunpack.c.h.b16 %v1890
  %v3585 = vunpack.c.l.b16 %v1891
  %v3586 = vunpack.c.h.b16 %v1891
  %v3587 = vunpack.c.l.b16 %v1892
  %v3588 = vunpack.c.h.b16 %v1892
  %v3589 = vunpack.c.l.b16 %v1893
  %v3590 = vunpack.c.h.b16 %v1893
  %v3591 = vunpack.c.l.b16 %v1894
  %v3592 = vunpack.c.l.b16 %v1895
  %v3593 = vunpack.c.h.b16 %v1895
  %v3594 = vunpack.c.l.b16 %v1896
  %v3595 = vunpack.c.h.b16 %v1896
  %v3596 = vunpack.c.l.b16 %v1897
  %v3597 = vunpack.c.h.b16 %v1897
  %v3598 = vunpack.c.l.b16 %v1898
  %v3599 = vunpack.c.h.b16 %v1898
  %v3600 = vunpack.c.l.b16 %v1899
  %v3601 = vunpack.c.h.b16 %v1899
  %v3602 = vunpack.c.l.b16 %v1900
  %v3603 = vunpack.c.h.b16 %v1900
  %v3604 = vunpack.c.l.b16 %v1901
  %v3605 = vunpack.c.l.b16 %v1902
  %v3606 = vunpack.c.h.b16 %v1902
  %v3607 = vunpack.c.l.b16 %v1903
  %v3608 = vunpack.c.h.b16 %v1903
  %v3609 = vunpack.c.l.b16 %v1904
  %v3610 = vunpack.c.h.b16 %v1904
  %v3611 = vunpack.c.l.b16 %v1905
  %v3612 = vunpack.c.h.b16 %v1905
  %v3613 = vunpack.c.l.b16 %v1906
  %v3614 = vunpack.c.h.b16 %v1906
  %v3615 = vunpack.c.l.b16 %v1907
  %v3616 = vunpack.c.h.b16 %v1907
  %v3617 = vunpack.c.l.b16 %v1908
  %v3618 = vunpack.c.l.b16 %v1909
  %v3619 = vunpack.c.h.b16 %v1909
  %v3620 = vunpack.c.l.b16 %v1910
  %v3621 = vunpack.c.h.b16 %v1910
  %v3622 = vunpack.c.l.b16 %v1911
  %v3623 = vunpack.c.h.b16 %v1911
  %v3624 = vunpack.c.l.b16 %v1912
  %v3625 = vunpack.c.h.b16 %v1912
  %v3626 = vunpack.c.l.b16 %v1913
  %v3627 = vunpack.c.h.b16 %v1913
  %v3628 = vunpack.c.l.b16 %v1914
  %v3629 = vunpack.c.h.b16 %v1914
  %v3630 = vunpack.c.l.b16 %v1915
  %v3631 = vunpack.c.l.b16 %v1916
  %v3632 = vunpack.c.h.b16 %v1916
  %v3633 = vunpack.c.l.b16 %v1917
  %v3634 = vunpack.c.h.b16 %v1917
  %v3635 = vunpack.c.l.b16 %v1918
  %v3636 = vunpack.c.h.b16 %v1918
  %v3637 = vunpack.c.l.b16 %v1919
  %v3638 = vunpack.c.h.b16 %v1919
  %v3639 = vunpack.c.l.b16 %v1920
  %v3640 = vunpack.c.h.b16 %v1920
  %v3641 = vunpack.c.l.b16 %v1921
  %v3642 = vunpack.c.h.b16 %v1921
  %v3643 = vunpack.c.l.b16 %v1922
  %v3644 = vunpack.c.l.b16 %v1923
  %v3645 = vunpack.c.h.b16 %v1923
  %v3646 = vunpack.c.l.b16 %v1924
  %v3647 = vunpack.c.h.b16 %v1924
  %v3648 = vunpack.c.l.b16 %v1925
  %v3649 = vunpack.c.h.b16 %v1925
  %v3650 = vunpack.c.l.b16 %v1926
  %v3651 = vunpack.c.h.b16 %v1926
  %v3652 = vunpack.c.l.b16 %v1927
  %v3653 = vunpack.c.h.b16 %v1927
  %v3654 = vunpack.c.l.b16 %v1928
  %v3655 = vunpack.c.h.b16 %v1928
  %v3656 = vunpack.c.l.b16 %v1929
  %v3657 = vunpack.c.l.b16 %v1930
  %v3658 = vunpack.c.h.b16 %v1930
  %v3659 = vunpack.c.l.b16 %v1931
  %v3660 = vunpack.c.h.b16 %v1931
  %v3661 = vunpack.c.l.b16 %v1932
  %v3662 = vunpack.c.h.b16 %v1932
  %v3663 = vunpack.c.l.b16 %v1933
  %v3664 = vunpack.c.h.b16 %v1933
  %v3665 = vunpack.c.l.b16 %v1934
  %v3666 = vunpack.c.h.b16 %v1934
  %v3667 = vunpack.c.l.b16 %v1935
  %v3668 = vunpack.c.h.b16 %v1935
  %v3669 = vunpack.c.l.b16 %v1936
  %v3670 = vunpack.c.l.b16 %v1937
  %v3671 = vunpack.c.h.b16 %v1937
  %v3672 = vunpack.c.l.b16 %v1938
  %v3673 = vunpack.c.h.b16 %v1938
  %v3674 = vunpack.c.l.b16 %v1939
  %v3675 = vunpack.c.h.b16 %v1939
  %v3676 = vunpack.c.l.b16 %v1940
  %v3677 = vunpack.c.h.b16 %v1940
  %v3678 = vunpack.c.l.b16 %v1941
  %v3679 = vunpack.c.h.b16 %v1941
  %v3680 = vunpack.c.l.b16 %v1942
  %v3681 = vunpack.c.h.b16 %v1942
  %v3682 = vunpack.c.l.b16 %v1943
  %v3683 = vunpack.c.l.b16 %v1944
  %v3684 = vunpack.c.h.b16 %v1944
  %v3685 = vunpack.c.l.b16 %v1945
  %v3686 = vunpack.c.h.b16 %v1945
  %v3687 = vunpack.c.l.b16 %v1946
  %v3688 = vunpack.c.h.b16 %v1946
  %v3689 = vunpack.c.l.b16 %v1947
  %v3690 = vunpack.c.h.b16 %v1947
  %v3691 = vunpack.c.l.b16 %v1948
  %v3692 = vunpack.c.h.b16 %v1948
  %v3693 = vunpack.c.l.b16 %v1949
  %v3694 = vunpack.c.h.b16 %v1949
  %v3695 = vunpack.c.l.b16 %v1950
  %v3696 = vunpack.c.l.b16 %v1951
  %v3697 = vunpack.c.h.b16 %v1951
  %v3698 = vunpack.c.l.b16 %v1952
  %v3699 = vunpack.c.h.b16 %v1952
  %v3700 = vunpack.c.l.b16 %v1953
  %v3701 = vunpack.c.h.b16 %v1953
  %v3702 = vunpack.c.l.b16 %v1954
  %v3703 = vunpack.c.h.b16 %v1954
  %v3704 = vunpack.c.l.b16 %v1955
  %v3705 = vunpack.c.h.b16 %v1955
  %v3706 = vunpack.c.l.b16 %v1956
  %v3707 = vunpack.c.h.b16 %v1956
  %v3708 = vunpack.c.l.b16 %v1957
  %v3709 = vunpack.c.l.b16 %v1958
  %v3710 = vunpack.c.h.b16 %v1958
  %v3711 = vunpack.c.l.b16 %v1959
  %v3712 = vunpack.c.h.b16 %v1959
  %v3713 = vunpack.c.l.b16 %v1960
  %v3714 = vunpack.c.h.b16 %v1960
  %v3715 = vunpack.c.l.b16 %v1961
  %v3716 = vunpack.c.h.b16 %v1961
  %v3717 = vunpack.c.l.b16 %v1962
  %v3718 = vunpack.c.h.b16 %v1962
  %v3719 = vunpack.c.l.b16 %v1963
  %v3720 = vunpack.c.h.b16 %v1963
  %v3721 = vunpack.c.l.b16 %v1964
  %v3722 = vunpack.c.l.b16 %v1965
  %v3723 = vunpack.c.h.b16 %v1965
  %v3724 = vunpack.c.l.b16 %v1966
  %v3725 = vunpack.c.h.b16 %v1966
  %v3726 = vunpack.c.l.b16 %v1967
  %v3727 = vunpack.c.h.b16 %v1967
  %v3728 = vunpack.c.l.b16 %v1968
  %v3729 = vunpack.c.h.b16 %v1968
  %v3730 = vunpack.c.l.b16 %v1969
  %v3731 = vunpack.c.h.b16 %v1969
  %v3732 = vunpack.c.l.b16 %v1970
  %v3733 = vunpack.c.h.b16 %v1970
  %v3734 = vunpack.c.l.b16 %v1971
  %v3735 = vunpack.c.l.b16 %v1972
  %v3736 = vunpack.c.h.b16 %v1972
  %v3737 = vunpack.c.l.b16 %v1973
  %v3738 = vunpack.c.h.b16 %v1973
  %v3739 = vunpack.c.l.b16 %v1974
  %v3740 = vunpack.c.h.b16 %v1974
  %v3741 = vunpack.c.l.b16 %v1975
  %v3742 = vunpack.c.h.b16 %v1975
  %v3743 = vunpack.c.l.b16 %v1976
  %v3744 = vunpack.c.h.b16 %v1976
  %v3745 = vunpack.c.l.b16 %v1977
  %v3746 = vunpack.c.h.b16 %v1977
  %v3747 = vunpack.c.l.b16 %v1978
  %v3748 = vunpack.c.l.b16 %v1979
  %v3749 = vunpack.c.h.b16 %v1979
  %v3750 = vunpack.c.l.b16 %v1980
  %v3751 = vunpack.c.h.b16 %v1980
  %v3752 = vunpack.c.l.b16 %v1981
  %v3753 = vunpack.c.h.b16 %v1981
  %v3754 = vunpack.c.l.b16 %v1982
  %v3755 = vunpack.c.h.b16 %v1982
  %v3756 = vunpack.c.l.b16 %v1983
  %v3757 = vunpack.c.h.b16 %v1983
  %v3758 = vunpack.c.l.b16 %v1984
  %v3759 = vunpack.c.h.b16 %v1984
  %v3760 = vunpack.c.l.b16 %v1985
  %v3761 = vunpack.c.l.b16 %v1986
  %v3762 = vunpack.c.h.b16 %v1986
  %v3763 = vunpack.c.l.b16 %v1987
  %v3764 = vunpack.c.h.b16 %v1987
  %v3765 = vunpack.c.l.b16 %v1988
  %v3766 = vunpack.c.h.b16 %v1988
  %v3767 = vunpack.c.l.b16 %v1989
  %v3768 = vunpack.c.h.b16 %v1989
  %v3769 = vunpack.c.l.b16 %v1990
  %v3770 = vunpack.c.h.b16 %v1990
  %v3771 = vunpack.c.l.b16 %v1991
  %v3772 = vunpack.c.h.b16 %v1991
  %v3773 = vunpack.c.l.b16 %v1992
  %v3774 = vunpack.c.l.b16 %v1993
  %v3775 = vunpack.c.h.b16 %v1993
  %v3776 = vunpack.c.l.b16 %v1994
  %v3777 = vunpack.c.h.b16 %v1994
  %v3778 = vunpack.c.l.b16 %v1995
  %v3779 = vunpack.c.h.b16 %v1995
  %v3780 = vunpack.c.l.b16 %v1996
  %v3781 = vunpack.c.h.b16 %v1996
  %v3782 = vunpack.c.l.b16 %v1997
  %v3783 = vunpack.c.h.b16 %v1997
  %v3784 = vunpack.c.l.b16 %v1998
  %v3785 = vunpack.c.h.b16 %v1998
  %v3786 = vunpack.c.l.b16 %v1999
  %v3787 = vunpack.c.l.b16 %v2000
  %v3788 = vunpack.c.h.b16 %v2000
  %v3789 = vunpack.c.l.b16 %v2001
  %v3790 = vunpack.c.h.b16 %v2001
  %v3791 = vunpack.c.l.b16 %v2002
  %v3792 = vunpack.c.h.b16 %v2002
  %v3793 = vunpack.c.l.b16 %v2003
  %v3794 = vunpack.c.h.b16 %v2003
  %v3795 = vunpack.c.l.b16 %v2004
  %v3796 = vunpack.c.h.b16 %v2004
  %v3797 = vunpack.c.l.b16 %v2005
  %v3798 = vunpack.c.h.b16 %v2005
  %v3799 = vunpack.c.l.b16 %v2006
  %v3800 = vunpack.c.l.b16 %v2007
  %v3801 = vunpack.c.h.b16 %v2007
  %v3802 = vunpack.c.l.b16 %v2008
  %v3803 = vunpack.c.h.b16 %v2008
  %v3804 = vunpack.c.l.b16 %v2009
  %v3805 = vunpack.c.h.b16 %v2009
  %v3806 = vunpack.c.l.b16 %v2010
  %v3807 = vunpack.c.h.b16 %v2010
  %v3808 = vunpack.c.l.b16 %v2011
  %v3809 = vunpack.c.h.b16 %v2011
  %v3810 = vunpack.c.l.b16 %v2012
  %v3811 = vunpack.c.h.b16 %v2012
  %v3812 = vunpack.c.l.b16 %v2013
  %v3813 = vunpack.c.l.b16 %v2014
  %v3814 = vunpack.c.h.b16 %v2014
  %v3815 = vunpack.c.l.b16 %v2015
  %v3816 = vunpack.c.h.b16 %v2015
  %v3817 = vunpack.c.l.b16 %v2016
  %v3818 = vunpack.c.h.b16 %v2016
  %v3819 = vunpack.c.l.b16 %v2017
  %v3820 = vunpack.c.h.b16 %v2017
  %v3821 = vunpack.c.l.b16 %v2018
  %v3822 = vunpack.c.h.b16 %v2018
  %v3823 = vunpack.c.l.b16 %v2019
  %v3824 = vunpack.c.h.b16 %v2019
  %v3825 = vunpack.c.l.b16 %v2020
  %v3826 = vunpack.c.l.b16 %v2021
  %v3827 = vunpack.c.h.b16 %v2021
  %v3828 = vunpack.c.l.b16 %v2022
  %v3829 = vunpack.c.h.b16 %v2022
  %v3830 = vunpack.c.l.b16 %v2023
  %v3831 = vunpack.c.h.b16 %v2023
  %v3832 = vunpack.c.l.b16 %v2024
  %v3833 = vunpack.c.h.b16 %v2024
  %v3834 = vunpack.c.l.b16 %v2025
  %v3835 = vunpack.c.h.b16 %v2025
  %v3836 = vunpack.c.l.b16 %v2026
  %v3837 = vunpack.c.h.b16 %v2026
  %v3838 = vunpack.c.l.b16 %v2027
  %v3839 = vunpack.c.l.b16 %v2028
  %v3840 = vunpack.c.h.b16 %v2028
  %v3841 = vunpack.c.l.b16 %v2029
  %v3842 = vunpack.c.h.b16 %v2029
  %v3843 = vunpack.c.l.b16 %v2030
  %v3844 = vunpack.c.h.b16 %v2030
  %v3845 = vunpack.c.l.b16 %v2031
  %v3846 = vunpack.c.h.b16 %v2031
  %v3847 = vunpack.c.l.b16 %v2032
  %v3848 = vunpack.c.h.b16 %v2032
  %v3849 = vunpack.c.l.b16 %v2033
  %v3850 = vunpack.c.h.b16 %v2033
  %v3851 = vunpack.c.l.b16 %v2034
  %v3852 = vunpack.c.l.b16 %v2035
  %v3853 = vunpack.c.h.b16 %v2035
  %v3854 = vunpack.c.l.b16 %v2036
  %v3855 = vunpack.c.h.b16 %v2036
  %v3856 = vunpack.c.l.b16 %v2037
  %v3857 = vunpack.c.h.b16 %v2037
  %v3858 = vunpack.c.l.b16 %v2038
  %v3859 = vunpack.c.h.b16 %v2038
  %v3860 = vunpack.c.l.b16 %v2039
  %v3861 = vunpack.c.h.b16 %v2039
  %v3862 = vunpack.c.l.b16 %v2040
  %v3863 = vunpack.c.h.b16 %v2040
  %v3864 = vunpack.c.l.b16 %v2041
  %v3865 = vunpack.c.l.b16 %v2042
  %v3866 = vunpack.c.h.b16 %v2042
  %v3867 = vunpack.c.l.b16 %v2043
  %v3868 = vunpack.c.h.b16 %v2043
  %v3869 = vunpack.c.l.b16 %v2044
  %v3870 = vunpack.c.h.b16 %v2044
  %v3871 = vunpack.c.l.b16 %v2045
  %v3872 = vunpack.c.h.b16 %v2045
  %v3873 = vunpack.c.l.b16 %v2046
  %v3874 = vunpack.c.h.b16 %v2046
  %v3875 = vunpack.c.l.b16 %v2047
  %v3876 = vunpack.c.h.b16 %v2047
  %v3877 = vunpack.c.l.b16 %v2048
  %v3878 = vunpack.c.l.b16 %v2049
  %v3879 = vunpack.c.h.b16 %v2049
  %v3880 = vunpack.c.l.b16 %v2050
  %v3881 = vunpack.c.h.b16 %v2050
  %v3882 = vunpack.c.l.b16 %v2051
  %v3883 = vunpack.c.h.b16 %v2051
  %v3884 = vunpack.c.l.b16 %v2052
  %v3885 = vunpack.c.h.b16 %v2052
  %v3886 = vunpack.c.l.b16 %v2053
  %v3887 = vunpack.c.h.b16 %v2053
  %v3888 = vunpack.c.l.b16 %v2054
  %v3889 = vunpack.c.h.b16 %v2054
  %v3890 = vunpack.c.l.b16 %v2055
  %v3891 = vunpack.c.l.b16 %v2056
  %v3892 = vunpack.c.h.b16 %v2056
  %v3893 = vunpack.c.l.b16 %v2057
  %v3894 = vunpack.c.h.b16 %v2057
  %v3895 = vunpack.c.l.b16 %v2058
  %v3896 = vunpack.c.h.b16 %v2058
  %v3897 = vunpack.c.l.b16 %v2059
  %v3898 = vunpack.c.h.b16 %v2059
  %v3899 = vunpack.c.l.b16 %v2060
  %v3900 = vunpack.c.h.b16 %v2060
  %v3901 = vunpack.c.l.b16 %v2061
  %v3902 = vunpack.c.h.b16 %v2061
  %v3903 = vunpack.c.l.b16 %v2062
  %v3904 = vunpack.c.l.b16 %v2063
  %v3905 = vunpack.c.h.b16 %v2063
  %v3906 = vunpack.c.l.b16 %v2064
  %v3907 = vunpack.c.h.b16 %v2064
  %v3908 = vunpack.c.l.b16 %v2065
  %v3909 = vunpack.c.h.b16 %v2065
  %v3910 = vunpack.c.l.b16 %v2066
  %v3911 = vunpack.c.h.b16 %v2066
  %v3912 = vunpack.c.l.b16 %v2067
  %v3913 = vunpack.c.h.b16 %v2067
  %v3914 = vunpack.c.l.b16 %v2068
  %v3915 = vunpack.c.h.b16 %v2068
  %v3916 = vunpack.c.l.b16 %v2069
  %v3917 = vunpack.c.l.b16 %v2070
  %v3918 = vunpack.c.h.b16 %v2070
  %v3919 = vunpack.c.l.b16 %v2071
  %v3920 = vunpack.c.h.b16 %v2071
  %v3921 = vunpack.c.l.b16 %v2072
  %v3922 = vunpack.c.h.b16 %v2072
  %v3923 = vunpack.c.l.b16 %v2073
  %v3924 = vunpack.c.h.b16 %v2073
  %v3925 = vunpack.c.l.b16 %v2074
  %v3926 = vunpack.c.h.b16 %v2074
  %v3927 = vunpack.c.l.b16 %v2075
  %v3928 = vunpack.c.h.b16 %v2075
  %v3929 = vunpack.c.l.b16 %v2076
  %v3930 = vunpack.c.l.b16 %v2077
  %v3931 = vunpack.c.h.b16 %v2077
  %v3932 = vunpack.c.l.b16 %v2078
  %v3933 = vunpack.c.h.b16 %v2078
  %v3934 = vunpack.c.l.b16 %v2079
  %v3935 = vunpack.c.h.b16 %v2079
  %v3936 = vunpack.c.l.b16 %v2080
  %v3937 = vunpack.c.h.b16 %v2080
  %v3938 = vunpack.c.l.b16 %v2081
  %v3939 = vunpack.c.h.b16 %v2081
  %v3940 = vunpack.c.l.b16 %v2082
  %v3941 = vunpack.c.h.b16 %v2082
  %v3942 = vunpack.c.l.b16 %v2083
  %v3943 = vunpack.c.l.b16 %v2084
  %v3944 = vunpack.c.h.b16 %v2084
  %v3945 = vunpack.c.l.b16 %v2085
  %v3946 = vunpack.c.h.b16 %v2085
  %v3947 = vunpack.c.l.b16 %v2086
  %v3948 = vunpack.c.h.b16 %v2086
  %v3949 = vunpack.c.l.b16 %v2087
  %v3950 = vunpack.c.h.b16 %v2087
  %v3951 = vunpack.c.l.b16 %v2088
  %v3952 = vunpack.c.h.b16 %v2088
  %v3953 = vunpack.c.l.b16 %v2089
  %v3954 = vunpack.c.h.b16 %v2089
  %v3955 = vunpack.c.l.b16 %v2090
  %v3956 = vunpack.c.l.b16 %v2091
  %v3957 = vunpack.c.h.b16 %v2091
  %v3958 = vunpack.c.l.b16 %v2092
  %v3959 = vunpack.c.h.b16 %v2092
  %v3960 = vunpack.c.l.b16 %v2093
  %v3961 = vunpack.c.h.b16 %v2093
  %v3962 = vunpack.c.l.b16 %v2094
  %v3963 = vunpack.c.h.b16 %v2094
  %v3964 = vunpack.c.l.b16 %v2095
  %v3965 = vunpack.c.h.b16 %v2095
  %v3966 = vunpack.c.l.b16 %v2096
  %v3967 = vunpack.c.h.b16 %v2096
  %v3968 = vunpack.c.l.b16 %v2097
  %v3969 = vunpack.c.l.b16 %v2098
  %v3970 = vunpack.c.h.b16 %v2098
  %v3971 = vunpack.c.l.b16 %v2099
  %v3972 = vunpack.c.h.b16 %v2099
  %v3973 = vunpack.c.l.b16 %v2100
  %v3974 = vunpack.c.h.b16 %v2100
  %v3975 = vunpack.c.l.b16 %v2101
  %v3976 = vunpack.c.h.b16 %v2101
  %v3977 = vunpack.c.l.b16 %v2102
  %v3978 = vunpack.c.h.b16 %v2102
  %v3979 = vunpack.c.l.b16 %v2103
  %v3980 = vunpack.c.h.b16 %v2103
  %v3981 = vunpack.c.l.b16 %v2104
  %v3982 = vunpack.c.l.b16 %v2105
  %v3983 = vunpack.c.h.b16 %v2105
  %v3984 = vunpack.c.l.b16 %v2106
  %v3985 = vunpack.c.h.b16 %v2106
  %v3986 = vunpack.c.l.b16 %v2107
  %v3987 = vunpack.c.h.b16 %v2107
  %v3988 = vunpack.c.l.b16 %v2108
  %v3989 = vunpack.c.h.b16 %v2108
  %v3990 = vunpack.c.l.b16 %v2109
  %v3991 = vunpack.c.h.b16 %v2109
  %v3992 = vunpack.c.l.b16 %v2110
  %v3993 = vunpack.c.h.b16 %v2110
  %v3994 = vunpack.c.l.b16 %v2111
  %v3995 = vunpack.c.l.b16 %v2112
  %v3996 = vunpack.c.h.b16 %v2112
  %v3997 = vunpack.c.l.b16 %v2113
  %v3998 = vunpack.c.h.b16 %v2113
  %v3999 = vunpack.c.l.b16 %v2114
  %v4000 = vunpack.c.h.b16 %v2114
  %v4001 = vunpack.c.l.b16 %v2115
  %v4002 = vunpack.c.h.b16 %v2115
  %v4003 = vunpack.c.l.b16 %v2116
  %v4004 = vunpack.c.h.b16 %v2116
  %v4005 = vunpack.c.l.b16 %v2117
  %v4006 = vunpack.c.h.b16 %v2117
  %v4007 = vunpack.c.l.b16 %v2118
  %v4008 = vunpack.c.l.b16 %v2119
  %v4009 = vunpack.c.h.b16 %v2119
  %v4010 = vunpack.c.l.b16 %v2120
  %v4011 = vunpack.c.h.b16 %v2120
  %v4012 = vunpack.c.l.b16 %v2121
  %v4013 = vunpack.c.h.b16 %v2121
  %v4014 = vunpack.c.l.b16 %v2122
  %v4015 = vunpack.c.h.b16 %v2122
  %v4016 = vunpack.c.l.b16 %v2123
  %v4017 = vunpack.c.h.b16 %v2123
  %v4018 = vunpack.c.l.b16 %v2124
  %v4019 = vunpack.c.h.b16 %v2124
  %v4020 = vunpack.c.l.b16 %v2125
  %v4021 = vunpack.c.l.b16 %v2126
  %v4022 = vunpack.c.h.b16 %v2126
  %v4023 = vunpack.c.l.b16 %v2127
  %v4024 = vunpack.c.h.b16 %v2127
  %v4025 = vunpack.c.l.b16 %v2128
  %v4026 = vunpack.c.h.b16 %v2128
  %v4027 = vunpack.c.l.b16 %v2129
  %v4028 = vunpack.c.h.b16 %v2129
  %v4029 = vunpack.c.l.b16 %v2130
  %v4030 = vunpack.c.h.b16 %v2130
  %v4031 = vunpack.c.l.b16 %v2131
  %v4032 = vunpack.c.h.b16 %v2131
  %v4033 = vunpack.c.l.b16 %v2132
  %v4034 = vunpack.c.l.b16 %v2133
  %v4035 = vunpack.c.h.b16 %v2133
  %v4036 = vunpack.c.l.b16 %v2134
  %v4037 = vunpack.c.h.b16 %v2134
  %v4038 = vunpack.c.l.b16 %v2135
  %v4039 = vunpack.c.h.b16 %v2135
  %v4040 = vunpack.c.l.b16 %v2136
  %v4041 = vunpack.c.h.b16 %v2136
  %v4042 = vunpack.c.l.b16 %v2137
  %v4043 = vunpack.c.h.b16 %v2137
  %v4044 = vunpack.c.l.b16 %v2138
  %v4045 = vunpack.c.h.b16 %v2138
  %v4046 = vunpack.c.l.b16 %v2139
  %v4047 = vunpack.c.l.b16 %v2140
  %v4048 = vunpack.c.h.b16 %v2140
  %v4049 = vunpack.c.l.b16 %v2141
  %v4050 = vunpack.c.h.b16 %v2141
  %v4051 = vunpack.c.l.b16 %v2142
  %v4052 = vunpack.c.h.b16 %v2142
  %v4053 = vunpack.c.l.b16 %v2143
  %v4054 = vunpack.c.h.b16 %v2143
  %v4055 = vunpack.c.l.b16 %v2144
  %v4056 = vunpack.c.h.b16 %v2144
  %v4057 = vunpack.c.l.b16 %v2145
  %v4058 = vunpack.c.h.b16 %v2145
  %v4059 = vunpack.c.l.b16 %v2146
  %v4060 = vunpack.c.l.b16 %v2147
  %v4061 = vunpack.c.h.b16 %v2147
  %v4062 = vunpack.c.l.b16 %v2148
  %v4063 = vunpack.c.h.b16 %v2148
  %v4064 = vunpack.c.l.b16 %v2149
  %v4065 = vunpack.c.h.b16 %v2149
  %v4066 = vunpack.c.l.b16 %v2150
  %v4067 = vunpack.c.h.b16 %v2150
  %v4068 = vunpack.c.l.b16 %v2151
  %v4069 = vunpack.c.h.b16 %v2151
  %v4070 = vunpack.c.l.b16 %v2152
  %v4071 = vunpack.c.h.b16 %v2152
  %v4072 = vunpack.c.l.b16 %v2153
  %v4073 = vunpack.c.l.b16 %v2154
  %v4074 = vunpack.c.h.b16 %v2154
  %v4075 = vunpack.c.l.b16 %v2155
  %v4076 = vunpack.c.h.b16 %v2155
  %v4077 = vunpack.c.l.b16 %v2156
  %v4078 = vunpack.c.h.b16 %v2156
  %v4079 = vunpack.c.l.b16 %v2157
  %v4080 = vunpack.c.h.b16 %v2157
  %v4081 = vunpack.c.l.b16 %v2158
  %v4082 = vunpack.c.h.b16 %v2158
  %v4083 = vunpack.c.l.b16 %v2159
  %v4084 = vunpack.c.h.b16 %v2159
  %v4085 = vunpack.c.l.b16 %v2160
  %v4086 = vunpack.c.l.b16 %v2161
  %v4087 = vunpack.c.h.b16 %v2161
  %v4088 = vunpack.c.l.b16 %v2162
  %v4089 = vunpack.c.h.b16 %v2162
  %v4090 = vunpack.c.l.b16 %v2163
  %v4091 = vunpack.c.h.b16 %v2163
  %v4092 = vunpack.c.l.b16 %v2164
  %v4093 = vunpack.c.h.b16 %v2164
  %v4094 = vunpack.c.l.b16 %v2165
  %v4095 = vunpack.c.h.b16 %v2165
  %v4096 = vunpack.c.l.b16 %v2166
  %v4097 = vunpack.c.h.b16 %v2166
  %v4098 = vunpack.c.l.b16 %v2167
  %v4099 = vunpack.c.l.b16 %v2168
  %v4100 = vunpack.c.h.b16 %v2168
  %v4101 = vunpack.c.l.b16 %v2169
  %v4102 = vunpack.c.h.b16 %v2169
  %v4103 = vunpack.c.l.b16 %v2170
  %v4104 = vunpack.c.h.b16 %v2170
  %v4105 = vunpack.c.l.b16 %v2171
  %v4106 = vunpack.c.h.b16 %v2171
  %v4107 = vunpack.c.l.b16 %v2172
  %v4108 = vunpack.c.h.b16 %v2172
  %v4109 = vunpack.c.l.b16 %v2173
  %v4110 = vunpack.c.h.b16 %v2173
  %v4111 = vunpack.c.l.b16 %v2174
  %v4112 = vunpack.c.l.b16 %v2175
  %v4113 = vunpack.c.h.b16 %v2175
  %v4114 = vunpack.c.l.b16 %v2176
  %v4115 = vunpack.c.h.b16 %v2176
  %v4116 = vunpack.c.l.b16 %v2177
  %v4117 = vunpack.c.h.b16 %v2177
  %v4118 = vunpack.c.l.b16 %v2178
  %v4119 = vunpack.c.h.b16 %v2178
  %v4120 = vunpack.c.l.b16 %v2179
  %v4121 = vunpack.c.h.b16 %v2179
  %v4122 = vunpack.c.l.b16 %v2180
  %v4123 = vunpack.c.h.b16 %v2180
  %v4124 = vunpack.c.l.b16 %v2181
  %v4125 = vunpack.c.l.b16 %v2182
  %v4126 = vunpack.c.h.b16 %v2182
  %v4127 = vunpack.c.l.b16 %v2183
  %v4128 = vunpack.c.h.b16 %v2183
  %v4129 = vunpack.c.l.b16 %v2184
  %v4130 = vunpack.c.h.b16 %v2184
  %v4131 = vunpack.c.l.b16 %v2185
  %v4132 = vunpack.c.h.b16 %v2185
  %v4133 = vunpack.c.l.b16 %v2186
  %v4134 = vunpack.c.h.b16 %v2186
  %v4135 = vunpack.c.l.b16 %v2187
  %v4136 = vunpack.c.h.b16 %v2187
  %v4137 = vunpack.c.l.b16 %v2188
  %v4138 = vunpack.c.l.b16 %v2189
  %v4139 = vunpack.c.h.b16 %v2189
  %v4140 = vunpack.c.l.b16 %v2190
  %v4141 = vunpack.c.h.b16 %v2190
  %v4142 = vunpack.c.l.b16 %v2191
  %v4143 = vunpack.c.h.b16 %v2191
  %v4144 = vunpack.c.l.b16 %v2192
  %v4145 = vunpack.c.h.b16 %v2192
  %v4146 = vunpack.c.l.b16 %v2193
  %v4147 = vunpack.c.h.b16 %v2193
  %v4148 = vunpack.c.l.b16 %v2194
  %v4149 = vunpack.c.h.b16 %v2194
  %v4150 = vunpack.c.l.b16 %v2195
  %v4151 = vunpack.c.l.b16 %v2196
  %v4152 = vunpack.c.h.b16 %v2196
  %v4153 = vunpack.c.l.b16 %v2197
  %v4154 = vunpack.c.h.b16 %v2197
  %v4155 = vunpack.c.l.b16 %v2198
  %v4156 = vunpack.c.h.b16 %v2198
  %v4157 = vunpack.c.l.b16 %v2199
  %v4158 = vunpack.c.h.b16 %v2199
  %v4159 = vunpack.c.l.b16 %v2200
  %v4160 = vunpack.c.h.b16 %v2200
  %v4161 = vunpack.c.l.b16 %v2201
  %v4162 = vunpack.c.h.b16 %v2201
  %v4163 = vunpack.c.l.b16 %v2202
  %v4164 = vunpack.c.l.b16 %v2203
  %v4165 = vunpack.c.h.b16 %v2203
  %v4166 = vunpack.c.l.b16 %v2204
  %v4167 = vunpack.c.h.b16 %v2204
  %v4168 = vunpack.c.l.b16 %v2205
  %v4169 = vunpack.c.h.b16 %v2205
  %v4170 = vunpack.c.l.b16 %v2206
  %v4171 = vunpack.c.h.b16 %v2206
  %v4172 = vunpack.c.l.b16 %v2207
  %v4173 = vunpack.c.h.b16 %v2207
  %v4174 = vunpack.c.l.b16 %v2208
  %v4175 = vunpack.c.h.b16 %v2208
  %v4176 = vunpack.c.l.b16 %v2209
  %v4177 = vunpack.c.l.b16 %v2210
  %v4178 = vunpack.c.h.b16 %v2210
  %v4179 = vunpack.c.l.b16 %v2211
  %v4180 = vunpack.c.h.b16 %v2211
  %v4181 = vunpack.c.l.b16 %v2212
  %v4182 = vunpack.c.h.b16 %v2212
  %v4183 = vunpack.c.l.b16 %v2213
  %v4184 = vunpack.c.h.b16 %v2213
  %v4185 = vunpack.c.l.b16 %v2214
  %v4186 = vunpack.c.h.b16 %v2214
  %v4187 = vunpack.c.l.b16 %v2215
  %v4188 = vunpack.c.h.b16 %v2215
  %v4189 = vunpack.c.l.b16 %v2216
  %v4190 = vunpack.c.l.b16 %v2217
  %v4191 = vunpack.c.h.b16 %v2217
  %v4192 = vunpack.c.l.b16 %v2218
  %v4193 = vunpack.c.h.b16 %v2218
  %v4194 = vunpack.c.l.b16 %v2219
  %v4195 = vunpack.c.h.b16 %v2219
  %v4196 = vunpack.c.l.b16 %v2220
  %v4197 = vunpack.c.h.b16 %v2220
  %v4198 = vunpack.c.l.b16 %v2221
  %v4199 = vunpack.c.h.b16 %v2221
  %v4200 = vunpack.c.l.b16 %v2222
  %v4201 = vunpack.c.h.b16 %v2222
  %v4202 = vunpack.c.l.b16 %v2223
  %v4203 = vunpack.c.l.b16 %v2224
  %v4204 = vunpack.c.h.b16 %v2224
  %v4205 = vunpack.c.l.b16 %v2225
  %v4206 = vunpack.c.h.b16 %v2225
  %v4207 = vunpack.c.l.b16 %v2226
  %v4208 = vunpack.c.h.b16 %v2226
  %v4209 = vunpack.c.l.b16 %v2227
  %v4210 = vunpack.c.h.b16 %v2227
  %v4211 = vunpack.c.l.b16 %v2228
  %v4212 = vunpack.c.h.b16 %v2228
  %v4213 = vunpack.c.l.b16 %v2229
  %v4214 = vunpack.c.h.b16 %v2229
  %v4215 = vunpack.c.l.b16 %v2230
  %v4216 = vunpack.c.l.b16 %v2231
  %v4217 = vunpack.c.h.b16 %v2231
  %v4218 = vunpack.c.l.b16 %v2232
  %v4219 = vunpack.c.h.b16 %v2232
  %v4220 = vunpack.c.l.b16 %v2233
  %v4221 = vunpack.c.h.b16 %v2233
  %v4222 = vunpack.c.l.b16 %v2234
  %v4223 = vunpack.c.h.b16 %v2234
  %v4224 = vunpack.c.l.b16 %v2235
  %v4225 = vunpack.c.h.b16 %v2235
  %v4226 = vunpack.c.l.b16 %v2236
  %v4227 = vunpack.c.h.b16 %v2236
  %v4228 = vunpack.c.l.b16 %v2237
  %v4229 = vunpack.c.l.b16 %v2238
  %v4230 = vunpack.c.h.b16 %v2238
  %v4231 = vunpack.c.l.b16 %v2239
  %v4232 = vunpack.c.h.b16 %v2239
  %v4233 = vunpack.c.l.b16 %v2240
  %v4234 = vunpack.c.h.b16 %v2240
  %v4235 = vunpack.c.l.b16 %v2241
  %v4236 = vunpack.c.h.b16 %v2241
  %v4237 = vunpack.c.l.b16 %v2242
  %v4238 = vunpack.c.h.b16 %v2242
  %v4239 = vunpack.c.l.b16 %v2243
  %v4240 = vunpack.c.h.b16 %v2243
  %v4241 = vunpack.c.l.b16 %v2244
  %v4242 = vunpack.c.l.b16 %v2245
  %v4243 = vunpack.c.h.b16 %v2245
  %v4244 = vunpack.c.l.b16 %v2246
  %v4245 = vunpack.c.h.b16 %v2246
  %v4246 = vunpack.c.l.b16 %v2247
  %v4247 = vunpack.c.h.b16 %v2247
  %v4248 = vunpack.c.l.b16 %v2248
  %v4249 = vunpack.c.h.b16 %v2248
  %v4250 = vunpack.c.l.b16 %v2249
  %v4251 = vunpack.c.h.b16 %v2249
  %v4252 = vunpack.c.l.b16 %v2250
  %v4253 = vunpack.c.h.b16 %v2250
  %v4254 = vunpack.c.l.b16 %v2251
  %v4255 = vunpack.c.l.b16 %v2252
  %v4256 = vunpack.c.h.b16 %v2252
  %v4257 = vunpack.c.l.b16 %v2253
  %v4258 = vunpack.c.h.b16 %v2253
  %v4259 = vunpack.c.l.b16 %v2254
  %v4260 = vunpack.c.h.b16 %v2254
  %v4261 = vunpack.c.l.b16 %v2255
  %v4262 = vunpack.c.h.b16 %v2255
  %v4263 = vunpack.c.l.b16 %v2256
  %v4264 = vunpack.c.h.b16 %v2256
  %v4265 = vunpack.c.l.b16 %v2257
  %v4266 = vunpack.c.h.b16 %v2257
  %v4267 = vunpack.c.l.b16 %v2258
  %v4268 = vunpack.c.l.b16 %v2259
  %v4269 = vunpack.c.h.b16 %v2259
  %v4270 = vunpack.c.l.b16 %v2260
  %v4271 = vunpack.c.h.b16 %v2260
  %v4272 = vunpack.c.l.b16 %v2261
  %v4273 = vunpack.c.h.b16 %v2261
  %v4274 = vunpack.c.l.b16 %v2262
  %v4275 = vunpack.c.h.b16 %v2262
  %v4276 = vunpack.c.l.b16 %v2263
  %v4277 = vunpack.c.h.b16 %v2263
  %v4278 = vunpack.c.l.b16 %v2264
  %v4279 = vunpack.c.h.b16 %v2264
  %v4280 = vunpack.c.l.b16 %v2265
  %v4281 = vunpack.c.l.b16 %v2266
  %v4282 = vunpack.c.h.b16 %v2266
  %v4283 = vunpack.c.l.b16 %v2267
  %v4284 = vunpack.c.h.b16 %v2267
  %v4285 = vunpack.c.l.b16 %v2268
  %v4286 = vunpack.c.h.b16 %v2268
  %v4287 = vunpack.c.l.b16 %v2269
  %v4288 = vunpack.c.h.b16 %v2269
  %v4289 = vunpack.c.l.b16 %v2270
  %v4290 = vunpack.c.h.b16 %v2270
  %v4291 = vunpack.c.l.b16 %v2271
  %v4292 = vunpack.c.h.b16 %v2271
  %v4293 = vunpack.c.l.b16 %v2272
  %v4294 = vunpack.c.l.b16 %v2273
  %v4295 = vunpack.c.h.b16 %v2273
  %v4296 = vunpack.c.l.b16 %v2274
  %v4297 = vunpack.c.h.b16 %v2274
  %v4298 = vunpack.c.l.b16 %v2275
  %v4299 = vunpack.c.h.b16 %v2275
  %v4300 = vunpack.c.l.b16 %v2276
  %v4301 = vunpack.c.h.b16 %v2276
  %v4302 = vunpack.c.l.b16 %v2277
  %v4303 = vunpack.c.h.b16 %v2277
  %v4304 = vunpack.c.l.b16 %v2278
  %v4305 = vunpack.c.h.b16 %v2278
  %v4306 = vunpack.c.l.b16 %v2279
  %v4307 = vunpack.c.l.b16 %v2280
  %v4308 = vunpack.c.h.b16 %v2280
  %v4309 = vunpack.c.l.b16 %v2281
  %v4310 = vunpack.c.h.b16 %v2281
  %v4311 = vunpack.c.l.b16 %v2282
  %v4312 = vunpack.c.h.b16 %v2282
  %v4313 = vunpack.c.l.b16 %v2283
  %v4314 = vunpack.c.h.b16 %v2283
  %v4315 = vunpack.c.l.b16 %v2284
  %v4316 = vunpack.c.h.b16 %v2284
  %v4317 = vunpack.c.l.b16 %v2285
  %v4318 = vunpack.c.h.b16 %v2285
  %v4319 = vunpack.c.l.b16 %v2286
  %v4320 = vunpack.c.l.b16 %v2287
  %v4321 = vunpack.c.h.b16 %v2287
  %v4322 = vunpack.c.l.b16 %v2288
  %v4323 = vunpack.c.h.b16 %v2288
  %v4324 = vunpack.c.l.b16 %v2289
  %v4325 = vunpack.c.h.b16 %v2289
  %v4326 = vunpack.c.l.b16 %v2290
  %v4327 = vunpack.c.h.b16 %v2290
  %v4328 = vunpack.c.l.b16 %v2291
  %v4329 = vunpack.c.h.b16 %v2291
  %v4330 = vunpack.c.l.b16 %v2292
  %v4331 = vunpack.c.h.b16 %v2292
  %v4332 = vunpack.c.l.b16 %v2293
  %v4333 = vunpack.c.l.b16 %v2294
  %v4334 = vunpack.c.h.b16 %v2294
  %v4335 = vunpack.c.l.b16 %v2295
  %v4336 = vunpack.c.h.b16 %v2295
  %v4337 = vunpack.c.l.b16 %v2296
  %v4338 = vunpack.c.h.b16 %v2296
  %v4339 = vunpack.c.l.b16 %v2297
  %v4340 = vunpack.c.h.b16 %v2297
  %v4341 = vunpack.c.l.b16 %v2298
  %v4342 = vunpack.c.h.b16 %v2298
  %v4343 = vunpack.c.l.b16 %v2299
  %v4344 = vunpack.c.h.b16 %v2299
  %v4345 = vunpack.c.l.b16 %v2300
  %v4346 = vunpack.c.l.b16 %v2301
  %v4347 = vunpack.c.h.b16 %v2301
  %v4348 = vunpack.c.l.b16 %v2302
  %v4349 = vunpack.c.h.b16 %v2302
  %v4350 = vunpack.c.l.b16 %v2303
  %v4351 = vunpack.c.h.b16 %v2303
  %v4352 = vunpack.c.l.b16 %v2304
  %v4353 = vunpack.c.h.b16 %v2304
  %v4354 = vunpack.c.l.b16 %v2305
  %v4355 = vunpack.c.h.b16 %v2305
  %v4356 = vunpack.c.l.b16 %v2306
  %v4357 = vunpack.c.h.b16 %v2306
  %v4358 = vunpack.c.l.b16 %v2307
  %v4359 = vunpack.c.l.b16 %v2308
  %v4360 = vunpack.c.h.b16 %v2308
  %v4361 = vunpack.c.l.b16 %v2309
  %v4362 = vunpack.c.h.b16 %v2309
  %v4363 = vunpack.c.l.b16 %v2310
  %v4364 = vunpack.c.h.b16 %v2310
  %v4365 = vunpack.c.l.b16 %v2311
  %v4366 = vunpack.c.h.b16 %v2311
  %v4367 = vunpack.c.l.b16 %v2312
  %v4368 = vunpack.c.h.b16 %v2312
  %v4369 = vunpack.c.l.b16 %v2313
  %v4370 = vunpack.c.h.b16 %v2313
  %v4371 = vunpack.c.l.b16 %v2314
  %v4372 = vunpack.c.l.b16 %v2315
  %v4373 = vunpack.c.h.b16 %v2315
  %v4374 = vunpack.c.l.b16 %v2316
  %v4375 = vunpack.c.h.b16 %v2316
  %v4376 = vunpack.c.l.b16 %v2317
  %v4377 = vunpack.c.h.b16 %v2317
  %v4378 = vunpack.c.l.b16 %v2318
  %v4379 = vunpack.c.h.b16 %v2318
  %v4380 = vunpack.c.l.b16 %v2319
  %v4381 = vunpack.c.h.b16 %v2319
  %v4382 = vunpack.c.l.b16 %v2320
  %v4383 = vunpack.c.h.b16 %v2320
  %v4384 = vunpack.c.l.b16 %v2321
  %v4385 = vunpack.c.l.b16 %v2322
  %v4386 = vunpack.c.h.b16 %v2322
  %v4387 = vunpack.c.l.b16 %v2323
  %v4388 = vunpack.c.h.b16 %v2323
  %v4389 = vunpack.c.l.b16 %v2324
  %v4390 = vunpack.c.h.b16 %v2324
  %v4391 = vunpack.c.l.b16 %v2325
  %v4392 = vunpack.c.h.b16 %v2325
  %v4393 = vunpack.c.l.b16 %v2326
  %v4394 = vunpack.c.h.b16 %v2326
  %v4395 = vunpack.c.l.b16 %v2327
  %v4396 = vunpack.c.h.b16 %v2327
  %v4397 = vunpack.c.l.b16 %v2328
  %v4398 = vunpack.c.l.b16 %v2329
  %v4399 = vunpack.c.h.b16 %v2329
  %v4400 = vunpack.c.l.b16 %v2330
  %v4401 = vunpack.c.h.b16 %v2330
  %v4402 = vunpack.c.l.b16 %v2331
  %v4403 = vunpack.c.h.b16 %v2331
  %v4404 = vunpack.c.l.b16 %v2332
  %v4405 = vunpack.c.h.b16 %v2332
  %v4406 = vunpack.c.l.b16 %v2333
  %v4407 = vunpack.c.h.b16 %v2333
  %v4408 = vunpack.c.l.b16 %v2334
  %v4409 = vunpack.c.h.b16 %v2334
  %v4410 = vunpack.c.l.b16 %v2335
  %v4411 = vunpack.c.l.b16 %v2336
  %v4412 = vunpack.c.h.b16 %v2336
  %v4413 = vunpack.c.l.b16 %v2337
  %v4414 = vunpack.c.h.b16 %v2337
  %v4415 = vunpack.c.l.b16 %v2338
  %v4416 = vunpack.c.h.b16 %v2338
  %v4417 = vunpack.c.l.b16 %v2339
  %v4418 = vunpack.c.h.b16 %v2339
  %v4419 = vunpack.c.l.b16 %v2340
  %v4420 = vunpack.c.h.b16 %v2340
  %v4421 = vunpack.c.l.b16 %v2341
  %v4422 = vunpack.c.h.b16 %v2341
  %v4423 = vunpack.c.l.b16 %v2342
  %v4424 = vunpack.c.l.b16 %v2343
  %v4425 = vunpack.c.h.b16 %v2343
  %v4426 = vunpack.c.l.b16 %v2344
  %v4427 = vunpack.c.h.b16 %v2344
  %v4428 = vunpack.c.l.b16 %v2345
  %v4429 = vunpack.c.h.b16 %v2345
  %v4430 = vunpack.c.l.b16 %v2346
  %v4431 = vunpack.c.h.b16 %v2346
  %v4432 = vunpack.c.l.b16 %v2347
  %v4433 = vunpack.c.h.b16 %v2347
  %v4434 = vunpack.c.l.b16 %v2348
  %v4435 = vunpack.c.h.b16 %v2348
  %v4436 = vunpack.c.l.b16 %v2349
  %v4437 = vunpack.c.l.b16 %v2350
  %v4438 = vunpack.c.h.b16 %v2350
  %v4439 = vunpack.c.l.b16 %v2351
  %v4440 = vunpack.c.h.b16 %v2351
  %v4441 = vunpack.c.l.b16 %v2352
  %v4442 = vunpack.c.h.b16 %v2352
  %v4443 = vunpack.c.l.b16 %v2353
  %v4444 = vunpack.c.h.b16 %v2353
  %v4445 = vunpack.c.l.b16 %v2354
  %v4446 = vunpack.c.h.b16 %v2354
  %v4447 = vunpack.c.l.b16 %v2355
  %v4448 = vunpack.c.h.b16 %v2355
  %v4449 = vunpack.c.l.b16 %v2356
  %v4450 = vunpack.c.l.b16 %v2357
  %v4451 = vunpack.c.h.b16 %v2357
  %v4452 = vunpack.c.l.b16 %v2358
  %v4453 = vunpack.c.h.b16 %v2358
  %v4454 = vunpack.c.l.b16 %v2359
  %v4455 = vunpack.c.h.b16 %v2359
  %v4456 = vunpack.c.l.b16 %v2360
  %v4457 = vunpack.c.h.b16 %v2360
  %v4458 = vunpack.c.l.b16 %v2361
  %v4459 = vunpack.c.h.b16 %v2361
  %v4460 = vunpack.c.l.b16 %v2362
  %v4461 = vunpack.c.h.b16 %v2362
  %v4462 = vunpack.c.l.b16 %v2363
  %v4463 = vunpack.c.l.b16 %v2364
  %v4464 = vunpack.c.h.b16 %v2364
  %v4465 = vunpack.c.l.b16 %v2365
  %v4466 = vunpack.c.h.b16 %v2365
  %v4467 = vunpack.c.l.b16 %v2366
  %v4468 = vunpack.c.h.b16 %v2366
  %v4469 = vunpack.c.l.b16 %v2367
  %v4470 = vunpack.c.h.b16 %v2367
  %v4471 = vunpack.c.l.b16 %v2368
  %v4472 = vunpack.c.h.b16 %v2368
  %v4473 = vunpack.c.l.b16 %v2369
  %v4474 = vunpack.c.h.b16 %v2369
  %v4475 = vunpack.c.l.b16 %v2370
  %v4476 = vunpack.c.l.b16 %v2371
  %v4477 = vunpack.c.h.b16 %v2371
  %v4478 = vunpack.c.l.b16 %v2372
  %v4479 = vunpack.c.h.b16 %v2372
  %v4480 = vunpack.c.l.b16 %v2373
  %v4481 = vunpack.c.h.b16 %v2373
  %v4482 = vunpack.c.l.b16 %v2374
  %v4483 = vunpack.c.h.b16 %v2374
  %v4484 = vunpack.c.l.b16 %v2375
  %v4485 = vunpack.c.h.b16 %v2375
  %v4486 = vunpack.c.l.b16 %v2376
  %v4487 = vunpack.c.h.b16 %v2376
  %v4488 = vunpack.c.l.b16 %v2377
  %v4489 = vunpack.c.l.b16 %v2378
  %v4490 = vunpack.c.h.b16 %v2378
  %v4491 = vunpack.c.l.b16 %v2379
  %v4492 = vunpack.c.h.b16 %v2379
  %v4493 = vunpack.c.l.b16 %v2380
  %v4494 = vunpack.c.h.b16 %v2380
  %v4495 = vunpack.c.l.b16 %v2381
  %v4496 = vunpack.c.h.b16 %v2381
  %v4497 = vunpack.c.l.b16 %v2382
  %v4498 = vunpack.c.h.b16 %v2382
  %v4499 = vunpack.c.l.b16 %v2383
  %v4500 = vunpack.c.h.b16 %v2383
  %v4501 = vunpack.c.l.b16 %v2384
  %v4502 = vunpack.c.l.b16 %v2385
  %v4503 = vunpack.c.h.b16 %v2385
  %v4504 = vunpack.c.l.b16 %v2386
  %v4505 = vunpack.c.h.b16 %v2386
  %v4506 = vunpack.c.l.b16 %v2387
  %v4507 = vunpack.c.h.b16 %v2387
  %v4508 = vunpack.c.l.b16 %v2388
  %v4509 = vunpack.c.h.b16 %v2388
  %v4510 = vunpack.c.l.b16 %v2389
  %v4511 = vunpack.c.h.b16 %v2389
  %v4512 = vunpack.c.l.b16 %v2390
  %v4513 = vunpack.c.h.b16 %v2390
  %v4514 = vunpack.c.l.b16 %v2391
  %v4515 = vunpack.c.l.b16 %v2392
  %v4516 = vunpack.c.h.b16 %v2392
  %v4517 = vunpack.c.l.b16 %v2393
  %v4518 = vunpack.c.h.b16 %v2393
  %v4519 = vunpack.c.l.b16 %v2394
  %v4520 = vunpack.c.h.b16 %v2394
  %v4521 = vunpack.c.l.b16 %v2395
  %v4522 = vunpack.c.h.b16 %v2395
  %v4523 = vunpack.c.l.b16 %v2396
  %v4524 = vunpack.c.h.b16 %v2396
  %v4525 = vunpack.c.l.b16 %v2397
  %v4526 = vunpack.c.h.b16 %v2397
  %v4527 = vunpack.c.l.b16 %v2398
  %v4528 = vunpack.c.l.b16 %v2399
  %v4529 = vunpack.c.h.b16 %v2399
  %v4530 = vunpack.c.l.b16 %v2400
  %v4531 = vunpack.c.h.b16 %v2400
  %v4532 = vunpack.c.l.b16 %v2401
  %v4533 = vunpack.c.h.b16 %v2401
  %v4534 = vunpack.c.l.b16 %v2402
  %v4535 = vunpack.c.h.b16 %v2402
  %v4536 = vunpack.c.l.b16 %v2403
  %v4537 = vunpack.c.h.b16 %v2403
  %v4538 = vunpack.c.l.b16 %v2404
  %v4539 = vunpack.c.h.b16 %v2404
  %v4540 = vunpack.c.l.b16 %v2405
  %v4541 = vunpack.c.l.b16 %v2406
  %v4542 = vunpack.c.h.b16 %v2406
  %v4543 = vunpack.c.l.b16 %v2407
  %v4544 = vunpack.c.h.b16 %v2407
  %v4545 = vunpack.c.l.b16 %v2408
  %v4546 = vunpack.c.h.b16 %v2408
  %v4547 = vunpack.c.l.b16 %v2409
  %v4548 = vunpack.c.h.b16 %v2409
  %v4549 = vunpack.c.l.b16 %v2410
  %v4550 = vunpack.c.h.b16 %v2410
  %v4551 = vunpack.c.l.b16 %v2411
  %v4552 = vunpack.c.h.b16 %v2411
  %v4553 = vunpack.c.l.b16 %v2412
  %v4554 = vunpack.c.l.b16 %v2413
  %v4555 = vunpack.c.h.b16 %v2413
  %v4556 = vunpack.c.l.b16 %v2414
  %v4557 = vunpack.c.h.b16 %v2414
  %v4558 = vunpack.c.l.b16 %v2415
  %v4559 = vunpack.c.h.b16 %v2415
  %v4560 = vunpack.c.l.b16 %v2416
  %v4561 = vunpack.c.h.b16 %v2416
  %v4562 = vunpack.c.l.b16 %v2417
  %v4563 = vunpack.c.h.b16 %v2417
  %v4564 = vunpack.c.l.b16 %v2418
  %v4565 = vunpack.c.h.b16 %v2418
  %v4566 = vunpack.c.l.b16 %v2419
  %v4567 = vunpack.c.l.b16 %v2420
  %v4568 = vunpack.c.h.b16 %v2420
  %v4569 = vunpack.c.l.b16 %v2421
  %v4570 = vunpack.c.h.b16 %v2421
  %v4571 = vunpack.c.l.b16 %v2422
  %v4572 = vunpack.c.h.b16 %v2422
  %v4573 = vunpack.c.l.b16 %v2423
  %v4574 = vunpack.c.h.b16 %v2423
  %v4575 = vunpack.c.l.b16 %v2424
  %v4576 = vunpack.c.h.b16 %v2424
  %v4577 = vunpack.c.l.b16 %v2425
  %v4578 = vunpack.c.h.b16 %v2425
  %v4579 = vunpack.c.l.b16 %v2426
  %v4580 = vunpack.c.l.b16 %v2427
  %v4581 = vunpack.c.h.b16 %v2427
  %v4582 = vunpack.c.l.b16 %v2428
  %v4583 = vunpack.c.h.b16 %v2428
  %v4584 = vunpack.c.l.b16 %v2429
  %v4585 = vunpack.c.h.b16 %v2429
  %v4586 = vunpack.c.l.b16 %v2430
  %v4587 = vunpack.c.h.b16 %v2430
  %v4588 = vunpack.c.l.b16 %v2431
  %v4589 = vunpack.c.h.b16 %v2431
  %v4590 = vunpack.c.l.b16 %v2432
  %v4591 = vunpack.c.h.b16 %v2432
  %v4592 = vunpack.c.l.b16 %v2433
  %v4593 = vunpack.c.l.b16 %v2434
  %v4594 = vunpack.c.h.b16 %v2434
  %v4595 = vunpack.c.l.b16 %v2435
  %v4596 = vunpack.c.h.b16 %v2435
  %v4597 = vunpack.c.l.b16 %v2436
  %v4598 = vunpack.c.h.b16 %v2436
  %v4599 = vunpack.c.l.b16 %v2437
  %v4600 = vunpack.c.h.b16 %v2437
  %v4601 = vunpack.c.l.b16 %v2438
  %v4602 = vunpack.c.h.b16 %v2438
  %v4603 = vunpack.c.l.b16 %v2439
  %v4604 = vunpack.c.h.b16 %v2439
  %v4605 = vunpack.c.l.b16 %v2440
  %v4606 = vunpack.c.l.b16 %v2441
  %v4607 = vunpack.c.h.b16 %v2441
  %v4608 = vunpack.c.l.b16 %v2442
  %v4609 = vunpack.c.h.b16 %v2442
  %v4610 = vunpack.c.l.b16 %v2443
  %v4611 = vunpack.c.h.b16 %v2443
  %v4612 = vunpack.c.l.b16 %v2444
  %v4613 = vunpack.c.h.b16 %v2444
  %v4614 = vunpack.c.l.b16 %v2445
  %v4615 = vunpack.c.h.b16 %v2445
  %v4616 = vunpack.c.l.b16 %v2446
  %v4617 = vunpack.c.h.b16 %v2446
  %v4618 = vunpack.c.l.b16 %v2447
  %v4619 = vunpack.c.l.b16 %v2448
  %v4620 = vunpack.c.h.b16 %v2448
  %v4621 = vunpack.c.l.b16 %v2449
  %v4622 = vunpack.c.h.b16 %v2449
  %v4623 = vunpack.c.l.b16 %v2450
  %v4624 = vunpack.c.h.b16 %v2450
  %v4625 = vunpack.c.l.b16 %v2451
  %v4626 = vunpack.c.h.b16 %v2451
  %v4627 = vunpack.c.l.b16 %v2452
  %v4628 = vunpack.c.h.b16 %v2452
  %v4629 = vunpack.c.l.b16 %v2453
  %v4630 = vunpack.c.h.b16 %v2453
  %v4631 = vunpack.c.l.b16 %v2454
  %v4632 = vunpack.c.l.b16 %v2455
  %v4633 = vunpack.c.h.b16 %v2455
  %v4634 = vunpack.c.l.b16 %v2456
  %v4635 = vunpack.c.h.b16 %v2456
  %v4636 = vunpack.c.l.b16 %v2457
  %v4637 = vunpack.c.h.b16 %v2457
  %v4638 = vunpack.c.l.b16 %v2458
  %v4639 = vunpack.c.h.b16 %v2458
  %v4640 = vunpack.c.l.b16 %v2459
  %v4641 = vunpack.c.h.b16 %v2459
  %v4642 = vunpack.c.l.b16 %v2460
  %v4643 = vunpack.c.h.b16 %v2460
  %v4644 = vunpack.c.l.b16 %v2461
  %v4645 = vunpack.c.l.b16 %v2462
  %v4646 = vunpack.c.h.b16 %v2462
  %v4647 = vunpack.c.l.b16 %v2463
  %v4648 = vunpack.c.h.b16 %v2463
  %v4649 = vunpack.c.l.b16 %v2464
  %v4650 = vunpack.c.h.b16 %v2464
  %v4651 = vunpack.c.l.b16 %v2465
  %v4652 = vunpack.c.h.b16 %v2465
  %v4653 = vunpack.c.l.b16 %v2466
  %v4654 = vunpack.c.h.b16 %v2466
  %v4655 = vunpack.c.l.b16 %v2467
  %v4656 = vunpack.c.h.b16 %v2467
  %v4657 = vunpack.c.l.b16 %v2468
  %v4658 = vunpack.c.l.b16 %v2469
  %v4659 = vunpack.c.h.b16 %v2469
  %v4660 = vunpack.c.l.b16 %v2470
  %v4661 = vunpack.c.h.b16 %v2470
  %v4662 = vunpack.c.l.b16 %v2471
  %v4663 = vunpack.c.h.b16 %v2471
  %v4664 = vunpack.c.l.b16 %v2472
  %v4665 = vunpack.c.h.b16 %v2472
  %v4666 = vunpack.c.l.b16 %v2473
  %v4667 = vunpack.c.h.b16 %v2473
  %v4668 = vunpack.c.l.b16 %v2474
  %v4669 = vunpack.c.h.b16 %v2474
  %v4670 = vunpack.c.l.b16 %v2475
  %v4671 = vunpack.c.l.b16 %v2476
  %v4672 = vunpack.c.h.b16 %v2476
  %v4673 = vunpack.c.l.b16 %v2477
  %v4674 = vunpack.c.h.b16 %v2477
  %v4675 = vunpack.c.l.b16 %v2478
  %v4676 = vunpack.c.h.b16 %v2478
  %v4677 = vunpack.c.l.b16 %v2479
  %v4678 = vunpack.c.h.b16 %v2479
  %v4679 = vunpack.c.l.b16 %v2480
  %v4680 = vunpack.c.h.b16 %v2480
  %v4681 = vunpack.c.l.b16 %v2481
  %v4682 = vunpack.c.h.b16 %v2481
  %v4683 = vunpack.c.l.b16 %v2482
  %v4684 = vunpack.c.l.b16 %v2483
  %v4685 = vunpack.c.h.b16 %v2483
  %v4686 = vunpack.c.l.b16 %v2484
  %v4687 = vunpack.c.h.b16 %v2484
  %v4688 = vunpack.c.l.b16 %v2485
  %v4689 = vunpack.c.h.b16 %v2485
  %v4690 = vunpack.c.l.b16 %v2486
  %v4691 = vunpack.c.h.b16 %v2486
  %v4692 = vunpack.c.l.b16 %v2487
  %v4693 = vunpack.c.h.b16 %v2487
  %v4694 = vunpack.c.l.b16 %v2488
  %v4695 = vunpack.c.h.b16 %v2488
  %v4696 = vunpack.c.l.b16 %v2489
  %v4697 = vunpack.c.l.b16 %v2490
  %v4698 = vunpack.c.h.b16 %v2490
  %v4699 = vunpack.c.l.b16 %v2491
  %v4700 = vunpack.c.h.b16 %v2491
  %v4701 = vunpack.c.l.b16 %v2492
  %v4702 = vunpack.c.h.b16 %v2492
  %v4703 = vunpack.c.l.b16 %v2493
  %v4704 = vunpack.c.h.b16 %v2493
  %v4705 = vunpack.c.l.b16 %v2494
  %v4706 = vunpack.c.h.b16 %v2494
  %v4707 = vunpack.c.l.b16 %v2495
  %v4708 = vunpack.c.h.b16 %v2495
  %v4709 = vunpack.c.l.b16 %v2496
  %v4710 = vunpack.c.l.b16 %v2497
  %v4711 = vunpack.c.h.b16 %v2497
  %v4712 = vunpack.c.l.b16 %v2498
  %v4713 = vunpack.c.h.b16 %v2498
  %v4714 = vunpack.c.l.b16 %v2499
  %v4715 = vunpack.c.h.b16 %v2499
  %v4716 = vunpack.c.l.b16 %v2500
  %v4717 = vunpack.c.h.b16 %v2500
  %v4718 = vunpack.c.l.b16 %v2501
  %v4719 = vunpack.c.h.b16 %v2501
  %v4720 = vunpack.c.l.b16 %v2502
  %v4721 = vunpack.c.h.b16 %v2502
  %v4722 = vunpack.c.l.b16 %v2503
  %v4723 = vunpack.c.l.b16 %v2504
  %v4724 = vunpack.c.h.b16 %v2504
  %v4725 = vunpack.c.l.b16 %v2505
  %v4726 = vunpack.c.h.b16 %v2505
  %v4727 = vunpack.c.l.b16 %v2506
  %v4728 = vunpack.c.h.b16 %v2506
  %v4729 = vunpack.c.l.b16 %v2507
  %v4730 = vunpack.c.h.b16 %v2507
  %v4731 = vunpack.c.l.b16 %v2508
  %v4732 = vunpack.c.h.b16 %v2508
  %v4733 = vunpack.c.l.b16 %v2509
  %v4734 = vunpack.c.h.b16 %v2509
  %v4735 = vunpack.c.l.b16 %v2510
  %v4736 = vunpack.c.l.b16 %v2511
  %v4737 = vunpack.c.h.b16 %v2511
  %v4738 = vunpack.c.l.b16 %v2512
  %v4739 = vunpack.c.h.b16 %v2512
  %v4740 = vunpack.c.l.b16 %v2513
  %v4741 = vunpack.c.h.b16 %v2513
  %v4742 = vunpack.c.l.b16 %v2514
  %v4743 = vunpack.c.h.b16 %v2514
  %v4744 = vunpack.c.l.b16 %v2515
  %v4745 = vunpack.c.h.b16 %v2515
  %v4746 = vunpack.c.l.b16 %v2516
  %v4747 = vunpack.c.h.b16 %v2516
  %v4748 = vunpack.c.l.b16 %v2517
  %v4749 = vunpack.c.l.b16 %v2518
  %v4750 = vunpack.c.h.b16 %v2518
  %v4751 = vunpack.c.l.b16 %v2519
  %v4752 = vunpack.c.h.b16 %v2519
  %v4753 = vunpack.c.l.b16 %v2520
  %v4754 = vunpack.c.h.b16 %v2520
  %v4755 = vunpack.c.l.b16 %v2521
  %v4756 = vunpack.c.h.b16 %v2521
  %v4757 = vunpack.c.l.b16 %v2522
  %v4758 = vunpack.c.h.b16 %v2522
  %v4759 = vunpack.c.l.b16 %v2523
  %v4760 = vunpack.c.h.b16 %v2523
  %v4761 = vunpack.c.l.b16 %v2524
  %v4762 = vunpack.c.l.b16 %v2525
  %v4763 = vunpack.c.h.b16 %v2525
  %v4764 = vunpack.c.l.b16 %v2526
  %v4765 = vunpack.c.h.b16 %v2526
  %v4766 = vunpack.c.l.b16 %v2527
  %v4767 = vunpack.c.h.b16 %v2527
  %v4768 = vunpack.c.l.b16 %v2528
  %v4769 = vunpack.c.h.b16 %v2528
  %v4770 = vunpack.c.l.b16 %v2529
  %v4771 = vunpack.c.h.b16 %v2529
  %v4772 = vunpack.c.l.b16 %v2530
  %v4773 = vunpack.c.h.b16 %v2530
  %v4774 = vunpack.c.l.b16 %v2531
  %v4775 = vunpack.c.l.b16 %v2532
  %v4776 = vunpack.c.h.b16 %v2532
  %v4777 = vunpack.c.l.b16 %v2533
  %v4778 = vunpack.c.h.b16 %v2533
  %v4779 = vunpack.c.l.b16 %v2534
  %v4780 = vunpack.c.h.b16 %v2534
  %v4781 = vunpack.c.l.b16 %v2535
  %v4782 = vunpack.c.h.b16 %v2535
  %v4783 = vunpack.c.l.b16 %v2536
  %v4784 = vunpack.c.h.b16 %v2536
  %v4785 = vunpack.c.l.b16 %v2537
  %v4786 = vunpack.c.h.b16 %v2537
  %v4787 = vunpack.c.l.b16 %v2538
  %v4788 = vunpack.c.l.b16 %v2539
  %v4789 = vunpack.c.h.b16 %v2539
  %v4790 = vunpack.c.l.b16 %v2540
  %v4791 = vunpack.c.h.b16 %v2540
  %v4792 = vunpack.c.l.b16 %v2541
  %v4793 = vunpack.c.h.b16 %v2541
  %v4794 = vunpack.c.l.b16 %v2542
  %v4795 = vunpack.c.h.b16 %v2542
  %v4796 = vunpack.c.l.b16 %v2543
  %v4797 = vunpack.c.h.b16 %v2543
  %v4798 = vunpack.c.l.b16 %v2544
  %v4799 = vunpack.c.h.b16 %v2544
  %v4800 = vunpack.c.l.b16 %v2545
  %v4801 = vunpack.c.l.b16 %v2546
  %v4802 = vunpack.c.h.b16 %v2546
  %v4803 = vunpack.c.l.b16 %v2547
  %v4804 = vunpack.c.h.b16 %v2547
  %v4805 = vunpack.c.l.b16 %v2548
  %v4806 = vunpack.c.h.b16 %v2548
  %v4807 = vunpack.c.l.b16 %v2549
  %v4808 = vunpack.c.h.b16 %v2549
  %v4809 = vunpack.c.l.b16 %v2550
  %v4810 = vunpack.c.h.b16 %v2550
  %v4811 = vunpack.c.l.b16 %v2551
  %v4812 = vunpack.c.h.b16 %v2551
  %v4813 = vunpack.c.l.b16 %v2552
  %v4814 = vunpack.c.l.b16 %v2553
  %v4815 = vunpack.c.h.b16 %v2553
  %v4816 = vunpack.c.l.b16 %v2554
  %v4817 = vunpack.c.h.b16 %v2554
  %v4818 = vunpack.c.l.b16 %v2555
  %v4819 = vunpack.c.h.b16 %v2555
  %v4820 = vunpack.c.l.b16 %v2556
  %v4821 = vunpack.c.h.b16 %v2556
  %v4822 = vunpack.c.l.b16 %v2557
  %v4823 = vunpack.c.h.b16 %v2557
  %v4824 = vunpack.c.l.b16 %v2558
  %v4825 = vunpack.c.h.b16 %v2558
  %v4826 = vunpack.c.l.b16 %v2559
  %v4827 = vunpack.c.l.b16 %v2560
  %v4828 = vunpack.c.h.b16 %v2560
  %v4829 = vunpack.c.l.b16 %v2561
  %v4830 = vunpack.c.h.b16 %v2561
  %v4831 = vunpack.c.l.b16 %v2562
  %v4832 = vunpack.c.h.b16 %v2562
  %v4833 = vunpack.c.l.b16 %v2563
  %v4834 = vunpack.c.h.b16 %v2563
  %v4835 = vunpack.c.l.b16 %v2564
  %v4836 = vunpack.c.h.b16 %v2564
  %v4837 = vunpack.c.l.b16 %v2565
  %v4838 = vunpack.c.h.b16 %v2565
  %v4839 = vunpack.c.l.b16 %v2566
  %v4840 = vunpack.c.l.b16 %v2567
  %v4841 = vunpack.c.h.b16 %v2567
  %v4842 = vunpack.c.l.b16 %v2568
  %v4843 = vunpack.c.h.b16 %v2568
  %v4844 = vunpack.c.l.b16 %v2569
  %v4845 = vunpack.c.h.b16 %v2569
  %v4846 = vunpack.c.l.b16 %v2570
  %v4847 = vunpack.c.h.b16 %v2570
  %v4848 = vunpack.c.l.b16 %v2571
  %v4849 = vunpack.c.h.b16 %v2571
  %v4850 = vunpack.c.l.b16 %v2572
  %v4851 = vunpack.c.h.b16 %v2572
  %v4852 = vunpack.c.l.b16 %v2573
  %v4853 = vunpack.c.l.b16 %v2574
  %v4854 = vunpack.c.h.b16 %v2574
  %v4855 = vunpack.c.l.b16 %v2575
  %v4856 = vunpack.c.h.b16 %v2575
  %v4857 = vunpack.c.l.b16 %v2576
  %v4858 = vunpack.c.h.b16 %v2576
  %v4859 = vunpack.c.l.b16 %v2577
  %v4860 = vunpack.c.h.b16 %v2577
  %v4861 = vunpack.c.l.b16 %v2578
  %v4862 = vunpack.c.h.b16 %v2578
  %v4863 = vunpack.c.l.b16 %v2579
  %v4864 = vunpack.c.h.b16 %v2579
  %v4865 = vunpack.c.l.b16 %v2580
  %v4866 = vunpack.c.l.b16 %v2581
  %v4867 = vunpack.c.h.b16 %v2581
  %v4868 = vunpack.c.l.b16 %v2582
  %v4869 = vunpack.c.h.b16 %v2582
  %v4870 = vunpack.c.l.b16 %v2583
  %v4871 = vunpack.c.h.b16 %v2583
  %v4872 = vunpack.c.l.b16 %v2584
  %v4873 = vunpack.c.h.b16 %v2584
  %v4874 = vunpack.c.l.b16 %v2585
  %v4875 = vunpack.c.h.b16 %v2585
  %v4876 = vunpack.c.l.b16 %v2586
  %v4877 = vunpack.c.h.b16 %v2586
  %v4878 = vunpack.c.l.b16 %v2587
  %v4879 = vunpack.c.l.b16 %v2588
  %v4880 = vunpack.c.h.b16 %v2588
  %v4881 = vunpack.c.l.b16 %v2589
  %v4882 = vunpack.c.h.b16 %v2589
  %v4883 = vunpack.c.l.b16 %v2590
  %v4884 = vunpack.c.h.b16 %v2590
  %v4885 = vunpack.c.l.b16 %v2591
  %v4886 = vunpack.c.h.b16 %v2591
  %v4887 = vunpack.c.l.b16 %v2592
  %v4888 = vunpack.c.h.b16 %v2592
  %v4889 = vunpack.c.l.b16 %v2593
  %v4890 = vunpack.c.h.b16 %v2593
  %v4891 = vunpack.c.l.b16 %v2594
  %v4892 = vunpack.c.l.b16 %v2595
  %v4893 = vunpack.c.h.b16 %v2595
  %v4894 = vunpack.c.l.b16 %v2596
  %v4895 = vunpack.c.h.b16 %v2596
  %v4896 = vunpack.c.l.b16 %v2597
  %v4897 = vunpack.c.h.b16 %v2597
  %v4898 = vunpack.c.l.b16 %v2598
  %v4899 = vunpack.c.h.b16 %v2598
  %v4900 = vunpack.c.l.b16 %v2599
  %v4901 = vunpack.c.h.b16 %v2599
  %v4902 = vunpack.c.l.b16 %v2600
  %v4903 = vunpack.c.h.b16 %v2600
  %v4904 = vunpack.c.l.b16 %v2601
  %v4905 = vunpack.c.l.b16 %v2602
  %v4906 = vunpack.c.h.b16 %v2602
  %v4907 = vunpack.c.l.b16 %v2603
  %v4908 = vunpack.c.h.b16 %v2603
  %v4909 = vunpack.c.l.b16 %v2604
  %v4910 = vunpack.c.h.b16 %v2604
  %v4911 = vunpack.c.l.b16 %v2605
  %v4912 = vunpack.c.h.b16 %v2605
  %v4913 = vunpack.c.l.b16 %v2606
  %v4914 = vunpack.c.h.b16 %v2606
  %v4915 = vunpack.c.l.b16 %v2607
  %v4916 = vunpack.c.h.b16 %v2607
  %v4917 = vunpack.c.l.b16 %v2608
  %v4918 = vpack.c.b16 %v3475, %v3462
  %v4919 = vpack.c.b16 %v3476, %v3463
  %v4920 = vpack.c.b16 %v3477, %v3464
  %v4921 = vpack.c.b16 %v3478, %v3465
  %v4922 = vpack.c.b16 %v3479, %v3466
  %v4923 = vpack.c.b16 %v3480, %v3467
  %v4924 = vpack.c.b16 %v3481, %v3468
  %v4925 = vpack.c.b16 %v3482, %v3469
  %v4926 = vpack.c.b16 %v3483, %v3470
  %v4927 = vpack.c.b16 %v3484, %v3471
  %v4928 = vpack.c.b16 %v3485, %v3472
  %v4929 = vpack.c.b16 %v3486, %v3473
  %v4930 = vpack.c.b16 %v3487, %v3474
  %v4931 = vpack.c.b16 %v3501, %v3488
  %v4932 = vpack.c.b16 %v3502, %v3489
  %v4933 = vpack.c.b16 %v3503, %v3490
  %v4934 = vpack.c.b16 %v3504, %v3491
  %v4935 = vpack.c.b16 %v3505, %v3492
  %v4936 = vpack.c.b16 %v3506, %v3493
  %v4937 = vpack.c.b16 %v3507, %v3494
  %v4938 = vpack.c.b16 %v3508, %v3495
  %v4939 = vpack.c.b16 %v3509, %v3496
  %v4940 = vpack.c.b16 %v3510, %v3497
  %v4941 = vpack.c.b16 %v3511, %v3498
  %v4942 = vpack.c.b16 %v3512, %v3499
  %v4943 = vpack.c.b16 %v3513, %v3500
  %v4944 = vpack.c.b16 %v3527, %v3514
  %v4945 = vpack.c.b16 %v3528, %v3515
  %v4946 = vpack.c.b16 %v3529, %v3516
  %v4947 = vpack.c.b16 %v3530, %v3517
  %v4948 = vpack.c.b16 %v3531, %v3518
  %v4949 = vpack.c.b16 %v3532, %v3519
  %v4950 = vpack.c.b16 %v3533, %v3520
  %v4951 = vpack.c.b16 %v3534, %v3521
  %v4952 = vpack.c.b16 %v3535, %v3522
  %v4953 = vpack.c.b16 %v3536, %v3523
  %v4954 = vpack.c.b16 %v3537, %v3524
  %v4955 = vpack.c.b16 %v3538, %v3525
  %v4956 = vpack.c.b16 %v3539, %v3526
  %v4957 = vpack.c.b16 %v3553, %v3540
  %v4958 = vpack.c.b16 %v3554, %v3541
  %v4959 = vpack.c.b16 %v3555, %v3542
  %v4960 = vpack.c.b16 %v3556, %v3543
  %v4961 = vpack.c.b16 %v3557, %v3544
  %v4962 = vpack.c.b16 %v3558, %v3545
  %v4963 = vpack.c.b16 %v3559, %v3546
  %v4964 = vpack.c.b16 %v3560, %v3547
  %v4965 = vpack.c.b16 %v3561, %v3548
  %v4966 = vpack.c.b16 %v3562, %v3549
  %v4967 = vpack.c.b16 %v3563, %v3550
  %v4968 = vpack.c.b16 %v3564, %v3551
  %v4969 = vpack.c.b16 %v3565, %v3552
  %v4970 = vpack.c.b16 %v3579, %v3566
  %v4971 = vpack.c.b16 %v3580, %v3567
  %v4972 = vpack.c.b16 %v3581, %v3568
  %v4973 = vpack.c.b16 %v3582, %v3569
  %v4974 = vpack.c.b16 %v3583, %v3570
  %v4975 = vpack.c.b16 %v3584, %v3571
  %v4976 = vpack.c.b16 %v3585, %v3572
  %v4977 = vpack.c.b16 %v3586, %v3573
  %v4978 = vpack.c.b16 %v3587, %v3574
  %v4979 = vpack.c.b16 %v3588, %v3575
  %v4980 = vpack.c.b16 %v3589, %v3576
  %v4981 = vpack.c.b16 %v3590, %v3577
  %v4982 = vpack.c.b16 %v3591, %v3578
  %v4983 = vpack.c.b16 %v3605, %v3592
  %v4984 = vpack.c.b16 %v3606, %v3593
  %v4985 = vpack.c.b16 %v3607, %v3594
  %v4986 = vpack.c.b16 %v3608, %v3595
  %v4987 = vpack.c.b16 %v3609, %v3596
  %v4988 = vpack.c.b16 %v3610, %v3597
  %v4989 = vpack.c.b16 %v3611, %v3598
  %v4990 = vpack.c.b16 %v3612, %v3599
  %v4991 = vpack.c.b16 %v3613, %v3600
  %v4992 = vpack.c.b16 %v3614, %v3601
  %v4993 = vpack.c.b16 %v3615, %v3602
  %v4994 = vpack.c.b16 %v3616, %v3603
  %v4995 = vpack.c.b16 %v3617, %v3604
  %v4996 = vpack.c.b16 %v3631, %v3618
  %v4997 = vpack.c.b16 %v3632, %v3619
  %v4998 = vpack.c.b16 %v3633, %v3620
  %v4999 = vpack.c.b16 %v3634, %v3621
  %v5000 = vpack.c.b16 %v3635, %v3622
  %v5001 = vpack.c.b16 %v3636, %v3623
  %v5002 = vpack.c.b16 %v3637, %v3624
  %v5003 = vpack.c.b16 %v3638, %v3625
  %v5004 = vpack.c.b16 %v3639, %v3626
  %v5005 = vpack.c.b16 %v3640, %v3627
  %v5006 = vpack.c.b16 %v3641, %v3628
  %v5007 = vpack.c.b16 %v3642, %v3629
  %v5008 = vpack.c.b16 %v3643, %v3630
  %v5009 = vpack.c.b16 %v3657, %v3644
  %v5010 = vpack.c.b16 %v3658, %v3645
  %v5011 = vpack.c.b16 %v3659, %v3646
  %v5012 = vpack.c.b16 %v3660, %v3647
  %v5013 = vpack.c.b16 %v3661, %v3648
  %v5014 = vpack.c.b16 %v3662, %v3649
  %v5015 = vpack.c.b16 %v3663, %v3650
  %v5016 = vpack.c.b16 %v3664, %v3651
  %v5017 = vpack.c.b16 %v3665, %v3652
  %v5018 = vpack.c.b16 %v3666, %v3653
  %v5019 = vpack.c.b16 %v3667, %v3654
  %v5020 = vpack.c.b16 %v3668, %v3655
  %v5021 = vpack.c.b16 %v3669, %v3656
  %v5022 = vpack.c.b16 %v3683, %v3670
  %v5023 = vpack.c.b16 %v3684, %v3671
  %v5024 = vpack.c.b16 %v3685, %v3672
  %v5025 = vpack.c.b16 %v3686, %v3673
  %v5026 = vpack.c.b16 %v3687, %v3674
  %v5027 = vpack.c.b16 %v3688, %v3675
  %v5028 = vpack.c.b16 %v3689, %v3676
  %v5029 = vpack.c.b16 %v3690, %v3677
  %v5030 = vpack.c.b16 %v3691, %v3678
  %v5031 = vpack.c.b16 %v3692, %v3679
  %v5032 = vpack.c.b16 %v3693, %v3680
  %v5033 = vpack.c.b16 %v3694, %v3681
  %v5034 = vpack.c.b16 %v3695, %v3682
  %v5035 = vpack.c.b16 %v3709, %v3696
  %v5036 = vpack.c.b16 %v3710, %v3697
  %v5037 = vpack.c.b16 %v3711, %v3698
  %v5038 = vpack.c.b16 %v3712, %v3699
  %v5039 = vpack.c.b16 %v3713, %v3700
  %v5040 = vpack.c.b16 %v3714, %v3701
  %v5041 = vpack.c.b16 %v3715, %v3702
  %v5042 = vpack.c.b16 %v3716, %v3703
  %v5043 = vpack.c.b16 %v3717, %v3704
  %v5044 = vpack.c.b16 %v3718, %v3705
  %v5045 = vpack.c.b16 %v3719, %v3706
  %v5046 = vpack.c.b16 %v3720, %v3707
  %v5047 = vpack.c.b16 %v3721, %v3708
  %v5048 = vpack.c.b16 %v3735, %v3722
  %v5049 = vpack.c.b16 %v3736, %v3723
  %v5050 = vpack.c.b16 %v3737, %v3724
  %v5051 = vpack.c.b16 %v3738, %v3725
  %v5052 = vpack.c.b16 %v3739, %v3726
  %v5053 = vpack.c.b16 %v3740, %v3727
  %v5054 = vpack.c.b16 %v3741, %v3728
  %v5055 = vpack.c.b16 %v3742, %v3729
  %v5056 = vpack.c.b16 %v3743, %v3730
  %v5057 = vpack.c.b16 %v3744, %v3731
  %v5058 = vpack.c.b16 %v3745, %v3732
  %v5059 = vpack.c.b16 %v3746, %v3733
  %v5060 = vpack.c.b16 %v3747, %v3734
  %v5061 = vpack.c.b16 %v3761, %v3748
  %v5062 = vpack.c.b16 %v3762, %v3749
  %v5063 = vpack.c.b16 %v3763, %v3750
  %v5064 = vpack.c.b16 %v3764, %v3751
  %v5065 = vpack.c.b16 %v3765, %v3752
  %v5066 = vpack.c.b16 %v3766, %v3753
  %v5067 = vpack.c.b16 %v3767, %v3754
  %v5068 = vpack.c.b16 %v3768, %v3755
  %v5069 = vpack.c.b16 %v3769, %v3756
  %v5070 = vpack.c.b16 %v3770, %v3757
  %v5071 = vpack.c.b16 %v3771, %v3758
  %v5072 = vpack.c.b16 %v3772, %v3759
  %v5073 = vpack.c.b16 %v3773, %v3760
  %v5074 = vpack.c.b16 %v3787, %v3774
  %v5075 = vpack.c.b16 %v3788, %v3775
  %v5076 = vpack.c.b16 %v3789, %v3776
  %v5077 = vpack.c.b16 %v3790, %v3777
  %v5078 = vpack.c.b16 %v3791, %v3778
  %v5079 = vpack.c.b16 %v3792, %v3779
  %v5080 = vpack.c.b16 %v3793, %v3780
  %v5081 = vpack.c.b16 %v3794, %v3781
  %v5082 = vpack.c.b16 %v3795, %v3782
  %v5083 = vpack.c.b16 %v3796, %v3783
  %v5084 = vpack.c.b16 %v3797, %v3784
  %v5085 = vpack.c.b16 %v3798, %v3785
  %v5086 = vpack.c.b16 %v3799, %v3786
  %v5087 = vpack.c.b16 %v3813, %v3800
  %v5088 = vpack.c.b16 %v3814, %v3801
  %v5089 = vpack.c.b16 %v3815, %v3802
  %v5090 = vpack.c.b16 %v3816, %v3803
  %v5091 = vpack.c.b16 %v3817, %v3804
  %v5092 = vpack.c.b16 %v3818, %v3805
  %v5093 = vpack.c.b16 %v3819, %v3806
  %v5094 = vpack.c.b16 %v3820, %v3807
  %v5095 = vpack.c.b16 %v3821, %v3808
  %v5096 = vpack.c.b16 %v3822, %v3809
  %v5097 = vpack.c.b16 %v3823, %v3810
  %v5098 = vpack.c.b16 %v3824, %v3811
  %v5099 = vpack.c.b16 %v3825, %v3812
  %v5100 = vpack.c.b16 %v3839, %v3826
  %v5101 = vpack.c.b16 %v3840, %v3827
  %v5102 = vpack.c.b16 %v3841, %v3828
  %v5103 = vpack.c.b16 %v3842, %v3829
  %v5104 = vpack.c.b16 %v3843, %v3830
  %v5105 = vpack.c.b16 %v3844, %v3831
  %v5106 = vpack.c.b16 %v3845, %v3832
  %v5107 = vpack.c.b16 %v3846, %v3833
  %v5108 = vpack.c.b16 %v3847, %v3834
  %v5109 = vpack.c.b16 %v3848, %v3835
  %v5110 = vpack.c.b16 %v3849, %v3836
  %v5111 = vpack.c.b16 %v3850, %v3837
  %v5112 = vpack.c.b16 %v3851, %v3838
  %v5113 = vpack.c.b16 %v3865, %v3852
  %v5114 = vpack.c.b16 %v3866, %v3853
  %v5115 = vpack.c.b16 %v3867, %v3854
  %v5116 = vpack.c.b16 %v3868, %v3855
  %v5117 = vpack.c.b16 %v3869, %v3856
  %v5118 = vpack.c.b16 %v3870, %v3857
  %v5119 = vpack.c.b16 %v3871, %v3858
  %v5120 = vpack.c.b16 %v3872, %v3859
  %v5121 = vpack.c.b16 %v3873, %v3860
  %v5122 = vpack.c.b16 %v3874, %v3861
  %v5123 = vpack.c.b16 %v3875, %v3862
  %v5124 = vpack.c.b16 %v3876, %v3863
  %v5125 = vpack.c.b16 %v3877, %v3864
  %v5126 = vpack.c.b16 %v3891, %v3878
  %v5127 = vpack.c.b16 %v3892, %v3879
  %v5128 = vpack.c.b16 %v3893, %v3880
  %v5129 = vpack.c.b16 %v3894, %v3881
  %v5130 = vpack.c.b16 %v3895, %v3882
  %v5131 = vpack.c.b16 %v3896, %v3883
  %v5132 = vpack.c.b16 %v3897, %v3884
  %v5133 = vpack.c.b16 %v3898, %v3885
  %v5134 = vpack.c.b16 %v3899, %v3886
  %v5135 = vpack.c.b16 %v3900, %v3887
  %v5136 = vpack.c.b16 %v3901, %v3888
  %v5137 = vpack.c.b16 %v3902, %v3889
  %v5138 = vpack.c.b16 %v3903, %v3890
  %v5139 = vpack.c.b16 %v3917, %v3904
  %v5140 = vpack.c.b16 %v3918, %v3905
  %v5141 = vpack.c.b16 %v3919, %v3906
  %v5142 = vpack.c.b16 %v3920, %v3907
  %v5143 = vpack.c.b16 %v3921, %v3908
  %v5144 = vpack.c.b16 %v3922, %v3909
  %v5145 = vpack.c.b16 %v3923, %v3910
  %v5146 = vpack.c.b16 %v3924, %v3911
  %v5147 = vpack.c.b16 %v3925, %v3912
  %v5148 = vpack.c.b16 %v3926, %v3913
  %v5149 = vpack.c.b16 %v3927, %v3914
  %v5150 = vpack.c.b16 %v3928, %v3915
  %v5151 = vpack.c.b16 %v3929, %v3916
  %v5152 = vpack.c.b16 %v3943, %v3930
  %v5153 = vpack.c.b16 %v3944, %v3931
  %v5154 = vpack.c.b16 %v3945, %v3932
  %v5155 = vpack.c.b16 %v3946, %v3933
  %v5156 = vpack.c.b16 %v3947, %v3934
  %v5157 = vpack.c.b16 %v3948, %v3935
  %v5158 = vpack.c.b16 %v3949, %v3936
  %v5159 = vpack.c.b16 %v3950, %v3937
  %v5160 = vpack.c.b16 %v3951, %v3938
  %v5161 = vpack.c.b16 %v3952, %v3939
  %v5162 = vpack.c.b16 %v3953, %v3940
  %v5163 = vpack.c.b16 %v3954, %v3941
  %v5164 = vpack.c.b16 %v3955, %v3942
  %v5165 = vpack.c.b16 %v3969, %v3956
  %v5166 = vpack.c.b16 %v3970, %v3957
  %v5167 = vpack.c.b16 %v3971, %v3958
  %v5168 = vpack.c.b16 %v3972, %v3959
  %v5169 = vpack.c.b16 %v3973, %v3960
  %v5170 = vpack.c.b16 %v3974, %v3961
  %v5171 = vpack.c.b16 %v3975, %v3962
  %v5172 = vpack.c.b16 %v3976, %v3963
  %v5173 = vpack.c.b16 %v3977, %v3964
  %v5174 = vpack.c.b16 %v3978, %v3965
  %v5175 = vpack.c.b16 %v3979, %v3966
  %v5176 = vpack.c.b16 %v3980, %v3967
  %v5177 = vpack.c.b16 %v3981, %v3968
  %v5178 = vpack.c.b16 %v3995, %v3982
  %v5179 = vpack.c.b16 %v3996, %v3983
  %v5180 = vpack.c.b16 %v3997, %v3984
  %v5181 = vpack.c.b16 %v3998, %v3985
  %v5182 = vpack.c.b16 %v3999, %v3986
  %v5183 = vpack.c.b16 %v4000, %v3987
  %v5184 = vpack.c.b16 %v4001, %v3988
  %v5185 = vpack.c.b16 %v4002, %v3989
  %v5186 = vpack.c.b16 %v4003, %v3990
  %v5187 = vpack.c.b16 %v4004, %v3991
  %v5188 = vpack.c.b16 %v4005, %v3992
  %v5189 = vpack.c.b16 %v4006, %v3993
  %v5190 = vpack.c.b16 %v4007, %v3994
  %v5191 = vpack.c.b16 %v4021, %v4008
  %v5192 = vpack.c.b16 %v4022, %v4009
  %v5193 = vpack.c.b16 %v4023, %v4010
  %v5194 = vpack.c.b16 %v4024, %v4011
  %v5195 = vpack.c.b16 %v4025, %v4012
  %v5196 = vpack.c.b16 %v4026, %v4013
  %v5197 = vpack.c.b16 %v4027, %v4014
  %v5198 = vpack.c.b16 %v4028, %v4015
  %v5199 = vpack.c.b16 %v4029, %v4016
  %v5200 = vpack.c.b16 %v4030, %v4017
  %v5201 = vpack.c.b16 %v4031, %v4018
  %v5202 = vpack.c.b16 %v4032, %v4019
  %v5203 = vpack.c.b16 %v4033, %v4020
  %v5204 = vpack.c.b16 %v4047, %v4034
  %v5205 = vpack.c.b16 %v4048, %v4035
  %v5206 = vpack.c.b16 %v4049, %v4036
  %v5207 = vpack.c.b16 %v4050, %v4037
  %v5208 = vpack.c.b16 %v4051, %v4038
  %v5209 = vpack.c.b16 %v4052, %v4039
  %v5210 = vpack.c.b16 %v4053, %v4040
  %v5211 = vpack.c.b16 %v4054, %v4041
  %v5212 = vpack.c.b16 %v4055, %v4042
  %v5213 = vpack.c.b16 %v4056, %v4043
  %v5214 = vpack.c.b16 %v4057, %v4044
  %v5215 = vpack.c.b16 %v4058, %v4045
  %v5216 = vpack.c.b16 %v4059, %v4046
  %v5217 = vpack.c.b16 %v4073, %v4060
  %v5218 = vpack.c.b16 %v4074, %v4061
  %v5219 = vpack.c.b16 %v4075, %v4062
  %v5220 = vpack.c.b16 %v4076, %v4063
  %v5221 = vpack.c.b16 %v4077, %v4064
  %v5222 = vpack.c.b16 %v4078, %v4065
  %v5223 = vpack.c.b16 %v4079, %v4066
  %v5224 = vpack.c.b16 %v4080, %v4067
  %v5225 = vpack.c.b16 %v4081, %v4068
  %v5226 = vpack.c.b16 %v4082, %v4069
  %v5227 = vpack.c.b16 %v4083, %v4070
  %v5228 = vpack.c.b16 %v4084, %v4071
  %v5229 = vpack.c.b16 %v4085, %v4072
  %v5230 = vpack.c.b16 %v4099, %v4086
  %v5231 = vpack.c.b16 %v4100, %v4087
  %v5232 = vpack.c.b16 %v4101, %v4088
  %v5233 = vpack.c.b16 %v4102, %v4089
  %v5234 = vpack.c.b16 %v4103, %v4090
  %v5235 = vpack.c.b16 %v4104, %v4091
  %v5236 = vpack.c.b16 %v4105, %v4092
  %v5237 = vpack.c.b16 %v4106, %v4093
  %v5238 = vpack.c.b16 %v4107, %v4094
  %v5239 = vpack.c.b16 %v4108, %v4095
  %v5240 = vpack.c.b16 %v4109, %v4096
  %v5241 = vpack.c.b16 %v4110, %v4097
  %v5242 = vpack.c.b16 %v4111, %v4098
  %v5243 = vpack.c.b16 %v4125, %v4112
  %v5244 = vpack.c.b16 %v4126, %v4113
  %v5245 = vpack.c.b16 %v4127, %v4114
  %v5246 = vpack.c.b16 %v4128, %v4115
  %v5247 = vpack.c.b16 %v4129, %v4116
  %v5248 = vpack.c.b16 %v4130, %v4117
  %v5249 = vpack.c.b16 %v4131, %v4118
  %v5250 = vpack.c.b16 %v4132, %v4119
  %v5251 = vpack.c.b16 %v4133, %v4120
  %v5252 = vpack.c.b16 %v4134, %v4121
  %v5253 = vpack.c.b16 %v4135, %v4122
  %v5254 = vpack.c.b16 %v4136, %v4123
  %v5255 = vpack.c.b16 %v4137, %v4124
  %v5256 = vpack.c.b16 %v4151, %v4138
  %v5257 = vpack.c.b16 %v4152, %v4139
  %v5258 = vpack.c.b16 %v4153, %v4140
  %v5259 = vpack.c.b16 %v4154, %v4141
  %v5260 = vpack.c.b16 %v4155, %v4142
  %v5261 = vpack.c.b16 %v4156, %v4143
  %v5262 = vpack.c.b16 %v4157, %v4144
  %v5263 = vpack.c.b16 %v4158, %v4145
  %v5264 = vpack.c.b16 %v4159, %v4146
  %v5265 = vpack.c.b16 %v4160, %v4147
  %v5266 = vpack.c.b16 %v4161, %v4148
  %v5267 = vpack.c.b16 %v4162, %v4149
  %v5268 = vpack.c.b16 %v4163, %v4150
  %v5269 = vpack.c.b16 %v4177, %v4164
  %v5270 = vpack.c.b16 %v4178, %v4165
  %v5271 = vpack.c.b16 %v4179, %v4166
  %v5272 = vpack.c.b16 %v4180, %v4167
  %v5273 = vpack.c.b16 %v4181, %v4168
  %v5274 = vpack.c.b16 %v4182, %v4169
  %v5275 = vpack.c.b16 %v4183, %v4170
  %v5276 = vpack.c.b16 %v4184, %v4171
  %v5277 = vpack.c.b16 %v4185, %v4172
  %v5278 = vpack.c.b16 %v4186, %v4173
  %v5279 = vpack.c.b16 %v4187, %v4174
  %v5280 = vpack.c.b16 %v4188, %v4175
  %v5281 = vpack.c.b16 %v4189, %v4176
  %v5282 = vpack.c.b16 %v4203, %v4190
  %v5283 = vpack.c.b16 %v4204, %v4191
  %v5284 = vpack.c.b16 %v4205, %v4192
  %v5285 = vpack.c.b16 %v4206, %v4193
  %v5286 = vpack.c.b16 %v4207, %v4194
  %v5287 = vpack.c.b16 %v4208, %v4195
  %v5288 = vpack.c.b16 %v4209, %v4196
  %v5289 = vpack.c.b16 %v4210, %v4197
  %v5290 = vpack.c.b16 %v4211, %v4198
  %v5291 = vpack.c.b16 %v4212, %v4199
  %v5292 = vpack.c.b16 %v4213, %v4200
  %v5293 = vpack.c.b16 %v4214, %v4201
  %v5294 = vpack.c.b16 %v4215, %v4202
  %v5295 = vpack.c.b16 %v4229, %v4216
  %v5296 = vpack.c.b16 %v4230, %v4217
  %v5297 = vpack.c.b16 %v4231, %v4218
  %v5298 = vpack.c.b16 %v4232, %v4219
  %v5299 = vpack.c.b16 %v4233, %v4220
  %v5300 = vpack.c.b16 %v4234, %v4221
  %v5301 = vpack.c.b16 %v4235, %v4222
  %v5302 = vpack.c.b16 %v4236, %v4223
  %v5303 = vpack.c.b16 %v4237, %v4224
  %v5304 = vpack.c.b16 %v4238, %v4225
  %v5305 = vpack.c.b16 %v4239, %v4226
  %v5306 = vpack.c.b16 %v4240, %v4227
  %v5307 = vpack.c.b16 %v4241, %v4228
  %v5308 = vpack.c.b16 %v4255, %v4242
  %v5309 = vpack.c.b16 %v4256, %v4243
  %v5310 = vpack.c.b16 %v4257, %v4244
  %v5311 = vpack.c.b16 %v4258, %v4245
  %v5312 = vpack.c.b16 %v4259, %v4246
  %v5313 = vpack.c.b16 %v4260, %v4247
  %v5314 = vpack.c.b16 %v4261, %v4248
  %v5315 = vpack.c.b16 %v4262, %v4249
  %v5316 = vpack.c.b16 %v4263, %v4250
  %v5317 = vpack.c.b16 %v4264, %v4251
  %v5318 = vpack.c.b16 %v4265, %v4252
  %v5319 = vpack.c.b16 %v4266, %v4253
  %v5320 = vpack.c.b16 %v4267, %v4254
  %v5321 = vpack.c.b16 %v4281, %v4268
  %v5322 = vpack.c.b16 %v4282, %v4269
  %v5323 = vpack.c.b16 %v4283, %v4270
  %v5324 = vpack.c.b16 %v4284, %v4271
  %v5325 = vpack.c.b16 %v4285, %v4272
  %v5326 = vpack.c.b16 %v4286, %v4273
  %v5327 = vpack.c.b16 %v4287, %v4274
  %v5328 = vpack.c.b16 %v4288, %v4275
  %v5329 = vpack.c.b16 %v4289, %v4276
  %v5330 = vpack.c.b16 %v4290, %v4277
  %v5331 = vpack.c.b16 %v4291, %v4278
  %v5332 = vpack.c.b16 %v4292, %v4279
  %v5333 = vpack.c.b16 %v4293, %v4280
  %v5334 = vpack.c.b16 %v4307, %v4294
  %v5335 = vpack.c.b16 %v4308, %v4295
  %v5336 = vpack.c.b16 %v4309, %v4296
  %v5337 = vpack.c.b16 %v4310, %v4297
  %v5338 = vpack.c.b16 %v4311, %v4298
  %v5339 = vpack.c.b16 %v4312, %v4299
  %v5340 = vpack.c.b16 %v4313, %v4300
  %v5341 = vpack.c.b16 %v4314, %v4301
  %v5342 = vpack.c.b16 %v4315, %v4302
  %v5343 = vpack.c.b16 %v4316, %v4303
  %v5344 = vpack.c.b16 %v4317, %v4304
  %v5345 = vpack.c.b16 %v4318, %v4305
  %v5346 = vpack.c.b16 %v4319, %v4306
  %v5347 = vpack.c.b16 %v4333, %v4320
  %v5348 = vpack.c.b16 %v4334, %v4321
  %v5349 = vpack.c.b16 %v4335, %v4322
  %v5350 = vpack.c.b16 %v4336, %v4323
  %v5351 = vpack.c.b16 %v4337, %v4324
  %v5352 = vpack.c.b16 %v4338, %v4325
  %v5353 = vpack.c.b16 %v4339, %v4326
  %v5354 = vpack.c.b16 %v4340, %v4327
  %v5355 = vpack.c.b16 %v4341, %v4328
  %v5356 = vpack.c.b16 %v4342, %v4329
  %v5357 = vpack.c.b16 %v4343, %v4330
  %v5358 = vpack.c.b16 %v4344, %v4331
  %v5359 = vpack.c.b16 %v4345, %v4332
  %v5360 = vpack.c.b16 %v4359, %v4346
  %v5361 = vpack.c.b16 %v4360, %v4347
  %v5362 = vpack.c.b16 %v4361, %v4348
  %v5363 = vpack.c.b16 %v4362, %v4349
  %v5364 = vpack.c.b16 %v4363, %v4350
  %v5365 = vpack.c.b16 %v4364, %v4351
  %v5366 = vpack.c.b16 %v4365, %v4352
  %v5367 = vpack.c.b16 %v4366, %v4353
  %v5368 = vpack.c.b16 %v4367, %v4354
  %v5369 = vpack.c.b16 %v4368, %v4355
  %v5370 = vpack.c.b16 %v4369, %v4356
  %v5371 = vpack.c.b16 %v4370, %v4357
  %v5372 = vpack.c.b16 %v4371, %v4358
  %v5373 = vpack.c.b16 %v4385, %v4372
  %v5374 = vpack.c.b16 %v4386, %v4373
  %v5375 = vpack.c.b16 %v4387, %v4374
  %v5376 = vpack.c.b16 %v4388, %v4375
  %v5377 = vpack.c.b16 %v4389, %v4376
  %v5378 = vpack.c.b16 %v4390, %v4377
  %v5379 = vpack.c.b16 %v4391, %v4378
  %v5380 = vpack.c.b16 %v4392, %v4379
  %v5381 = vpack.c.b16 %v4393, %v4380
  %v5382 = vpack.c.b16 %v4394, %v4381
  %v5383 = vpack.c.b16 %v4395, %v4382
  %v5384 = vpack.c.b16 %v4396, %v4383
  %v5385 = vpack.c.b16 %v4397, %v4384
  %v5386 = vpack.c.b16 %v4411, %v4398
  %v5387 = vpack.c.b16 %v4412, %v4399
  %v5388 = vpack.c.b16 %v4413, %v4400
  %v5389 = vpack.c.b16 %v4414, %v4401
  %v5390 = vpack.c.b16 %v4415, %v4402
  %v5391 = vpack.c.b16 %v4416, %v4403
  %v5392 = vpack.c.b16 %v4417, %v4404
  %v5393 = vpack.c.b16 %v4418, %v4405
  %v5394 = vpack.c.b16 %v4419, %v4406
  %v5395 = vpack.c.b16 %v4420, %v4407
  %v5396 = vpack.c.b16 %v4421, %v4408
  %v5397 = vpack.c.b16 %v4422, %v4409
  %v5398 = vpack.c.b16 %v4423, %v4410
  %v5399 = vpack.c.b16 %v4437, %v4424
  %v5400 = vpack.c.b16 %v4438, %v4425
  %v5401 = vpack.c.b16 %v4439, %v4426
  %v5402 = vpack.c.b16 %v4440, %v4427
  %v5403 = vpack.c.b16 %v4441, %v4428
  %v5404 = vpack.c.b16 %v4442, %v4429
  %v5405 = vpack.c.b16 %v4443, %v4430
  %v5406 = vpack.c.b16 %v4444, %v4431
  %v5407 = vpack.c.b16 %v4445, %v4432
  %v5408 = vpack.c.b16 %v4446, %v4433
  %v5409 = vpack.c.b16 %v4447, %v4434
  %v5410 = vpack.c.b16 %v4448, %v4435
  %v5411 = vpack.c.b16 %v4449, %v4436
  %v5412 = vpack.c.b16 %v4463, %v4450
  %v5413 = vpack.c.b16 %v4464, %v4451
  %v5414 = vpack.c.b16 %v4465, %v4452
  %v5415 = vpack.c.b16 %v4466, %v4453
  %v5416 = vpack.c.b16 %v4467, %v4454
  %v5417 = vpack.c.b16 %v4468, %v4455
  %v5418 = vpack.c.b16 %v4469, %v4456
  %v5419 = vpack.c.b16 %v4470, %v4457
  %v5420 = vpack.c.b16 %v4471, %v4458
  %v5421 = vpack.c.b16 %v4472, %v4459
  %v5422 = vpack.c.b16 %v4473, %v4460
  %v5423 = vpack.c.b16 %v4474, %v4461
  %v5424 = vpack.c.b16 %v4475, %v4462
  %v5425 = vpack.c.b16 %v4489, %v4476
  %v5426 = vpack.c.b16 %v4490, %v4477
  %v5427 = vpack.c.b16 %v4491, %v4478
  %v5428 = vpack.c.b16 %v4492, %v4479
  %v5429 = vpack.c.b16 %v4493, %v4480
  %v5430 = vpack.c.b16 %v4494, %v4481
  %v5431 = vpack.c.b16 %v4495, %v4482
  %v5432 = vpack.c.b16 %v4496, %v4483
  %v5433 = vpack.c.b16 %v4497, %v4484
  %v5434 = vpack.c.b16 %v4498, %v4485
  %v5435 = vpack.c.b16 %v4499, %v4486
  %v5436 = vpack.c.b16 %v4500, %v4487
  %v5437 = vpack.c.b16 %v4501, %v4488
  %v5438 = vpack.c.b16 %v4515, %v4502
  %v5439 = vpack.c.b16 %v4516, %v4503
  %v5440 = vpack.c.b16 %v4517, %v4504
  %v5441 = vpack.c.b16 %v4518, %v4505
  %v5442 = vpack.c.b16 %v4519, %v4506
  %v5443 = vpack.c.b16 %v4520, %v4507
  %v5444 = vpack.c.b16 %v4521, %v4508
  %v5445 = vpack.c.b16 %v4522, %v4509
  %v5446 = vpack.c.b16 %v4523, %v4510
  %v5447 = vpack.c.b16 %v4524, %v4511
  %v5448 = vpack.c.b16 %v4525, %v4512
  %v5449 = vpack.c.b16 %v4526, %v4513
  %v5450 = vpack.c.b16 %v4527, %v4514
  %v5451 = vpack.c.b16 %v4541, %v4528
  %v5452 = vpack.c.b16 %v4542, %v4529
  %v5453 = vpack.c.b16 %v4543, %v4530
  %v5454 = vpack.c.b16 %v4544, %v4531
  %v5455 = vpack.c.b16 %v4545, %v4532
  %v5456 = vpack.c.b16 %v4546, %v4533
  %v5457 = vpack.c.b16 %v4547, %v4534
  %v5458 = vpack.c.b16 %v4548, %v4535
  %v5459 = vpack.c.b16 %v4549, %v4536
  %v5460 = vpack.c.b16 %v4550, %v4537
  %v5461 = vpack.c.b16 %v4551, %v4538
  %v5462 = vpack.c.b16 %v4552, %v4539
  %v5463 = vpack.c.b16 %v4553, %v4540
  %v5464 = vpack.c.b16 %v4567, %v4554
  %v5465 = vpack.c.b16 %v4568, %v4555
  %v5466 = vpack.c.b16 %v4569, %v4556
  %v5467 = vpack.c.b16 %v4570, %v4557
  %v5468 = vpack.c.b16 %v4571, %v4558
  %v5469 = vpack.c.b16 %v4572, %v4559
  %v5470 = vpack.c.b16 %v4573, %v4560
  %v5471 = vpack.c.b16 %v4574, %v4561
  %v5472 = vpack.c.b16 %v4575, %v4562
  %v5473 = vpack.c.b16 %v4576, %v4563
  %v5474 = vpack.c.b16 %v4577, %v4564
  %v5475 = vpack.c.b16 %v4578, %v4565
  %v5476 = vpack.c.b16 %v4579, %v4566
  %v5477 = vpack.c.b16 %v4593, %v4580
  %v5478 = vpack.c.b16 %v4594, %v4581
  %v5479 = vpack.c.b16 %v4595, %v4582
  %v5480 = vpack.c.b16 %v4596, %v4583
  %v5481 = vpack.c.b16 %v4597, %v4584
  %v5482 = vpack.c.b16 %v4598, %v4585
  %v5483 = vpack.c.b16 %v4599, %v4586
  %v5484 = vpack.c.b16 %v4600, %v4587
  %v5485 = vpack.c.b16 %v4601, %v4588
  %v5486 = vpack.c.b16 %v4602, %v4589
  %v5487 = vpack.c.b16 %v4603, %v4590
  %v5488 = vpack.c.b16 %v4604, %v4591
  %v5489 = vpack.c.b16 %v4605, %v4592
  %v5490 = vpack.c.b16 %v4619, %v4606
  %v5491 = vpack.c.b16 %v4620, %v4607
  %v5492 = vpack.c.b16 %v4621, %v4608
  %v5493 = vpack.c.b16 %v4622, %v4609
  %v5494 = vpack.c.b16 %v4623, %v4610
  %v5495 = vpack.c.b16 %v4624, %v4611
  %v5496 = vpack.c.b16 %v4625, %v4612
  %v5497 = vpack.c.b16 %v4626, %v4613
  %v5498 = vpack.c.b16 %v4627, %v4614
  %v5499 = vpack.c.b16 %v4628, %v4615
  %v5500 = vpack.c.b16 %v4629, %v4616
  %v5501 = vpack.c.b16 %v4630, %v4617
  %v5502 = vpack.c.b16 %v4631, %v4618
  %v5503 = vpack.c.b16 %v4645, %v4632
  %v5504 = vpack.c.b16 %v4646, %v4633
  %v5505 = vpack.c.b16 %v4647, %v4634
  %v5506 = vpack.c.b16 %v4648, %v4635
  %v5507 = vpack.c.b16 %v4649, %v4636
  %v5508 = vpack.c.b16 %v4650, %v4637
  %v5509 = vpack.c.b16 %v4651, %v4638
  %v5510 = vpack.c.b16 %v4652, %v4639
  %v5511 = vpack.c.b16 %v4653, %v4640
  %v5512 = vpack.c.b16 %v4654, %v4641
  %v5513 = vpack.c.b16 %v4655, %v4642
  %v5514 = vpack.c.b16 %v4656, %v4643
  %v5515 = vpack.c.b16 %v4657, %v4644
  %v5516 = vpack.c.b16 %v4671, %v4658
  %v5517 = vpack.c.b16 %v4672, %v4659
  %v5518 = vpack.c.b16 %v4673, %v4660
  %v5519 = vpack.c.b16 %v4674, %v4661
  %v5520 = vpack.c.b16 %v4675, %v4662
  %v5521 = vpack.c.b16 %v4676, %v4663
  %v5522 = vpack.c.b16 %v4677, %v4664
  %v5523 = vpack.c.b16 %v4678, %v4665
  %v5524 = vpack.c.b16 %v4679, %v4666
  %v5525 = vpack.c.b16 %v4680, %v4667
  %v5526 = vpack.c.b16 %v4681, %v4668
  %v5527 = vpack.c.b16 %v4682, %v4669
  %v5528 = vpack.c.b16 %v4683, %v4670
  %v5529 = vpack.c.b16 %v4697, %v4684
  %v5530 = vpack.c.b16 %v4698, %v4685
  %v5531 = vpack.c.b16 %v4699, %v4686
  %v5532 = vpack.c.b16 %v4700, %v4687
  %v5533 = vpack.c.b16 %v4701, %v4688
  %v5534 = vpack.c.b16 %v4702, %v4689
  %v5535 = vpack.c.b16 %v4703, %v4690
  %v5536 = vpack.c.b16 %v4704, %v4691
  %v5537 = vpack.c.b16 %v4705, %v4692
  %v5538 = vpack.c.b16 %v4706, %v4693
  %v5539 = vpack.c.b16 %v4707, %v4694
  %v5540 = vpack.c.b16 %v4708, %v4695
  %v5541 = vpack.c.b16 %v4709, %v4696
  %v5542 = vpack.c.b16 %v4723, %v4710
  %v5543 = vpack.c.b16 %v4724, %v4711
  %v5544 = vpack.c.b16 %v4725, %v4712
  %v5545 = vpack.c.b16 %v4726, %v4713
  %v5546 = vpack.c.b16 %v4727, %v4714
  %v5547 = vpack.c.b16 %v4728, %v4715
  %v5548 = vpack.c.b16 %v4729, %v4716
  %v5549 = vpack.c.b16 %v4730, %v4717
  %v5550 = vpack.c.b16 %v4731, %v4718
  %v5551 = vpack.c.b16 %v4732, %v4719
  %v5552 = vpack.c.b16 %v4733, %v4720
  %v5553 = vpack.c.b16 %v4734, %v4721
  %v5554 = vpack.c.b16 %v4735, %v4722
  %v5555 = vpack.c.b16 %v4749, %v4736
  %v5556 = vpack.c.b16 %v4750, %v4737
  %v5557 = vpack.c.b16 %v4751, %v4738
  %v5558 = vpack.c.b16 %v4752, %v4739
  %v5559 = vpack.c.b16 %v4753, %v4740
  %v5560 = vpack.c.b16 %v4754, %v4741
  %v5561 = vpack.c.b16 %v4755, %v4742
  %v5562 = vpack.c.b16 %v4756, %v4743
  %v5563 = vpack.c.b16 %v4757, %v4744
  %v5564 = vpack.c.b16 %v4758, %v4745
  %v5565 = vpack.c.b16 %v4759, %v4746
  %v5566 = vpack.c.b16 %v4760, %v4747
  %v5567 = vpack.c.b16 %v4761, %v4748
  %v5568 = vpack.c.b16 %v4775, %v4762
  %v5569 = vpack.c.b16 %v4776, %v4763
  %v5570 = vpack.c.b16 %v4777, %v4764
  %v5571 = vpack.c.b16 %v4778, %v4765
  %v5572 = vpack.c.b16 %v4779, %v4766
  %v5573 = vpack.c.b16 %v4780, %v4767
  %v5574 = vpack.c.b16 %v4781, %v4768
  %v5575 = vpack.c.b16 %v4782, %v4769
  %v5576 = vpack.c.b16 %v4783, %v4770
  %v5577 = vpack.c.b16 %v4784, %v4771
  %v5578 = vpack.c.b16 %v4785, %v4772
  %v5579 = vpack.c.b16 %v4786, %v4773
  %v5580 = vpack.c.b16 %v4787, %v4774
  %v5581 = vpack.c.b16 %v4801, %v4788
  %v5582 = vpack.c.b16 %v4802, %v4789
  %v5583 = vpack.c.b16 %v4803, %v4790
  %v5584 = vpack.c.b16 %v4804, %v4791
  %v5585 = vpack.c.b16 %v4805, %v4792
  %v5586 = vpack.c.b16 %v4806, %v4793
  %v5587 = vpack.c.b16 %v4807, %v4794
  %v5588 = vpack.c.b16 %v4808, %v4795
  %v5589 = vpack.c.b16 %v4809, %v4796
  %v5590 = vpack.c.b16 %v4810, %v4797
  %v5591 = vpack.c.b16 %v4811, %v4798
  %v5592 = vpack.c.b16 %v4812, %v4799
  %v5593 = vpack.c.b16 %v4813, %v4800
  %v5594 = vpack.c.b16 %v4827, %v4814
  %v5595 = vpack.c.b16 %v4828, %v4815
  %v5596 = vpack.c.b16 %v4829, %v4816
  %v5597 = vpack.c.b16 %v4830, %v4817
  %v5598 = vpack.c.b16 %v4831, %v4818
  %v5599 = vpack.c.b16 %v4832, %v4819
  %v5600 = vpack.c.b16 %v4833, %v4820
  %v5601 = vpack.c.b16 %v4834, %v4821
  %v5602 = vpack.c.b16 %v4835, %v4822
  %v5603 = vpack.c.b16 %v4836, %v4823
  %v5604 = vpack.c.b16 %v4837, %v4824
  %v5605 = vpack.c.b16 %v4838, %v4825
  %v5606 = vpack.c.b16 %v4839, %v4826
  %v5607 = vpack.c.b16 %v4853, %v4840
  %v5608 = vpack.c.b16 %v4854, %v4841
  %v5609 = vpack.c.b16 %v4855, %v4842
  %v5610 = vpack.c.b16 %v4856, %v4843
  %v5611 = vpack.c.b16 %v4857, %v4844
  %v5612 = vpack.c.b16 %v4858, %v4845
  %v5613 = vpack.c.b16 %v4859, %v4846
  %v5614 = vpack.c.b16 %v4860, %v4847
  %v5615 = vpack.c.b16 %v4861, %v4848
  %v5616 = vpack.c.b16 %v4862, %v4849
  %v5617 = vpack.c.b16 %v4863, %v4850
  %v5618 = vpack.c.b16 %v4864, %v4851
  %v5619 = vpack.c.b16 %v4865, %v4852
  %v5620 = vpack.c.b16 %v4879, %v4866
  %v5621 = vpack.c.b16 %v4880, %v4867
  %v5622 = vpack.c.b16 %v4881, %v4868
  %v5623 = vpack.c.b16 %v4882, %v4869
  %v5624 = vpack.c.b16 %v4883, %v4870
  %v5625 = vpack.c.b16 %v4884, %v4871
  %v5626 = vpack.c.b16 %v4885, %v4872
  %v5627 = vpack.c.b16 %v4886, %v4873
  %v5628 = vpack.c.b16 %v4887, %v4874
  %v5629 = vpack.c.b16 %v4888, %v4875
  %v5630 = vpack.c.b16 %v4889, %v4876
  %v5631 = vpack.c.b16 %v4890, %v4877
  %v5632 = vpack.c.b16 %v4891, %v4878
  %v5633 = vpack.c.b16 %v4905, %v4892
  %v5634 = vpack.c.b16 %v4906, %v4893
  %v5635 = vpack.c.b16 %v4907, %v4894
  %v5636 = vpack.c.b16 %v4908, %v4895
  %v5637 = vpack.c.b16 %v4909, %v4896
  %v5638 = vpack.c.b16 %v4910, %v4897
  %v5639 = vpack.c.b16 %v4911, %v4898
  %v5640 = vpack.c.b16 %v4912, %v4899
  %v5641 = vpack.c.b16 %v4913, %v4900
  %v5642 = vpack.c.b16 %v4914, %v4901
  %v5643 = vpack.c.b16 %v4915, %v4902
  %v5644 = vpack.c.b16 %v4916, %v4903
  %v5645 = vpack.c.b16 %v4917, %v4904
  %6374 = vmatprep.subr.bf16.mxu0 %v4919
  %6375 = vmatpush1.bf16.msra.mxu0 %v4918
  %6376 = vmatprep.subr.bf16.mxu0 %v4932
  %6377 = vmatpush1.bf16.msra.mxu0 %v4931
  %6378 = vmatprep.subr.bf16.mxu0 %v4945
  %6379 = vmatpush1.bf16.msra.mxu0 %v4944
  %6380 = vmatprep.subr.bf16.mxu0 %v4958
  %6381 = vmatpush1.bf16.msra.mxu0 %v4957
  %6382 = vmatprep.subr.bf16.mxu0 %v4971
  %6383 = vmatpush1.bf16.msra.mxu0 %v4970
  %6384 = vmatprep.subr.bf16.mxu0 %v4984
  %6385 = vmatpush1.bf16.msra.mxu0 %v4983
  %6386 = vmatprep.subr.bf16.mxu0 %v4997
  %6387 = vmatpush1.bf16.msra.mxu0 %v4996
  %6388 = vmatprep.subr.bf16.mxu0 %v5010
  %6389 = vmatpush1.bf16.msra.mxu0 %v5009
  %6390 = vmatprep.subr.bf16.mxu0 %v5023
  %6391 = vmatpush1.bf16.msra.mxu0 %v5022
  %6392 = vmatprep.subr.bf16.mxu0 %v5036
  %6393 = vmatpush1.bf16.msra.mxu0 %v5035
  %6394 = vmatprep.subr.bf16.mxu0 %v5049
  %6395 = vmatpush1.bf16.msra.mxu0 %v5048
  %6396 = vmatprep.subr.bf16.mxu0 %v5062
  %6397 = vmatpush1.bf16.msra.mxu0 %v5061
  %6398 = vmatprep.subr.bf16.mxu0 %v5075
  %6399 = vmatpush1.bf16.msra.mxu0 %v5074
  %6400 = vmatprep.subr.bf16.mxu0 %v5088
  %6401 = vmatpush1.bf16.msra.mxu0 %v5087
  %6402 = vmatprep.subr.bf16.mxu0 %v5101
  %6403 = vmatpush1.bf16.msra.mxu0 %v5100
  %6404 = vmatprep.subr.bf16.mxu0 %v5114
  %6405 = vmatpush1.bf16.msra.mxu0 %v5113
  %6406 = vmatprep.mubr.bf16.mxu0 %v1819
  %6407 = vmatmul.mubr.bf16.gmra.mrb[0].mxu0 %v1818
  %v6408 = vpop.f32.mrb[0].mxu0
  %v6409 = vadd.f32 %v2616, %v6408
  %v6410 = vpop.f32.mrb[0].mxu0
  %v6411 = vadd.f32 %v2620, %v6410
  %v6412 = vpop.f32.mrb[0].mxu0
  %v6413 = vpop.f32.mrb[0].mxu0
  %6414 = vdwg.mxu0
  %6415 = vmatprep.subr.bf16.mxu0 %v5127
  %6416 = vmatpush1.bf16.msra.mxu0 %v5126
  %6417 = vmatprep.subr.bf16.mxu0 %v5140
  %6418 = vmatpush1.bf16.msra.mxu0 %v5139
  %6419 = vmatprep.subr.bf16.mxu0 %v5153
  %6420 = vmatpush1.bf16.msra.mxu0 %v5152
  %6421 = vmatprep.subr.bf16.mxu0 %v5166
  %6422 = vmatpush1.bf16.msra.mxu0 %v5165
  %6423 = vmatprep.subr.bf16.mxu0 %v5179
  %6424 = vmatpush1.bf16.msra.mxu0 %v5178
  %6425 = vmatprep.subr.bf16.mxu0 %v5192
  %6426 = vmatpush1.bf16.msra.mxu0 %v5191
  %6427 = vmatprep.subr.bf16.mxu0 %v5205
  %6428 = vmatpush1.bf16.msra.mxu0 %v5204
  %6429 = vmatprep.subr.bf16.mxu0 %v5218
  %6430 = vmatpush1.bf16.msra.mxu0 %v5217
  %6431 = vmatprep.subr.bf16.mxu0 %v5231
  %6432 = vmatpush1.bf16.msra.mxu0 %v5230
  %6433 = vmatprep.subr.bf16.mxu0 %v5244
  %6434 = vmatpush1.bf16.msra.mxu0 %v5243
  %6435 = vmatprep.subr.bf16.mxu0 %v5257
  %6436 = vmatpush1.bf16.msra.mxu0 %v5256
  %6437 = vmatprep.subr.bf16.mxu0 %v5270
  %6438 = vmatpush1.bf16.msra.mxu0 %v5269
  %6439 = vmatprep.subr.bf16.mxu0 %v5283
  %6440 = vmatpush1.bf16.msra.mxu0 %v5282
  %6441 = vmatprep.subr.bf16.mxu0 %v5296
  %6442 = vmatpush1.bf16.msra.mxu0 %v5295
  %6443 = vmatprep.subr.bf16.mxu0 %v5309
  %6444 = vmatpush1.bf16.msra.mxu0 %v5308
  %6445 = vmatprep.subr.bf16.mxu0 %v5322
  %6446 = vmatpush1.bf16.msra.mxu0 %v5321
  %6447 = vmatprep.mubr.bf16.mxu0 %v1821
  %6448 = vmatmul.mubr.bf16.gmra.mrb[0].mxu0 %v1820
  %v6449 = vpop.f32.mrb[0].mxu0
  %v6450 = vadd.f32 %v6409, %v6449
  %v6451 = vpop.f32.mrb[0].mxu0
  %v6452 = vadd.f32 %v6411, %v6451
  %v6453 = vpop.f32.mrb[0].mxu0
  %v6454 = vpop.f32.mrb[0].mxu0
  %6455 = vdwg.mxu0
  %6456 = vmatprep.subr.bf16.mxu0 %v5335
  %6457 = vmatpush1.bf16.msra.mxu0 %v5334
  %6458 = vmatprep.subr.bf16.mxu0 %v5348
  %6459 = vmatpush1.bf16.msra.mxu0 %v5347
  %6460 = vmatprep.subr.bf16.mxu0 %v5361
  %6461 = vmatpush1.bf16.msra.mxu0 %v5360
  %6462 = vmatprep.subr.bf16.mxu0 %v5374
  %6463 = vmatpush1.bf16.msra.mxu0 %v5373
  %6464 = vmatprep.subr.bf16.mxu0 %v5387
  %6465 = vmatpush1.bf16.msra.mxu0 %v5386
  %6466 = vmatprep.subr.bf16.mxu0 %v5400
  %6467 = vmatpush1.bf16.msra.mxu0 %v5399
  %6468 = vmatprep.subr.bf16.mxu0 %v5413
  %6469 = vmatpush1.bf16.msra.mxu0 %v5412
  %6470 = vmatprep.subr.bf16.mxu0 %v5426
  %6471 = vmatpush1.bf16.msra.mxu0 %v5425
  %6472 = vmatprep.subr.bf16.mxu0 %v5439
  %6473 = vmatpush1.bf16.msra.mxu0 %v5438
  %6474 = vmatprep.subr.bf16.mxu0 %v5452
  %6475 = vmatpush1.bf16.msra.mxu0 %v5451
  %6476 = vmatprep.subr.bf16.mxu0 %v5465
  %6477 = vmatpush1.bf16.msra.mxu0 %v5464
  %6478 = vmatprep.subr.bf16.mxu0 %v5478
  %6479 = vmatpush1.bf16.msra.mxu0 %v5477
  %6480 = vmatprep.subr.bf16.mxu0 %v5491
  %6481 = vmatpush1.bf16.msra.mxu0 %v5490
  %6482 = vmatprep.subr.bf16.mxu0 %v5504
  %6483 = vmatpush1.bf16.msra.mxu0 %v5503
  %6484 = vmatprep.subr.bf16.mxu0 %v5517
  %6485 = vmatpush1.bf16.msra.mxu0 %v5516
  %6486 = vmatprep.subr.bf16.mxu0 %v5530
  %6487 = vmatpush1.bf16.msra.mxu0 %v5529
  %6488 = vmatprep.mubr.bf16.mxu0 %v1823
  %6489 = vmatmul.mubr.bf16.gmra.mrb[0].mxu0 %v1822
  %v6490 = vpop.f32.mrb[0].mxu0
  %v6491 = vadd.f32 %v6450, %v6490
  %v6492 = vpop.f32.mrb[0].mxu0
  %v6493 = vadd.f32 %v6452, %v6492
  %v6494 = vpop.f32.mrb[0].mxu0
  %v6495 = vpop.f32.mrb[0].mxu0
  %6496 = vdwg.mxu0
  %6497 = vmatprep.subr.bf16.mxu0 %v5543
  %6498 = vmatpush1.bf16.msra.mxu0 %v5542
  %6499 = vmatprep.subr.bf16.mxu0 %v5556
  %6500 = vmatpush1.bf16.msra.mxu0 %v5555
  %6501 = vmatprep.subr.bf16.mxu0 %v5569
  %6502 = vmatpush1.bf16.msra.mxu0 %v5568
  %6503 = vmatprep.subr.bf16.mxu0 %v5582
  %6504 = vmatpush1.bf16.msra.mxu0 %v5581
  %6505 = vmatprep.subr.bf16.mxu0 %v5595
  %6506 = vmatpush1.bf16.msra.mxu0 %v5594
  %6507 = vmatprep.subr.bf16.mxu0 %v5608
  %6508 = vmatpush1.bf16.msra.mxu0 %v5607
  %6509 = vmatprep.subr.bf16.mxu0 %v5621
  %6510 = vmatpush1.bf16.msra.mxu0 %v5620
  %6511 = vmatprep.subr.bf16.mxu0 %v5634
  %6512 = vmatpush1.bf16.msra.mxu0 %v5633
  %6513 = vmatprep.subr.bf16.mxu0 0
  %6514 = vmatpush1.bf16.msra.mxu0 0
  %6515 = vmatprep.subr.bf16.mxu0 0
  %6516 = vmatpush1.bf16.msra.mxu0 0
  %6517 = vmatprep.subr.bf16.mxu0 0
  %6518 = vmatpush1.bf16.msra.mxu0 0
  %6519 = vmatprep.subr.bf16.mxu0 0
  %6520 = vmatpush1.bf16.msra.mxu0 0
  %6521 = vmatprep.subr.bf16.mxu0 0
  %6522 = vmatpush1.bf16.msra.mxu0 0
  %6523 = vmatprep.subr.bf16.mxu0 0
  %6524 = vmatpush1.bf16.msra.mxu0 0
  %6525 = vmatprep.subr.bf16.mxu0 0
  %6526 = vmatpush1.bf16.msra.mxu0 0
  %6527 = vmatprep.subr.bf16.mxu0 0
  %6528 = vmatpush1.bf16.msra.mxu0 0
  %6529 = vmatprep.mubr.bf16.mxu0 0
  %6530 = vmatmul.mubr.bf16.gmra.mrb[0].mxu0 %v1824
  %v6531 = vpop.f32.mrb[0].mxu0
  %v6532 = vadd.f32 %v6491, %v6531
  %v6533 = vpop.f32.mrb[0].mxu0
  %v6534 = vadd.f32 %v6493, %v6533
  %v6535 = vpop.f32.mrb[0].mxu0
  %v6536 = vpop.f32.mrb[0].mxu0
  %6537 = vdwg.mxu0
  %6538 = vmatprep.subr.bf16.mxu0 %v4921
  %6539 = vmatpush1.bf16.msra.mxu0 %v4920
  %6540 = vmatprep.subr.bf16.mxu0 %v4934
  %6541 = vmatpush1.bf16.msra.mxu0 %v4933
  %6542 = vmatprep.subr.bf16.mxu0 %v4947
  %6543 = vmatpush1.bf16.msra.mxu0 %v4946
  %6544 = vmatprep.subr.bf16.mxu0 %v4960
  %6545 = vmatpush1.bf16.msra.mxu0 %v4959
  %6546 = vmatprep.subr.bf16.mxu0 %v4973
  %6547 = vmatpush1.bf16.msra.mxu0 %v4972
  %6548 = vmatprep.subr.bf16.mxu0 %v4986
  %6549 = vmatpush1.bf16.msra.mxu0 %v4985
  %6550 = vmatprep.subr.bf16.mxu0 %v4999
  %6551 = vmatpush1.bf16.msra.mxu0 %v4998
  %6552 = vmatprep.subr.bf16.mxu0 %v5012
  %6553 = vmatpush1.bf16.msra.mxu0 %v5011
  %6554 = vmatprep.subr.bf16.mxu0 %v5025
  %6555 = vmatpush1.bf16.msra.mxu0 %v5024
  %6556 = vmatprep.subr.bf16.mxu0 %v5038
  %6557 = vmatpush1.bf16.msra.mxu0 %v5037
  %6558 = vmatprep.subr.bf16.mxu0 %v5051
  %6559 = vmatpush1.bf16.msra.mxu0 %v5050
  %6560 = vmatprep.subr.bf16.mxu0 %v5064
  %6561 = vmatpush1.bf16.msra.mxu0 %v5063
  %6562 = vmatprep.subr.bf16.mxu0 %v5077
  %6563 = vmatpush1.bf16.msra.mxu0 %v5076
  %6564 = vmatprep.subr.bf16.mxu0 %v5090
  %6565 = vmatpush1.bf16.msra.mxu0 %v5089
  %6566 = vmatprep.subr.bf16.mxu0 %v5103
  %6567 = vmatpush1.bf16.msra.mxu0 %v5102
  %6568 = vmatprep.subr.bf16.mxu0 %v5116
  %6569 = vmatpush1.bf16.msra.mxu0 %v5115
  %6570 = vmatprep.mubr.bf16.mxu0 %v1819
  %6571 = vmatmul.mubr.bf16.gmra.mrb[0].mxu0 %v1818
  %v6572 = vpop.f32.mrb[0].mxu0
  %v6573 = vadd.f32 %v2624, %v6572
  %v6574 = vpop.f32.mrb[0].mxu0
  %v6575 = vadd.f32 %v2628, %v6574
  %v6576 = vpop.f32.mrb[0].mxu0
  %v6577 = vpop.f32.mrb[0].mxu0
  %6578 = vdwg.mxu0
  %6579 = vmatprep.subr.bf16.mxu0 %v5129
  %6580 = vmatpush1.bf16.msra.mxu0 %v5128
  %6581 = vmatprep.subr.bf16.mxu0 %v5142
  %6582 = vmatpush1.bf16.msra.mxu0 %v5141
  %6583 = vmatprep.subr.bf16.mxu0 %v5155
  %6584 = vmatpush1.bf16.msra.mxu0 %v5154
  %6585 = vmatprep.subr.bf16.mxu0 %v5168
  %6586 = vmatpush1.bf16.msra.mxu0 %v5167
  %6587 = vmatprep.subr.bf16.mxu0 %v5181
  %6588 = vmatpush1.bf16.msra.mxu0 %v5180
  %6589 = vmatprep.subr.bf16.mxu0 %v5194
  %6590 = vmatpush1.bf16.msra.mxu0 %v5193
  %6591 = vmatprep.subr.bf16.mxu0 %v5207
  %6592 = vmatpush1.bf16.msra.mxu0 %v5206
  %6593 = vmatprep.subr.bf16.mxu0 %v5220
  %6594 = vmatpush1.bf16.msra.mxu0 %v5219
  %6595 = vmatprep.subr.bf16.mxu0 %v5233
  %6596 = vmatpush1.bf16.msra.mxu0 %v5232
  %6597 = vmatprep.subr.bf16.mxu0 %v5246
  %6598 = vmatpush1.bf16.msra.mxu0 %v5245
  %6599 = vmatprep.subr.bf16.mxu0 %v5259
  %6600 = vmatpush1.bf16.msra.mxu0 %v5258
  %6601 = vmatprep.subr.bf16.mxu0 %v5272
  %6602 = vmatpush1.bf16.msra.mxu0 %v5271
  %6603 = vmatprep.subr.bf16.mxu0 %v5285
  %6604 = vmatpush1.bf16.msra.mxu0 %v5284
  %6605 = vmatprep.subr.bf16.mxu0 %v5298
  %6606 = vmatpush1.bf16.msra.mxu0 %v5297
  %6607 = vmatprep.subr.bf16.mxu0 %v5311
  %6608 = vmatpush1.bf16.msra.mxu0 %v5310
  %6609 = vmatprep.subr.bf16.mxu0 %v5324
  %6610 = vmatpush1.bf16.msra.mxu0 %v5323
  %6611 = vmatprep.mubr.bf16.mxu0 %v1821
  %6612 = vmatmul.mubr.bf16.gmra.mrb[0].mxu0 %v1820
  %v6613 = vpop.f32.mrb[0].mxu0
  %v6614 = vadd.f32 %v6573, %v6613
  %v6615 = vpop.f32.mrb[0].mxu0
  %v6616 = vadd.f32 %v6575, %v6615
  %v6617 = vpop.f32.mrb[0].mxu0
  %v6618 = vpop.f32.mrb[0].mxu0
  %6619 = vdwg.mxu0
  %6620 = vmatprep.subr.bf16.mxu0 %v5337
  %6621 = vmatpush1.bf16.msra.mxu0 %v5336
  %6622 = vmatprep.subr.bf16.mxu0 %v5350
  %6623 = vmatpush1.bf16.msra.mxu0 %v5349
  %6624 = vmatprep.subr.bf16.mxu0 %v5363
  %6625 = vmatpush1.bf16.msra.mxu0 %v5362
  %6626 = vmatprep.subr.bf16.mxu0 %v5376
  %6627 = vmatpush1.bf16.msra.mxu0 %v5375
  %6628 = vmatprep.subr.bf16.mxu0 %v5389
  %6629 = vmatpush1.bf16.msra.mxu0 %v5388
  %6630 = vmatprep.subr.bf16.mxu0 %v5402
  %6631 = vmatpush1.bf16.msra.mxu0 %v5401
  %6632 = vmatprep.subr.bf16.mxu0 %v5415
  %6633 = vmatpush1.bf16.msra.mxu0 %v5414
  %6634 = vmatprep.subr.bf16.mxu0 %v5428
  %6635 = vmatpush1.bf16.msra.mxu0 %v5427
  %6636 = vmatprep.subr.bf16.mxu0 %v5441
  %6637 = vmatpush1.bf16.msra.mxu0 %v5440
  %6638 = vmatprep.subr.bf16.mxu0 %v5454
  %6639 = vmatpush1.bf16.msra.mxu0 %v5453
  %6640 = vmatprep.subr.bf16.mxu0 %v5467
  %6641 = vmatpush1.bf16.msra.mxu0 %v5466
  %6642 = vmatprep.subr.bf16.mxu0 %v5480
  %6643 = vmatpush1.bf16.msra.mxu0 %v5479
  %6644 = vmatprep.subr.bf16.mxu0 %v5493
  %6645 = vmatpush1.bf16.msra.mxu0 %v5492
  %6646 = vmatprep.subr.bf16.mxu0 %v5506
  %6647 = vmatpush1.bf16.msra.mxu0 %v5505
  %6648 = vmatprep.subr.bf16.mxu0 %v5519
  %6649 = vmatpush1.bf16.msra.mxu0 %v5518
  %6650 = vmatprep.subr.bf16.mxu0 %v5532
  %6651 = vmatpush1.bf16.msra.mxu0 %v5531
  %6652 = vmatprep.mubr.bf16.mxu0 %v1823
  %6653 = vmatmul.mubr.bf16.gmra.mrb[0].mxu0 %v1822
  %v6654 = vpop.f32.mrb[0].mxu0
  %v6655 = vadd.f32 %v6614, %v6654
  %v6656 = vpop.f32.mrb[0].mxu0
  %v6657 = vadd.f32 %v6616, %v6656
  %v6658 = vpop.f32.mrb[0].mxu0
  %v6659 = vpop.f32.mrb[0].mxu0
  %6660 = vdwg.mxu0
  %6661 = vmatprep.subr.bf16.mxu0 %v5545
  %6662 = vmatpush1.bf16.msra.mxu0 %v5544
  %6663 = vmatprep.subr.bf16.mxu0 %v5558
  %6664 = vmatpush1.bf16.msra.mxu0 %v5557
  %6665 = vmatprep.subr.bf16.mxu0 %v5571
  %6666 = vmatpush1.bf16.msra.mxu0 %v5570
  %6667 = vmatprep.subr.bf16.mxu0 %v5584
  %6668 = vmatpush1.bf16.msra.mxu0 %v5583
  %6669 = vmatprep.subr.bf16.mxu0 %v5597
  %6670 = vmatpush1.bf16.msra.mxu0 %v5596
  %6671 = vmatprep.subr.bf16.mxu0 %v5610
  %6672 = vmatpush1.bf16.msra.mxu0 %v5609
  %6673 = vmatprep.subr.bf16.mxu0 %v5623
  %6674 = vmatpush1.bf16.msra.mxu0 %v5622
  %6675 = vmatprep.subr.bf16.mxu0 %v5636
  %6676 = vmatpush1.bf16.msra.mxu0 %v5635
  %6677 = vmatprep.subr.bf16.mxu0 0
  %6678 = vmatpush1.bf16.msra.mxu0 0
  %6679 = vmatprep.subr.bf16.mxu0 0
  %6680 = vmatpush1.bf16.msra.mxu0 0
  %6681 = vmatprep.subr.bf16.mxu0 0
  %6682 = vmatpush1.bf16.msra.mxu0 0
  %6683 = vmatprep.subr.bf16.mxu0 0
  %6684 = vmatpush1.bf16.msra.mxu0 0
  %6685 = vmatprep.subr.bf16.mxu0 0
  %6686 = vmatpush1.bf16.msra.mxu0 0
  %6687 = vmatprep.subr.bf16.mxu0 0
  %6688 = vmatpush1.bf16.msra.mxu0 0
  %6689 = vmatprep.subr.bf16.mxu0 0
  %6690 = vmatpush1.bf16.msra.mxu0 0
  %6691 = vmatprep.subr.bf16.mxu0 0
  %6692 = vmatpush1.bf16.msra.mxu0 0
  %6693 = vmatprep.mubr.bf16.mxu0 0
  %6694 = vmatmul.mubr.bf16.gmra.mrb[0].mxu0 %v1824
  %v6695 = vpop.f32.mrb[0].mxu0
  %v6696 = vadd.f32 %v6655, %v6695
  %v6697 = vpop.f32.mrb[0].mxu0
  %v6698 = vadd.f32 %v6657, %v6697
  %v6699 = vpop.f32.mrb[0].mxu0
  %v6700 = vpop.f32.mrb[0].mxu0
  %6701 = vdwg.mxu0
  %6702 = vmatprep.subr.bf16.mxu0 %v4923
  %6703 = vmatpush1.bf16.msra.mxu0 %v4922
  %6704 = vmatprep.subr.bf16.mxu0 %v4936
  %6705 = vmatpush1.bf16.msra.mxu0 %v4935
  %6706 = vmatprep.subr.bf16.mxu0 %v4949
  %6707 = vmatpush1.bf16.msra.mxu0 %v4948
  %6708 = vmatprep.subr.bf16.mxu0 %v4962
  %6709 = vmatpush1.bf16.msra.mxu0 %v4961
  %6710 = vmatprep.subr.bf16.mxu0 %v4975
  %6711 = vmatpush1.bf16.msra.mxu0 %v4974
  %6712 = vmatprep.subr.bf16.mxu0 %v4988
  %6713 = vmatpush1.bf16.msra.mxu0 %v4987
  %6714 = vmatprep.subr.bf16.mxu0 %v5001
  %6715 = vmatpush1.bf16.msra.mxu0 %v5000
  %6716 = vmatprep.subr.bf16.mxu0 %v5014
  %6717 = vmatpush1.bf16.msra.mxu0 %v5013
  %6718 = vmatprep.subr.bf16.mxu0 %v5027
  %6719 = vmatpush1.bf16.msra.mxu0 %v5026
  %6720 = vmatprep.subr.bf16.mxu0 %v5040
  %6721 = vmatpush1.bf16.msra.mxu0 %v5039
  %6722 = vmatprep.subr.bf16.mxu0 %v5053
  %6723 = vmatpush1.bf16.msra.mxu0 %v5052
  %6724 = vmatprep.subr.bf16.mxu0 %v5066
  %6725 = vmatpush1.bf16.msra.mxu0 %v5065
  %6726 = vmatprep.subr.bf16.mxu0 %v5079
  %6727 = vmatpush1.bf16.msra.mxu0 %v5078
  %6728 = vmatprep.subr.bf16.mxu0 %v5092
  %6729 = vmatpush1.bf16.msra.mxu0 %v5091
  %6730 = vmatprep.subr.bf16.mxu0 %v5105
  %6731 = vmatpush1.bf16.msra.mxu0 %v5104
  %6732 = vmatprep.subr.bf16.mxu0 %v5118
  %6733 = vmatpush1.bf16.msra.mxu0 %v5117
  %6734 = vmatprep.mubr.bf16.mxu0 %v1819
  %6735 = vmatmul.mubr.bf16.gmra.mrb[0].mxu0 %v1818
  %v6736 = vpop.f32.mrb[0].mxu0
  %v6737 = vadd.f32 %v2632, %v6736
  %v6738 = vpop.f32.mrb[0].mxu0
  %v6739 = vadd.f32 %v2636, %v6738
  %v6740 = vpop.f32.mrb[0].mxu0
  %v6741 = vpop.f32.mrb[0].mxu0
  %6742 = vdwg.mxu0
  %6743 = vmatprep.subr.bf16.mxu0 %v5131
  %6744 = vmatpush1.bf16.msra.mxu0 %v5130
  %6745 = vmatprep.subr.bf16.mxu0 %v5144
  %6746 = vmatpush1.bf16.msra.mxu0 %v5143
  %6747 = vmatprep.subr.bf16.mxu0 %v5157
  %6748 = vmatpush1.bf16.msra.mxu0 %v5156
  %6749 = vmatprep.subr.bf16.mxu0 %v5170
  %6750 = vmatpush1.bf16.msra.mxu0 %v5169
  %6751 = vmatprep.subr.bf16.mxu0 %v5183
  %6752 = vmatpush1.bf16.msra.mxu0 %v5182
  %6753 = vmatprep.subr.bf16.mxu0 %v5196
  %6754 = vmatpush1.bf16.msra.mxu0 %v5195
  %6755 = vmatprep.subr.bf16.mxu0 %v5209
  %6756 = vmatpush1.bf16.msra.mxu0 %v5208
  %6757 = vmatprep.subr.bf16.mxu0 %v5222
  %6758 = vmatpush1.bf16.msra.mxu0 %v5221
  %6759 = vmatprep.subr.bf16.mxu0 %v5235
  %6760 = vmatpush1.bf16.msra.mxu0 %v5234
  %6761 = vmatprep.subr.bf16.mxu0 %v5248
  %6762 = vmatpush1.bf16.msra.mxu0 %v5247
  %6763 = vmatprep.subr.bf16.mxu0 %v5261
  %6764 = vmatpush1.bf16.msra.mxu0 %v5260
  %6765 = vmatprep.subr.bf16.mxu0 %v5274
  %6766 = vmatpush1.bf16.msra.mxu0 %v5273
  %6767 = vmatprep.subr.bf16.mxu0 %v5287
  %6768 = vmatpush1.bf16.msra.mxu0 %v5286
  %6769 = vmatprep.subr.bf16.mxu0 %v5300
  %6770 = vmatpush1.bf16.msra.mxu0 %v5299
  %6771 = vmatprep.subr.bf16.mxu0 %v5313
  %6772 = vmatpush1.bf16.msra.mxu0 %v5312
  %6773 = vmatprep.subr.bf16.mxu0 %v5326
  %6774 = vmatpush1.bf16.msra.mxu0 %v5325
  %6775 = vmatprep.mubr.bf16.mxu0 %v1821
  %6776 = vmatmul.mubr.bf16.gmra.mrb[0].mxu0 %v1820
  %v6777 = vpop.f32.mrb[0].mxu0
  %v6778 = vadd.f32 %v6737, %v6777
  %v6779 = vpop.f32.mrb[0].mxu0
  %v6780 = vadd.f32 %v6739, %v6779
  %v6781 = vpop.f32.mrb[0].mxu0
  %v6782 = vpop.f32.mrb[0].mxu0
  %6783 = vdwg.mxu0
  %6784 = vmatprep.subr.bf16.mxu0 %v5339
  %6785 = vmatpush1.bf16.msra.mxu0 %v5338
  %6786 = vmatprep.subr.bf16.mxu0 %v5352
  %6787 = vmatpush1.bf16.msra.mxu0 %v5351
  %6788 = vmatprep.subr.bf16.mxu0 %v5365
  %6789 = vmatpush1.bf16.msra.mxu0 %v5364
  %6790 = vmatprep.subr.bf16.mxu0 %v5378
  %6791 = vmatpush1.bf16.msra.mxu0 %v5377
  %6792 = vmatprep.subr.bf16.mxu0 %v5391
  %6793 = vmatpush1.bf16.msra.mxu0 %v5390
  %6794 = vmatprep.subr.bf16.mxu0 %v5404
  %6795 = vmatpush1.bf16.msra.mxu0 %v5403
  %6796 = vmatprep.subr.bf16.mxu0 %v5417
  %6797 = vmatpush1.bf16.msra.mxu0 %v5416
  %6798 = vmatprep.subr.bf16.mxu0 %v5430
  %6799 = vmatpush1.bf16.msra.mxu0 %v5429
  %6800 = vmatprep.subr.bf16.mxu0 %v5443
  %6801 = vmatpush1.bf16.msra.mxu0 %v5442
  %6802 = vmatprep.subr.bf16.mxu0 %v5456
  %6803 = vmatpush1.bf16.msra.mxu0 %v5455
  %6804 = vmatprep.subr.bf16.mxu0 %v5469
  %6805 = vmatpush1.bf16.msra.mxu0 %v5468
  %6806 = vmatprep.subr.bf16.mxu0 %v5482
  %6807 = vmatpush1.bf16.msra.mxu0 %v5481
  %6808 = vmatprep.subr.bf16.mxu0 %v5495
  %6809 = vmatpush1.bf16.msra.mxu0 %v5494
  %6810 = vmatprep.subr.bf16.mxu0 %v5508
  %6811 = vmatpush1.bf16.msra.mxu0 %v5507
  %6812 = vmatprep.subr.bf16.mxu0 %v5521
  %6813 = vmatpush1.bf16.msra.mxu0 %v5520
  %6814 = vmatprep.subr.bf16.mxu0 %v5534
  %6815 = vmatpush1.bf16.msra.mxu0 %v5533
  %6816 = vmatprep.mubr.bf16.mxu0 %v1823
  %6817 = vmatmul.mubr.bf16.gmra.mrb[0].mxu0 %v1822
  %v6818 = vpop.f32.mrb[0].mxu0
  %v6819 = vadd.f32 %v6778, %v6818
  %v6820 = vpop.f32.mrb[0].mxu0
  %v6821 = vadd.f32 %v6780, %v6820
  %v6822 = vpop.f32.mrb[0].mxu0
  %v6823 = vpop.f32.mrb[0].mxu0
  %6824 = vdwg.mxu0
  %6825 = vmatprep.subr.bf16.mxu0 %v5547
  %6826 = vmatpush1.bf16.msra.mxu0 %v5546
  %6827 = vmatprep.subr.bf16.mxu0 %v5560
  %6828 = vmatpush1.bf16.msra.mxu0 %v5559
  %6829 = vmatprep.subr.bf16.mxu0 %v5573
  %6830 = vmatpush1.bf16.msra.mxu0 %v5572
  %6831 = vmatprep.subr.bf16.mxu0 %v5586
  %6832 = vmatpush1.bf16.msra.mxu0 %v5585
  %6833 = vmatprep.subr.bf16.mxu0 %v5599
  %6834 = vmatpush1.bf16.msra.mxu0 %v5598
  %6835 = vmatprep.subr.bf16.mxu0 %v5612
  %6836 = vmatpush1.bf16.msra.mxu0 %v5611
  %6837 = vmatprep.subr.bf16.mxu0 %v5625
  %6838 = vmatpush1.bf16.msra.mxu0 %v5624
  %6839 = vmatprep.subr.bf16.mxu0 %v5638
  %6840 = vmatpush1.bf16.msra.mxu0 %v5637
  %6841 = vmatprep.subr.bf16.mxu0 0
  %6842 = vmatpush1.bf16.msra.mxu0 0
  %6843 = vmatprep.subr.bf16.mxu0 0
  %6844 = vmatpush1.bf16.msra.mxu0 0
  %6845 = vmatprep.subr.bf16.mxu0 0
  %6846 = vmatpush1.bf16.msra.mxu0 0
  %6847 = vmatprep.subr.bf16.mxu0 0
  %6848 = vmatpush1.bf16.msra.mxu0 0
  %6849 = vmatprep.subr.bf16.mxu0 0
  %6850 = vmatpush1.bf16.msra.mxu0 0
  %6851 = vmatprep.subr.bf16.mxu0 0
  %6852 = vmatpush1.bf16.msra.mxu0 0
  %6853 = vmatprep.subr.bf16.mxu0 0
  %6854 = vmatpush1.bf16.msra.mxu0 0
  %6855 = vmatprep.subr.bf16.mxu0 0
  %6856 = vmatpush1.bf16.msra.mxu0 0
  %6857 = vmatprep.mubr.bf16.mxu0 0
  %6858 = vmatmul.mubr.bf16.gmra.mrb[0].mxu0 %v1824
  %v6859 = vpop.f32.mrb[0].mxu0
  %v6860 = vadd.f32 %v6819, %v6859
  %v6861 = vpop.f32.mrb[0].mxu0
  %v6862 = vadd.f32 %v6821, %v6861
  %v6863 = vpop.f32.mrb[0].mxu0
  %v6864 = vpop.f32.mrb[0].mxu0
  %6865 = vdwg.mxu0
  %6866 = vmatprep.subr.bf16.mxu0 %v4925
  %6867 = vmatpush1.bf16.msra.mxu0 %v4924
  %6868 = vmatprep.subr.bf16.mxu0 %v4938
  %6869 = vmatpush1.bf16.msra.mxu0 %v4937
  %6870 = vmatprep.subr.bf16.mxu0 %v4951
  %6871 = vmatpush1.bf16.msra.mxu0 %v4950
  %6872 = vmatprep.subr.bf16.mxu0 %v4964
  %6873 = vmatpush1.bf16.msra.mxu0 %v4963
  %6874 = vmatprep.subr.bf16.mxu0 %v4977
  %6875 = vmatpush1.bf16.msra.mxu0 %v4976
  %6876 = vmatprep.subr.bf16.mxu0 %v4990
  %6877 = vmatpush1.bf16.msra.mxu0 %v4989
  %6878 = vmatprep.subr.bf16.mxu0 %v5003
  %6879 = vmatpush1.bf16.msra.mxu0 %v5002
  %6880 = vmatprep.subr.bf16.mxu0 %v5016
  %6881 = vmatpush1.bf16.msra.mxu0 %v5015
  %6882 = vmatprep.subr.bf16.mxu0 %v5029
  %6883 = vmatpush1.bf16.msra.mxu0 %v5028
  %6884 = vmatprep.subr.bf16.mxu0 %v5042
  %6885 = vmatpush1.bf16.msra.mxu0 %v5041
  %6886 = vmatprep.subr.bf16.mxu0 %v5055
  %6887 = vmatpush1.bf16.msra.mxu0 %v5054
  %6888 = vmatprep.subr.bf16.mxu0 %v5068
  %6889 = vmatpush1.bf16.msra.mxu0 %v5067
  %6890 = vmatprep.subr.bf16.mxu0 %v5081
  %6891 = vmatpush1.bf16.msra.mxu0 %v5080
  %6892 = vmatprep.subr.bf16.mxu0 %v5094
  %6893 = vmatpush1.bf16.msra.mxu0 %v5093
  %6894 = vmatprep.subr.bf16.mxu0 %v5107
  %6895 = vmatpush1.bf16.msra.mxu0 %v5106
  %6896 = vmatprep.subr.bf16.mxu0 %v5120
  %6897 = vmatpush1.bf16.msra.mxu0 %v5119
  %6898 = vmatprep.mubr.bf16.mxu0 %v1819
  %6899 = vmatmul.mubr.bf16.gmra.mrb[0].mxu0 %v1818
  %v6900 = vpop.f32.mrb[0].mxu0
  %v6901 = vadd.f32 %v2640, %v6900
  %v6902 = vpop.f32.mrb[0].mxu0
  %v6903 = vadd.f32 %v2644, %v6902
  %v6904 = vpop.f32.mrb[0].mxu0
  %v6905 = vpop.f32.mrb[0].mxu0
  %6906 = vdwg.mxu0
  %6907 = vmatprep.subr.bf16.mxu0 %v5133
  %6908 = vmatpush1.bf16.msra.mxu0 %v5132
  %6909 = vmatprep.subr.bf16.mxu0 %v5146
  %6910 = vmatpush1.bf16.msra.mxu0 %v5145
  %6911 = vmatprep.subr.bf16.mxu0 %v5159
  %6912 = vmatpush1.bf16.msra.mxu0 %v5158
  %6913 = vmatprep.subr.bf16.mxu0 %v5172
  %6914 = vmatpush1.bf16.msra.mxu0 %v5171
  %6915 = vmatprep.subr.bf16.mxu0 %v5185
  %6916 = vmatpush1.bf16.msra.mxu0 %v5184
  %6917 = vmatprep.subr.bf16.mxu0 %v5198
  %6918 = vmatpush1.bf16.msra.mxu0 %v5197
  %6919 = vmatprep.subr.bf16.mxu0 %v5211
  %6920 = vmatpush1.bf16.msra.mxu0 %v5210
  %6921 = vmatprep.subr.bf16.mxu0 %v5224
  %6922 = vmatpush1.bf16.msra.mxu0 %v5223
  %6923 = vmatprep.subr.bf16.mxu0 %v5237
  %6924 = vmatpush1.bf16.msra.mxu0 %v5236
  %6925 = vmatprep.subr.bf16.mxu0 %v5250
  %6926 = vmatpush1.bf16.msra.mxu0 %v5249
  %6927 = vmatprep.subr.bf16.mxu0 %v5263
  %6928 = vmatpush1.bf16.msra.mxu0 %v5262
  %6929 = vmatprep.subr.bf16.mxu0 %v5276
  %6930 = vmatpush1.bf16.msra.mxu0 %v5275
  %6931 = vmatprep.subr.bf16.mxu0 %v5289
  %6932 = vmatpush1.bf16.msra.mxu0 %v5288
  %6933 = vmatprep.subr.bf16.mxu0 %v5302
  %6934 = vmatpush1.bf16.msra.mxu0 %v5301
  %6935 = vmatprep.subr.bf16.mxu0 %v5315
  %6936 = vmatpush1.bf16.msra.mxu0 %v5314
  %6937 = vmatprep.subr.bf16.mxu0 %v5328
  %6938 = vmatpush1.bf16.msra.mxu0 %v5327
  %6939 = vmatprep.mubr.bf16.mxu0 %v1821
  %6940 = vmatmul.mubr.bf16.gmra.mrb[0].mxu0 %v1820
  %v6941 = vpop.f32.mrb[0].mxu0
  %v6942 = vadd.f32 %v6901, %v6941
  %v6943 = vpop.f32.mrb[0].mxu0
  %v6944 = vadd.f32 %v6903, %v6943
  %v6945 = vpop.f32.mrb[0].mxu0
  %v6946 = vpop.f32.mrb[0].mxu0
  %6947 = vdwg.mxu0
  %6948 = vmatprep.subr.bf16.mxu0 %v5341
  %6949 = vmatpush1.bf16.msra.mxu0 %v5340
  %6950 = vmatprep.subr.bf16.mxu0 %v5354
  %6951 = vmatpush1.bf16.msra.mxu0 %v5353
  %6952 = vmatprep.subr.bf16.mxu0 %v5367
  %6953 = vmatpush1.bf16.msra.mxu0 %v5366
  %6954 = vmatprep.subr.bf16.mxu0 %v5380
  %6955 = vmatpush1.bf16.msra.mxu0 %v5379
  %6956 = vmatprep.subr.bf16.mxu0 %v5393
  %6957 = vmatpush1.bf16.msra.mxu0 %v5392
  %6958 = vmatprep.subr.bf16.mxu0 %v5406
  %6959 = vmatpush1.bf16.msra.mxu0 %v5405
  %6960 = vmatprep.subr.bf16.mxu0 %v5419
  %6961 = vmatpush1.bf16.msra.mxu0 %v5418
  %6962 = vmatprep.subr.bf16.mxu0 %v5432
  %6963 = vmatpush1.bf16.msra.mxu0 %v5431
  %6964 = vmatprep.subr.bf16.mxu0 %v5445
  %6965 = vmatpush1.bf16.msra.mxu0 %v5444
  %6966 = vmatprep.subr.bf16.mxu0 %v5458
  %6967 = vmatpush1.bf16.msra.mxu0 %v5457
  %6968 = vmatprep.subr.bf16.mxu0 %v5471
  %6969 = vmatpush1.bf16.msra.mxu0 %v5470
  %6970 = vmatprep.subr.bf16.mxu0 %v5484
  %6971 = vmatpush1.bf16.msra.mxu0 %v5483
  %6972 = vmatprep.subr.bf16.mxu0 %v5497
  %6973 = vmatpush1.bf16.msra.mxu0 %v5496
  %6974 = vmatprep.subr.bf16.mxu0 %v5510
  %6975 = vmatpush1.bf16.msra.mxu0 %v5509
  %6976 = vmatprep.subr.bf16.mxu0 %v5523
  %6977 = vmatpush1.bf16.msra.mxu0 %v5522
  %6978 = vmatprep.subr.bf16.mxu0 %v5536
  %6979 = vmatpush1.bf16.msra.mxu0 %v5535
  %6980 = vmatprep.mubr.bf16.mxu0 %v1823
  %6981 = vmatmul.mubr.bf16.gmra.mrb[0].mxu0 %v1822
  %v6982 = vpop.f32.mrb[0].mxu0
  %v6983 = vadd.f32 %v6942, %v6982
  %v6984 = vpop.f32.mrb[0].mxu0
  %v6985 = vadd.f32 %v6944, %v6984
  %v6986 = vpop.f32.mrb[0].mxu0
  %v6987 = vpop.f32.mrb[0].mxu0
  %6988 = vdwg.mxu0
  %6989 = vmatprep.subr.bf16.mxu0 %v5549
  %6990 = vmatpush1.bf16.msra.mxu0 %v5548
  %6991 = vmatprep.subr.bf16.mxu0 %v5562
  %6992 = vmatpush1.bf16.msra.mxu0 %v5561
  %6993 = vmatprep.subr.bf16.mxu0 %v5575
  %6994 = vmatpush1.bf16.msra.mxu0 %v5574
  %6995 = vmatprep.subr.bf16.mxu0 %v5588
  %6996 = vmatpush1.bf16.msra.mxu0 %v5587
  %6997 = vmatprep.subr.bf16.mxu0 %v5601
  %6998 = vmatpush1.bf16.msra.mxu0 %v5600
  %6999 = vmatprep.subr.bf16.mxu0 %v5614
  %7000 = vmatpush1.bf16.msra.mxu0 %v5613
  %7001 = vmatprep.subr.bf16.mxu0 %v5627
  %7002 = vmatpush1.bf16.msra.mxu0 %v5626
  %7003 = vmatprep.subr.bf16.mxu0 %v5640
  %7004 = vmatpush1.bf16.msra.mxu0 %v5639
  %7005 = vmatprep.subr.bf16.mxu0 0
  %7006 = vmatpush1.bf16.msra.mxu0 0
  %7007 = vmatprep.subr.bf16.mxu0 0
  %7008 = vmatpush1.bf16.msra.mxu0 0
  %7009 = vmatprep.subr.bf16.mxu0 0
  %7010 = vmatpush1.bf16.msra.mxu0 0
  %7011 = vmatprep.subr.bf16.mxu0 0
  %7012 = vmatpush1.bf16.msra.mxu0 0
  %7013 = vmatprep.subr.bf16.mxu0 0
  %7014 = vmatpush1.bf16.msra.mxu0 0
  %7015 = vmatprep.subr.bf16.mxu0 0
  %7016 = vmatpush1.bf16.msra.mxu0 0
  %7017 = vmatprep.subr.bf16.mxu0 0
  %7018 = vmatpush1.bf16.msra.mxu0 0
  %7019 = vmatprep.subr.bf16.mxu0 0
  %7020 = vmatpush1.bf16.msra.mxu0 0
  %7021 = vmatprep.mubr.bf16.mxu0 0
  %7022 = vmatmul.mubr.bf16.gmra.mrb[0].mxu0 %v1824
  %v7023 = vpop.f32.mrb[0].mxu0
  %v7024 = vadd.f32 %v6983, %v7023
  %v7025 = vpop.f32.mrb[0].mxu0
  %v7026 = vadd.f32 %v6985, %v7025
  %v7027 = vpop.f32.mrb[0].mxu0
  %v7028 = vpop.f32.mrb[0].mxu0
  %7029 = vdwg.mxu0
  %7030 = vmatprep.subr.bf16.mxu0 %v4927
  %7031 = vmatpush1.bf16.msra.mxu0 %v4926
  %7032 = vmatprep.subr.bf16.mxu0 %v4940
  %7033 = vmatpush1.bf16.msra.mxu0 %v4939
  %7034 = vmatprep.subr.bf16.mxu0 %v4953
  %7035 = vmatpush1.bf16.msra.mxu0 %v4952
  %7036 = vmatprep.subr.bf16.mxu0 %v4966
  %7037 = vmatpush1.bf16.msra.mxu0 %v4965
  %7038 = vmatprep.subr.bf16.mxu0 %v4979
  %7039 = vmatpush1.bf16.msra.mxu0 %v4978
  %7040 = vmatprep.subr.bf16.mxu0 %v4992
  %7041 = vmatpush1.bf16.msra.mxu0 %v4991
  %7042 = vmatprep.subr.bf16.mxu0 %v5005
  %7043 = vmatpush1.bf16.msra.mxu0 %v5004
  %7044 = vmatprep.subr.bf16.mxu0 %v5018
  %7045 = vmatpush1.bf16.msra.mxu0 %v5017
  %7046 = vmatprep.subr.bf16.mxu0 %v5031
  %7047 = vmatpush1.bf16.msra.mxu0 %v5030
  %7048 = vmatprep.subr.bf16.mxu0 %v5044
  %7049 = vmatpush1.bf16.msra.mxu0 %v5043
  %7050 = vmatprep.subr.bf16.mxu0 %v5057
  %7051 = vmatpush1.bf16.msra.mxu0 %v5056
  %7052 = vmatprep.subr.bf16.mxu0 %v5070
  %7053 = vmatpush1.bf16.msra.mxu0 %v5069
  %7054 = vmatprep.subr.bf16.mxu0 %v5083
  %7055 = vmatpush1.bf16.msra.mxu0 %v5082
  %7056 = vmatprep.subr.bf16.mxu0 %v5096
  %7057 = vmatpush1.bf16.msra.mxu0 %v5095
  %7058 = vmatprep.subr.bf16.mxu0 %v5109
  %7059 = vmatpush1.bf16.msra.mxu0 %v5108
  %7060 = vmatprep.subr.bf16.mxu0 %v5122
  %7061 = vmatpush1.bf16.msra.mxu0 %v5121
  %7062 = vmatprep.mubr.bf16.mxu0 %v1819
  %7063 = vmatmul.mubr.bf16.gmra.mrb[0].mxu0 %v1818
  %v7064 = vpop.f32.mrb[0].mxu0
  %v7065 = vadd.f32 %v2648, %v7064
  %v7066 = vpop.f32.mrb[0].mxu0
  %v7067 = vadd.f32 %v2652, %v7066
  %v7068 = vpop.f32.mrb[0].mxu0
  %v7069 = vpop.f32.mrb[0].mxu0
  %7070 = vdwg.mxu0
  %7071 = vmatprep.subr.bf16.mxu0 %v5135
  %7072 = vmatpush1.bf16.msra.mxu0 %v5134
  %7073 = vmatprep.subr.bf16.mxu0 %v5148
  %7074 = vmatpush1.bf16.msra.mxu0 %v5147
  %7075 = vmatprep.subr.bf16.mxu0 %v5161
  %7076 = vmatpush1.bf16.msra.mxu0 %v5160
  %7077 = vmatprep.subr.bf16.mxu0 %v5174
  %7078 = vmatpush1.bf16.msra.mxu0 %v5173
  %7079 = vmatprep.subr.bf16.mxu0 %v5187
  %7080 = vmatpush1.bf16.msra.mxu0 %v5186
  %7081 = vmatprep.subr.bf16.mxu0 %v5200
  %7082 = vmatpush1.bf16.msra.mxu0 %v5199
  %7083 = vmatprep.subr.bf16.mxu0 %v5213
  %7084 = vmatpush1.bf16.msra.mxu0 %v5212
  %7085 = vmatprep.subr.bf16.mxu0 %v5226
  %7086 = vmatpush1.bf16.msra.mxu0 %v5225
  %7087 = vmatprep.subr.bf16.mxu0 %v5239
  %7088 = vmatpush1.bf16.msra.mxu0 %v5238
  %7089 = vmatprep.subr.bf16.mxu0 %v5252
  %7090 = vmatpush1.bf16.msra.mxu0 %v5251
  %7091 = vmatprep.subr.bf16.mxu0 %v5265
  %7092 = vmatpush1.bf16.msra.mxu0 %v5264
  %7093 = vmatprep.subr.bf16.mxu0 %v5278
  %7094 = vmatpush1.bf16.msra.mxu0 %v5277
  %7095 = vmatprep.subr.bf16.mxu0 %v5291
  %7096 = vmatpush1.bf16.msra.mxu0 %v5290
  %7097 = vmatprep.subr.bf16.mxu0 %v5304
  %7098 = vmatpush1.bf16.msra.mxu0 %v5303
  %7099 = vmatprep.subr.bf16.mxu0 %v5317
  %7100 = vmatpush1.bf16.msra.mxu0 %v5316
  %7101 = vmatprep.subr.bf16.mxu0 %v5330
  %7102 = vmatpush1.bf16.msra.mxu0 %v5329
  %7103 = vmatprep.mubr.bf16.mxu0 %v1821
  %7104 = vmatmul.mubr.bf16.gmra.mrb[0].mxu0 %v1820
  %v7105 = vpop.f32.mrb[0].mxu0
  %v7106 = vadd.f32 %v7065, %v7105
  %v7107 = vpop.f32.mrb[0].mxu0
  %v7108 = vadd.f32 %v7067, %v7107
  %v7109 = vpop.f32.mrb[0].mxu0
  %v7110 = vpop.f32.mrb[0].mxu0
  %7111 = vdwg.mxu0
  %7112 = vmatprep.subr.bf16.mxu0 %v5343
  %7113 = vmatpush1.bf16.msra.mxu0 %v5342
  %7114 = vmatprep.subr.bf16.mxu0 %v5356
  %7115 = vmatpush1.bf16.msra.mxu0 %v5355
  %7116 = vmatprep.subr.bf16.mxu0 %v5369
  %7117 = vmatpush1.bf16.msra.mxu0 %v5368
  %7118 = vmatprep.subr.bf16.mxu0 %v5382
  %7119 = vmatpush1.bf16.msra.mxu0 %v5381
  %7120 = vmatprep.subr.bf16.mxu0 %v5395
  %7121 = vmatpush1.bf16.msra.mxu0 %v5394
  %7122 = vmatprep.subr.bf16.mxu0 %v5408
  %7123 = vmatpush1.bf16.msra.mxu0 %v5407
  %7124 = vmatprep.subr.bf16.mxu0 %v5421
  %7125 = vmatpush1.bf16.msra.mxu0 %v5420
  %7126 = vmatprep.subr.bf16.mxu0 %v5434
  %7127 = vmatpush1.bf16.msra.mxu0 %v5433
  %7128 = vmatprep.subr.bf16.mxu0 %v5447
  %7129 = vmatpush1.bf16.msra.mxu0 %v5446
  %7130 = vmatprep.subr.bf16.mxu0 %v5460
  %7131 = vmatpush1.bf16.msra.mxu0 %v5459
  %7132 = vmatprep.subr.bf16.mxu0 %v5473
  %7133 = vmatpush1.bf16.msra.mxu0 %v5472
  %7134 = vmatprep.subr.bf16.mxu0 %v5486
  %7135 = vmatpush1.bf16.msra.mxu0 %v5485
  %7136 = vmatprep.subr.bf16.mxu0 %v5499
  %7137 = vmatpush1.bf16.msra.mxu0 %v5498
  %7138 = vmatprep.subr.bf16.mxu0 %v5512
  %7139 = vmatpush1.bf16.msra.mxu0 %v5511
  %7140 = vmatprep.subr.bf16.mxu0 %v5525
  %7141 = vmatpush1.bf16.msra.mxu0 %v5524
  %7142 = vmatprep.subr.bf16.mxu0 %v5538
  %7143 = vmatpush1.bf16.msra.mxu0 %v5537
  %7144 = vmatprep.mubr.bf16.mxu0 %v1823
  %7145 = vmatmul.mubr.bf16.gmra.mrb[0].mxu0 %v1822
  %v7146 = vpop.f32.mrb[0].mxu0
  %v7147 = vadd.f32 %v7106, %v7146
  %v7148 = vpop.f32.mrb[0].mxu0
  %v7149 = vadd.f32 %v7108, %v7148
  %v7150 = vpop.f32.mrb[0].mxu0
  %v7151 = vpop.f32.mrb[0].mxu0
  %7152 = vdwg.mxu0
  %7153 = vmatprep.subr.bf16.mxu0 %v5551
  %7154 = vmatpush1.bf16.msra.mxu0 %v5550
  %7155 = vmatprep.subr.bf16.mxu0 %v5564
  %7156 = vmatpush1.bf16.msra.mxu0 %v5563
  %7157 = vmatprep.subr.bf16.mxu0 %v5577
  %7158 = vmatpush1.bf16.msra.mxu0 %v5576
  %7159 = vmatprep.subr.bf16.mxu0 %v5590
  %7160 = vmatpush1.bf16.msra.mxu0 %v5589
  %7161 = vmatprep.subr.bf16.mxu0 %v5603
  %7162 = vmatpush1.bf16.msra.mxu0 %v5602
  %7163 = vmatprep.subr.bf16.mxu0 %v5616
  %7164 = vmatpush1.bf16.msra.mxu0 %v5615
  %7165 = vmatprep.subr.bf16.mxu0 %v5629
  %7166 = vmatpush1.bf16.msra.mxu0 %v5628
  %7167 = vmatprep.subr.bf16.mxu0 %v5642
  %7168 = vmatpush1.bf16.msra.mxu0 %v5641
  %7169 = vmatprep.subr.bf16.mxu0 0
  %7170 = vmatpush1.bf16.msra.mxu0 0
  %7171 = vmatprep.subr.bf16.mxu0 0
  %7172 = vmatpush1.bf16.msra.mxu0 0
  %7173 = vmatprep.subr.bf16.mxu0 0
  %7174 = vmatpush1.bf16.msra.mxu0 0
  %7175 = vmatprep.subr.bf16.mxu0 0
  %7176 = vmatpush1.bf16.msra.mxu0 0
  %7177 = vmatprep.subr.bf16.mxu0 0
  %7178 = vmatpush1.bf16.msra.mxu0 0
  %7179 = vmatprep.subr.bf16.mxu0 0
  %7180 = vmatpush1.bf16.msra.mxu0 0
  %7181 = vmatprep.subr.bf16.mxu0 0
  %7182 = vmatpush1.bf16.msra.mxu0 0
  %7183 = vmatprep.subr.bf16.mxu0 0
  %7184 = vmatpush1.bf16.msra.mxu0 0
  %7185 = vmatprep.mubr.bf16.mxu0 0
  %7186 = vmatmul.mubr.bf16.gmra.mrb[0].mxu0 %v1824
  %v7187 = vpop.f32.mrb[0].mxu0
  %v7188 = vadd.f32 %v7147, %v7187
  %v7189 = vpop.f32.mrb[0].mxu0
  %v7190 = vadd.f32 %v7149, %v7189
  %v7191 = vpop.f32.mrb[0].mxu0
  %v7192 = vpop.f32.mrb[0].mxu0
  %7193 = vdwg.mxu0
  %7194 = vmatprep.subr.bf16.mxu0 %v4929
  %7195 = vmatpush1.bf16.msra.mxu0 %v4928
  %7196 = vmatprep.subr.bf16.mxu0 %v4942
  %7197 = vmatpush1.bf16.msra.mxu0 %v4941
  %7198 = vmatprep.subr.bf16.mxu0 %v4955
  %7199 = vmatpush1.bf16.msra.mxu0 %v4954
  %7200 = vmatprep.subr.bf16.mxu0 %v4968
  %7201 = vmatpush1.bf16.msra.mxu0 %v4967
  %7202 = vmatprep.subr.bf16.mxu0 %v4981
  %7203 = vmatpush1.bf16.msra.mxu0 %v4980
  %7204 = vmatprep.subr.bf16.mxu0 %v4994
  %7205 = vmatpush1.bf16.msra.mxu0 %v4993
  %7206 = vmatprep.subr.bf16.mxu0 %v5007
  %7207 = vmatpush1.bf16.msra.mxu0 %v5006
  %7208 = vmatprep.subr.bf16.mxu0 %v5020
  %7209 = vmatpush1.bf16.msra.mxu0 %v5019
  %7210 = vmatprep.subr.bf16.mxu0 %v5033
  %7211 = vmatpush1.bf16.msra.mxu0 %v5032
  %7212 = vmatprep.subr.bf16.mxu0 %v5046
  %7213 = vmatpush1.bf16.msra.mxu0 %v5045
  %7214 = vmatprep.subr.bf16.mxu0 %v5059
  %7215 = vmatpush1.bf16.msra.mxu0 %v5058
  %7216 = vmatprep.subr.bf16.mxu0 %v5072
  %7217 = vmatpush1.bf16.msra.mxu0 %v5071
  %7218 = vmatprep.subr.bf16.mxu0 %v5085
  %7219 = vmatpush1.bf16.msra.mxu0 %v5084
  %7220 = vmatprep.subr.bf16.mxu0 %v5098
  %7221 = vmatpush1.bf16.msra.mxu0 %v5097
  %7222 = vmatprep.subr.bf16.mxu0 %v5111
  %7223 = vmatpush1.bf16.msra.mxu0 %v5110
  %7224 = vmatprep.subr.bf16.mxu0 %v5124
  %7225 = vmatpush1.bf16.msra.mxu0 %v5123
  %7226 = vmatprep.mubr.bf16.mxu0 %v1819
  %7227 = vmatmul.mubr.bf16.gmra.mrb[0].mxu0 %v1818
  %v7228 = vpop.f32.mrb[0].mxu0
  %v7229 = vadd.f32 %v2656, %v7228
  %v7230 = vpop.f32.mrb[0].mxu0
  %v7231 = vadd.f32 %v2660, %v7230
  %v7232 = vpop.f32.mrb[0].mxu0
  %v7233 = vpop.f32.mrb[0].mxu0
  %7234 = vdwg.mxu0
  %7235 = vmatprep.subr.bf16.mxu0 %v5137
  %7236 = vmatpush1.bf16.msra.mxu0 %v5136
  %7237 = vmatprep.subr.bf16.mxu0 %v5150
  %7238 = vmatpush1.bf16.msra.mxu0 %v5149
  %7239 = vmatprep.subr.bf16.mxu0 %v5163
  %7240 = vmatpush1.bf16.msra.mxu0 %v5162
  %7241 = vmatprep.subr.bf16.mxu0 %v5176
  %7242 = vmatpush1.bf16.msra.mxu0 %v5175
  %7243 = vmatprep.subr.bf16.mxu0 %v5189
  %7244 = vmatpush1.bf16.msra.mxu0 %v5188
  %7245 = vmatprep.subr.bf16.mxu0 %v5202
  %7246 = vmatpush1.bf16.msra.mxu0 %v5201
  %7247 = vmatprep.subr.bf16.mxu0 %v5215
  %7248 = vmatpush1.bf16.msra.mxu0 %v5214
  %7249 = vmatprep.subr.bf16.mxu0 %v5228
  %7250 = vmatpush1.bf16.msra.mxu0 %v5227
  %7251 = vmatprep.subr.bf16.mxu0 %v5241
  %7252 = vmatpush1.bf16.msra.mxu0 %v5240
  %7253 = vmatprep.subr.bf16.mxu0 %v5254
  %7254 = vmatpush1.bf16.msra.mxu0 %v5253
  %7255 = vmatprep.subr.bf16.mxu0 %v5267
  %7256 = vmatpush1.bf16.msra.mxu0 %v5266
  %7257 = vmatprep.subr.bf16.mxu0 %v5280
  %7258 = vmatpush1.bf16.msra.mxu0 %v5279
  %7259 = vmatprep.subr.bf16.mxu0 %v5293
  %7260 = vmatpush1.bf16.msra.mxu0 %v5292
  %7261 = vmatprep.subr.bf16.mxu0 %v5306
  %7262 = vmatpush1.bf16.msra.mxu0 %v5305
  %7263 = vmatprep.subr.bf16.mxu0 %v5319
  %7264 = vmatpush1.bf16.msra.mxu0 %v5318
  %7265 = vmatprep.subr.bf16.mxu0 %v5332
  %7266 = vmatpush1.bf16.msra.mxu0 %v5331
  %7267 = vmatprep.mubr.bf16.mxu0 %v1821
  %7268 = vmatmul.mubr.bf16.gmra.mrb[0].mxu0 %v1820
  %v7269 = vpop.f32.mrb[0].mxu0
  %v7270 = vadd.f32 %v7229, %v7269
  %v7271 = vpop.f32.mrb[0].mxu0
  %v7272 = vadd.f32 %v7231, %v7271
  %v7273 = vpop.f32.mrb[0].mxu0
  %v7274 = vpop.f32.mrb[0].mxu0
  %7275 = vdwg.mxu0
  %7276 = vmatprep.subr.bf16.mxu0 %v5345
  %7277 = vmatpush1.bf16.msra.mxu0 %v5344
  %7278 = vmatprep.subr.bf16.mxu0 %v5358
  %7279 = vmatpush1.bf16.msra.mxu0 %v5357
  %7280 = vmatprep.subr.bf16.mxu0 %v5371
  %7281 = vmatpush1.bf16.msra.mxu0 %v5370
  %7282 = vmatprep.subr.bf16.mxu0 %v5384
  %7283 = vmatpush1.bf16.msra.mxu0 %v5383
  %7284 = vmatprep.subr.bf16.mxu0 %v5397
  %7285 = vmatpush1.bf16.msra.mxu0 %v5396
  %7286 = vmatprep.subr.bf16.mxu0 %v5410
  %7287 = vmatpush1.bf16.msra.mxu0 %v5409
  %7288 = vmatprep.subr.bf16.mxu0 %v5423
  %7289 = vmatpush1.bf16.msra.mxu0 %v5422
  %7290 = vmatprep.subr.bf16.mxu0 %v5436
  %7291 = vmatpush1.bf16.msra.mxu0 %v5435
  %7292 = vmatprep.subr.bf16.mxu0 %v5449
  %7293 = vmatpush1.bf16.msra.mxu0 %v5448
  %7294 = vmatprep.subr.bf16.mxu0 %v5462
  %7295 = vmatpush1.bf16.msra.mxu0 %v5461
  %7296 = vmatprep.subr.bf16.mxu0 %v5475
  %7297 = vmatpush1.bf16.msra.mxu0 %v5474
  %7298 = vmatprep.subr.bf16.mxu0 %v5488
  %7299 = vmatpush1.bf16.msra.mxu0 %v5487
  %7300 = vmatprep.subr.bf16.mxu0 %v5501
  %7301 = vmatpush1.bf16.msra.mxu0 %v5500
  %7302 = vmatprep.subr.bf16.mxu0 %v5514
  %7303 = vmatpush1.bf16.msra.mxu0 %v5513
  %7304 = vmatprep.subr.bf16.mxu0 %v5527
  %7305 = vmatpush1.bf16.msra.mxu0 %v5526
  %7306 = vmatprep.subr.bf16.mxu0 %v5540
  %7307 = vmatpush1.bf16.msra.mxu0 %v5539
  %7308 = vmatprep.mubr.bf16.mxu0 %v1823
  %7309 = vmatmul.mubr.bf16.gmra.mrb[0].mxu0 %v1822
  %v7310 = vpop.f32.mrb[0].mxu0
  %v7311 = vadd.f32 %v7270, %v7310
  %v7312 = vpop.f32.mrb[0].mxu0
  %v7313 = vadd.f32 %v7272, %v7312
  %v7314 = vpop.f32.mrb[0].mxu0
  %v7315 = vpop.f32.mrb[0].mxu0
  %7316 = vdwg.mxu0
  %7317 = vmatprep.subr.bf16.mxu0 %v5553
  %7318 = vmatpush1.bf16.msra.mxu0 %v5552
  %7319 = vmatprep.subr.bf16.mxu0 %v5566
  %7320 = vmatpush1.bf16.msra.mxu0 %v5565
  %7321 = vmatprep.subr.bf16.mxu0 %v5579
  %7322 = vmatpush1.bf16.msra.mxu0 %v5578
  %7323 = vmatprep.subr.bf16.mxu0 %v5592
  %7324 = vmatpush1.bf16.msra.mxu0 %v5591
  %7325 = vmatprep.subr.bf16.mxu0 %v5605
  %7326 = vmatpush1.bf16.msra.mxu0 %v5604
  %7327 = vmatprep.subr.bf16.mxu0 %v5618
  %7328 = vmatpush1.bf16.msra.mxu0 %v5617
  %7329 = vmatprep.subr.bf16.mxu0 %v5631
  %7330 = vmatpush1.bf16.msra.mxu0 %v5630
  %7331 = vmatprep.subr.bf16.mxu0 %v5644
  %7332 = vmatpush1.bf16.msra.mxu0 %v5643
  %7333 = vmatprep.subr.bf16.mxu0 0
  %7334 = vmatpush1.bf16.msra.mxu0 0
  %7335 = vmatprep.subr.bf16.mxu0 0
  %7336 = vmatpush1.bf16.msra.mxu0 0
  %7337 = vmatprep.subr.bf16.mxu0 0
  %7338 = vmatpush1.bf16.msra.mxu0 0
  %7339 = vmatprep.subr.bf16.mxu0 0
  %7340 = vmatpush1.bf16.msra.mxu0 0
  %7341 = vmatprep.subr.bf16.mxu0 0
  %7342 = vmatpush1.bf16.msra.mxu0 0
  %7343 = vmatprep.subr.bf16.mxu0 0
  %7344 = vmatpush1.bf16.msra.mxu0 0
  %7345 = vmatprep.subr.bf16.mxu0 0
  %7346 = vmatpush1.bf16.msra.mxu0 0
  %7347 = vmatprep.subr.bf16.mxu0 0
  %7348 = vmatpush1.bf16.msra.mxu0 0
  %7349 = vmatprep.mubr.bf16.mxu0 0
  %7350 = vmatmul.mubr.bf16.gmra.mrb[0].mxu0 %v1824
  %v7351 = vpop.f32.mrb[0].mxu0
  %v7352 = vadd.f32 %v7311, %v7351
  %v7353 = vpop.f32.mrb[0].mxu0
  %v7354 = vadd.f32 %v7313, %v7353
  %v7355 = vpop.f32.mrb[0].mxu0
  %v7356 = vpop.f32.mrb[0].mxu0
  %7357 = vdwg.mxu0
  %7358 = vmatprep.subr.bf16.mxu0 0
  %7359 = vmatpush1.bf16.msra.mxu0 %v4930
  %7360 = vmatprep.subr.bf16.mxu0 0
  %7361 = vmatpush1.bf16.msra.mxu0 %v4943
  %7362 = vmatprep.subr.bf16.mxu0 0
  %7363 = vmatpush1.bf16.msra.mxu0 %v4956
  %7364 = vmatprep.subr.bf16.mxu0 0
  %7365 = vmatpush1.bf16.msra.mxu0 %v4969
  %7366 = vmatprep.subr.bf16.mxu0 0
  %7367 = vmatpush1.bf16.msra.mxu0 %v4982
  %7368 = vmatprep.subr.bf16.mxu0 0
  %7369 = vmatpush1.bf16.msra.mxu0 %v4995
  %7370 = vmatprep.subr.bf16.mxu0 0
  %7371 = vmatpush1.bf16.msra.mxu0 %v5008
  %7372 = vmatprep.subr.bf16.mxu0 0
  %7373 = vmatpush1.bf16.msra.mxu0 %v5021
  %7374 = vmatprep.subr.bf16.mxu0 0
  %7375 = vmatpush1.bf16.msra.mxu0 %v5034
  %7376 = vmatprep.subr.bf16.mxu0 0
  %7377 = vmatpush1.bf16.msra.mxu0 %v5047
  %7378 = vmatprep.subr.bf16.mxu0 0
  %7379 = vmatpush1.bf16.msra.mxu0 %v5060
  %7380 = vmatprep.subr.bf16.mxu0 0
  %7381 = vmatpush1.bf16.msra.mxu0 %v5073
  %7382 = vmatprep.subr.bf16.mxu0 0
  %7383 = vmatpush1.bf16.msra.mxu0 %v5086
  %7384 = vmatprep.subr.bf16.mxu0 0
  %7385 = vmatpush1.bf16.msra.mxu0 %v5099
  %7386 = vmatprep.subr.bf16.mxu0 0
  %7387 = vmatpush1.bf16.msra.mxu0 %v5112
  %7388 = vmatprep.subr.bf16.mxu0 0
  %7389 = vmatpush1.bf16.msra.mxu0 %v5125
  %7390 = vmatprep.mubr.bf16.mxu0 %v1819
  %7391 = vmatmul.mubr.bf16.gmra.mrb[0].mxu0 %v1818
  %v7392 = vpop.f32.mrb[0].mxu0
  %v7393 = vadd.f32 %v2664, %v7392
  %v7394 = vpop.f32.mrb[0].mxu0
  %v7395 = vpop.f32.mrb[0].mxu0
  %v7396 = vpop.f32.mrb[0].mxu0
  %7397 = vdwg.mxu0
  %7398 = vmatprep.subr.bf16.mxu0 0
  %7399 = vmatpush1.bf16.msra.mxu0 %v5138
  %7400 = vmatprep.subr.bf16.mxu0 0
  %7401 = vmatpush1.bf16.msra.mxu0 %v5151
  %7402 = vmatprep.subr.bf16.mxu0 0
  %7403 = vmatpush1.bf16.msra.mxu0 %v5164
  %7404 = vmatprep.subr.bf16.mxu0 0
  %7405 = vmatpush1.bf16.msra.mxu0 %v5177
  %7406 = vmatprep.subr.bf16.mxu0 0
  %7407 = vmatpush1.bf16.msra.mxu0 %v5190
  %7408 = vmatprep.subr.bf16.mxu0 0
  %7409 = vmatpush1.bf16.msra.mxu0 %v5203
  %7410 = vmatprep.subr.bf16.mxu0 0
  %7411 = vmatpush1.bf16.msra.mxu0 %v5216
  %7412 = vmatprep.subr.bf16.mxu0 0
  %7413 = vmatpush1.bf16.msra.mxu0 %v5229
  %7414 = vmatprep.subr.bf16.mxu0 0
  %7415 = vmatpush1.bf16.msra.mxu0 %v5242
  %7416 = vmatprep.subr.bf16.mxu0 0
  %7417 = vmatpush1.bf16.msra.mxu0 %v5255
  %7418 = vmatprep.subr.bf16.mxu0 0
  %7419 = vmatpush1.bf16.msra.mxu0 %v5268
  %7420 = vmatprep.subr.bf16.mxu0 0
  %7421 = vmatpush1.bf16.msra.mxu0 %v5281
  %7422 = vmatprep.subr.bf16.mxu0 0
  %7423 = vmatpush1.bf16.msra.mxu0 %v5294
  %7424 = vmatprep.subr.bf16.mxu0 0
  %7425 = vmatpush1.bf16.msra.mxu0 %v5307
  %7426 = vmatprep.subr.bf16.mxu0 0
  %7427 = vmatpush1.bf16.msra.mxu0 %v5320
  %7428 = vmatprep.subr.bf16.mxu0 0
  %7429 = vmatpush1.bf16.msra.mxu0 %v5333
  %7430 = vmatprep.mubr.bf16.mxu0 %v1821
  %7431 = vmatmul.mubr.bf16.gmra.mrb[0].mxu0 %v1820
  %v7432 = vpop.f32.mrb[0].mxu0
  %v7433 = vadd.f32 %v7393, %v7432
  %v7434 = vpop.f32.mrb[0].mxu0
  %v7435 = vpop.f32.mrb[0].mxu0
  %v7436 = vpop.f32.mrb[0].mxu0
  %7437 = vdwg.mxu0
  %7438 = vmatprep.subr.bf16.mxu0 0
  %7439 = vmatpush1.bf16.msra.mxu0 %v5346
  %7440 = vmatprep.subr.bf16.mxu0 0
  %7441 = vmatpush1.bf16.msra.mxu0 %v5359
  %7442 = vmatprep.subr.bf16.mxu0 0
  %7443 = vmatpush1.bf16.msra.mxu0 %v5372
  %7444 = vmatprep.subr.bf16.mxu0 0
  %7445 = vmatpush1.bf16.msra.mxu0 %v5385
  %7446 = vmatprep.subr.bf16.mxu0 0
  %7447 = vmatpush1.bf16.msra.mxu0 %v5398
  %7448 = vmatprep.subr.bf16.mxu0 0
  %7449 = vmatpush1.bf16.msra.mxu0 %v5411
  %7450 = vmatprep.subr.bf16.mxu0 0
  %7451 = vmatpush1.bf16.msra.mxu0 %v5424
  %7452 = vmatprep.subr.bf16.mxu0 0
  %7453 = vmatpush1.bf16.msra.mxu0 %v5437
  %7454 = vmatprep.subr.bf16.mxu0 0
  %7455 = vmatpush1.bf16.msra.mxu0 %v5450
  %7456 = vmatprep.subr.bf16.mxu0 0
  %7457 = vmatpush1.bf16.msra.mxu0 %v5463
  %7458 = vmatprep.subr.bf16.mxu0 0
  %7459 = vmatpush1.bf16.msra.mxu0 %v5476
  %7460 = vmatprep.subr.bf16.mxu0 0
  %7461 = vmatpush1.bf16.msra.mxu0 %v5489
  %7462 = vmatprep.subr.bf16.mxu0 0
  %7463 = vmatpush1.bf16.msra.mxu0 %v5502
  %7464 = vmatprep.subr.bf16.mxu0 0
  %7465 = vmatpush1.bf16.msra.mxu0 %v5515
  %7466 = vmatprep.subr.bf16.mxu0 0
  %7467 = vmatpush1.bf16.msra.mxu0 %v5528
  %7468 = vmatprep.subr.bf16.mxu0 0
  %7469 = vmatpush1.bf16.msra.mxu0 %v5541
  %7470 = vmatprep.mubr.bf16.mxu0 %v1823
  %7471 = vmatmul.mubr.bf16.gmra.mrb[0].mxu0 %v1822
  %v7472 = vpop.f32.mrb[0].mxu0
  %v7473 = vadd.f32 %v7433, %v7472
  %v7474 = vpop.f32.mrb[0].mxu0
  %v7475 = vpop.f32.mrb[0].mxu0
  %v7476 = vpop.f32.mrb[0].mxu0
  %7477 = vdwg.mxu0
  %7478 = vmatprep.subr.bf16.mxu0 0
  %7479 = vmatpush1.bf16.msra.mxu0 %v5554
  %7480 = vmatprep.subr.bf16.mxu0 0
  %7481 = vmatpush1.bf16.msra.mxu0 %v5567
  %7482 = vmatprep.subr.bf16.mxu0 0
  %7483 = vmatpush1.bf16.msra.mxu0 %v5580
  %7484 = vmatprep.subr.bf16.mxu0 0
  %7485 = vmatpush1.bf16.msra.mxu0 %v5593
  %7486 = vmatprep.subr.bf16.mxu0 0
  %7487 = vmatpush1.bf16.msra.mxu0 %v5606
  %7488 = vmatprep.subr.bf16.mxu0 0
  %7489 = vmatpush1.bf16.msra.mxu0 %v5619
  %7490 = vmatprep.subr.bf16.mxu0 0
  %7491 = vmatpush1.bf16.msra.mxu0 %v5632
  %7492 = vmatprep.subr.bf16.mxu0 0
  %7493 = vmatpush1.bf16.msra.mxu0 %v5645
  %7494 = vmatprep.subr.bf16.mxu0 0
  %7495 = vmatpush1.bf16.msra.mxu0 0
  %7496 = vmatprep.subr.bf16.mxu0 0
  %7497 = vmatpush1.bf16.msra.mxu0 0
  %7498 = vmatprep.subr.bf16.mxu0 0
  %7499 = vmatpush1.bf16.msra.mxu0 0
  %7500 = vmatprep.subr.bf16.mxu0 0
  %7501 = vmatpush1.bf16.msra.mxu0 0
  %7502 = vmatprep.subr.bf16.mxu0 0
  %7503 = vmatpush1.bf16.msra.mxu0 0
  %7504 = vmatprep.subr.bf16.mxu0 0
  %7505 = vmatpush1.bf16.msra.mxu0 0
  %7506 = vmatprep.subr.bf16.mxu0 0
  %7507 = vmatpush1.bf16.msra.mxu0 0
  %7508 = vmatprep.subr.bf16.mxu0 0
  %7509 = vmatpush1.bf16.msra.mxu0 0
  %7510 = vmatprep.mubr.bf16.mxu0 0
  %7511 = vmatmul.mubr.bf16.gmra.mrb[0].mxu0 %v1824
  %v7512 = vpop.f32.mrb[0].mxu0
  %v7513 = vadd.f32 %v7473, %v7512
  %v7514 = vpop.f32.mrb[0].mxu0
  %v7515 = vpop.f32.mrb[0].mxu0
  %v7516 = vpop.f32.mrb[0].mxu0
  %7517 = vdwg.mxu0
  %v7518 = vmax.f32 %v6532, 0.0
  %v7519 = vmax.f32 %v6534, 0.0
  %v7520 = vmax.f32 %v6696, 0.0
  %v7521 = vmax.f32 %v6698, 0.0
  %v7522 = vmax.f32 %v6860, 0.0
  %v7523 = vmax.f32 %v6862, 0.0
  %v7524 = vmax.f32 %v7024, 0.0
  %v7525 = vmax.f32 %v7026, 0.0
  %v7526 = vmax.f32 %v7188, 0.0
  %v7527 = vmax.f32 %v7190, 0.0
  %v7528 = vmax.f32 %v7352, 0.0
  %v7529 = vmax.f32 %v7354, 0.0
  %v7530 = vmax.f32 %v7513, 0.0
  %v7531 = vpack.c.bf16 %v7518, %v7518
  %v7532 = vpack.c.bf16 %v7519, %v7519
  %v7533 = vpack.c.bf16 %v7520, %v7520
  %v7534 = vpack.c.bf16 %v7521, %v7521
  %v7535 = vpack.c.bf16 %v7522, %v7522
  %v7536 = vpack.c.bf16 %v7523, %v7523
  %v7537 = vpack.c.bf16 %v7524, %v7524
  %v7538 = vpack.c.bf16 %v7525, %v7525
  %v7539 = vpack.c.bf16 %v7526, %v7526
  %v7540 = vpack.c.bf16 %v7527, %v7527
  %v7541 = vpack.c.bf16 %v7528, %v7528
  %v7542 = vpack.c.bf16 %v7529, %v7529
  %v7543 = vpack.c.bf16 %v7530, %v7530
  %v7544 = vld [vmem:[%s9] sm:$0xff]
  %v7545 = vld [vmem:[%s9 + $0x8] sm:$0xff]
  %v7546 = vld [vmem:[%s9 + $0x10] sm:$0xff]
  %v7547 = vld [vmem:[%s9 + $0x18] sm:$0xf]
  %v7548 = vld [vmem:[%s9 + $0x1c] sm:$0xff]
  %v7549 = vld [vmem:[%s9 + $0x24] sm:$0xff]
  %v7550 = vld [vmem:[%s9 + $0x2c] sm:$0xff]
  %v7551 = vld [vmem:[%s9 + $0x34] sm:$0xf]
  %v7552 = vld [vmem:[%s9 + $0x38] sm:$0xff]
  %v7553 = vld [vmem:[%s9 + $0x40] sm:$0xff]
  %v7554 = vld [vmem:[%s9 + $0x48] sm:$0xff]
  %v7555 = vld [vmem:[%s9 + $0x50] sm:$0xf]
  %v7556 = vld [vmem:[%s9 + $0x54] sm:$0xff]
  %v7557 = vld [vmem:[%s9 + $0x5c] sm:$0xff]
  %v7558 = vld [vmem:[%s9 + $0x64] sm:$0xff]
  %v7559 = vld [vmem:[%s9 + $0x6c] sm:$0xf]
  %v7560 = vld [vmem:[%s9 + $0x70] sm:$0xff]
  %v7561 = vld [vmem:[%s9 + $0x78] sm:$0xff]
  %v7562 = vld [vmem:[%s9 + $0x80] sm:$0xff]
  %v7563 = vld [vmem:[%s9 + $0x88] sm:$0xf]
  %v7564 = vld [vmem:[%s9 + $0x8c] sm:$0xff]
  %v7565 = vld [vmem:[%s9 + $0x94] sm:$0xff]
  %v7566 = vld [vmem:[%s9 + $0x9c] sm:$0xff]
  %v7567 = vld [vmem:[%s9 + $0xa4] sm:$0xf]
  %v7568 = vld [vmem:[%s9 + $0xa8] sm:$0xff]
  %v7569 = vld [vmem:[%s9 + $0xb0] sm:$0xff]
  %v7570 = vld [vmem:[%s9 + $0xb8] sm:$0xff]
  %v7571 = vld [vmem:[%s9 + $0xc0] sm:$0xf]
  %v7572 = vld [vmem:[%s9 + $0xc4] sm:$0xff]
  %v7573 = vld [vmem:[%s9 + $0xcc] sm:$0xff]
  %v7574 = vld [vmem:[%s9 + $0xd4] sm:$0xff]
  %v7575 = vld [vmem:[%s9 + $0xdc] sm:$0xf]
  %v7576 = vld [vmem:[%s9 + $0xe0] sm:$0xff]
  %v7577 = vld [vmem:[%s9 + $0xe8] sm:$0xff]
  %v7578 = vld [vmem:[%s9 + $0xf0] sm:$0xff]
  %v7579 = vld [vmem:[%s9 + $0xf8] sm:$0xf]
  %v7580 = vld [vmem:[%s9 + $0xfc] sm:$0xff]
  %v7581 = vld [vmem:[%s9 + $0x104] sm:$0xff]
  %v7582 = vld [vmem:[%s9 + $0x10c] sm:$0xff]
  %v7583 = vld [vmem:[%s9 + $0x114] sm:$0xf]
  %v7584 = vld [vmem:[%s9 + $0x118] sm:$0xff]
  %v7585 = vld [vmem:[%s9 + $0x120] sm:$0xff]
  %v7586 = vld [vmem:[%s9 + $0x128] sm:$0xff]
  %v7587 = vld [vmem:[%s9 + $0x130] sm:$0xf]
  %v7588 = vld [vmem:[%s9 + $0x134] sm:$0xff]
  %v7589 = vld [vmem:[%s9 + $0x13c] sm:$0xff]
  %v7590 = vld [vmem:[%s9 + $0x144] sm:$0xff]
  %v7591 = vld [vmem:[%s9 + $0x14c] sm:$0xf]
  %v7592 = vld [vmem:[%s9 + $0x150] sm:$0xff]
  %v7593 = vld [vmem:[%s9 + $0x158] sm:$0xff]
  %v7594 = vld [vmem:[%s9 + $0x160] sm:$0xff]
  %v7595 = vld [vmem:[%s9 + $0x168] sm:$0xf]
  %v7596 = vld [vmem:[%s9 + $0x16c] sm:$0xff]
  %v7597 = vld [vmem:[%s9 + $0x174] sm:$0xff]
  %v7598 = vld [vmem:[%s9 + $0x17c] sm:$0xff]
  %v7599 = vld [vmem:[%s9 + $0x184] sm:$0xf]
  %v7600 = vld [vmem:[%s9 + $0x188] sm:$0xff]
  %v7601 = vld [vmem:[%s9 + $0x190] sm:$0xff]
  %v7602 = vld [vmem:[%s9 + $0x198] sm:$0xff]
  %v7603 = vld [vmem:[%s9 + $0x1a0] sm:$0xf]
  %v7604 = vld [vmem:[%s9 + $0x1a4] sm:$0xff]
  %v7605 = vld [vmem:[%s9 + $0x1ac] sm:$0xff]
  %v7606 = vld [vmem:[%s9 + $0x1b4] sm:$0xff]
  %v7607 = vld [vmem:[%s9 + $0x1bc] sm:$0xf]
  %v7608 = vld [vmem:[%s9 + $0x1c0] sm:$0xff]
  %v7609 = vld [vmem:[%s9 + $0x1c8] sm:$0xff]
  %v7610 = vld [vmem:[%s9 + $0x1d0] sm:$0xff]
  %v7611 = vld [vmem:[%s9 + $0x1d8] sm:$0xf]
  %v7612 = vld [vmem:[%s9 + $0x1dc] sm:$0xff]
  %v7613 = vld [vmem:[%s9 + $0x1e4] sm:$0xff]
  %v7614 = vld [vmem:[%s9 + $0x1ec] sm:$0xff]
  %v7615 = vld [vmem:[%s9 + $0x1f4] sm:$0xf]
  %v7616 = vld [vmem:[%s9 + $0x1f8] sm:$0xff]
  %v7617 = vld [vmem:[%s9 + $0x200] sm:$0xff]
  %v7618 = vld [vmem:[%s9 + $0x208] sm:$0xff]
  %v7619 = vld [vmem:[%s9 + $0x210] sm:$0xf]
  %v7620 = vld [vmem:[%s9 + $0x214] sm:$0xff]
  %v7621 = vld [vmem:[%s9 + $0x21c] sm:$0xff]
  %v7622 = vld [vmem:[%s9 + $0x224] sm:$0xff]
  %v7623 = vld [vmem:[%s9 + $0x22c] sm:$0xf]
  %v7624 = vld [vmem:[%s9 + $0x230] sm:$0xff]
  %v7625 = vld [vmem:[%s9 + $0x238] sm:$0xff]
  %v7626 = vld [vmem:[%s9 + $0x240] sm:$0xff]
  %v7627 = vld [vmem:[%s9 + $0x248] sm:$0xf]
  %v7628 = vld [vmem:[%s9 + $0x24c] sm:$0xff]
  %v7629 = vld [vmem:[%s9 + $0x254] sm:$0xff]
  %v7630 = vld [vmem:[%s9 + $0x25c] sm:$0xff]
  %v7631 = vld [vmem:[%s9 + $0x264] sm:$0xf]
  %v7632 = vld [vmem:[%s9 + $0x268] sm:$0xff]
  %v7633 = vld [vmem:[%s9 + $0x270] sm:$0xff]
  %v7634 = vld [vmem:[%s9 + $0x278] sm:$0xff]
  %v7635 = vld [vmem:[%s9 + $0x280] sm:$0xf]
  %v7636 = vld [vmem:[%s9 + $0x284] sm:$0xff]
  %v7637 = vld [vmem:[%s9 + $0x28c] sm:$0xff]
  %v7638 = vld [vmem:[%s9 + $0x294] sm:$0xff]
  %v7639 = vld [vmem:[%s9 + $0x29c] sm:$0xf]
  %v7640 = vld [vmem:[%s9 + $0x2a0] sm:$0xff]
  %v7641 = vld [vmem:[%s9 + $0x2a8] sm:$0xff]
  %v7642 = vld [vmem:[%s9 + $0x2b0] sm:$0xff]
  %v7643 = vld [vmem:[%s9 + $0x2b8] sm:$0xf]
  %v7644 = vld [vmem:[%s9 + $0x2bc] sm:$0xff]
  %v7645 = vld [vmem:[%s9 + $0x2c4] sm:$0xff]
  %v7646 = vld [vmem:[%s9 + $0x2cc] sm:$0xff]
  %v7647 = vld [vmem:[%s9 + $0x2d4] sm:$0xf]
  %v7648 = vld [vmem:[%s9 + $0x2d8] sm:$0xff]
  %v7649 = vld [vmem:[%s9 + $0x2e0] sm:$0xff]
  %v7650 = vld [vmem:[%s9 + $0x2e8] sm:$0xff]
  %v7651 = vld [vmem:[%s9 + $0x2f0] sm:$0xf]
  %v7652 = vld [vmem:[%s9 + $0x2f4] sm:$0xff]
  %v7653 = vld [vmem:[%s9 + $0x2fc] sm:$0xff]
  %v7654 = vld [vmem:[%s9 + $0x304] sm:$0xff]
  %v7655 = vld [vmem:[%s9 + $0x30c] sm:$0xf]
  %v7656 = vld [vmem:[%s9 + $0x310] sm:$0xff]
  %v7657 = vld [vmem:[%s9 + $0x318] sm:$0xff]
  %v7658 = vld [vmem:[%s9 + $0x320] sm:$0xff]
  %v7659 = vld [vmem:[%s9 + $0x328] sm:$0xf]
  %v7660 = vld [vmem:[%s9 + $0x32c] sm:$0xff]
  %v7661 = vld [vmem:[%s9 + $0x334] sm:$0xff]
  %v7662 = vld [vmem:[%s9 + $0x33c] sm:$0xff]
  %v7663 = vld [vmem:[%s9 + $0x344] sm:$0xf]
  %v7664 = vld [vmem:[%s9 + $0x348] sm:$0xff]
  %v7665 = vld [vmem:[%s9 + $0x350] sm:$0xff]
  %v7666 = vld [vmem:[%s9 + $0x358] sm:$0xff]
  %v7667 = vld [vmem:[%s9 + $0x360] sm:$0xf]
  %v7668 = vld [vmem:[%s9 + $0x364] sm:$0xff]
  %v7669 = vld [vmem:[%s9 + $0x36c] sm:$0xff]
  %v7670 = vld [vmem:[%s9 + $0x374] sm:$0xff]
  %v7671 = vld [vmem:[%s9 + $0x37c] sm:$0xf]
  %v7672 = vld [vmem:[%s9 + $0x380] sm:$0xff]
  %v7673 = vld [vmem:[%s9 + $0x388] sm:$0xff]
  %v7674 = vld [vmem:[%s9 + $0x390] sm:$0xff]
  %v7675 = vld [vmem:[%s9 + $0x398] sm:$0xf]
  %v7676 = vld [vmem:[%s9 + $0x39c] sm:$0xff]
  %v7677 = vld [vmem:[%s9 + $0x3a4] sm:$0xff]
  %v7678 = vld [vmem:[%s9 + $0x3ac] sm:$0xff]
  %v7679 = vld [vmem:[%s9 + $0x3b4] sm:$0xf]
  %v7680 = vld [vmem:[%s9 + $0x3b8] sm:$0xff]
  %v7681 = vld [vmem:[%s9 + $0x3c0] sm:$0xff]
  %v7682 = vld [vmem:[%s9 + $0x3c8] sm:$0xff]
  %v7683 = vld [vmem:[%s9 + $0x3d0] sm:$0xf]
  %v7684 = vld [vmem:[%s9 + $0x3d4] sm:$0xff]
  %v7685 = vld [vmem:[%s9 + $0x3dc] sm:$0xff]
  %v7686 = vld [vmem:[%s9 + $0x3e4] sm:$0xff]
  %v7687 = vld [vmem:[%s9 + $0x3ec] sm:$0xf]
  %v7688 = vld [vmem:[%s9 + $0x3f0] sm:$0xff]
  %v7689 = vld [vmem:[%s9 + $0x3f8] sm:$0xff]
  %v7690 = vld [vmem:[%s9 + $0x400] sm:$0xff]
  %v7691 = vld [vmem:[%s9 + $0x408] sm:$0xf]
  %v7692 = vld [vmem:[%s9 + $0x40c] sm:$0xff]
  %v7693 = vld [vmem:[%s9 + $0x414] sm:$0xff]
  %v7694 = vld [vmem:[%s9 + $0x41c] sm:$0xff]
  %v7695 = vld [vmem:[%s9 + $0x424] sm:$0xf]
  %v7696 = vld [vmem:[%s9 + $0x428] sm:$0xff]
  %v7697 = vld [vmem:[%s9 + $0x430] sm:$0xff]
  %v7698 = vld [vmem:[%s9 + $0x438] sm:$0xff]
  %v7699 = vld [vmem:[%s9 + $0x440] sm:$0xf]
  %v7700 = vld [vmem:[%s9 + $0x444] sm:$0xff]
  %v7701 = vld [vmem:[%s9 + $0x44c] sm:$0xff]
  %v7702 = vld [vmem:[%s9 + $0x454] sm:$0xff]
  %v7703 = vld [vmem:[%s9 + $0x45c] sm:$0xf]
  %v7704 = vld [vmem:[%s9 + $0x460] sm:$0xff]
  %v7705 = vld [vmem:[%s9 + $0x468] sm:$0xff]
  %v7706 = vld [vmem:[%s9 + $0x470] sm:$0xff]
  %v7707 = vld [vmem:[%s9 + $0x478] sm:$0xf]
  %v7708 = vld [vmem:[%s9 + $0x47c] sm:$0xff]
  %v7709 = vld [vmem:[%s9 + $0x484] sm:$0xff]
  %v7710 = vld [vmem:[%s9 + $0x48c] sm:$0xff]
  %v7711 = vld [vmem:[%s9 + $0x494] sm:$0xf]
  %v7712 = vld [vmem:[%s9 + $0x498] sm:$0xff]
  %v7713 = vld [vmem:[%s9 + $0x4a0] sm:$0xff]
  %v7714 = vld [vmem:[%s9 + $0x4a8] sm:$0xff]
  %v7715 = vld [vmem:[%s9 + $0x4b0] sm:$0xf]
  %v7716 = vld [vmem:[%s9 + $0x4b4] sm:$0xff]
  %v7717 = vld [vmem:[%s9 + $0x4bc] sm:$0xff]
  %v7718 = vld [vmem:[%s9 + $0x4c4] sm:$0xff]
  %v7719 = vld [vmem:[%s9 + $0x4cc] sm:$0xf]
  %v7720 = vld [vmem:[%s9 + $0x4d0] sm:$0xff]
  %v7721 = vld [vmem:[%s9 + $0x4d8] sm:$0xff]
  %v7722 = vld [vmem:[%s9 + $0x4e0] sm:$0xff]
  %v7723 = vld [vmem:[%s9 + $0x4e8] sm:$0xf]
  %v7724 = vld [vmem:[%s9 + $0x4ec] sm:$0xff]
  %v7725 = vld [vmem:[%s9 + $0x4f4] sm:$0xff]
  %v7726 = vld [vmem:[%s9 + $0x4fc] sm:$0xff]
  %v7727 = vld [vmem:[%s9 + $0x504] sm:$0xf]
  %v7728 = vld [vmem:[%s9 + $0x508] sm:$0xff]
  %v7729 = vld [vmem:[%s9 + $0x510] sm:$0xff]
  %v7730 = vld [vmem:[%s9 + $0x518] sm:$0xff]
  %v7731 = vld [vmem:[%s9 + $0x520] sm:$0xf]
  %v7732 = vld [vmem:[%s9 + $0x524] sm:$0xff]
  %v7733 = vld [vmem:[%s9 + $0x52c] sm:$0xff]
  %v7734 = vld [vmem:[%s9 + $0x534] sm:$0xff]
  %v7735 = vld [vmem:[%s9 + $0x53c] sm:$0xf]
  %v7736 = vld [vmem:[%s9 + $0x540] sm:$0xff]
  %v7737 = vld [vmem:[%s9 + $0x548] sm:$0xff]
  %v7738 = vld [vmem:[%s9 + $0x550] sm:$0xff]
  %v7739 = vld [vmem:[%s9 + $0x558] sm:$0xf]
  %v7740 = vld [vmem:[%s9 + $0x55c] sm:$0xff]
  %v7741 = vld [vmem:[%s9 + $0x564] sm:$0xff]
  %v7742 = vld [vmem:[%s9 + $0x56c] sm:$0xff]
  %v7743 = vld [vmem:[%s9 + $0x574] sm:$0xf]
  %v7744 = vld [vmem:[%s9 + $0x578] sm:$0xff]
  %v7745 = vld [vmem:[%s9 + $0x580] sm:$0xff]
  %v7746 = vld [vmem:[%s9 + $0x588] sm:$0xff]
  %v7747 = vld [vmem:[%s9 + $0x590] sm:$0xf]
  %v7748 = vld [vmem:[%s9 + $0x594] sm:$0xff]
  %v7749 = vld [vmem:[%s9 + $0x59c] sm:$0xff]
  %v7750 = vld [vmem:[%s9 + $0x5a4] sm:$0xff]
  %v7751 = vld [vmem:[%s9 + $0x5ac] sm:$0xf]
  %v7752 = vld [vmem:[%s9 + $0x5b0] sm:$0xff]
  %v7753 = vld [vmem:[%s9 + $0x5b8] sm:$0xff]
  %v7754 = vld [vmem:[%s9 + $0x5c0] sm:$0xff]
  %v7755 = vld [vmem:[%s9 + $0x5c8] sm:$0xf]
  %v7756 = vld [vmem:[%s9 + $0x5cc] sm:$0xff]
  %v7757 = vld [vmem:[%s9 + $0x5d4] sm:$0xff]
  %v7758 = vld [vmem:[%s9 + $0x5dc] sm:$0xff]
  %v7759 = vld [vmem:[%s9 + $0x5e4] sm:$0xf]
  %v7760 = vld [vmem:[%s9 + $0x5e8] sm:$0xff]
  %v7761 = vld [vmem:[%s9 + $0x5f0] sm:$0xff]
  %v7762 = vld [vmem:[%s9 + $0x5f8] sm:$0xff]
  %v7763 = vld [vmem:[%s9 + $0x600] sm:$0xf]
  %v7764 = vld [vmem:[%s9 + $0x604] sm:$0xff]
  %v7765 = vld [vmem:[%s9 + $0x60c] sm:$0xff]
  %v7766 = vld [vmem:[%s9 + $0x614] sm:$0xff]
  %v7767 = vld [vmem:[%s9 + $0x61c] sm:$0xf]
  %v7768 = vld [vmem:[%s9 + $0x620] sm:$0xff]
  %v7769 = vld [vmem:[%s9 + $0x628] sm:$0xff]
  %v7770 = vld [vmem:[%s9 + $0x630] sm:$0xff]
  %v7771 = vld [vmem:[%s9 + $0x638] sm:$0xf]
  %v7772 = vld [vmem:[%s9 + $0x63c] sm:$0xff]
  %v7773 = vld [vmem:[%s9 + $0x644] sm:$0xff]
  %v7774 = vld [vmem:[%s9 + $0x64c] sm:$0xff]
  %v7775 = vld [vmem:[%s9 + $0x654] sm:$0xf]
  %v7776 = vld [vmem:[%s9 + $0x658] sm:$0xff]
  %v7777 = vld [vmem:[%s9 + $0x660] sm:$0xff]
  %v7778 = vld [vmem:[%s9 + $0x668] sm:$0xff]
  %v7779 = vld [vmem:[%s9 + $0x670] sm:$0xf]
  %v7780 = vld [vmem:[%s9 + $0x674] sm:$0xff]
  %v7781 = vld [vmem:[%s9 + $0x67c] sm:$0xff]
  %v7782 = vld [vmem:[%s9 + $0x684] sm:$0xff]
  %v7783 = vld [vmem:[%s9 + $0x68c] sm:$0xf]
  %v7784 = vld [vmem:[%s9 + $0x690] sm:$0xff]
  %v7785 = vld [vmem:[%s9 + $0x698] sm:$0xff]
  %v7786 = vld [vmem:[%s9 + $0x6a0] sm:$0xff]
  %v7787 = vld [vmem:[%s9 + $0x6a8] sm:$0xf]
  %v7788 = vld [vmem:[%s9 + $0x6ac] sm:$0xff]
  %v7789 = vld [vmem:[%s9 + $0x6b4] sm:$0xff]
  %v7790 = vld [vmem:[%s9 + $0x6bc] sm:$0xff]
  %v7791 = vld [vmem:[%s9 + $0x6c4] sm:$0xf]
  %v7792 = vld [vmem:[%s9 + $0x6c8] sm:$0xff]
  %v7793 = vld [vmem:[%s9 + $0x6d0] sm:$0xff]
  %v7794 = vld [vmem:[%s9 + $0x6d8] sm:$0xff]
  %v7795 = vld [vmem:[%s9 + $0x6e0] sm:$0xf]
  %v7796 = vld [vmem:[%s9 + $0x6e4] sm:$0xff]
  %v7797 = vld [vmem:[%s9 + $0x6ec] sm:$0xff]
  %v7798 = vld [vmem:[%s9 + $0x6f4] sm:$0xff]
  %v7799 = vld [vmem:[%s9 + $0x6fc] sm:$0xf]
  %v7800 = vld [vmem:[%s9 + $0x700] sm:$0xff]
  %v7801 = vld [vmem:[%s9 + $0x708] sm:$0xff]
  %v7802 = vld [vmem:[%s9 + $0x710] sm:$0xff]
  %v7803 = vld [vmem:[%s9 + $0x718] sm:$0xf]
  %v7804 = vld [vmem:[%s9 + $0x71c] sm:$0xff]
  %v7805 = vld [vmem:[%s9 + $0x724] sm:$0xff]
  %v7806 = vld [vmem:[%s9 + $0x72c] sm:$0xff]
  %v7807 = vld [vmem:[%s9 + $0x734] sm:$0xf]
  %v7808 = vld [vmem:[%s9 + $0x738] sm:$0xff]
  %v7809 = vld [vmem:[%s9 + $0x740] sm:$0xff]
  %v7810 = vld [vmem:[%s9 + $0x748] sm:$0xff]
  %v7811 = vld [vmem:[%s9 + $0x750] sm:$0xf]
  %v7812 = vld [vmem:[%s9 + $0x754] sm:$0xff]
  %v7813 = vld [vmem:[%s9 + $0x75c] sm:$0xff]
  %v7814 = vld [vmem:[%s9 + $0x764] sm:$0xff]
  %v7815 = vld [vmem:[%s9 + $0x76c] sm:$0xf]
  %v7816 = vld [vmem:[%s9 + $0x770] sm:$0xff]
  %v7817 = vld [vmem:[%s9 + $0x778] sm:$0xff]
  %v7818 = vld [vmem:[%s9 + $0x780] sm:$0xff]
  %v7819 = vld [vmem:[%s9 + $0x788] sm:$0xf]
  %v7820 = vld [vmem:[%s9 + $0x78c] sm:$0xff]
  %v7821 = vld [vmem:[%s9 + $0x794] sm:$0xff]
  %v7822 = vld [vmem:[%s9 + $0x79c] sm:$0xff]
  %v7823 = vld [vmem:[%s9 + $0x7a4] sm:$0xf]
  %v7824 = vld [vmem:[%s9 + $0x7a8] sm:$0xff]
  %v7825 = vld [vmem:[%s9 + $0x7b0] sm:$0xff]
  %v7826 = vld [vmem:[%s9 + $0x7b8] sm:$0xff]
  %v7827 = vld [vmem:[%s9 + $0x7c0] sm:$0xf]
  %v7828 = vld [vmem:[%s9 + $0x7c4] sm:$0xff]
  %v7829 = vld [vmem:[%s9 + $0x7cc] sm:$0xff]
  %v7830 = vld [vmem:[%s9 + $0x7d4] sm:$0xff]
  %v7831 = vld [vmem:[%s9 + $0x7dc] sm:$0xf]
  %v7832 = vld [vmem:[%s9 + $0x7e0] sm:$0xff]
  %v7833 = vld [vmem:[%s9 + $0x7e8] sm:$0xff]
  %v7834 = vld [vmem:[%s9 + $0x7f0] sm:$0xff]
  %v7835 = vld [vmem:[%s9 + $0x7f8] sm:$0xf]
  %v7836 = vld [vmem:[%s9 + $0x7fc] sm:$0xff]
  %v7837 = vld [vmem:[%s9 + $0x804] sm:$0xff]
  %v7838 = vld [vmem:[%s9 + $0x80c] sm:$0xff]
  %v7839 = vld [vmem:[%s9 + $0x814] sm:$0xf]
  %v7840 = vld [vmem:[%s9 + $0x818] sm:$0xff]
  %v7841 = vld [vmem:[%s9 + $0x820] sm:$0xff]
  %v7842 = vld [vmem:[%s9 + $0x828] sm:$0xff]
  %v7843 = vld [vmem:[%s9 + $0x830] sm:$0xf]
  %v7844 = vld [vmem:[%s9 + $0x834] sm:$0xff]
  %v7845 = vld [vmem:[%s9 + $0x83c] sm:$0xff]
  %v7846 = vld [vmem:[%s9 + $0x844] sm:$0xff]
  %v7847 = vld [vmem:[%s9 + $0x84c] sm:$0xf]
  %v7848 = vld [vmem:[%s9 + $0x850] sm:$0xff]
  %v7849 = vld [vmem:[%s9 + $0x858] sm:$0xff]
  %v7850 = vld [vmem:[%s9 + $0x860] sm:$0xff]
  %v7851 = vld [vmem:[%s9 + $0x868] sm:$0xf]
  %v7852 = vld [vmem:[%s9 + $0x86c] sm:$0xff]
  %v7853 = vld [vmem:[%s9 + $0x874] sm:$0xff]
  %v7854 = vld [vmem:[%s9 + $0x87c] sm:$0xff]
  %v7855 = vld [vmem:[%s9 + $0x884] sm:$0xf]
  %v7856 = vld [vmem:[%s9 + $0x888] sm:$0xff]
  %v7857 = vld [vmem:[%s9 + $0x890] sm:$0xff]
  %v7858 = vld [vmem:[%s9 + $0x898] sm:$0xff]
  %v7859 = vld [vmem:[%s9 + $0x8a0] sm:$0xf]
  %v7860 = vld [vmem:[%s9 + $0x8a4] sm:$0xff]
  %v7861 = vld [vmem:[%s9 + $0x8ac] sm:$0xff]
  %v7862 = vld [vmem:[%s9 + $0x8b4] sm:$0xff]
  %v7863 = vld [vmem:[%s9 + $0x8bc] sm:$0xf]
  %v7864 = vld [vmem:[%s9 + $0x8c0] sm:$0xff]
  %v7865 = vld [vmem:[%s9 + $0x8c8] sm:$0xff]
  %v7866 = vld [vmem:[%s9 + $0x8d0] sm:$0xff]
  %v7867 = vld [vmem:[%s9 + $0x8d8] sm:$0xf]
  %v7868 = vld [vmem:[%s9 + $0x8dc] sm:$0xff]
  %v7869 = vld [vmem:[%s9 + $0x8e4] sm:$0xff]
  %v7870 = vld [vmem:[%s9 + $0x8ec] sm:$0xff]
  %v7871 = vld [vmem:[%s9 + $0x8f4] sm:$0xf]
  %v7872 = vld [vmem:[%s9 + $0x8f8] sm:$0xff]
  %v7873 = vld [vmem:[%s9 + $0x900] sm:$0xff]
  %v7874 = vld [vmem:[%s9 + $0x908] sm:$0xff]
  %v7875 = vld [vmem:[%s9 + $0x910] sm:$0xf]
  %v7876 = vld [vmem:[%s9 + $0x914] sm:$0xff]
  %v7877 = vld [vmem:[%s9 + $0x91c] sm:$0xff]
  %v7878 = vld [vmem:[%s9 + $0x924] sm:$0xff]
  %v7879 = vld [vmem:[%s9 + $0x92c] sm:$0xf]
  %v7880 = vld [vmem:[%s9 + $0x930] sm:$0xff]
  %v7881 = vld [vmem:[%s9 + $0x938] sm:$0xff]
  %v7882 = vld [vmem:[%s9 + $0x940] sm:$0xff]
  %v7883 = vld [vmem:[%s9 + $0x948] sm:$0xf]
  %v7884 = vld [vmem:[%s9 + $0x94c] sm:$0xff]
  %v7885 = vld [vmem:[%s9 + $0x954] sm:$0xff]
  %v7886 = vld [vmem:[%s9 + $0x95c] sm:$0xff]
  %v7887 = vld [vmem:[%s9 + $0x964] sm:$0xf]
  %v7888 = vld [vmem:[%s9 + $0x968] sm:$0xff]
  %v7889 = vld [vmem:[%s9 + $0x970] sm:$0xff]
  %v7890 = vld [vmem:[%s9 + $0x978] sm:$0xff]
  %v7891 = vld [vmem:[%s9 + $0x980] sm:$0xf]
  %v7892 = vld [vmem:[%s9 + $0x984] sm:$0xff]
  %v7893 = vld [vmem:[%s9 + $0x98c] sm:$0xff]
  %v7894 = vld [vmem:[%s9 + $0x994] sm:$0xff]
  %v7895 = vld [vmem:[%s9 + $0x99c] sm:$0xf]
  %v7896 = vld [vmem:[%s9 + $0x9a0] sm:$0xff]
  %v7897 = vld [vmem:[%s9 + $0x9a8] sm:$0xff]
  %v7898 = vld [vmem:[%s9 + $0x9b0] sm:$0xff]
  %v7899 = vld [vmem:[%s9 + $0x9b8] sm:$0xf]
  %v7900 = vld [vmem:[%s9 + $0x9bc] sm:$0xff]
  %v7901 = vld [vmem:[%s9 + $0x9c4] sm:$0xff]
  %v7902 = vld [vmem:[%s9 + $0x9cc] sm:$0xff]
  %v7903 = vld [vmem:[%s9 + $0x9d4] sm:$0xf]
  %v7904 = vld [vmem:[%s9 + $0x9d8] sm:$0xff]
  %v7905 = vld [vmem:[%s9 + $0x9e0] sm:$0xff]
  %v7906 = vld [vmem:[%s9 + $0x9e8] sm:$0xff]
  %v7907 = vld [vmem:[%s9 + $0x9f0] sm:$0xf]
  %v7908 = vld [vmem:[%s9 + $0x9f4] sm:$0xff]
  %v7909 = vld [vmem:[%s9 + $0x9fc] sm:$0xff]
  %v7910 = vld [vmem:[%s9 + $0xa04] sm:$0xff]
  %v7911 = vld [vmem:[%s9 + $0xa0c] sm:$0xf]
  %v7912 = vld [vmem:[%s9 + $0xa10] sm:$0xff]
  %v7913 = vld [vmem:[%s9 + $0xa18] sm:$0xff]
  %v7914 = vld [vmem:[%s9 + $0xa20] sm:$0xff]
  %v7915 = vld [vmem:[%s9 + $0xa28] sm:$0xf]
  %v7916 = vld [vmem:[%s9 + $0xa2c] sm:$0xff]
  %v7917 = vld [vmem:[%s9 + $0xa34] sm:$0xff]
  %v7918 = vld [vmem:[%s9 + $0xa3c] sm:$0xff]
  %v7919 = vld [vmem:[%s9 + $0xa44] sm:$0xf]
  %v7920 = vld [vmem:[%s9 + $0xa48] sm:$0xff]
  %v7921 = vld [vmem:[%s9 + $0xa50] sm:$0xff]
  %v7922 = vld [vmem:[%s9 + $0xa58] sm:$0xff]
  %v7923 = vld [vmem:[%s9 + $0xa60] sm:$0xf]
  %v7924 = vld [vmem:[%s9 + $0xa64] sm:$0xff]
  %v7925 = vld [vmem:[%s9 + $0xa6c] sm:$0xff]
  %v7926 = vld [vmem:[%s9 + $0xa74] sm:$0xff]
  %v7927 = vld [vmem:[%s9 + $0xa7c] sm:$0xf]
  %v7928 = vld [vmem:[%s9 + $0xa80] sm:$0xff]
  %v7929 = vld [vmem:[%s9 + $0xa88] sm:$0xff]
  %v7930 = vld [vmem:[%s9 + $0xa90] sm:$0xff]
  %v7931 = vld [vmem:[%s9 + $0xa98] sm:$0xf]
  %v7932 = vld [vmem:[%s9 + $0xa9c] sm:$0xff]
  %v7933 = vld [vmem:[%s9 + $0xaa4] sm:$0xff]
  %v7934 = vld [vmem:[%s9 + $0xaac] sm:$0xff]
  %v7935 = vld [vmem:[%s9 + $0xab4] sm:$0xf]
  %v7936 = vld [vmem:[%s9 + $0xab8] sm:$0xff]
  %v7937 = vld [vmem:[%s9 + $0xac0] sm:$0xff]
  %v7938 = vld [vmem:[%s9 + $0xac8] sm:$0xff]
  %v7939 = vld [vmem:[%s9 + $0xad0] sm:$0xf]
  %v7940 = vld [vmem:[%s9 + $0xad4] sm:$0xff]
  %v7941 = vld [vmem:[%s9 + $0xadc] sm:$0xff]
  %v7942 = vld [vmem:[%s9 + $0xae4] sm:$0xff]
  %v7943 = vld [vmem:[%s9 + $0xaec] sm:$0xf]
  %v7944 = vld [vmem:[%s9 + $0xaf0] sm:$0xff]
  %v7945 = vld [vmem:[%s9 + $0xaf8] sm:$0xff]
  %v7946 = vld [vmem:[%s9 + $0xb00] sm:$0xff]
  %v7947 = vld [vmem:[%s9 + $0xb08] sm:$0xf]
  %v7948 = vld [vmem:[%s9 + $0xb0c] sm:$0xff]
  %v7949 = vld [vmem:[%s9 + $0xb14] sm:$0xff]
  %v7950 = vld [vmem:[%s9 + $0xb1c] sm:$0xff]
  %v7951 = vld [vmem:[%s9 + $0xb24] sm:$0xf]
  %v7952 = vld [vmem:[%s9 + $0xb28] sm:$0xff]
  %v7953 = vld [vmem:[%s9 + $0xb30] sm:$0xff]
  %v7954 = vld [vmem:[%s9 + $0xb38] sm:$0xff]
  %v7955 = vld [vmem:[%s9 + $0xb40] sm:$0xf]
  %v7956 = vld [vmem:[%s9 + $0xb44] sm:$0xff]
  %v7957 = vld [vmem:[%s9 + $0xb4c] sm:$0xff]
  %v7958 = vld [vmem:[%s9 + $0xb54] sm:$0xff]
  %v7959 = vld [vmem:[%s9 + $0xb5c] sm:$0xf]
  %v7960 = vld [vmem:[%s9 + $0xb60] sm:$0xff]
  %v7961 = vld [vmem:[%s9 + $0xb68] sm:$0xff]
  %v7962 = vld [vmem:[%s9 + $0xb70] sm:$0xff]
  %v7963 = vld [vmem:[%s9 + $0xb78] sm:$0xf]
  %v7964 = vld [vmem:[%s9 + $0xb7c] sm:$0xff]
  %v7965 = vld [vmem:[%s9 + $0xb84] sm:$0xff]
  %v7966 = vld [vmem:[%s9 + $0xb8c] sm:$0xff]
  %v7967 = vld [vmem:[%s9 + $0xb94] sm:$0xf]
  %v7968 = vld [vmem:[%s9 + $0xb98] sm:$0xff]
  %v7969 = vld [vmem:[%s9 + $0xba0] sm:$0xff]
  %v7970 = vld [vmem:[%s9 + $0xba8] sm:$0xff]
  %v7971 = vld [vmem:[%s9 + $0xbb0] sm:$0xf]
  %v7972 = vld [vmem:[%s9 + $0xbb4] sm:$0xff]
  %v7973 = vld [vmem:[%s9 + $0xbbc] sm:$0xff]
  %v7974 = vld [vmem:[%s9 + $0xbc4] sm:$0xff]
  %v7975 = vld [vmem:[%s9 + $0xbcc] sm:$0xf]
  %v7976 = vld [vmem:[%s9 + $0xbd0] sm:$0xff]
  %v7977 = vld [vmem:[%s9 + $0xbd8] sm:$0xff]
  %v7978 = vld [vmem:[%s9 + $0xbe0] sm:$0xff]
  %v7979 = vld [vmem:[%s9 + $0xbe8] sm:$0xf]
  %v7980 = vld [vmem:[%s9 + $0xbec] sm:$0xff]
  %v7981 = vld [vmem:[%s9 + $0xbf4] sm:$0xff]
  %v7982 = vld [vmem:[%s9 + $0xbfc] sm:$0xff]
  %v7983 = vld [vmem:[%s9 + $0xc04] sm:$0xf]
  %v7984 = vld [vmem:[%s9 + $0xc08] sm:$0xff]
  %v7985 = vld [vmem:[%s9 + $0xc10] sm:$0xff]
  %v7986 = vld [vmem:[%s9 + $0xc18] sm:$0xff]
  %v7987 = vld [vmem:[%s9 + $0xc20] sm:$0xf]
  %v7988 = vld [vmem:[%s9 + $0xc24] sm:$0xff]
  %v7989 = vld [vmem:[%s9 + $0xc2c] sm:$0xff]
  %v7990 = vld [vmem:[%s9 + $0xc34] sm:$0xff]
  %v7991 = vld [vmem:[%s9 + $0xc3c] sm:$0xf]
  %v7992 = vld [vmem:[%s9 + $0xc40] sm:$0xff]
  %v7993 = vld [vmem:[%s9 + $0xc48] sm:$0xff]
  %v7994 = vld [vmem:[%s9 + $0xc50] sm:$0xff]
  %v7995 = vld [vmem:[%s9 + $0xc58] sm:$0xf]
  %v7996 = vld [vmem:[%s9 + $0xc5c] sm:$0xff]
  %v7997 = vld [vmem:[%s9 + $0xc64] sm:$0xff]
  %v7998 = vld [vmem:[%s9 + $0xc6c] sm:$0xff]
  %v7999 = vld [vmem:[%s9 + $0xc74] sm:$0xf]
  %v8000 = vld [vmem:[%s9 + $0xc78] sm:$0xff]
  %v8001 = vld [vmem:[%s9 + $0xc80] sm:$0xff]
  %v8002 = vld [vmem:[%s9 + $0xc88] sm:$0xff]
  %v8003 = vld [vmem:[%s9 + $0xc90] sm:$0xf]
  %v8004 = vld [vmem:[%s9 + $0xc94] sm:$0xff]
  %v8005 = vld [vmem:[%s9 + $0xc9c] sm:$0xff]
  %v8006 = vld [vmem:[%s9 + $0xca4] sm:$0xff]
  %v8007 = vld [vmem:[%s9 + $0xcac] sm:$0xf]
  %v8008 = vld [vmem:[%s9 + $0xcb0] sm:$0xff]
  %v8009 = vld [vmem:[%s9 + $0xcb8] sm:$0xff]
  %v8010 = vld [vmem:[%s9 + $0xcc0] sm:$0xff]
  %v8011 = vld [vmem:[%s9 + $0xcc8] sm:$0xf]
  %v8012 = vld [vmem:[%s9 + $0xccc] sm:$0xff]
  %v8013 = vld [vmem:[%s9 + $0xcd4] sm:$0xff]
  %v8014 = vld [vmem:[%s9 + $0xcdc] sm:$0xff]
  %v8015 = vld [vmem:[%s9 + $0xce4] sm:$0xf]
  %v8016 = vld [vmem:[%s9 + $0xce8] sm:$0xff]
  %v8017 = vld [vmem:[%s9 + $0xcf0] sm:$0xff]
  %v8018 = vld [vmem:[%s9 + $0xcf8] sm:$0xff]
  %v8019 = vld [vmem:[%s9 + $0xd00] sm:$0xf]
  %v8020 = vld [vmem:[%s9 + $0xd04] sm:$0xff]
  %v8021 = vld [vmem:[%s9 + $0xd0c] sm:$0xff]
  %v8022 = vld [vmem:[%s9 + $0xd14] sm:$0xff]
  %v8023 = vld [vmem:[%s9 + $0xd1c] sm:$0xf]
  %v8024 = vld [vmem:[%s9 + $0xd20] sm:$0xff]
  %v8025 = vld [vmem:[%s9 + $0xd28] sm:$0xff]
  %v8026 = vld [vmem:[%s9 + $0xd30] sm:$0xff]
  %v8027 = vld [vmem:[%s9 + $0xd38] sm:$0xf]
  %v8028 = vld [vmem:[%s9 + $0xd3c] sm:$0xff]
  %v8029 = vld [vmem:[%s9 + $0xd44] sm:$0xff]
  %v8030 = vld [vmem:[%s9 + $0xd4c] sm:$0xff]
  %v8031 = vld [vmem:[%s9 + $0xd54] sm:$0xf]
  %v8032 = vld [vmem:[%s9 + $0xd58] sm:$0xff]
  %v8033 = vld [vmem:[%s9 + $0xd60] sm:$0xff]
  %v8034 = vld [vmem:[%s9 + $0xd68] sm:$0xff]
  %v8035 = vld [vmem:[%s9 + $0xd70] sm:$0xf]
  %v8036 = vld [vmem:[%s9 + $0xd74] sm:$0xff]
  %v8037 = vld [vmem:[%s9 + $0xd7c] sm:$0xff]
  %v8038 = vld [vmem:[%s9 + $0xd84] sm:$0xff]
  %v8039 = vld [vmem:[%s9 + $0xd8c] sm:$0xf]
  %v8040 = vld [vmem:[%s9 + $0xd90] sm:$0xff]
  %v8041 = vld [vmem:[%s9 + $0xd98] sm:$0xff]
  %v8042 = vld [vmem:[%s9 + $0xda0] sm:$0xff]
  %v8043 = vld [vmem:[%s9 + $0xda8] sm:$0xf]
  %v8044 = vld [vmem:[%s9 + $0xdac] sm:$0xff]
  %v8045 = vld [vmem:[%s9 + $0xdb4] sm:$0xff]
  %v8046 = vld [vmem:[%s9 + $0xdbc] sm:$0xff]
  %v8047 = vld [vmem:[%s9 + $0xdc4] sm:$0xf]
  %v8048 = vld [vmem:[%s9 + $0xdc8] sm:$0xff]
  %v8049 = vld [vmem:[%s9 + $0xdd0] sm:$0xff]
  %v8050 = vld [vmem:[%s9 + $0xdd8] sm:$0xff]
  %v8051 = vld [vmem:[%s9 + $0xde0] sm:$0xf]
  %v8052 = vld [vmem:[%s9 + $0xde4] sm:$0xff]
  %v8053 = vld [vmem:[%s9 + $0xdec] sm:$0xff]
  %v8054 = vld [vmem:[%s9 + $0xdf4] sm:$0xff]
  %v8055 = vld [vmem:[%s9 + $0xdfc] sm:$0xf]
  %v8056 = vld [vmem:[%s9 + $0xe00] sm:$0xff]
  %v8057 = vld [vmem:[%s9 + $0xe08] sm:$0xff]
  %v8058 = vld [vmem:[%s9 + $0xe10] sm:$0xff]
  %v8059 = vld [vmem:[%s9 + $0xe18] sm:$0xf]
  %v8060 = vld [vmem:[%s9 + $0xe1c] sm:$0xff]
  %v8061 = vld [vmem:[%s9 + $0xe24] sm:$0xff]
  %v8062 = vld [vmem:[%s9 + $0xe2c] sm:$0xff]
  %v8063 = vld [vmem:[%s9 + $0xe34] sm:$0xf]
  %v8064 = vld [vmem:[%s9 + $0xe38] sm:$0xff]
  %v8065 = vld [vmem:[%s9 + $0xe40] sm:$0xff]
  %v8066 = vld [vmem:[%s9 + $0xe48] sm:$0xff]
  %v8067 = vld [vmem:[%s9 + $0xe50] sm:$0xf]
  %v8068 = vld [vmem:[%s9 + $0xe54] sm:$0xff]
  %v8069 = vld [vmem:[%s9 + $0xe5c] sm:$0xff]
  %v8070 = vld [vmem:[%s9 + $0xe64] sm:$0xff]
  %v8071 = vld [vmem:[%s9 + $0xe6c] sm:$0xf]
  %v8072 = vld [vmem:[%s9 + $0xe70] sm:$0xff]
  %v8073 = vld [vmem:[%s9 + $0xe78] sm:$0xff]
  %v8074 = vld [vmem:[%s9 + $0xe80] sm:$0xff]
  %v8075 = vld [vmem:[%s9 + $0xe88] sm:$0xf]
  %v8076 = vld [vmem:[%s9 + $0xe8c] sm:$0xff]
  %v8077 = vld [vmem:[%s9 + $0xe94] sm:$0xff]
  %v8078 = vld [vmem:[%s9 + $0xe9c] sm:$0xff]
  %v8079 = vld [vmem:[%s9 + $0xea4] sm:$0xf]
  %v8080 = vld [vmem:[%s9 + $0xea8] sm:$0xff]
  %v8081 = vld [vmem:[%s9 + $0xeb0] sm:$0xff]
  %v8082 = vld [vmem:[%s9 + $0xeb8] sm:$0xff]
  %v8083 = vld [vmem:[%s9 + $0xec0] sm:$0xf]
  %v8084 = vld [vmem:[%s9 + $0xec4] sm:$0xff]
  %v8085 = vld [vmem:[%s9 + $0xecc] sm:$0xff]
  %v8086 = vld [vmem:[%s9 + $0xed4] sm:$0xff]
  %v8087 = vld [vmem:[%s9 + $0xedc] sm:$0xf]
  %v8088 = vld [vmem:[%s9 + $0xee0] sm:$0xff]
  %v8089 = vld [vmem:[%s9 + $0xee8] sm:$0xff]
  %v8090 = vld [vmem:[%s9 + $0xef0] sm:$0xff]
  %v8091 = vld [vmem:[%s9 + $0xef8] sm:$0xf]
  %v8092 = vld [vmem:[%s9 + $0xefc] sm:$0xff]
  %v8093 = vld [vmem:[%s9 + $0xf04] sm:$0xff]
  %v8094 = vld [vmem:[%s9 + $0xf0c] sm:$0xff]
  %v8095 = vld [vmem:[%s9 + $0xf14] sm:$0xf]
  %v8096 = vld [vmem:[%s9 + $0xf18] sm:$0xff]
  %v8097 = vld [vmem:[%s9 + $0xf20] sm:$0xff]
  %v8098 = vld [vmem:[%s9 + $0xf28] sm:$0xff]
  %v8099 = vld [vmem:[%s9 + $0xf30] sm:$0xf]
  %v8100 = vld [vmem:[%s9 + $0xf34] sm:$0xff]
  %v8101 = vld [vmem:[%s9 + $0xf3c] sm:$0xff]
  %v8102 = vld [vmem:[%s9 + $0xf44] sm:$0xff]
  %v8103 = vld [vmem:[%s9 + $0xf4c] sm:$0xf]
  %v8104 = vld [vmem:[%s9 + $0xf50] sm:$0xff]
  %v8105 = vld [vmem:[%s9 + $0xf58] sm:$0xff]
  %v8106 = vld [vmem:[%s9 + $0xf60] sm:$0xff]
  %v8107 = vld [vmem:[%s9 + $0xf68] sm:$0xf]
  %v8108 = vld [vmem:[%s9 + $0xf6c] sm:$0xff]
  %v8109 = vld [vmem:[%s9 + $0xf74] sm:$0xff]
  %v8110 = vld [vmem:[%s9 + $0xf7c] sm:$0xff]
  %v8111 = vld [vmem:[%s9 + $0xf84] sm:$0xf]
  %v8112 = vld [vmem:[%s9 + $0xf88] sm:$0xff]
  %v8113 = vld [vmem:[%s9 + $0xf90] sm:$0xff]
  %v8114 = vld [vmem:[%s9 + $0xf98] sm:$0xff]
  %v8115 = vld [vmem:[%s9 + $0xfa0] sm:$0xf]
  %v8116 = vld [vmem:[%s9 + $0xfa4] sm:$0xff]
  %v8117 = vld [vmem:[%s9 + $0xfac] sm:$0xff]
  %v8118 = vld [vmem:[%s9 + $0xfb4] sm:$0xff]
  %v8119 = vld [vmem:[%s9 + $0xfbc] sm:$0xf]
  %v8120 = vld [vmem:[%s9 + $0xfc0] sm:$0xff]
  %v8121 = vld [vmem:[%s9 + $0xfc8] sm:$0xff]
  %v8122 = vld [vmem:[%s9 + $0xfd0] sm:$0xff]
  %v8123 = vld [vmem:[%s9 + $0xfd8] sm:$0xf]
  %v8124 = vld [vmem:[%s9 + $0xfdc] sm:$0xff]
  %v8125 = vld [vmem:[%s9 + $0xfe4] sm:$0xff]
  %v8126 = vld [vmem:[%s9 + $0xfec] sm:$0xff]
  %v8127 = vld [vmem:[%s9 + $0xff4] sm:$0xf]
  %v8128 = vld [vmem:[%s9 + $0xff8] sm:$0xff]
  %v8129 = vld [vmem:[%s9 + $0x1000] sm:$0xff]
  %v8130 = vld [vmem:[%s9 + $0x1008] sm:$0xff]
  %v8131 = vld [vmem:[%s9 + $0x1010] sm:$0xf]
  %v8132 = vld [vmem:[%s9 + $0x1014] sm:$0xff]
  %v8133 = vld [vmem:[%s9 + $0x101c] sm:$0xff]
  %v8134 = vld [vmem:[%s9 + $0x1024] sm:$0xff]
  %v8135 = vld [vmem:[%s9 + $0x102c] sm:$0xf]
  %v8136 = vld [vmem:[%s9 + $0x1030] sm:$0xff]
  %v8137 = vld [vmem:[%s9 + $0x1038] sm:$0xff]
  %v8138 = vld [vmem:[%s9 + $0x1040] sm:$0xff]
  %v8139 = vld [vmem:[%s9 + $0x1048] sm:$0xf]
  %v8140 = vld [vmem:[%s9 + $0x104c] sm:$0xff]
  %v8141 = vld [vmem:[%s9 + $0x1054] sm:$0xff]
  %v8142 = vld [vmem:[%s9 + $0x105c] sm:$0xff]
  %v8143 = vld [vmem:[%s9 + $0x1064] sm:$0xf]
  %v8144 = vld [vmem:[%s9 + $0x1068] sm:$0xff]
  %v8145 = vld [vmem:[%s9 + $0x1070] sm:$0xff]
  %v8146 = vld [vmem:[%s9 + $0x1078] sm:$0xff]
  %v8147 = vld [vmem:[%s9 + $0x1080] sm:$0xf]
  %v8148 = vld [vmem:[%s9 + $0x1084] sm:$0xff]
  %v8149 = vld [vmem:[%s9 + $0x108c] sm:$0xff]
  %v8150 = vld [vmem:[%s9 + $0x1094] sm:$0xff]
  %v8151 = vld [vmem:[%s9 + $0x109c] sm:$0xf]
  %v8152 = vld [vmem:[%s9 + $0x10a0] sm:$0xff]
  %v8153 = vld [vmem:[%s9 + $0x10a8] sm:$0xff]
  %v8154 = vld [vmem:[%s9 + $0x10b0] sm:$0xff]
  %v8155 = vld [vmem:[%s9 + $0x10b8] sm:$0xf]
  %v8156 = vld [vmem:[%s9 + $0x10bc] sm:$0xff]
  %v8157 = vld [vmem:[%s9 + $0x10c4] sm:$0xff]
  %v8158 = vld [vmem:[%s9 + $0x10cc] sm:$0xff]
  %v8159 = vld [vmem:[%s9 + $0x10d4] sm:$0xf]
  %v8160 = vld [vmem:[%s9 + $0x10d8] sm:$0xff]
  %v8161 = vld [vmem:[%s9 + $0x10e0] sm:$0xff]
  %v8162 = vld [vmem:[%s9 + $0x10e8] sm:$0xff]
  %v8163 = vld [vmem:[%s9 + $0x10f0] sm:$0xf]
  %v8164 = vld [vmem:[%s9 + $0x10f4] sm:$0xff]
  %v8165 = vld [vmem:[%s9 + $0x10fc] sm:$0xff]
  %v8166 = vld [vmem:[%s9 + $0x1104] sm:$0xff]
  %v8167 = vld [vmem:[%s9 + $0x110c] sm:$0xf]
  %v8168 = vld [vmem:[%s9 + $0x1110] sm:$0xff]
  %v8169 = vld [vmem:[%s9 + $0x1118] sm:$0xff]
  %v8170 = vld [vmem:[%s9 + $0x1120] sm:$0xff]
  %v8171 = vld [vmem:[%s9 + $0x1128] sm:$0xf]
  %v8172 = vld [vmem:[%s9 + $0x112c] sm:$0xff]
  %v8173 = vld [vmem:[%s9 + $0x1134] sm:$0xff]
  %v8174 = vld [vmem:[%s9 + $0x113c] sm:$0xff]
  %v8175 = vld [vmem:[%s9 + $0x1144] sm:$0xf]
  %v8176 = vld [vmem:[%s9 + $0x1148] sm:$0xff]
  %v8177 = vld [vmem:[%s9 + $0x1150] sm:$0xff]
  %v8178 = vld [vmem:[%s9 + $0x1158] sm:$0xff]
  %v8179 = vld [vmem:[%s9 + $0x1160] sm:$0xf]
  %v8180 = vld [vmem:[%s9 + $0x1164] sm:$0xff]
  %v8181 = vld [vmem:[%s9 + $0x116c] sm:$0xff]
  %v8182 = vld [vmem:[%s9 + $0x1174] sm:$0xff]
  %v8183 = vld [vmem:[%s9 + $0x117c] sm:$0xf]
  %v8184 = vld [vmem:[%s9 + $0x1180] sm:$0xff]
  %v8185 = vld [vmem:[%s9 + $0x1188] sm:$0xff]
  %v8186 = vld [vmem:[%s9 + $0x1190] sm:$0xff]
  %v8187 = vld [vmem:[%s9 + $0x1198] sm:$0xf]
  %v8188 = vld [vmem:[%s9 + $0x119c] sm:$0xff]
  %v8189 = vld [vmem:[%s9 + $0x11a4] sm:$0xff]
  %v8190 = vld [vmem:[%s9 + $0x11ac] sm:$0xff]
  %v8191 = vld [vmem:[%s9 + $0x11b4] sm:$0xf]
  %v8192 = vld [vmem:[%s9 + $0x11b8] sm:$0xff]
  %v8193 = vld [vmem:[%s9 + $0x11c0] sm:$0xff]
  %v8194 = vld [vmem:[%s9 + $0x11c8] sm:$0xff]
  %v8195 = vld [vmem:[%s9 + $0x11d0] sm:$0xf]
  %v8196 = vld [vmem:[%s9 + $0x11d4] sm:$0xff]
  %v8197 = vld [vmem:[%s9 + $0x11dc] sm:$0xff]
  %v8198 = vld [vmem:[%s9 + $0x11e4] sm:$0xff]
  %v8199 = vld [vmem:[%s9 + $0x11ec] sm:$0xf]
  %v8200 = vld [vmem:[%s9 + $0x11f0] sm:$0xff]
  %v8201 = vld [vmem:[%s9 + $0x11f8] sm:$0xff]
  %v8202 = vld [vmem:[%s9 + $0x1200] sm:$0xff]
  %v8203 = vld [vmem:[%s9 + $0x1208] sm:$0xf]
  %v8204 = vld [vmem:[%s9 + $0x120c] sm:$0xff]
  %v8205 = vld [vmem:[%s9 + $0x1214] sm:$0xff]
  %v8206 = vld [vmem:[%s9 + $0x121c] sm:$0xff]
  %v8207 = vld [vmem:[%s9 + $0x1224] sm:$0xf]
  %v8208 = vld [vmem:[%s9 + $0x1228] sm:$0xff]
  %v8209 = vld [vmem:[%s9 + $0x1230] sm:$0xff]
  %v8210 = vld [vmem:[%s9 + $0x1238] sm:$0xff]
  %v8211 = vld [vmem:[%s9 + $0x1240] sm:$0xf]
  %v8212 = vld [vmem:[%s9 + $0x1244] sm:$0xff]
  %v8213 = vld [vmem:[%s9 + $0x124c] sm:$0xff]
  %v8214 = vld [vmem:[%s9 + $0x1254] sm:$0xff]
  %v8215 = vld [vmem:[%s9 + $0x125c] sm:$0xf]
  %v8216 = vld [vmem:[%s9 + $0x1260] sm:$0xff]
  %v8217 = vld [vmem:[%s9 + $0x1268] sm:$0xff]
  %v8218 = vld [vmem:[%s9 + $0x1270] sm:$0xff]
  %v8219 = vld [vmem:[%s9 + $0x1278] sm:$0xf]
  %v8220 = vld [vmem:[%s9 + $0x127c] sm:$0xff]
  %v8221 = vld [vmem:[%s9 + $0x1284] sm:$0xff]
  %v8222 = vld [vmem:[%s9 + $0x128c] sm:$0xff]
  %v8223 = vld [vmem:[%s9 + $0x1294] sm:$0xf]
  %v8224 = vld [vmem:[%s9 + $0x1298] sm:$0xff]
  %v8225 = vld [vmem:[%s9 + $0x12a0] sm:$0xff]
  %v8226 = vld [vmem:[%s9 + $0x12a8] sm:$0xff]
  %v8227 = vld [vmem:[%s9 + $0x12b0] sm:$0xf]
  %v8228 = vld [vmem:[%s9 + $0x12b4] sm:$0xff]
  %v8229 = vld [vmem:[%s9 + $0x12bc] sm:$0xff]
  %v8230 = vld [vmem:[%s9 + $0x12c4] sm:$0xff]
  %v8231 = vld [vmem:[%s9 + $0x12cc] sm:$0xf]
  %v8232 = vld [vmem:[%s9 + $0x12d0] sm:$0xff]
  %v8233 = vld [vmem:[%s9 + $0x12d8] sm:$0xff]
  %v8234 = vld [vmem:[%s9 + $0x12e0] sm:$0xff]
  %v8235 = vld [vmem:[%s9 + $0x12e8] sm:$0xf]
  %v8236 = vld [vmem:[%s9 + $0x12ec] sm:$0xff]
  %v8237 = vld [vmem:[%s9 + $0x12f4] sm:$0xff]
  %v8238 = vld [vmem:[%s9 + $0x12fc] sm:$0xff]
  %v8239 = vld [vmem:[%s9 + $0x1304] sm:$0xf]
  %v8240 = vld [vmem:[%s9 + $0x1308] sm:$0xff]
  %v8241 = vld [vmem:[%s9 + $0x1310] sm:$0xff]
  %v8242 = vld [vmem:[%s9 + $0x1318] sm:$0xff]
  %v8243 = vld [vmem:[%s9 + $0x1320] sm:$0xf]
  %v8244 = vld [vmem:[%s9 + $0x1324] sm:$0xff]
  %v8245 = vld [vmem:[%s9 + $0x132c] sm:$0xff]
  %v8246 = vld [vmem:[%s9 + $0x1334] sm:$0xff]
  %v8247 = vld [vmem:[%s9 + $0x133c] sm:$0xf]
  %v8248 = vld [vmem:[%s9 + $0x1340] sm:$0xff]
  %v8249 = vld [vmem:[%s9 + $0x1348] sm:$0xff]
  %v8250 = vld [vmem:[%s9 + $0x1350] sm:$0xff]
  %v8251 = vld [vmem:[%s9 + $0x1358] sm:$0xf]
  %v8252 = vld [vmem:[%s9 + $0x135c] sm:$0xff]
  %v8253 = vld [vmem:[%s9 + $0x1364] sm:$0xff]
  %v8254 = vld [vmem:[%s9 + $0x136c] sm:$0xff]
  %v8255 = vld [vmem:[%s9 + $0x1374] sm:$0xf]
  %v8256 = vld [vmem:[%s9 + $0x1378] sm:$0xff]
  %v8257 = vld [vmem:[%s9 + $0x1380] sm:$0xff]
  %v8258 = vld [vmem:[%s9 + $0x1388] sm:$0xff]
  %v8259 = vld [vmem:[%s9 + $0x1390] sm:$0xf]
  %v8260 = vld [vmem:[%s9 + $0x1394] sm:$0xff]
  %v8261 = vld [vmem:[%s9 + $0x139c] sm:$0xff]
  %v8262 = vld [vmem:[%s9 + $0x13a4] sm:$0xff]
  %v8263 = vld [vmem:[%s9 + $0x13ac] sm:$0xf]
  %v8264 = vld [vmem:[%s9 + $0x13b0] sm:$0xff]
  %v8265 = vld [vmem:[%s9 + $0x13b8] sm:$0xff]
  %v8266 = vld [vmem:[%s9 + $0x13c0] sm:$0xff]
  %v8267 = vld [vmem:[%s9 + $0x13c8] sm:$0xf]
  %v8268 = vld [vmem:[%s9 + $0x13cc] sm:$0xff]
  %v8269 = vld [vmem:[%s9 + $0x13d4] sm:$0xff]
  %v8270 = vld [vmem:[%s9 + $0x13dc] sm:$0xff]
  %v8271 = vld [vmem:[%s9 + $0x13e4] sm:$0xf]
  %v8272 = vld [vmem:[%s9 + $0x13e8] sm:$0xff]
  %v8273 = vld [vmem:[%s9 + $0x13f0] sm:$0xff]
  %v8274 = vld [vmem:[%s9 + $0x13f8] sm:$0xff]
  %v8275 = vld [vmem:[%s9 + $0x1400] sm:$0xf]
  %v8276 = vld [vmem:[%s9 + $0x1404] sm:$0xff]
  %v8277 = vld [vmem:[%s9 + $0x140c] sm:$0xff]
  %v8278 = vld [vmem:[%s9 + $0x1414] sm:$0xff]
  %v8279 = vld [vmem:[%s9 + $0x141c] sm:$0xf]
  %v8280 = vld [vmem:[%s9 + $0x1420] sm:$0xff]
  %v8281 = vld [vmem:[%s9 + $0x1428] sm:$0xff]
  %v8282 = vld [vmem:[%s9 + $0x1430] sm:$0xff]
  %v8283 = vld [vmem:[%s9 + $0x1438] sm:$0xf]
  %v8284 = vld [vmem:[%s9 + $0x143c] sm:$0xff]
  %v8285 = vld [vmem:[%s9 + $0x1444] sm:$0xff]
  %v8286 = vld [vmem:[%s9 + $0x144c] sm:$0xff]
  %v8287 = vld [vmem:[%s9 + $0x1454] sm:$0xf]
  %v8288 = vld [vmem:[%s9 + $0x1458] sm:$0xff]
  %v8289 = vld [vmem:[%s9 + $0x1460] sm:$0xff]
  %v8290 = vld [vmem:[%s9 + $0x1468] sm:$0xff]
  %v8291 = vld [vmem:[%s9 + $0x1470] sm:$0xf]
  %v8292 = vld [vmem:[%s9 + $0x1474] sm:$0xff]
  %v8293 = vld [vmem:[%s9 + $0x147c] sm:$0xff]
  %v8294 = vld [vmem:[%s9 + $0x1484] sm:$0xff]
  %v8295 = vld [vmem:[%s9 + $0x148c] sm:$0xf]
  %v8296 = vld [vmem:[%s9 + $0x1490] sm:$0xff]
  %v8297 = vld [vmem:[%s9 + $0x1498] sm:$0xff]
  %v8298 = vld [vmem:[%s9 + $0x14a0] sm:$0xff]
  %v8299 = vld [vmem:[%s9 + $0x14a8] sm:$0xf]
  %v8300 = vld [vmem:[%s9 + $0x14ac] sm:$0xff]
  %v8301 = vld [vmem:[%s9 + $0x14b4] sm:$0xff]
  %v8302 = vld [vmem:[%s9 + $0x14bc] sm:$0xff]
  %v8303 = vld [vmem:[%s9 + $0x14c4] sm:$0xf]
  %v8304 = vld [vmem:[%s9 + $0x14c8] sm:$0xff]
  %v8305 = vld [vmem:[%s9 + $0x14d0] sm:$0xff]
  %v8306 = vld [vmem:[%s9 + $0x14d8] sm:$0xff]
  %v8307 = vld [vmem:[%s9 + $0x14e0] sm:$0xf]
  %v8308 = vld [vmem:[%s9 + $0x14e4] sm:$0xff]
  %v8309 = vld [vmem:[%s9 + $0x14ec] sm:$0xff]
  %v8310 = vld [vmem:[%s9 + $0x14f4] sm:$0xff]
  %v8311 = vld [vmem:[%s9 + $0x14fc] sm:$0xf]
  %v8312 = vld [vmem:[%s9 + $0x1500] sm:$0xff]
  %v8313 = vld [vmem:[%s9 + $0x1508] sm:$0xff]
  %v8314 = vld [vmem:[%s9 + $0x1510] sm:$0xff]
  %v8315 = vld [vmem:[%s9 + $0x1518] sm:$0xf]
  %v8316 = vld [vmem:[%s9 + $0x151c] sm:$0xff]
  %v8317 = vld [vmem:[%s9 + $0x1524] sm:$0xff]
  %v8318 = vld [vmem:[%s9 + $0x152c] sm:$0xff]
  %v8319 = vld [vmem:[%s9 + $0x1534] sm:$0xf]
  %v8320 = vld [vmem:[%s9 + $0x1538] sm:$0xff]
  %v8321 = vld [vmem:[%s9 + $0x1540] sm:$0xff]
  %v8322 = vld [vmem:[%s9 + $0x1548] sm:$0xff]
  %v8323 = vld [vmem:[%s9 + $0x1550] sm:$0xf]
  %v8324 = vld [vmem:[%s9 + $0x1554] sm:$0xff]
  %v8325 = vld [vmem:[%s9 + $0x155c] sm:$0xff]
  %v8326 = vld [vmem:[%s9 + $0x1564] sm:$0xff]
  %v8327 = vld [vmem:[%s9 + $0x156c] sm:$0xf]
  %v8328 = vld [vmem:[%s9 + $0x1570] sm:$0xff]
  %v8329 = vld [vmem:[%s9 + $0x1578] sm:$0xff]
  %v8330 = vld [vmem:[%s9 + $0x1580] sm:$0xff]
  %v8331 = vld [vmem:[%s9 + $0x1588] sm:$0xf]
  %v8332 = vld [vmem:[%s9 + $0x158c] sm:$0xff]
  %v8333 = vld [vmem:[%s9 + $0x1594] sm:$0xff]
  %v8334 = vld [vmem:[%s9 + $0x159c] sm:$0xff]
  %v8335 = vld [vmem:[%s9 + $0x15a4] sm:$0xf]
  %v8336 = vld [vmem:[%s9 + $0x15a8] sm:$0xff]
  %v8337 = vld [vmem:[%s9 + $0x15b0] sm:$0xff]
  %v8338 = vld [vmem:[%s9 + $0x15b8] sm:$0xff]
  %v8339 = vld [vmem:[%s9 + $0x15c0] sm:$0xf]
  %v8340 = vld [vmem:[%s9 + $0x15c4] sm:$0xff]
  %v8341 = vld [vmem:[%s9 + $0x15cc] sm:$0xff]
  %v8342 = vld [vmem:[%s9 + $0x15d4] sm:$0xff]
  %v8343 = vld [vmem:[%s9 + $0x15dc] sm:$0xf]
  %v8344 = vld [vmem:[%s9 + $0x15e0] sm:$0xff]
  %v8345 = vld [vmem:[%s9 + $0x15e8] sm:$0xff]
  %v8346 = vld [vmem:[%s9 + $0x15f0] sm:$0xff]
  %v8347 = vld [vmem:[%s9 + $0x15f8] sm:$0xf]
  %v8348 = vld [vmem:[%s9 + $0x15fc] sm:$0xff]
  %v8349 = vld [vmem:[%s9 + $0x1604] sm:$0xff]
  %v8350 = vld [vmem:[%s9 + $0x160c] sm:$0xff]
  %v8351 = vld [vmem:[%s9 + $0x1614] sm:$0xf]
  %v8352 = vld [vmem:[%s9 + $0x1618] sm:$0xff]
  %v8353 = vld [vmem:[%s9 + $0x1620] sm:$0xff]
  %v8354 = vld [vmem:[%s9 + $0x1628] sm:$0xff]
  %v8355 = vld [vmem:[%s9 + $0x1630] sm:$0xf]
  %v8356 = vld [vmem:[%s9 + $0x1634] sm:$0xff]
  %v8357 = vld [vmem:[%s9 + $0x163c] sm:$0xff]
  %v8358 = vld [vmem:[%s9 + $0x1644] sm:$0xff]
  %v8359 = vld [vmem:[%s9 + $0x164c] sm:$0xf]
  %v8360 = vld [vmem:[%s9 + $0x1650] sm:$0xff]
  %v8361 = vld [vmem:[%s9 + $0x1658] sm:$0xff]
  %v8362 = vld [vmem:[%s9 + $0x1660] sm:$0xff]
  %v8363 = vld [vmem:[%s9 + $0x1668] sm:$0xf]
  %v8364 = vld [vmem:[%s9 + $0x166c] sm:$0xff]
  %v8365 = vld [vmem:[%s9 + $0x1674] sm:$0xff]
  %v8366 = vld [vmem:[%s9 + $0x167c] sm:$0xff]
  %v8367 = vld [vmem:[%s9 + $0x1684] sm:$0xf]
  %v8368 = vld [vmem:[%s9 + $0x1688] sm:$0xff]
  %v8369 = vld [vmem:[%s9 + $0x1690] sm:$0xff]
  %v8370 = vld [vmem:[%s9 + $0x1698] sm:$0xff]
  %v8371 = vld [vmem:[%s9 + $0x16a0] sm:$0xf]
  %v8372 = vld [vmem:[%s9 + $0x16a4] sm:$0xff]
  %v8373 = vld [vmem:[%s9 + $0x16ac] sm:$0xff]
  %v8374 = vld [vmem:[%s9 + $0x16b4] sm:$0xff]
  %v8375 = vld [vmem:[%s9 + $0x16bc] sm:$0xf]
  %v8376 = vld [vmem:[%s10] sm:$0xff]
  %v8378 = vlaneseq
  %v8379 = vshrl.u32 %v8378, 7
  %v8380 = vsub.s32 0, %v8379
  %v8381 = vrot.slane %v8376, %v8380
  %v8382 = vlaneseq
  %v8383 = vshrl.u32 %v8382, 7
  %v8384 = vsub.s32 1, %v8383
  %v8385 = vrot.slane %v8376, %v8384
  %v8386 = vlaneseq
  %v8387 = vshrl.u32 %v8386, 7
  %v8388 = vsub.s32 2, %v8387
  %v8389 = vrot.slane %v8376, %v8388
  %v8390 = vlaneseq
  %v8391 = vshrl.u32 %v8390, 7
  %v8392 = vsub.s32 3, %v8391
  %v8393 = vrot.slane %v8376, %v8392
  %v8394 = vlaneseq
  %v8395 = vshrl.u32 %v8394, 7
  %v8396 = vsub.s32 4, %v8395
  %v8397 = vrot.slane %v8376, %v8396
  %v8398 = vlaneseq
  %v8399 = vshrl.u32 %v8398, 7
  %v8400 = vsub.s32 5, %v8399
  %v8401 = vrot.slane %v8376, %v8400
  %v8402 = vlaneseq
  %v8403 = vshrl.u32 %v8402, 7
  %v8404 = vsub.s32 6, %v8403
  %v8405 = vrot.slane %v8376, %v8404
  %v9245 = vunpack.c.l.b16 %v7544
  %v9246 = vunpack.c.h.b16 %v7544
  %v9247 = vunpack.c.l.b16 %v7545
  %v9248 = vunpack.c.h.b16 %v7545
  %v9249 = vunpack.c.l.b16 %v7546
  %v9250 = vunpack.c.h.b16 %v7546
  %v9251 = vunpack.c.l.b16 %v7547
  %v9252 = vunpack.c.l.b16 %v7548
  %v9253 = vunpack.c.h.b16 %v7548
  %v9254 = vunpack.c.l.b16 %v7549
  %v9255 = vunpack.c.h.b16 %v7549
  %v9256 = vunpack.c.l.b16 %v7550
  %v9257 = vunpack.c.h.b16 %v7550
  %v9258 = vunpack.c.l.b16 %v7551
  %v9259 = vunpack.c.l.b16 %v7552
  %v9260 = vunpack.c.h.b16 %v7552
  %v9261 = vunpack.c.l.b16 %v7553
  %v9262 = vunpack.c.h.b16 %v7553
  %v9263 = vunpack.c.l.b16 %v7554
  %v9264 = vunpack.c.h.b16 %v7554
  %v9265 = vunpack.c.l.b16 %v7555
  %v9266 = vunpack.c.l.b16 %v7556
  %v9267 = vunpack.c.h.b16 %v7556
  %v9268 = vunpack.c.l.b16 %v7557
  %v9269 = vunpack.c.h.b16 %v7557
  %v9270 = vunpack.c.l.b16 %v7558
  %v9271 = vunpack.c.h.b16 %v7558
  %v9272 = vunpack.c.l.b16 %v7559
  %v9273 = vunpack.c.l.b16 %v7560
  %v9274 = vunpack.c.h.b16 %v7560
  %v9275 = vunpack.c.l.b16 %v7561
  %v9276 = vunpack.c.h.b16 %v7561
  %v9277 = vunpack.c.l.b16 %v7562
  %v9278 = vunpack.c.h.b16 %v7562
  %v9279 = vunpack.c.l.b16 %v7563
  %v9280 = vunpack.c.l.b16 %v7564
  %v9281 = vunpack.c.h.b16 %v7564
  %v9282 = vunpack.c.l.b16 %v7565
  %v9283 = vunpack.c.h.b16 %v7565
  %v9284 = vunpack.c.l.b16 %v7566
  %v9285 = vunpack.c.h.b16 %v7566
  %v9286 = vunpack.c.l.b16 %v7567
  %v9287 = vunpack.c.l.b16 %v7568
  %v9288 = vunpack.c.h.b16 %v7568
  %v9289 = vunpack.c.l.b16 %v7569
  %v9290 = vunpack.c.h.b16 %v7569
  %v9291 = vunpack.c.l.b16 %v7570
  %v9292 = vunpack.c.h.b16 %v7570
  %v9293 = vunpack.c.l.b16 %v7571
  %v9294 = vunpack.c.l.b16 %v7572
  %v9295 = vunpack.c.h.b16 %v7572
  %v9296 = vunpack.c.l.b16 %v7573
  %v9297 = vunpack.c.h.b16 %v7573
  %v9298 = vunpack.c.l.b16 %v7574
  %v9299 = vunpack.c.h.b16 %v7574
  %v9300 = vunpack.c.l.b16 %v7575
  %v9301 = vunpack.c.l.b16 %v7576
  %v9302 = vunpack.c.h.b16 %v7576
  %v9303 = vunpack.c.l.b16 %v7577
  %v9304 = vunpack.c.h.b16 %v7577
  %v9305 = vunpack.c.l.b16 %v7578
  %v9306 = vunpack.c.h.b16 %v7578
  %v9307 = vunpack.c.l.b16 %v7579
  %v9308 = vunpack.c.l.b16 %v7580
  %v9309 = vunpack.c.h.b16 %v7580
  %v9310 = vunpack.c.l.b16 %v7581
  %v9311 = vunpack.c.h.b16 %v7581
  %v9312 = vunpack.c.l.b16 %v7582
  %v9313 = vunpack.c.h.b16 %v7582
  %v9314 = vunpack.c.l.b16 %v7583
  %v9315 = vunpack.c.l.b16 %v7584
  %v9316 = vunpack.c.h.b16 %v7584
  %v9317 = vunpack.c.l.b16 %v7585
  %v9318 = vunpack.c.h.b16 %v7585
  %v9319 = vunpack.c.l.b16 %v7586
  %v9320 = vunpack.c.h.b16 %v7586
  %v9321 = vunpack.c.l.b16 %v7587
  %v9322 = vunpack.c.l.b16 %v7588
  %v9323 = vunpack.c.h.b16 %v7588
  %v9324 = vunpack.c.l.b16 %v7589
  %v9325 = vunpack.c.h.b16 %v7589
  %v9326 = vunpack.c.l.b16 %v7590
  %v9327 = vunpack.c.h.b16 %v7590
  %v9328 = vunpack.c.l.b16 %v7591
  %v9329 = vunpack.c.l.b16 %v7592
  %v9330 = vunpack.c.h.b16 %v7592
  %v9331 = vunpack.c.l.b16 %v7593
  %v9332 = vunpack.c.h.b16 %v7593
  %v9333 = vunpack.c.l.b16 %v7594
  %v9334 = vunpack.c.h.b16 %v7594
  %v9335 = vunpack.c.l.b16 %v7595
  %v9336 = vunpack.c.l.b16 %v7596
  %v9337 = vunpack.c.h.b16 %v7596
  %v9338 = vunpack.c.l.b16 %v7597
  %v9339 = vunpack.c.h.b16 %v7597
  %v9340 = vunpack.c.l.b16 %v7598
  %v9341 = vunpack.c.h.b16 %v7598
  %v9342 = vunpack.c.l.b16 %v7599
  %v9343 = vunpack.c.l.b16 %v7600
  %v9344 = vunpack.c.h.b16 %v7600
  %v9345 = vunpack.c.l.b16 %v7601
  %v9346 = vunpack.c.h.b16 %v7601
  %v9347 = vunpack.c.l.b16 %v7602
  %v9348 = vunpack.c.h.b16 %v7602
  %v9349 = vunpack.c.l.b16 %v7603
  %v9350 = vunpack.c.l.b16 %v7604
  %v9351 = vunpack.c.h.b16 %v7604
  %v9352 = vunpack.c.l.b16 %v7605
  %v9353 = vunpack.c.h.b16 %v7605
  %v9354 = vunpack.c.l.b16 %v7606
  %v9355 = vunpack.c.h.b16 %v7606
  %v9356 = vunpack.c.l.b16 %v7607
  %v9357 = vunpack.c.l.b16 %v7608
  %v9358 = vunpack.c.h.b16 %v7608
  %v9359 = vunpack.c.l.b16 %v7609
  %v9360 = vunpack.c.h.b16 %v7609
  %v9361 = vunpack.c.l.b16 %v7610
  %v9362 = vunpack.c.h.b16 %v7610
  %v9363 = vunpack.c.l.b16 %v7611
  %v9364 = vunpack.c.l.b16 %v7612
  %v9365 = vunpack.c.h.b16 %v7612
  %v9366 = vunpack.c.l.b16 %v7613
  %v9367 = vunpack.c.h.b16 %v7613
  %v9368 = vunpack.c.l.b16 %v7614
  %v9369 = vunpack.c.h.b16 %v7614
  %v9370 = vunpack.c.l.b16 %v7615
  %v9371 = vunpack.c.l.b16 %v7616
  %v9372 = vunpack.c.h.b16 %v7616
  %v9373 = vunpack.c.l.b16 %v7617
  %v9374 = vunpack.c.h.b16 %v7617
  %v9375 = vunpack.c.l.b16 %v7618
  %v9376 = vunpack.c.h.b16 %v7618
  %v9377 = vunpack.c.l.b16 %v7619
  %v9378 = vunpack.c.l.b16 %v7620
  %v9379 = vunpack.c.h.b16 %v7620
  %v9380 = vunpack.c.l.b16 %v7621
  %v9381 = vunpack.c.h.b16 %v7621
  %v9382 = vunpack.c.l.b16 %v7622
  %v9383 = vunpack.c.h.b16 %v7622
  %v9384 = vunpack.c.l.b16 %v7623
  %v9385 = vunpack.c.l.b16 %v7624
  %v9386 = vunpack.c.h.b16 %v7624
  %v9387 = vunpack.c.l.b16 %v7625
  %v9388 = vunpack.c.h.b16 %v7625
  %v9389 = vunpack.c.l.b16 %v7626
  %v9390 = vunpack.c.h.b16 %v7626
  %v9391 = vunpack.c.l.b16 %v7627
  %v9392 = vunpack.c.l.b16 %v7628
  %v9393 = vunpack.c.h.b16 %v7628
  %v9394 = vunpack.c.l.b16 %v7629
  %v9395 = vunpack.c.h.b16 %v7629
  %v9396 = vunpack.c.l.b16 %v7630
  %v9397 = vunpack.c.h.b16 %v7630
  %v9398 = vunpack.c.l.b16 %v7631
  %v9399 = vunpack.c.l.b16 %v7632
  %v9400 = vunpack.c.h.b16 %v7632
  %v9401 = vunpack.c.l.b16 %v7633
  %v9402 = vunpack.c.h.b16 %v7633
  %v9403 = vunpack.c.l.b16 %v7634
  %v9404 = vunpack.c.h.b16 %v7634
  %v9405 = vunpack.c.l.b16 %v7635
  %v9406 = vunpack.c.l.b16 %v7636
  %v9407 = vunpack.c.h.b16 %v7636
  %v9408 = vunpack.c.l.b16 %v7637
  %v9409 = vunpack.c.h.b16 %v7637
  %v9410 = vunpack.c.l.b16 %v7638
  %v9411 = vunpack.c.h.b16 %v7638
  %v9412 = vunpack.c.l.b16 %v7639
  %v9413 = vunpack.c.l.b16 %v7640
  %v9414 = vunpack.c.h.b16 %v7640
  %v9415 = vunpack.c.l.b16 %v7641
  %v9416 = vunpack.c.h.b16 %v7641
  %v9417 = vunpack.c.l.b16 %v7642
  %v9418 = vunpack.c.h.b16 %v7642
  %v9419 = vunpack.c.l.b16 %v7643
  %v9420 = vunpack.c.l.b16 %v7644
  %v9421 = vunpack.c.h.b16 %v7644
  %v9422 = vunpack.c.l.b16 %v7645
  %v9423 = vunpack.c.h.b16 %v7645
  %v9424 = vunpack.c.l.b16 %v7646
  %v9425 = vunpack.c.h.b16 %v7646
  %v9426 = vunpack.c.l.b16 %v7647
  %v9427 = vunpack.c.l.b16 %v7648
  %v9428 = vunpack.c.h.b16 %v7648
  %v9429 = vunpack.c.l.b16 %v7649
  %v9430 = vunpack.c.h.b16 %v7649
  %v9431 = vunpack.c.l.b16 %v7650
  %v9432 = vunpack.c.h.b16 %v7650
  %v9433 = vunpack.c.l.b16 %v7651
  %v9434 = vunpack.c.l.b16 %v7652
  %v9435 = vunpack.c.h.b16 %v7652
  %v9436 = vunpack.c.l.b16 %v7653
  %v9437 = vunpack.c.h.b16 %v7653
  %v9438 = vunpack.c.l.b16 %v7654
  %v9439 = vunpack.c.h.b16 %v7654
  %v9440 = vunpack.c.l.b16 %v7655
  %v9441 = vunpack.c.l.b16 %v7656
  %v9442 = vunpack.c.h.b16 %v7656
  %v9443 = vunpack.c.l.b16 %v7657
  %v9444 = vunpack.c.h.b16 %v7657
  %v9445 = vunpack.c.l.b16 %v7658
  %v9446 = vunpack.c.h.b16 %v7658
  %v9447 = vunpack.c.l.b16 %v7659
  %v9448 = vunpack.c.l.b16 %v7660
  %v9449 = vunpack.c.h.b16 %v7660
  %v9450 = vunpack.c.l.b16 %v7661
  %v9451 = vunpack.c.h.b16 %v7661
  %v9452 = vunpack.c.l.b16 %v7662
  %v9453 = vunpack.c.h.b16 %v7662
  %v9454 = vunpack.c.l.b16 %v7663
  %v9455 = vunpack.c.l.b16 %v7664
  %v9456 = vunpack.c.h.b16 %v7664
  %v9457 = vunpack.c.l.b16 %v7665
  %v9458 = vunpack.c.h.b16 %v7665
  %v9459 = vunpack.c.l.b16 %v7666
  %v9460 = vunpack.c.h.b16 %v7666
  %v9461 = vunpack.c.l.b16 %v7667
  %v9462 = vunpack.c.l.b16 %v7668
  %v9463 = vunpack.c.h.b16 %v7668
  %v9464 = vunpack.c.l.b16 %v7669
  %v9465 = vunpack.c.h.b16 %v7669
  %v9466 = vunpack.c.l.b16 %v7670
  %v9467 = vunpack.c.h.b16 %v7670
  %v9468 = vunpack.c.l.b16 %v7671
  %v9469 = vunpack.c.l.b16 %v7672
  %v9470 = vunpack.c.h.b16 %v7672
  %v9471 = vunpack.c.l.b16 %v7673
  %v9472 = vunpack.c.h.b16 %v7673
  %v9473 = vunpack.c.l.b16 %v7674
  %v9474 = vunpack.c.h.b16 %v7674
  %v9475 = vunpack.c.l.b16 %v7675
  %v9476 = vunpack.c.l.b16 %v7676
  %v9477 = vunpack.c.h.b16 %v7676
  %v9478 = vunpack.c.l.b16 %v7677
  %v9479 = vunpack.c.h.b16 %v7677
  %v9480 = vunpack.c.l.b16 %v7678
  %v9481 = vunpack.c.h.b16 %v7678
  %v9482 = vunpack.c.l.b16 %v7679
  %v9483 = vunpack.c.l.b16 %v7680
  %v9484 = vunpack.c.h.b16 %v7680
  %v9485 = vunpack.c.l.b16 %v7681
  %v9486 = vunpack.c.h.b16 %v7681
  %v9487 = vunpack.c.l.b16 %v7682
  %v9488 = vunpack.c.h.b16 %v7682
  %v9489 = vunpack.c.l.b16 %v7683
  %v9490 = vunpack.c.l.b16 %v7684
  %v9491 = vunpack.c.h.b16 %v7684
  %v9492 = vunpack.c.l.b16 %v7685
  %v9493 = vunpack.c.h.b16 %v7685
  %v9494 = vunpack.c.l.b16 %v7686
  %v9495 = vunpack.c.h.b16 %v7686
  %v9496 = vunpack.c.l.b16 %v7687
  %v9497 = vunpack.c.l.b16 %v7688
  %v9498 = vunpack.c.h.b16 %v7688
  %v9499 = vunpack.c.l.b16 %v7689
  %v9500 = vunpack.c.h.b16 %v7689
  %v9501 = vunpack.c.l.b16 %v7690
  %v9502 = vunpack.c.h.b16 %v7690
  %v9503 = vunpack.c.l.b16 %v7691
  %v9504 = vunpack.c.l.b16 %v7692
  %v9505 = vunpack.c.h.b16 %v7692
  %v9506 = vunpack.c.l.b16 %v7693
  %v9507 = vunpack.c.h.b16 %v7693
  %v9508 = vunpack.c.l.b16 %v7694
  %v9509 = vunpack.c.h.b16 %v7694
  %v9510 = vunpack.c.l.b16 %v7695
  %v9511 = vunpack.c.l.b16 %v7696
  %v9512 = vunpack.c.h.b16 %v7696
  %v9513 = vunpack.c.l.b16 %v7697
  %v9514 = vunpack.c.h.b16 %v7697
  %v9515 = vunpack.c.l.b16 %v7698
  %v9516 = vunpack.c.h.b16 %v7698
  %v9517 = vunpack.c.l.b16 %v7699
  %v9518 = vunpack.c.l.b16 %v7700
  %v9519 = vunpack.c.h.b16 %v7700
  %v9520 = vunpack.c.l.b16 %v7701
  %v9521 = vunpack.c.h.b16 %v7701
  %v9522 = vunpack.c.l.b16 %v7702
  %v9523 = vunpack.c.h.b16 %v7702
  %v9524 = vunpack.c.l.b16 %v7703
  %v9525 = vunpack.c.l.b16 %v7704
  %v9526 = vunpack.c.h.b16 %v7704
  %v9527 = vunpack.c.l.b16 %v7705
  %v9528 = vunpack.c.h.b16 %v7705
  %v9529 = vunpack.c.l.b16 %v7706
  %v9530 = vunpack.c.h.b16 %v7706
  %v9531 = vunpack.c.l.b16 %v7707
  %v9532 = vunpack.c.l.b16 %v7708
  %v9533 = vunpack.c.h.b16 %v7708
  %v9534 = vunpack.c.l.b16 %v7709
  %v9535 = vunpack.c.h.b16 %v7709
  %v9536 = vunpack.c.l.b16 %v7710
  %v9537 = vunpack.c.h.b16 %v7710
  %v9538 = vunpack.c.l.b16 %v7711
  %v9539 = vunpack.c.l.b16 %v7712
  %v9540 = vunpack.c.h.b16 %v7712
  %v9541 = vunpack.c.l.b16 %v7713
  %v9542 = vunpack.c.h.b16 %v7713
  %v9543 = vunpack.c.l.b16 %v7714
  %v9544 = vunpack.c.h.b16 %v7714
  %v9545 = vunpack.c.l.b16 %v7715
  %v9546 = vunpack.c.l.b16 %v7716
  %v9547 = vunpack.c.h.b16 %v7716
  %v9548 = vunpack.c.l.b16 %v7717
  %v9549 = vunpack.c.h.b16 %v7717
  %v9550 = vunpack.c.l.b16 %v7718
  %v9551 = vunpack.c.h.b16 %v7718
  %v9552 = vunpack.c.l.b16 %v7719
  %v9553 = vunpack.c.l.b16 %v7720
  %v9554 = vunpack.c.h.b16 %v7720
  %v9555 = vunpack.c.l.b16 %v7721
  %v9556 = vunpack.c.h.b16 %v7721
  %v9557 = vunpack.c.l.b16 %v7722
  %v9558 = vunpack.c.h.b16 %v7722
  %v9559 = vunpack.c.l.b16 %v7723
  %v9560 = vunpack.c.l.b16 %v7724
  %v9561 = vunpack.c.h.b16 %v7724
  %v9562 = vunpack.c.l.b16 %v7725
  %v9563 = vunpack.c.h.b16 %v7725
  %v9564 = vunpack.c.l.b16 %v7726
  %v9565 = vunpack.c.h.b16 %v7726
  %v9566 = vunpack.c.l.b16 %v7727
  %v9567 = vunpack.c.l.b16 %v7728
  %v9568 = vunpack.c.h.b16 %v7728
  %v9569 = vunpack.c.l.b16 %v7729
  %v9570 = vunpack.c.h.b16 %v7729
  %v9571 = vunpack.c.l.b16 %v7730
  %v9572 = vunpack.c.h.b16 %v7730
  %v9573 = vunpack.c.l.b16 %v7731
  %v9574 = vunpack.c.l.b16 %v7732
  %v9575 = vunpack.c.h.b16 %v7732
  %v9576 = vunpack.c.l.b16 %v7733
  %v9577 = vunpack.c.h.b16 %v7733
  %v9578 = vunpack.c.l.b16 %v7734
  %v9579 = vunpack.c.h.b16 %v7734
  %v9580 = vunpack.c.l.b16 %v7735
  %v9581 = vunpack.c.l.b16 %v7736
  %v9582 = vunpack.c.h.b16 %v7736
  %v9583 = vunpack.c.l.b16 %v7737
  %v9584 = vunpack.c.h.b16 %v7737
  %v9585 = vunpack.c.l.b16 %v7738
  %v9586 = vunpack.c.h.b16 %v7738
  %v9587 = vunpack.c.l.b16 %v7739
  %v9588 = vunpack.c.l.b16 %v7740
  %v9589 = vunpack.c.h.b16 %v7740
  %v9590 = vunpack.c.l.b16 %v7741
  %v9591 = vunpack.c.h.b16 %v7741
  %v9592 = vunpack.c.l.b16 %v7742
  %v9593 = vunpack.c.h.b16 %v7742
  %v9594 = vunpack.c.l.b16 %v7743
  %v9595 = vunpack.c.l.b16 %v7744
  %v9596 = vunpack.c.h.b16 %v7744
  %v9597 = vunpack.c.l.b16 %v7745
  %v9598 = vunpack.c.h.b16 %v7745
  %v9599 = vunpack.c.l.b16 %v7746
  %v9600 = vunpack.c.h.b16 %v7746
  %v9601 = vunpack.c.l.b16 %v7747
  %v9602 = vunpack.c.l.b16 %v7748
  %v9603 = vunpack.c.h.b16 %v7748
  %v9604 = vunpack.c.l.b16 %v7749
  %v9605 = vunpack.c.h.b16 %v7749
  %v9606 = vunpack.c.l.b16 %v7750
  %v9607 = vunpack.c.h.b16 %v7750
  %v9608 = vunpack.c.l.b16 %v7751
  %v9609 = vunpack.c.l.b16 %v7752
  %v9610 = vunpack.c.h.b16 %v7752
  %v9611 = vunpack.c.l.b16 %v7753
  %v9612 = vunpack.c.h.b16 %v7753
  %v9613 = vunpack.c.l.b16 %v7754
  %v9614 = vunpack.c.h.b16 %v7754
  %v9615 = vunpack.c.l.b16 %v7755
  %v9616 = vunpack.c.l.b16 %v7756
  %v9617 = vunpack.c.h.b16 %v7756
  %v9618 = vunpack.c.l.b16 %v7757
  %v9619 = vunpack.c.h.b16 %v7757
  %v9620 = vunpack.c.l.b16 %v7758
  %v9621 = vunpack.c.h.b16 %v7758
  %v9622 = vunpack.c.l.b16 %v7759
  %v9623 = vunpack.c.l.b16 %v7760
  %v9624 = vunpack.c.h.b16 %v7760
  %v9625 = vunpack.c.l.b16 %v7761
  %v9626 = vunpack.c.h.b16 %v7761
  %v9627 = vunpack.c.l.b16 %v7762
  %v9628 = vunpack.c.h.b16 %v7762
  %v9629 = vunpack.c.l.b16 %v7763
  %v9630 = vunpack.c.l.b16 %v7764
  %v9631 = vunpack.c.h.b16 %v7764
  %v9632 = vunpack.c.l.b16 %v7765
  %v9633 = vunpack.c.h.b16 %v7765
  %v9634 = vunpack.c.l.b16 %v7766
  %v9635 = vunpack.c.h.b16 %v7766
  %v9636 = vunpack.c.l.b16 %v7767
  %v9637 = vunpack.c.l.b16 %v7768
  %v9638 = vunpack.c.h.b16 %v7768
  %v9639 = vunpack.c.l.b16 %v7769
  %v9640 = vunpack.c.h.b16 %v7769
  %v9641 = vunpack.c.l.b16 %v7770
  %v9642 = vunpack.c.h.b16 %v7770
  %v9643 = vunpack.c.l.b16 %v7771
  %v9644 = vunpack.c.l.b16 %v7772
  %v9645 = vunpack.c.h.b16 %v7772
  %v9646 = vunpack.c.l.b16 %v7773
  %v9647 = vunpack.c.h.b16 %v7773
  %v9648 = vunpack.c.l.b16 %v7774
  %v9649 = vunpack.c.h.b16 %v7774
  %v9650 = vunpack.c.l.b16 %v7775
  %v9651 = vunpack.c.l.b16 %v7776
  %v9652 = vunpack.c.h.b16 %v7776
  %v9653 = vunpack.c.l.b16 %v7777
  %v9654 = vunpack.c.h.b16 %v7777
  %v9655 = vunpack.c.l.b16 %v7778
  %v9656 = vunpack.c.h.b16 %v7778
  %v9657 = vunpack.c.l.b16 %v7779
  %v9658 = vunpack.c.l.b16 %v7780
  %v9659 = vunpack.c.h.b16 %v7780
  %v9660 = vunpack.c.l.b16 %v7781
  %v9661 = vunpack.c.h.b16 %v7781
  %v9662 = vunpack.c.l.b16 %v7782
  %v9663 = vunpack.c.h.b16 %v7782
  %v9664 = vunpack.c.l.b16 %v7783
  %v9665 = vunpack.c.l.b16 %v7784
  %v9666 = vunpack.c.h.b16 %v7784
  %v9667 = vunpack.c.l.b16 %v7785
  %v9668 = vunpack.c.h.b16 %v7785
  %v9669 = vunpack.c.l.b16 %v7786
  %v9670 = vunpack.c.h.b16 %v7786
  %v9671 = vunpack.c.l.b16 %v7787
  %v9672 = vunpack.c.l.b16 %v7788
  %v9673 = vunpack.c.h.b16 %v7788
  %v9674 = vunpack.c.l.b16 %v7789
  %v9675 = vunpack.c.h.b16 %v7789
  %v9676 = vunpack.c.l.b16 %v7790
  %v9677 = vunpack.c.h.b16 %v7790
  %v9678 = vunpack.c.l.b16 %v7791
  %v9679 = vunpack.c.l.b16 %v7792
  %v9680 = vunpack.c.h.b16 %v7792
  %v9681 = vunpack.c.l.b16 %v7793
  %v9682 = vunpack.c.h.b16 %v7793
  %v9683 = vunpack.c.l.b16 %v7794
  %v9684 = vunpack.c.h.b16 %v7794
  %v9685 = vunpack.c.l.b16 %v7795
  %v9686 = vunpack.c.l.b16 %v7796
  %v9687 = vunpack.c.h.b16 %v7796
  %v9688 = vunpack.c.l.b16 %v7797
  %v9689 = vunpack.c.h.b16 %v7797
  %v9690 = vunpack.c.l.b16 %v7798
  %v9691 = vunpack.c.h.b16 %v7798
  %v9692 = vunpack.c.l.b16 %v7799
  %v9693 = vunpack.c.l.b16 %v7800
  %v9694 = vunpack.c.h.b16 %v7800
  %v9695 = vunpack.c.l.b16 %v7801
  %v9696 = vunpack.c.h.b16 %v7801
  %v9697 = vunpack.c.l.b16 %v7802
  %v9698 = vunpack.c.h.b16 %v7802
  %v9699 = vunpack.c.l.b16 %v7803
  %v9700 = vunpack.c.l.b16 %v7804
  %v9701 = vunpack.c.h.b16 %v7804
  %v9702 = vunpack.c.l.b16 %v7805
  %v9703 = vunpack.c.h.b16 %v7805
  %v9704 = vunpack.c.l.b16 %v7806
  %v9705 = vunpack.c.h.b16 %v7806
  %v9706 = vunpack.c.l.b16 %v7807
  %v9707 = vunpack.c.l.b16 %v7808
  %v9708 = vunpack.c.h.b16 %v7808
  %v9709 = vunpack.c.l.b16 %v7809
  %v9710 = vunpack.c.h.b16 %v7809
  %v9711 = vunpack.c.l.b16 %v7810
  %v9712 = vunpack.c.h.b16 %v7810
  %v9713 = vunpack.c.l.b16 %v7811
  %v9714 = vunpack.c.l.b16 %v7812
  %v9715 = vunpack.c.h.b16 %v7812
  %v9716 = vunpack.c.l.b16 %v7813
  %v9717 = vunpack.c.h.b16 %v7813
  %v9718 = vunpack.c.l.b16 %v7814
  %v9719 = vunpack.c.h.b16 %v7814
  %v9720 = vunpack.c.l.b16 %v7815
  %v9721 = vunpack.c.l.b16 %v7816
  %v9722 = vunpack.c.h.b16 %v7816
  %v9723 = vunpack.c.l.b16 %v7817
  %v9724 = vunpack.c.h.b16 %v7817
  %v9725 = vunpack.c.l.b16 %v7818
  %v9726 = vunpack.c.h.b16 %v7818
  %v9727 = vunpack.c.l.b16 %v7819
  %v9728 = vunpack.c.l.b16 %v7820
  %v9729 = vunpack.c.h.b16 %v7820
  %v9730 = vunpack.c.l.b16 %v7821
  %v9731 = vunpack.c.h.b16 %v7821
  %v9732 = vunpack.c.l.b16 %v7822
  %v9733 = vunpack.c.h.b16 %v7822
  %v9734 = vunpack.c.l.b16 %v7823
  %v9735 = vunpack.c.l.b16 %v7824
  %v9736 = vunpack.c.h.b16 %v7824
  %v9737 = vunpack.c.l.b16 %v7825
  %v9738 = vunpack.c.h.b16 %v7825
  %v9739 = vunpack.c.l.b16 %v7826
  %v9740 = vunpack.c.h.b16 %v7826
  %v9741 = vunpack.c.l.b16 %v7827
  %v9742 = vunpack.c.l.b16 %v7828
  %v9743 = vunpack.c.h.b16 %v7828
  %v9744 = vunpack.c.l.b16 %v7829
  %v9745 = vunpack.c.h.b16 %v7829
  %v9746 = vunpack.c.l.b16 %v7830
  %v9747 = vunpack.c.h.b16 %v7830
  %v9748 = vunpack.c.l.b16 %v7831
  %v9749 = vunpack.c.l.b16 %v7832
  %v9750 = vunpack.c.h.b16 %v7832
  %v9751 = vunpack.c.l.b16 %v7833
  %v9752 = vunpack.c.h.b16 %v7833
  %v9753 = vunpack.c.l.b16 %v7834
  %v9754 = vunpack.c.h.b16 %v7834
  %v9755 = vunpack.c.l.b16 %v7835
  %v9756 = vunpack.c.l.b16 %v7836
  %v9757 = vunpack.c.h.b16 %v7836
  %v9758 = vunpack.c.l.b16 %v7837
  %v9759 = vunpack.c.h.b16 %v7837
  %v9760 = vunpack.c.l.b16 %v7838
  %v9761 = vunpack.c.h.b16 %v7838
  %v9762 = vunpack.c.l.b16 %v7839
  %v9763 = vunpack.c.l.b16 %v7840
  %v9764 = vunpack.c.h.b16 %v7840
  %v9765 = vunpack.c.l.b16 %v7841
  %v9766 = vunpack.c.h.b16 %v7841
  %v9767 = vunpack.c.l.b16 %v7842
  %v9768 = vunpack.c.h.b16 %v7842
  %v9769 = vunpack.c.l.b16 %v7843
  %v9770 = vunpack.c.l.b16 %v7844
  %v9771 = vunpack.c.h.b16 %v7844
  %v9772 = vunpack.c.l.b16 %v7845
  %v9773 = vunpack.c.h.b16 %v7845
  %v9774 = vunpack.c.l.b16 %v7846
  %v9775 = vunpack.c.h.b16 %v7846
  %v9776 = vunpack.c.l.b16 %v7847
  %v9777 = vunpack.c.l.b16 %v7848
  %v9778 = vunpack.c.h.b16 %v7848
  %v9779 = vunpack.c.l.b16 %v7849
  %v9780 = vunpack.c.h.b16 %v7849
  %v9781 = vunpack.c.l.b16 %v7850
  %v9782 = vunpack.c.h.b16 %v7850
  %v9783 = vunpack.c.l.b16 %v7851
  %v9784 = vunpack.c.l.b16 %v7852
  %v9785 = vunpack.c.h.b16 %v7852
  %v9786 = vunpack.c.l.b16 %v7853
  %v9787 = vunpack.c.h.b16 %v7853
  %v9788 = vunpack.c.l.b16 %v7854
  %v9789 = vunpack.c.h.b16 %v7854
  %v9790 = vunpack.c.l.b16 %v7855
  %v9791 = vunpack.c.l.b16 %v7856
  %v9792 = vunpack.c.h.b16 %v7856
  %v9793 = vunpack.c.l.b16 %v7857
  %v9794 = vunpack.c.h.b16 %v7857
  %v9795 = vunpack.c.l.b16 %v7858
  %v9796 = vunpack.c.h.b16 %v7858
  %v9797 = vunpack.c.l.b16 %v7859
  %v9798 = vunpack.c.l.b16 %v7860
  %v9799 = vunpack.c.h.b16 %v7860
  %v9800 = vunpack.c.l.b16 %v7861
  %v9801 = vunpack.c.h.b16 %v7861
  %v9802 = vunpack.c.l.b16 %v7862
  %v9803 = vunpack.c.h.b16 %v7862
  %v9804 = vunpack.c.l.b16 %v7863
  %v9805 = vunpack.c.l.b16 %v7864
  %v9806 = vunpack.c.h.b16 %v7864
  %v9807 = vunpack.c.l.b16 %v7865
  %v9808 = vunpack.c.h.b16 %v7865
  %v9809 = vunpack.c.l.b16 %v7866
  %v9810 = vunpack.c.h.b16 %v7866
  %v9811 = vunpack.c.l.b16 %v7867
  %v9812 = vunpack.c.l.b16 %v7868
  %v9813 = vunpack.c.h.b16 %v7868
  %v9814 = vunpack.c.l.b16 %v7869
  %v9815 = vunpack.c.h.b16 %v7869
  %v9816 = vunpack.c.l.b16 %v7870
  %v9817 = vunpack.c.h.b16 %v7870
  %v9818 = vunpack.c.l.b16 %v7871
  %v9819 = vunpack.c.l.b16 %v7872
  %v9820 = vunpack.c.h.b16 %v7872
  %v9821 = vunpack.c.l.b16 %v7873
  %v9822 = vunpack.c.h.b16 %v7873
  %v9823 = vunpack.c.l.b16 %v7874
  %v9824 = vunpack.c.h.b16 %v7874
  %v9825 = vunpack.c.l.b16 %v7875
  %v9826 = vunpack.c.l.b16 %v7876
  %v9827 = vunpack.c.h.b16 %v7876
  %v9828 = vunpack.c.l.b16 %v7877
  %v9829 = vunpack.c.h.b16 %v7877
  %v9830 = vunpack.c.l.b16 %v7878
  %v9831 = vunpack.c.h.b16 %v7878
  %v9832 = vunpack.c.l.b16 %v7879
  %v9833 = vunpack.c.l.b16 %v7880
  %v9834 = vunpack.c.h.b16 %v7880
  %v9835 = vunpack.c.l.b16 %v7881
  %v9836 = vunpack.c.h.b16 %v7881
  %v9837 = vunpack.c.l.b16 %v7882
  %v9838 = vunpack.c.h.b16 %v7882
  %v9839 = vunpack.c.l.b16 %v7883
  %v9840 = vunpack.c.l.b16 %v7884
  %v9841 = vunpack.c.h.b16 %v7884
  %v9842 = vunpack.c.l.b16 %v7885
  %v9843 = vunpack.c.h.b16 %v7885
  %v9844 = vunpack.c.l.b16 %v7886
  %v9845 = vunpack.c.h.b16 %v7886
  %v9846 = vunpack.c.l.b16 %v7887
  %v9847 = vunpack.c.l.b16 %v7888
  %v9848 = vunpack.c.h.b16 %v7888
  %v9849 = vunpack.c.l.b16 %v7889
  %v9850 = vunpack.c.h.b16 %v7889
  %v9851 = vunpack.c.l.b16 %v7890
  %v9852 = vunpack.c.h.b16 %v7890
  %v9853 = vunpack.c.l.b16 %v7891
  %v9854 = vunpack.c.l.b16 %v7892
  %v9855 = vunpack.c.h.b16 %v7892
  %v9856 = vunpack.c.l.b16 %v7893
  %v9857 = vunpack.c.h.b16 %v7893
  %v9858 = vunpack.c.l.b16 %v7894
  %v9859 = vunpack.c.h.b16 %v7894
  %v9860 = vunpack.c.l.b16 %v7895
  %v9861 = vunpack.c.l.b16 %v7896
  %v9862 = vunpack.c.h.b16 %v7896
  %v9863 = vunpack.c.l.b16 %v7897
  %v9864 = vunpack.c.h.b16 %v7897
  %v9865 = vunpack.c.l.b16 %v7898
  %v9866 = vunpack.c.h.b16 %v7898
  %v9867 = vunpack.c.l.b16 %v7899
  %v9868 = vunpack.c.l.b16 %v7900
  %v9869 = vunpack.c.h.b16 %v7900
  %v9870 = vunpack.c.l.b16 %v7901
  %v9871 = vunpack.c.h.b16 %v7901
  %v9872 = vunpack.c.l.b16 %v7902
  %v9873 = vunpack.c.h.b16 %v7902
  %v9874 = vunpack.c.l.b16 %v7903
  %v9875 = vunpack.c.l.b16 %v7904
  %v9876 = vunpack.c.h.b16 %v7904
  %v9877 = vunpack.c.l.b16 %v7905
  %v9878 = vunpack.c.h.b16 %v7905
  %v9879 = vunpack.c.l.b16 %v7906
  %v9880 = vunpack.c.h.b16 %v7906
  %v9881 = vunpack.c.l.b16 %v7907
  %v9882 = vunpack.c.l.b16 %v7908
  %v9883 = vunpack.c.h.b16 %v7908
  %v9884 = vunpack.c.l.b16 %v7909
  %v9885 = vunpack.c.h.b16 %v7909
  %v9886 = vunpack.c.l.b16 %v7910
  %v9887 = vunpack.c.h.b16 %v7910
  %v9888 = vunpack.c.l.b16 %v7911
  %v9889 = vunpack.c.l.b16 %v7912
  %v9890 = vunpack.c.h.b16 %v7912
  %v9891 = vunpack.c.l.b16 %v7913
  %v9892 = vunpack.c.h.b16 %v7913
  %v9893 = vunpack.c.l.b16 %v7914
  %v9894 = vunpack.c.h.b16 %v7914
  %v9895 = vunpack.c.l.b16 %v7915
  %v9896 = vunpack.c.l.b16 %v7916
  %v9897 = vunpack.c.h.b16 %v7916
  %v9898 = vunpack.c.l.b16 %v7917
  %v9899 = vunpack.c.h.b16 %v7917
  %v9900 = vunpack.c.l.b16 %v7918
  %v9901 = vunpack.c.h.b16 %v7918
  %v9902 = vunpack.c.l.b16 %v7919
  %v9903 = vunpack.c.l.b16 %v7920
  %v9904 = vunpack.c.h.b16 %v7920
  %v9905 = vunpack.c.l.b16 %v7921
  %v9906 = vunpack.c.h.b16 %v7921
  %v9907 = vunpack.c.l.b16 %v7922
  %v9908 = vunpack.c.h.b16 %v7922
  %v9909 = vunpack.c.l.b16 %v7923
  %v9910 = vunpack.c.l.b16 %v7924
  %v9911 = vunpack.c.h.b16 %v7924
  %v9912 = vunpack.c.l.b16 %v7925
  %v9913 = vunpack.c.h.b16 %v7925
  %v9914 = vunpack.c.l.b16 %v7926
  %v9915 = vunpack.c.h.b16 %v7926
  %v9916 = vunpack.c.l.b16 %v7927
  %v9917 = vunpack.c.l.b16 %v7928
  %v9918 = vunpack.c.h.b16 %v7928
  %v9919 = vunpack.c.l.b16 %v7929
  %v9920 = vunpack.c.h.b16 %v7929
  %v9921 = vunpack.c.l.b16 %v7930
  %v9922 = vunpack.c.h.b16 %v7930
  %v9923 = vunpack.c.l.b16 %v7931
  %v9924 = vunpack.c.l.b16 %v7932
  %v9925 = vunpack.c.h.b16 %v7932
  %v9926 = vunpack.c.l.b16 %v7933
  %v9927 = vunpack.c.h.b16 %v7933
  %v9928 = vunpack.c.l.b16 %v7934
  %v9929 = vunpack.c.h.b16 %v7934
  %v9930 = vunpack.c.l.b16 %v7935
  %v9931 = vunpack.c.l.b16 %v7936
  %v9932 = vunpack.c.h.b16 %v7936
  %v9933 = vunpack.c.l.b16 %v7937
  %v9934 = vunpack.c.h.b16 %v7937
  %v9935 = vunpack.c.l.b16 %v7938
  %v9936 = vunpack.c.h.b16 %v7938
  %v9937 = vunpack.c.l.b16 %v7939
  %v9938 = vunpack.c.l.b16 %v7940
  %v9939 = vunpack.c.h.b16 %v7940
  %v9940 = vunpack.c.l.b16 %v7941
  %v9941 = vunpack.c.h.b16 %v7941
  %v9942 = vunpack.c.l.b16 %v7942
  %v9943 = vunpack.c.h.b16 %v7942
  %v9944 = vunpack.c.l.b16 %v7943
  %v9945 = vunpack.c.l.b16 %v7944
  %v9946 = vunpack.c.h.b16 %v7944
  %v9947 = vunpack.c.l.b16 %v7945
  %v9948 = vunpack.c.h.b16 %v7945
  %v9949 = vunpack.c.l.b16 %v7946
  %v9950 = vunpack.c.h.b16 %v7946
  %v9951 = vunpack.c.l.b16 %v7947
  %v9952 = vunpack.c.l.b16 %v7948
  %v9953 = vunpack.c.h.b16 %v7948
  %v9954 = vunpack.c.l.b16 %v7949
  %v9955 = vunpack.c.h.b16 %v7949
  %v9956 = vunpack.c.l.b16 %v7950
  %v9957 = vunpack.c.h.b16 %v7950
  %v9958 = vunpack.c.l.b16 %v7951
  %v9959 = vunpack.c.l.b16 %v7952
  %v9960 = vunpack.c.h.b16 %v7952
  %v9961 = vunpack.c.l.b16 %v7953
  %v9962 = vunpack.c.h.b16 %v7953
  %v9963 = vunpack.c.l.b16 %v7954
  %v9964 = vunpack.c.h.b16 %v7954
  %v9965 = vunpack.c.l.b16 %v7955
  %v9966 = vunpack.c.l.b16 %v7956
  %v9967 = vunpack.c.h.b16 %v7956
  %v9968 = vunpack.c.l.b16 %v7957
  %v9969 = vunpack.c.h.b16 %v7957
  %v9970 = vunpack.c.l.b16 %v7958
  %v9971 = vunpack.c.h.b16 %v7958
  %v9972 = vunpack.c.l.b16 %v7959
  %v9973 = vunpack.c.l.b16 %v7960
  %v9974 = vunpack.c.h.b16 %v7960
  %v9975 = vunpack.c.l.b16 %v7961
  %v9976 = vunpack.c.h.b16 %v7961
  %v9977 = vunpack.c.l.b16 %v7962
  %v9978 = vunpack.c.h.b16 %v7962
  %v9979 = vunpack.c.l.b16 %v7963
  %v9980 = vunpack.c.l.b16 %v7964
  %v9981 = vunpack.c.h.b16 %v7964
  %v9982 = vunpack.c.l.b16 %v7965
  %v9983 = vunpack.c.h.b16 %v7965
  %v9984 = vunpack.c.l.b16 %v7966
  %v9985 = vunpack.c.h.b16 %v7966
  %v9986 = vunpack.c.l.b16 %v7967
  %v9987 = vunpack.c.l.b16 %v7968
  %v9988 = vunpack.c.h.b16 %v7968
  %v9989 = vunpack.c.l.b16 %v7969
  %v9990 = vunpack.c.h.b16 %v7969
  %v9991 = vunpack.c.l.b16 %v7970
  %v9992 = vunpack.c.h.b16 %v7970
  %v9993 = vunpack.c.l.b16 %v7971
  %v9994 = vunpack.c.l.b16 %v7972
  %v9995 = vunpack.c.h.b16 %v7972
  %v9996 = vunpack.c.l.b16 %v7973
  %v9997 = vunpack.c.h.b16 %v7973
  %v9998 = vunpack.c.l.b16 %v7974
  %v9999 = vunpack.c.h.b16 %v7974
  %v10000 = vunpack.c.l.b16 %v7975
  %v10001 = vunpack.c.l.b16 %v7976
  %v10002 = vunpack.c.h.b16 %v7976
  %v10003 = vunpack.c.l.b16 %v7977
  %v10004 = vunpack.c.h.b16 %v7977
  %v10005 = vunpack.c.l.b16 %v7978
  %v10006 = vunpack.c.h.b16 %v7978
  %v10007 = vunpack.c.l.b16 %v7979
  %v10008 = vunpack.c.l.b16 %v7980
  %v10009 = vunpack.c.h.b16 %v7980
  %v10010 = vunpack.c.l.b16 %v7981
  %v10011 = vunpack.c.h.b16 %v7981
  %v10012 = vunpack.c.l.b16 %v7982
  %v10013 = vunpack.c.h.b16 %v7982
  %v10014 = vunpack.c.l.b16 %v7983
  %v10015 = vunpack.c.l.b16 %v7984
  %v10016 = vunpack.c.h.b16 %v7984
  %v10017 = vunpack.c.l.b16 %v7985
  %v10018 = vunpack.c.h.b16 %v7985
  %v10019 = vunpack.c.l.b16 %v7986
  %v10020 = vunpack.c.h.b16 %v7986
  %v10021 = vunpack.c.l.b16 %v7987
  %v10022 = vunpack.c.l.b16 %v7988
  %v10023 = vunpack.c.h.b16 %v7988
  %v10024 = vunpack.c.l.b16 %v7989
  %v10025 = vunpack.c.h.b16 %v7989
  %v10026 = vunpack.c.l.b16 %v7990
  %v10027 = vunpack.c.h.b16 %v7990
  %v10028 = vunpack.c.l.b16 %v7991
  %v10029 = vunpack.c.l.b16 %v7992
  %v10030 = vunpack.c.h.b16 %v7992
  %v10031 = vunpack.c.l.b16 %v7993
  %v10032 = vunpack.c.h.b16 %v7993
  %v10033 = vunpack.c.l.b16 %v7994
  %v10034 = vunpack.c.h.b16 %v7994
  %v10035 = vunpack.c.l.b16 %v7995
  %v10036 = vunpack.c.l.b16 %v7996
  %v10037 = vunpack.c.h.b16 %v7996
  %v10038 = vunpack.c.l.b16 %v7997
  %v10039 = vunpack.c.h.b16 %v7997
  %v10040 = vunpack.c.l.b16 %v7998
  %v10041 = vunpack.c.h.b16 %v7998
  %v10042 = vunpack.c.l.b16 %v7999
  %v10043 = vunpack.c.l.b16 %v8000
  %v10044 = vunpack.c.h.b16 %v8000
  %v10045 = vunpack.c.l.b16 %v8001
  %v10046 = vunpack.c.h.b16 %v8001
  %v10047 = vunpack.c.l.b16 %v8002
  %v10048 = vunpack.c.h.b16 %v8002
  %v10049 = vunpack.c.l.b16 %v8003
  %v10050 = vunpack.c.l.b16 %v8004
  %v10051 = vunpack.c.h.b16 %v8004
  %v10052 = vunpack.c.l.b16 %v8005
  %v10053 = vunpack.c.h.b16 %v8005
  %v10054 = vunpack.c.l.b16 %v8006
  %v10055 = vunpack.c.h.b16 %v8006
  %v10056 = vunpack.c.l.b16 %v8007
  %v10057 = vunpack.c.l.b16 %v8008
  %v10058 = vunpack.c.h.b16 %v8008
  %v10059 = vunpack.c.l.b16 %v8009
  %v10060 = vunpack.c.h.b16 %v8009
  %v10061 = vunpack.c.l.b16 %v8010
  %v10062 = vunpack.c.h.b16 %v8010
  %v10063 = vunpack.c.l.b16 %v8011
  %v10064 = vunpack.c.l.b16 %v8012
  %v10065 = vunpack.c.h.b16 %v8012
  %v10066 = vunpack.c.l.b16 %v8013
  %v10067 = vunpack.c.h.b16 %v8013
  %v10068 = vunpack.c.l.b16 %v8014
  %v10069 = vunpack.c.h.b16 %v8014
  %v10070 = vunpack.c.l.b16 %v8015
  %v10071 = vunpack.c.l.b16 %v8016
  %v10072 = vunpack.c.h.b16 %v8016
  %v10073 = vunpack.c.l.b16 %v8017
  %v10074 = vunpack.c.h.b16 %v8017
  %v10075 = vunpack.c.l.b16 %v8018
  %v10076 = vunpack.c.h.b16 %v8018
  %v10077 = vunpack.c.l.b16 %v8019
  %v10078 = vunpack.c.l.b16 %v8020
  %v10079 = vunpack.c.h.b16 %v8020
  %v10080 = vunpack.c.l.b16 %v8021
  %v10081 = vunpack.c.h.b16 %v8021
  %v10082 = vunpack.c.l.b16 %v8022
  %v10083 = vunpack.c.h.b16 %v8022
  %v10084 = vunpack.c.l.b16 %v8023
  %v10085 = vunpack.c.l.b16 %v8024
  %v10086 = vunpack.c.h.b16 %v8024
  %v10087 = vunpack.c.l.b16 %v8025
  %v10088 = vunpack.c.h.b16 %v8025
  %v10089 = vunpack.c.l.b16 %v8026
  %v10090 = vunpack.c.h.b16 %v8026
  %v10091 = vunpack.c.l.b16 %v8027
  %v10092 = vunpack.c.l.b16 %v8028
  %v10093 = vunpack.c.h.b16 %v8028
  %v10094 = vunpack.c.l.b16 %v8029
  %v10095 = vunpack.c.h.b16 %v8029
  %v10096 = vunpack.c.l.b16 %v8030
  %v10097 = vunpack.c.h.b16 %v8030
  %v10098 = vunpack.c.l.b16 %v8031
  %v10099 = vunpack.c.l.b16 %v8032
  %v10100 = vunpack.c.h.b16 %v8032
  %v10101 = vunpack.c.l.b16 %v8033
  %v10102 = vunpack.c.h.b16 %v8033
  %v10103 = vunpack.c.l.b16 %v8034
  %v10104 = vunpack.c.h.b16 %v8034
  %v10105 = vunpack.c.l.b16 %v8035
  %v10106 = vunpack.c.l.b16 %v8036
  %v10107 = vunpack.c.h.b16 %v8036
  %v10108 = vunpack.c.l.b16 %v8037
  %v10109 = vunpack.c.h.b16 %v8037
  %v10110 = vunpack.c.l.b16 %v8038
  %v10111 = vunpack.c.h.b16 %v8038
  %v10112 = vunpack.c.l.b16 %v8039
  %v10113 = vunpack.c.l.b16 %v8040
  %v10114 = vunpack.c.h.b16 %v8040
  %v10115 = vunpack.c.l.b16 %v8041
  %v10116 = vunpack.c.h.b16 %v8041
  %v10117 = vunpack.c.l.b16 %v8042
  %v10118 = vunpack.c.h.b16 %v8042
  %v10119 = vunpack.c.l.b16 %v8043
  %v10120 = vunpack.c.l.b16 %v8044
  %v10121 = vunpack.c.h.b16 %v8044
  %v10122 = vunpack.c.l.b16 %v8045
  %v10123 = vunpack.c.h.b16 %v8045
  %v10124 = vunpack.c.l.b16 %v8046
  %v10125 = vunpack.c.h.b16 %v8046
  %v10126 = vunpack.c.l.b16 %v8047
  %v10127 = vunpack.c.l.b16 %v8048
  %v10128 = vunpack.c.h.b16 %v8048
  %v10129 = vunpack.c.l.b16 %v8049
  %v10130 = vunpack.c.h.b16 %v8049
  %v10131 = vunpack.c.l.b16 %v8050
  %v10132 = vunpack.c.h.b16 %v8050
  %v10133 = vunpack.c.l.b16 %v8051
  %v10134 = vunpack.c.l.b16 %v8052
  %v10135 = vunpack.c.h.b16 %v8052
  %v10136 = vunpack.c.l.b16 %v8053
  %v10137 = vunpack.c.h.b16 %v8053
  %v10138 = vunpack.c.l.b16 %v8054
  %v10139 = vunpack.c.h.b16 %v8054
  %v10140 = vunpack.c.l.b16 %v8055
  %v10141 = vunpack.c.l.b16 %v8056
  %v10142 = vunpack.c.h.b16 %v8056
  %v10143 = vunpack.c.l.b16 %v8057
  %v10144 = vunpack.c.h.b16 %v8057
  %v10145 = vunpack.c.l.b16 %v8058
  %v10146 = vunpack.c.h.b16 %v8058
  %v10147 = vunpack.c.l.b16 %v8059
  %v10148 = vunpack.c.l.b16 %v8060
  %v10149 = vunpack.c.h.b16 %v8060
  %v10150 = vunpack.c.l.b16 %v8061
  %v10151 = vunpack.c.h.b16 %v8061
  %v10152 = vunpack.c.l.b16 %v8062
  %v10153 = vunpack.c.h.b16 %v8062
  %v10154 = vunpack.c.l.b16 %v8063
  %v10155 = vunpack.c.l.b16 %v8064
  %v10156 = vunpack.c.h.b16 %v8064
  %v10157 = vunpack.c.l.b16 %v8065
  %v10158 = vunpack.c.h.b16 %v8065
  %v10159 = vunpack.c.l.b16 %v8066
  %v10160 = vunpack.c.h.b16 %v8066
  %v10161 = vunpack.c.l.b16 %v8067
  %v10162 = vunpack.c.l.b16 %v8068
  %v10163 = vunpack.c.h.b16 %v8068
  %v10164 = vunpack.c.l.b16 %v8069
  %v10165 = vunpack.c.h.b16 %v8069
  %v10166 = vunpack.c.l.b16 %v8070
  %v10167 = vunpack.c.h.b16 %v8070
  %v10168 = vunpack.c.l.b16 %v8071
  %v10169 = vunpack.c.l.b16 %v8072
  %v10170 = vunpack.c.h.b16 %v8072
  %v10171 = vunpack.c.l.b16 %v8073
  %v10172 = vunpack.c.h.b16 %v8073
  %v10173 = vunpack.c.l.b16 %v8074
  %v10174 = vunpack.c.h.b16 %v8074
  %v10175 = vunpack.c.l.b16 %v8075
  %v10176 = vunpack.c.l.b16 %v8076
  %v10177 = vunpack.c.h.b16 %v8076
  %v10178 = vunpack.c.l.b16 %v8077
  %v10179 = vunpack.c.h.b16 %v8077
  %v10180 = vunpack.c.l.b16 %v8078
  %v10181 = vunpack.c.h.b16 %v8078
  %v10182 = vunpack.c.l.b16 %v8079
  %v10183 = vunpack.c.l.b16 %v8080
  %v10184 = vunpack.c.h.b16 %v8080
  %v10185 = vunpack.c.l.b16 %v8081
  %v10186 = vunpack.c.h.b16 %v8081
  %v10187 = vunpack.c.l.b16 %v8082
  %v10188 = vunpack.c.h.b16 %v8082
  %v10189 = vunpack.c.l.b16 %v8083
  %v10190 = vunpack.c.l.b16 %v8084
  %v10191 = vunpack.c.h.b16 %v8084
  %v10192 = vunpack.c.l.b16 %v8085
  %v10193 = vunpack.c.h.b16 %v8085
  %v10194 = vunpack.c.l.b16 %v8086
  %v10195 = vunpack.c.h.b16 %v8086
  %v10196 = vunpack.c.l.b16 %v8087
  %v10197 = vunpack.c.l.b16 %v8088
  %v10198 = vunpack.c.h.b16 %v8088
  %v10199 = vunpack.c.l.b16 %v8089
  %v10200 = vunpack.c.h.b16 %v8089
  %v10201 = vunpack.c.l.b16 %v8090
  %v10202 = vunpack.c.h.b16 %v8090
  %v10203 = vunpack.c.l.b16 %v8091
  %v10204 = vunpack.c.l.b16 %v8092
  %v10205 = vunpack.c.h.b16 %v8092
  %v10206 = vunpack.c.l.b16 %v8093
  %v10207 = vunpack.c.h.b16 %v8093
  %v10208 = vunpack.c.l.b16 %v8094
  %v10209 = vunpack.c.h.b16 %v8094
  %v10210 = vunpack.c.l.b16 %v8095
  %v10211 = vunpack.c.l.b16 %v8096
  %v10212 = vunpack.c.h.b16 %v8096
  %v10213 = vunpack.c.l.b16 %v8097
  %v10214 = vunpack.c.h.b16 %v8097
  %v10215 = vunpack.c.l.b16 %v8098
  %v10216 = vunpack.c.h.b16 %v8098
  %v10217 = vunpack.c.l.b16 %v8099
  %v10218 = vunpack.c.l.b16 %v8100
  %v10219 = vunpack.c.h.b16 %v8100
  %v10220 = vunpack.c.l.b16 %v8101
  %v10221 = vunpack.c.h.b16 %v8101
  %v10222 = vunpack.c.l.b16 %v8102
  %v10223 = vunpack.c.h.b16 %v8102
  %v10224 = vunpack.c.l.b16 %v8103
  %v10225 = vunpack.c.l.b16 %v8104
  %v10226 = vunpack.c.h.b16 %v8104
  %v10227 = vunpack.c.l.b16 %v8105
  %v10228 = vunpack.c.h.b16 %v8105
  %v10229 = vunpack.c.l.b16 %v8106
  %v10230 = vunpack.c.h.b16 %v8106
  %v10231 = vunpack.c.l.b16 %v8107
  %v10232 = vunpack.c.l.b16 %v8108
  %v10233 = vunpack.c.h.b16 %v8108
  %v10234 = vunpack.c.l.b16 %v8109
  %v10235 = vunpack.c.h.b16 %v8109
  %v10236 = vunpack.c.l.b16 %v8110
  %v10237 = vunpack.c.h.b16 %v8110
  %v10238 = vunpack.c.l.b16 %v8111
  %v10239 = vunpack.c.l.b16 %v8112
  %v10240 = vunpack.c.h.b16 %v8112
  %v10241 = vunpack.c.l.b16 %v8113
  %v10242 = vunpack.c.h.b16 %v8113
  %v10243 = vunpack.c.l.b16 %v8114
  %v10244 = vunpack.c.h.b16 %v8114
  %v10245 = vunpack.c.l.b16 %v8115
  %v10246 = vunpack.c.l.b16 %v8116
  %v10247 = vunpack.c.h.b16 %v8116
  %v10248 = vunpack.c.l.b16 %v8117
  %v10249 = vunpack.c.h.b16 %v8117
  %v10250 = vunpack.c.l.b16 %v8118
  %v10251 = vunpack.c.h.b16 %v8118
  %v10252 = vunpack.c.l.b16 %v8119
  %v10253 = vunpack.c.l.b16 %v8120
  %v10254 = vunpack.c.h.b16 %v8120
  %v10255 = vunpack.c.l.b16 %v8121
  %v10256 = vunpack.c.h.b16 %v8121
  %v10257 = vunpack.c.l.b16 %v8122
  %v10258 = vunpack.c.h.b16 %v8122
  %v10259 = vunpack.c.l.b16 %v8123
  %v10260 = vunpack.c.l.b16 %v8124
  %v10261 = vunpack.c.h.b16 %v8124
  %v10262 = vunpack.c.l.b16 %v8125
  %v10263 = vunpack.c.h.b16 %v8125
  %v10264 = vunpack.c.l.b16 %v8126
  %v10265 = vunpack.c.h.b16 %v8126
  %v10266 = vunpack.c.l.b16 %v8127
  %v10267 = vunpack.c.l.b16 %v8128
  %v10268 = vunpack.c.h.b16 %v8128
  %v10269 = vunpack.c.l.b16 %v8129
  %v10270 = vunpack.c.h.b16 %v8129
  %v10271 = vunpack.c.l.b16 %v8130
  %v10272 = vunpack.c.h.b16 %v8130
  %v10273 = vunpack.c.l.b16 %v8131
  %v10274 = vunpack.c.l.b16 %v8132
  %v10275 = vunpack.c.h.b16 %v8132
  %v10276 = vunpack.c.l.b16 %v8133
  %v10277 = vunpack.c.h.b16 %v8133
  %v10278 = vunpack.c.l.b16 %v8134
  %v10279 = vunpack.c.h.b16 %v8134
  %v10280 = vunpack.c.l.b16 %v8135
  %v10281 = vunpack.c.l.b16 %v8136
  %v10282 = vunpack.c.h.b16 %v8136
  %v10283 = vunpack.c.l.b16 %v8137
  %v10284 = vunpack.c.h.b16 %v8137
  %v10285 = vunpack.c.l.b16 %v8138
  %v10286 = vunpack.c.h.b16 %v8138
  %v10287 = vunpack.c.l.b16 %v8139
  %v10288 = vunpack.c.l.b16 %v8140
  %v10289 = vunpack.c.h.b16 %v8140
  %v10290 = vunpack.c.l.b16 %v8141
  %v10291 = vunpack.c.h.b16 %v8141
  %v10292 = vunpack.c.l.b16 %v8142
  %v10293 = vunpack.c.h.b16 %v8142
  %v10294 = vunpack.c.l.b16 %v8143
  %v10295 = vunpack.c.l.b16 %v8144
  %v10296 = vunpack.c.h.b16 %v8144
  %v10297 = vunpack.c.l.b16 %v8145
  %v10298 = vunpack.c.h.b16 %v8145
  %v10299 = vunpack.c.l.b16 %v8146
  %v10300 = vunpack.c.h.b16 %v8146
  %v10301 = vunpack.c.l.b16 %v8147
  %v10302 = vunpack.c.l.b16 %v8148
  %v10303 = vunpack.c.h.b16 %v8148
  %v10304 = vunpack.c.l.b16 %v8149
  %v10305 = vunpack.c.h.b16 %v8149
  %v10306 = vunpack.c.l.b16 %v8150
  %v10307 = vunpack.c.h.b16 %v8150
  %v10308 = vunpack.c.l.b16 %v8151
  %v10309 = vunpack.c.l.b16 %v8152
  %v10310 = vunpack.c.h.b16 %v8152
  %v10311 = vunpack.c.l.b16 %v8153
  %v10312 = vunpack.c.h.b16 %v8153
  %v10313 = vunpack.c.l.b16 %v8154
  %v10314 = vunpack.c.h.b16 %v8154
  %v10315 = vunpack.c.l.b16 %v8155
  %v10316 = vunpack.c.l.b16 %v8156
  %v10317 = vunpack.c.h.b16 %v8156
  %v10318 = vunpack.c.l.b16 %v8157
  %v10319 = vunpack.c.h.b16 %v8157
  %v10320 = vunpack.c.l.b16 %v8158
  %v10321 = vunpack.c.h.b16 %v8158
  %v10322 = vunpack.c.l.b16 %v8159
  %v10323 = vunpack.c.l.b16 %v8160
  %v10324 = vunpack.c.h.b16 %v8160
  %v10325 = vunpack.c.l.b16 %v8161
  %v10326 = vunpack.c.h.b16 %v8161
  %v10327 = vunpack.c.l.b16 %v8162
  %v10328 = vunpack.c.h.b16 %v8162
  %v10329 = vunpack.c.l.b16 %v8163
  %v10330 = vunpack.c.l.b16 %v8164
  %v10331 = vunpack.c.h.b16 %v8164
  %v10332 = vunpack.c.l.b16 %v8165
  %v10333 = vunpack.c.h.b16 %v8165
  %v10334 = vunpack.c.l.b16 %v8166
  %v10335 = vunpack.c.h.b16 %v8166
  %v10336 = vunpack.c.l.b16 %v8167
  %v10337 = vunpack.c.l.b16 %v8168
  %v10338 = vunpack.c.h.b16 %v8168
  %v10339 = vunpack.c.l.b16 %v8169
  %v10340 = vunpack.c.h.b16 %v8169
  %v10341 = vunpack.c.l.b16 %v8170
  %v10342 = vunpack.c.h.b16 %v8170
  %v10343 = vunpack.c.l.b16 %v8171
  %v10344 = vunpack.c.l.b16 %v8172
  %v10345 = vunpack.c.h.b16 %v8172
  %v10346 = vunpack.c.l.b16 %v8173
  %v10347 = vunpack.c.h.b16 %v8173
  %v10348 = vunpack.c.l.b16 %v8174
  %v10349 = vunpack.c.h.b16 %v8174
  %v10350 = vunpack.c.l.b16 %v8175
  %v10351 = vunpack.c.l.b16 %v8176
  %v10352 = vunpack.c.h.b16 %v8176
  %v10353 = vunpack.c.l.b16 %v8177
  %v10354 = vunpack.c.h.b16 %v8177
  %v10355 = vunpack.c.l.b16 %v8178
  %v10356 = vunpack.c.h.b16 %v8178
  %v10357 = vunpack.c.l.b16 %v8179
  %v10358 = vunpack.c.l.b16 %v8180
  %v10359 = vunpack.c.h.b16 %v8180
  %v10360 = vunpack.c.l.b16 %v8181
  %v10361 = vunpack.c.h.b16 %v8181
  %v10362 = vunpack.c.l.b16 %v8182
  %v10363 = vunpack.c.h.b16 %v8182
  %v10364 = vunpack.c.l.b16 %v8183
  %v10365 = vunpack.c.l.b16 %v8184
  %v10366 = vunpack.c.h.b16 %v8184
  %v10367 = vunpack.c.l.b16 %v8185
  %v10368 = vunpack.c.h.b16 %v8185
  %v10369 = vunpack.c.l.b16 %v8186
  %v10370 = vunpack.c.h.b16 %v8186
  %v10371 = vunpack.c.l.b16 %v8187
  %v10372 = vunpack.c.l.b16 %v8188
  %v10373 = vunpack.c.h.b16 %v8188
  %v10374 = vunpack.c.l.b16 %v8189
  %v10375 = vunpack.c.h.b16 %v8189
  %v10376 = vunpack.c.l.b16 %v8190
  %v10377 = vunpack.c.h.b16 %v8190
  %v10378 = vunpack.c.l.b16 %v8191
  %v10379 = vunpack.c.l.b16 %v8192
  %v10380 = vunpack.c.h.b16 %v8192
  %v10381 = vunpack.c.l.b16 %v8193
  %v10382 = vunpack.c.h.b16 %v8193
  %v10383 = vunpack.c.l.b16 %v8194
  %v10384 = vunpack.c.h.b16 %v8194
  %v10385 = vunpack.c.l.b16 %v8195
  %v10386 = vunpack.c.l.b16 %v8196
  %v10387 = vunpack.c.h.b16 %v8196
  %v10388 = vunpack.c.l.b16 %v8197
  %v10389 = vunpack.c.h.b16 %v8197
  %v10390 = vunpack.c.l.b16 %v8198
  %v10391 = vunpack.c.h.b16 %v8198
  %v10392 = vunpack.c.l.b16 %v8199
  %v10393 = vunpack.c.l.b16 %v8200
  %v10394 = vunpack.c.h.b16 %v8200
  %v10395 = vunpack.c.l.b16 %v8201
  %v10396 = vunpack.c.h.b16 %v8201
  %v10397 = vunpack.c.l.b16 %v8202
  %v10398 = vunpack.c.h.b16 %v8202
  %v10399 = vunpack.c.l.b16 %v8203
  %v10400 = vunpack.c.l.b16 %v8204
  %v10401 = vunpack.c.h.b16 %v8204
  %v10402 = vunpack.c.l.b16 %v8205
  %v10403 = vunpack.c.h.b16 %v8205
  %v10404 = vunpack.c.l.b16 %v8206
  %v10405 = vunpack.c.h.b16 %v8206
  %v10406 = vunpack.c.l.b16 %v8207
  %v10407 = vunpack.c.l.b16 %v8208
  %v10408 = vunpack.c.h.b16 %v8208
  %v10409 = vunpack.c.l.b16 %v8209
  %v10410 = vunpack.c.h.b16 %v8209
  %v10411 = vunpack.c.l.b16 %v8210
  %v10412 = vunpack.c.h.b16 %v8210
  %v10413 = vunpack.c.l.b16 %v8211
  %v10414 = vunpack.c.l.b16 %v8212
  %v10415 = vunpack.c.h.b16 %v8212
  %v10416 = vunpack.c.l.b16 %v8213
  %v10417 = vunpack.c.h.b16 %v8213
  %v10418 = vunpack.c.l.b16 %v8214
  %v10419 = vunpack.c.h.b16 %v8214
  %v10420 = vunpack.c.l.b16 %v8215
  %v10421 = vunpack.c.l.b16 %v8216
  %v10422 = vunpack.c.h.b16 %v8216
  %v10423 = vunpack.c.l.b16 %v8217
  %v10424 = vunpack.c.h.b16 %v8217
  %v10425 = vunpack.c.l.b16 %v8218
  %v10426 = vunpack.c.h.b16 %v8218
  %v10427 = vunpack.c.l.b16 %v8219
  %v10428 = vunpack.c.l.b16 %v8220
  %v10429 = vunpack.c.h.b16 %v8220
  %v10430 = vunpack.c.l.b16 %v8221
  %v10431 = vunpack.c.h.b16 %v8221
  %v10432 = vunpack.c.l.b16 %v8222
  %v10433 = vunpack.c.h.b16 %v8222
  %v10434 = vunpack.c.l.b16 %v8223
  %v10435 = vunpack.c.l.b16 %v8224
  %v10436 = vunpack.c.h.b16 %v8224
  %v10437 = vunpack.c.l.b16 %v8225
  %v10438 = vunpack.c.h.b16 %v8225
  %v10439 = vunpack.c.l.b16 %v8226
  %v10440 = vunpack.c.h.b16 %v8226
  %v10441 = vunpack.c.l.b16 %v8227
  %v10442 = vunpack.c.l.b16 %v8228
  %v10443 = vunpack.c.h.b16 %v8228
  %v10444 = vunpack.c.l.b16 %v8229
  %v10445 = vunpack.c.h.b16 %v8229
  %v10446 = vunpack.c.l.b16 %v8230
  %v10447 = vunpack.c.h.b16 %v8230
  %v10448 = vunpack.c.l.b16 %v8231
  %v10449 = vunpack.c.l.b16 %v8232
  %v10450 = vunpack.c.h.b16 %v8232
  %v10451 = vunpack.c.l.b16 %v8233
  %v10452 = vunpack.c.h.b16 %v8233
  %v10453 = vunpack.c.l.b16 %v8234
  %v10454 = vunpack.c.h.b16 %v8234
  %v10455 = vunpack.c.l.b16 %v8235
  %v10456 = vunpack.c.l.b16 %v8236
  %v10457 = vunpack.c.h.b16 %v8236
  %v10458 = vunpack.c.l.b16 %v8237
  %v10459 = vunpack.c.h.b16 %v8237
  %v10460 = vunpack.c.l.b16 %v8238
  %v10461 = vunpack.c.h.b16 %v8238
  %v10462 = vunpack.c.l.b16 %v8239
  %v10463 = vunpack.c.l.b16 %v8240
  %v10464 = vunpack.c.h.b16 %v8240
  %v10465 = vunpack.c.l.b16 %v8241
  %v10466 = vunpack.c.h.b16 %v8241
  %v10467 = vunpack.c.l.b16 %v8242
  %v10468 = vunpack.c.h.b16 %v8242
  %v10469 = vunpack.c.l.b16 %v8243
  %v10470 = vunpack.c.l.b16 %v8244
  %v10471 = vunpack.c.h.b16 %v8244
  %v10472 = vunpack.c.l.b16 %v8245
  %v10473 = vunpack.c.h.b16 %v8245
  %v10474 = vunpack.c.l.b16 %v8246
  %v10475 = vunpack.c.h.b16 %v8246
  %v10476 = vunpack.c.l.b16 %v8247
  %v10477 = vunpack.c.l.b16 %v8248
  %v10478 = vunpack.c.h.b16 %v8248
  %v10479 = vunpack.c.l.b16 %v8249
  %v10480 = vunpack.c.h.b16 %v8249
  %v10481 = vunpack.c.l.b16 %v8250
  %v10482 = vunpack.c.h.b16 %v8250
  %v10483 = vunpack.c.l.b16 %v8251
  %v10484 = vunpack.c.l.b16 %v8252
  %v10485 = vunpack.c.h.b16 %v8252
  %v10486 = vunpack.c.l.b16 %v8253
  %v10487 = vunpack.c.h.b16 %v8253
  %v10488 = vunpack.c.l.b16 %v8254
  %v10489 = vunpack.c.h.b16 %v8254
  %v10490 = vunpack.c.l.b16 %v8255
  %v10491 = vunpack.c.l.b16 %v8256
  %v10492 = vunpack.c.h.b16 %v8256
  %v10493 = vunpack.c.l.b16 %v8257
  %v10494 = vunpack.c.h.b16 %v8257
  %v10495 = vunpack.c.l.b16 %v8258
  %v10496 = vunpack.c.h.b16 %v8258
  %v10497 = vunpack.c.l.b16 %v8259
  %v10498 = vunpack.c.l.b16 %v8260
  %v10499 = vunpack.c.h.b16 %v8260
  %v10500 = vunpack.c.l.b16 %v8261
  %v10501 = vunpack.c.h.b16 %v8261
  %v10502 = vunpack.c.l.b16 %v8262
  %v10503 = vunpack.c.h.b16 %v8262
  %v10504 = vunpack.c.l.b16 %v8263
  %v10505 = vunpack.c.l.b16 %v8264
  %v10506 = vunpack.c.h.b16 %v8264
  %v10507 = vunpack.c.l.b16 %v8265
  %v10508 = vunpack.c.h.b16 %v8265
  %v10509 = vunpack.c.l.b16 %v8266
  %v10510 = vunpack.c.h.b16 %v8266
  %v10511 = vunpack.c.l.b16 %v8267
  %v10512 = vunpack.c.l.b16 %v8268
  %v10513 = vunpack.c.h.b16 %v8268
  %v10514 = vunpack.c.l.b16 %v8269
  %v10515 = vunpack.c.h.b16 %v8269
  %v10516 = vunpack.c.l.b16 %v8270
  %v10517 = vunpack.c.h.b16 %v8270
  %v10518 = vunpack.c.l.b16 %v8271
  %v10519 = vunpack.c.l.b16 %v8272
  %v10520 = vunpack.c.h.b16 %v8272
  %v10521 = vunpack.c.l.b16 %v8273
  %v10522 = vunpack.c.h.b16 %v8273
  %v10523 = vunpack.c.l.b16 %v8274
  %v10524 = vunpack.c.h.b16 %v8274
  %v10525 = vunpack.c.l.b16 %v8275
  %v10526 = vunpack.c.l.b16 %v8276
  %v10527 = vunpack.c.h.b16 %v8276
  %v10528 = vunpack.c.l.b16 %v8277
  %v10529 = vunpack.c.h.b16 %v8277
  %v10530 = vunpack.c.l.b16 %v8278
  %v10531 = vunpack.c.h.b16 %v8278
  %v10532 = vunpack.c.l.b16 %v8279
  %v10533 = vunpack.c.l.b16 %v8280
  %v10534 = vunpack.c.h.b16 %v8280
  %v10535 = vunpack.c.l.b16 %v8281
  %v10536 = vunpack.c.h.b16 %v8281
  %v10537 = vunpack.c.l.b16 %v8282
  %v10538 = vunpack.c.h.b16 %v8282
  %v10539 = vunpack.c.l.b16 %v8283
  %v10540 = vunpack.c.l.b16 %v8284
  %v10541 = vunpack.c.h.b16 %v8284
  %v10542 = vunpack.c.l.b16 %v8285
  %v10543 = vunpack.c.h.b16 %v8285
  %v10544 = vunpack.c.l.b16 %v8286
  %v10545 = vunpack.c.h.b16 %v8286
  %v10546 = vunpack.c.l.b16 %v8287
  %v10547 = vunpack.c.l.b16 %v8288
  %v10548 = vunpack.c.h.b16 %v8288
  %v10549 = vunpack.c.l.b16 %v8289
  %v10550 = vunpack.c.h.b16 %v8289
  %v10551 = vunpack.c.l.b16 %v8290
  %v10552 = vunpack.c.h.b16 %v8290
  %v10553 = vunpack.c.l.b16 %v8291
  %v10554 = vunpack.c.l.b16 %v8292
  %v10555 = vunpack.c.h.b16 %v8292
  %v10556 = vunpack.c.l.b16 %v8293
  %v10557 = vunpack.c.h.b16 %v8293
  %v10558 = vunpack.c.l.b16 %v8294
  %v10559 = vunpack.c.h.b16 %v8294
  %v10560 = vunpack.c.l.b16 %v8295
  %v10561 = vunpack.c.l.b16 %v8296
  %v10562 = vunpack.c.h.b16 %v8296
  %v10563 = vunpack.c.l.b16 %v8297
  %v10564 = vunpack.c.h.b16 %v8297
  %v10565 = vunpack.c.l.b16 %v8298
  %v10566 = vunpack.c.h.b16 %v8298
  %v10567 = vunpack.c.l.b16 %v8299
  %v10568 = vunpack.c.l.b16 %v8300
  %v10569 = vunpack.c.h.b16 %v8300
  %v10570 = vunpack.c.l.b16 %v8301
  %v10571 = vunpack.c.h.b16 %v8301
  %v10572 = vunpack.c.l.b16 %v8302
  %v10573 = vunpack.c.h.b16 %v8302
  %v10574 = vunpack.c.l.b16 %v8303
  %v10575 = vunpack.c.l.b16 %v8304
  %v10576 = vunpack.c.h.b16 %v8304
  %v10577 = vunpack.c.l.b16 %v8305
  %v10578 = vunpack.c.h.b16 %v8305
  %v10579 = vunpack.c.l.b16 %v8306
  %v10580 = vunpack.c.h.b16 %v8306
  %v10581 = vunpack.c.l.b16 %v8307
  %v10582 = vunpack.c.l.b16 %v8308
  %v10583 = vunpack.c.h.b16 %v8308
  %v10584 = vunpack.c.l.b16 %v8309
  %v10585 = vunpack.c.h.b16 %v8309
  %v10586 = vunpack.c.l.b16 %v8310
  %v10587 = vunpack.c.h.b16 %v8310
  %v10588 = vunpack.c.l.b16 %v8311
  %v10589 = vunpack.c.l.b16 %v8312
  %v10590 = vunpack.c.h.b16 %v8312
  %v10591 = vunpack.c.l.b16 %v8313
  %v10592 = vunpack.c.h.b16 %v8313
  %v10593 = vunpack.c.l.b16 %v8314
  %v10594 = vunpack.c.h.b16 %v8314
  %v10595 = vunpack.c.l.b16 %v8315
  %v10596 = vunpack.c.l.b16 %v8316
  %v10597 = vunpack.c.h.b16 %v8316
  %v10598 = vunpack.c.l.b16 %v8317
  %v10599 = vunpack.c.h.b16 %v8317
  %v10600 = vunpack.c.l.b16 %v8318
  %v10601 = vunpack.c.h.b16 %v8318
  %v10602 = vunpack.c.l.b16 %v8319
  %v10603 = vunpack.c.l.b16 %v8320
  %v10604 = vunpack.c.h.b16 %v8320
  %v10605 = vunpack.c.l.b16 %v8321
  %v10606 = vunpack.c.h.b16 %v8321
  %v10607 = vunpack.c.l.b16 %v8322
  %v10608 = vunpack.c.h.b16 %v8322
  %v10609 = vunpack.c.l.b16 %v8323
  %v10610 = vunpack.c.l.b16 %v8324
  %v10611 = vunpack.c.h.b16 %v8324
  %v10612 = vunpack.c.l.b16 %v8325
  %v10613 = vunpack.c.h.b16 %v8325
  %v10614 = vunpack.c.l.b16 %v8326
  %v10615 = vunpack.c.h.b16 %v8326
  %v10616 = vunpack.c.l.b16 %v8327
  %v10617 = vunpack.c.l.b16 %v8328
  %v10618 = vunpack.c.h.b16 %v8328
  %v10619 = vunpack.c.l.b16 %v8329
  %v10620 = vunpack.c.h.b16 %v8329
  %v10621 = vunpack.c.l.b16 %v8330
  %v10622 = vunpack.c.h.b16 %v8330
  %v10623 = vunpack.c.l.b16 %v8331
  %v10624 = vunpack.c.l.b16 %v8332
  %v10625 = vunpack.c.h.b16 %v8332
  %v10626 = vunpack.c.l.b16 %v8333
  %v10627 = vunpack.c.h.b16 %v8333
  %v10628 = vunpack.c.l.b16 %v8334
  %v10629 = vunpack.c.h.b16 %v8334
  %v10630 = vunpack.c.l.b16 %v8335
  %v10631 = vunpack.c.l.b16 %v8336
  %v10632 = vunpack.c.h.b16 %v8336
  %v10633 = vunpack.c.l.b16 %v8337
  %v10634 = vunpack.c.h.b16 %v8337
  %v10635 = vunpack.c.l.b16 %v8338
  %v10636 = vunpack.c.h.b16 %v8338
  %v10637 = vunpack.c.l.b16 %v8339
  %v10638 = vunpack.c.l.b16 %v8340
  %v10639 = vunpack.c.h.b16 %v8340
  %v10640 = vunpack.c.l.b16 %v8341
  %v10641 = vunpack.c.h.b16 %v8341
  %v10642 = vunpack.c.l.b16 %v8342
  %v10643 = vunpack.c.h.b16 %v8342
  %v10644 = vunpack.c.l.b16 %v8343
  %v10645 = vunpack.c.l.b16 %v8344
  %v10646 = vunpack.c.h.b16 %v8344
  %v10647 = vunpack.c.l.b16 %v8345
  %v10648 = vunpack.c.h.b16 %v8345
  %v10649 = vunpack.c.l.b16 %v8346
  %v10650 = vunpack.c.h.b16 %v8346
  %v10651 = vunpack.c.l.b16 %v8347
  %v10652 = vunpack.c.l.b16 %v8348
  %v10653 = vunpack.c.h.b16 %v8348
  %v10654 = vunpack.c.l.b16 %v8349
  %v10655 = vunpack.c.h.b16 %v8349
  %v10656 = vunpack.c.l.b16 %v8350
  %v10657 = vunpack.c.h.b16 %v8350
  %v10658 = vunpack.c.l.b16 %v8351
  %v10659 = vunpack.c.l.b16 %v8352
  %v10660 = vunpack.c.h.b16 %v8352
  %v10661 = vunpack.c.l.b16 %v8353
  %v10662 = vunpack.c.h.b16 %v8353
  %v10663 = vunpack.c.l.b16 %v8354
  %v10664 = vunpack.c.h.b16 %v8354
  %v10665 = vunpack.c.l.b16 %v8355
  %v10666 = vunpack.c.l.b16 %v8356
  %v10667 = vunpack.c.h.b16 %v8356
  %v10668 = vunpack.c.l.b16 %v8357
  %v10669 = vunpack.c.h.b16 %v8357
  %v10670 = vunpack.c.l.b16 %v8358
  %v10671 = vunpack.c.h.b16 %v8358
  %v10672 = vunpack.c.l.b16 %v8359
  %v10673 = vunpack.c.l.b16 %v8360
  %v10674 = vunpack.c.h.b16 %v8360
  %v10675 = vunpack.c.l.b16 %v8361
  %v10676 = vunpack.c.h.b16 %v8361
  %v10677 = vunpack.c.l.b16 %v8362
  %v10678 = vunpack.c.h.b16 %v8362
  %v10679 = vunpack.c.l.b16 %v8363
  %v10680 = vunpack.c.l.b16 %v8364
  %v10681 = vunpack.c.h.b16 %v8364
  %v10682 = vunpack.c.l.b16 %v8365
  %v10683 = vunpack.c.h.b16 %v8365
  %v10684 = vunpack.c.l.b16 %v8366
  %v10685 = vunpack.c.h.b16 %v8366
  %v10686 = vunpack.c.l.b16 %v8367
  %v10687 = vunpack.c.l.b16 %v8368
  %v10688 = vunpack.c.h.b16 %v8368
  %v10689 = vunpack.c.l.b16 %v8369
  %v10690 = vunpack.c.h.b16 %v8369
  %v10691 = vunpack.c.l.b16 %v8370
  %v10692 = vunpack.c.h.b16 %v8370
  %v10693 = vunpack.c.l.b16 %v8371
  %v10694 = vunpack.c.l.b16 %v8372
  %v10695 = vunpack.c.h.b16 %v8372
  %v10696 = vunpack.c.l.b16 %v8373
  %v10697 = vunpack.c.h.b16 %v8373
  %v10698 = vunpack.c.l.b16 %v8374
  %v10699 = vunpack.c.h.b16 %v8374
  %v10700 = vunpack.c.l.b16 %v8375
  %v10701 = vpack.c.b16 %v9252, %v9245
  %v10702 = vpack.c.b16 %v9253, %v9246
  %v10703 = vpack.c.b16 %v9254, %v9247
  %v10704 = vpack.c.b16 %v9255, %v9248
  %v10705 = vpack.c.b16 %v9256, %v9249
  %v10706 = vpack.c.b16 %v9257, %v9250
  %v10707 = vpack.c.b16 %v9258, %v9251
  %v10708 = vpack.c.b16 %v9266, %v9259
  %v10709 = vpack.c.b16 %v9267, %v9260
  %v10710 = vpack.c.b16 %v9268, %v9261
  %v10711 = vpack.c.b16 %v9269, %v9262
  %v10712 = vpack.c.b16 %v9270, %v9263
  %v10713 = vpack.c.b16 %v9271, %v9264
  %v10714 = vpack.c.b16 %v9272, %v9265
  %v10715 = vpack.c.b16 %v9280, %v9273
  %v10716 = vpack.c.b16 %v9281, %v9274
  %v10717 = vpack.c.b16 %v9282, %v9275
  %v10718 = vpack.c.b16 %v9283, %v9276
  %v10719 = vpack.c.b16 %v9284, %v9277
  %v10720 = vpack.c.b16 %v9285, %v9278
  %v10721 = vpack.c.b16 %v9286, %v9279
  %v10722 = vpack.c.b16 %v9294, %v9287
  %v10723 = vpack.c.b16 %v9295, %v9288
  %v10724 = vpack.c.b16 %v9296, %v9289
  %v10725 = vpack.c.b16 %v9297, %v9290
  %v10726 = vpack.c.b16 %v9298, %v9291
  %v10727 = vpack.c.b16 %v9299, %v9292
  %v10728 = vpack.c.b16 %v9300, %v9293
  %v10729 = vpack.c.b16 %v9308, %v9301
  %v10730 = vpack.c.b16 %v9309, %v9302
  %v10731 = vpack.c.b16 %v9310, %v9303
  %v10732 = vpack.c.b16 %v9311, %v9304
  %v10733 = vpack.c.b16 %v9312, %v9305
  %v10734 = vpack.c.b16 %v9313, %v9306
  %v10735 = vpack.c.b16 %v9314, %v9307
  %v10736 = vpack.c.b16 %v9322, %v9315
  %v10737 = vpack.c.b16 %v9323, %v9316
  %v10738 = vpack.c.b16 %v9324, %v9317
  %v10739 = vpack.c.b16 %v9325, %v9318
  %v10740 = vpack.c.b16 %v9326, %v9319
  %v10741 = vpack.c.b16 %v9327, %v9320
  %v10742 = vpack.c.b16 %v9328, %v9321
  %v10743 = vpack.c.b16 %v9336, %v9329
  %v10744 = vpack.c.b16 %v9337, %v9330
  %v10745 = vpack.c.b16 %v9338, %v9331
  %v10746 = vpack.c.b16 %v9339, %v9332
  %v10747 = vpack.c.b16 %v9340, %v9333
  %v10748 = vpack.c.b16 %v9341, %v9334
  %v10749 = vpack.c.b16 %v9342, %v9335
  %v10750 = vpack.c.b16 %v9350, %v9343
  %v10751 = vpack.c.b16 %v9351, %v9344
  %v10752 = vpack.c.b16 %v9352, %v9345
  %v10753 = vpack.c.b16 %v9353, %v9346
  %v10754 = vpack.c.b16 %v9354, %v9347
  %v10755 = vpack.c.b16 %v9355, %v9348
  %v10756 = vpack.c.b16 %v9356, %v9349
  %v10757 = vpack.c.b16 %v9364, %v9357
  %v10758 = vpack.c.b16 %v9365, %v9358
  %v10759 = vpack.c.b16 %v9366, %v9359
  %v10760 = vpack.c.b16 %v9367, %v9360
  %v10761 = vpack.c.b16 %v9368, %v9361
  %v10762 = vpack.c.b16 %v9369, %v9362
  %v10763 = vpack.c.b16 %v9370, %v9363
  %v10764 = vpack.c.b16 %v9378, %v9371
  %v10765 = vpack.c.b16 %v9379, %v9372
  %v10766 = vpack.c.b16 %v9380, %v9373
  %v10767 = vpack.c.b16 %v9381, %v9374
  %v10768 = vpack.c.b16 %v9382, %v9375
  %v10769 = vpack.c.b16 %v9383, %v9376
  %v10770 = vpack.c.b16 %v9384, %v9377
  %v10771 = vpack.c.b16 %v9392, %v9385
  %v10772 = vpack.c.b16 %v9393, %v9386
  %v10773 = vpack.c.b16 %v9394, %v9387
  %v10774 = vpack.c.b16 %v9395, %v9388
  %v10775 = vpack.c.b16 %v9396, %v9389
  %v10776 = vpack.c.b16 %v9397, %v9390
  %v10777 = vpack.c.b16 %v9398, %v9391
  %v10778 = vpack.c.b16 %v9406, %v9399
  %v10779 = vpack.c.b16 %v9407, %v9400
  %v10780 = vpack.c.b16 %v9408, %v9401
  %v10781 = vpack.c.b16 %v9409, %v9402
  %v10782 = vpack.c.b16 %v9410, %v9403
  %v10783 = vpack.c.b16 %v9411, %v9404
  %v10784 = vpack.c.b16 %v9412, %v9405
  %v10785 = vpack.c.b16 %v9420, %v9413
  %v10786 = vpack.c.b16 %v9421, %v9414
  %v10787 = vpack.c.b16 %v9422, %v9415
  %v10788 = vpack.c.b16 %v9423, %v9416
  %v10789 = vpack.c.b16 %v9424, %v9417
  %v10790 = vpack.c.b16 %v9425, %v9418
  %v10791 = vpack.c.b16 %v9426, %v9419
  %v10792 = vpack.c.b16 %v9434, %v9427
  %v10793 = vpack.c.b16 %v9435, %v9428
  %v10794 = vpack.c.b16 %v9436, %v9429
  %v10795 = vpack.c.b16 %v9437, %v9430
  %v10796 = vpack.c.b16 %v9438, %v9431
  %v10797 = vpack.c.b16 %v9439, %v9432
  %v10798 = vpack.c.b16 %v9440, %v9433
  %v10799 = vpack.c.b16 %v9448, %v9441
  %v10800 = vpack.c.b16 %v9449, %v9442
  %v10801 = vpack.c.b16 %v9450, %v9443
  %v10802 = vpack.c.b16 %v9451, %v9444
  %v10803 = vpack.c.b16 %v9452, %v9445
  %v10804 = vpack.c.b16 %v9453, %v9446
  %v10805 = vpack.c.b16 %v9454, %v9447
  %v10806 = vpack.c.b16 %v9462, %v9455
  %v10807 = vpack.c.b16 %v9463, %v9456
  %v10808 = vpack.c.b16 %v9464, %v9457
  %v10809 = vpack.c.b16 %v9465, %v9458
  %v10810 = vpack.c.b16 %v9466, %v9459
  %v10811 = vpack.c.b16 %v9467, %v9460
  %v10812 = vpack.c.b16 %v9468, %v9461
  %v10813 = vpack.c.b16 %v9476, %v9469
  %v10814 = vpack.c.b16 %v9477, %v9470
  %v10815 = vpack.c.b16 %v9478, %v9471
  %v10816 = vpack.c.b16 %v9479, %v9472
  %v10817 = vpack.c.b16 %v9480, %v9473
  %v10818 = vpack.c.b16 %v9481, %v9474
  %v10819 = vpack.c.b16 %v9482, %v9475
  %v10820 = vpack.c.b16 %v9490, %v9483
  %v10821 = vpack.c.b16 %v9491, %v9484
  %v10822 = vpack.c.b16 %v9492, %v9485
  %v10823 = vpack.c.b16 %v9493, %v9486
  %v10824 = vpack.c.b16 %v9494, %v9487
  %v10825 = vpack.c.b16 %v9495, %v9488
  %v10826 = vpack.c.b16 %v9496, %v9489
  %v10827 = vpack.c.b16 %v9504, %v9497
  %v10828 = vpack.c.b16 %v9505, %v9498
  %v10829 = vpack.c.b16 %v9506, %v9499
  %v10830 = vpack.c.b16 %v9507, %v9500
  %v10831 = vpack.c.b16 %v9508, %v9501
  %v10832 = vpack.c.b16 %v9509, %v9502
  %v10833 = vpack.c.b16 %v9510, %v9503
  %v10834 = vpack.c.b16 %v9518, %v9511
  %v10835 = vpack.c.b16 %v9519, %v9512
  %v10836 = vpack.c.b16 %v9520, %v9513
  %v10837 = vpack.c.b16 %v9521, %v9514
  %v10838 = vpack.c.b16 %v9522, %v9515
  %v10839 = vpack.c.b16 %v9523, %v9516
  %v10840 = vpack.c.b16 %v9524, %v9517
  %v10841 = vpack.c.b16 %v9532, %v9525
  %v10842 = vpack.c.b16 %v9533, %v9526
  %v10843 = vpack.c.b16 %v9534, %v9527
  %v10844 = vpack.c.b16 %v9535, %v9528
  %v10845 = vpack.c.b16 %v9536, %v9529
  %v10846 = vpack.c.b16 %v9537, %v9530
  %v10847 = vpack.c.b16 %v9538, %v9531
  %v10848 = vpack.c.b16 %v9546, %v9539
  %v10849 = vpack.c.b16 %v9547, %v9540
  %v10850 = vpack.c.b16 %v9548, %v9541
  %v10851 = vpack.c.b16 %v9549, %v9542
  %v10852 = vpack.c.b16 %v9550, %v9543
  %v10853 = vpack.c.b16 %v9551, %v9544
  %v10854 = vpack.c.b16 %v9552, %v9545
  %v10855 = vpack.c.b16 %v9560, %v9553
  %v10856 = vpack.c.b16 %v9561, %v9554
  %v10857 = vpack.c.b16 %v9562, %v9555
  %v10858 = vpack.c.b16 %v9563, %v9556
  %v10859 = vpack.c.b16 %v9564, %v9557
  %v10860 = vpack.c.b16 %v9565, %v9558
  %v10861 = vpack.c.b16 %v9566, %v9559
  %v10862 = vpack.c.b16 %v9574, %v9567
  %v10863 = vpack.c.b16 %v9575, %v9568
  %v10864 = vpack.c.b16 %v9576, %v9569
  %v10865 = vpack.c.b16 %v9577, %v9570
  %v10866 = vpack.c.b16 %v9578, %v9571
  %v10867 = vpack.c.b16 %v9579, %v9572
  %v10868 = vpack.c.b16 %v9580, %v9573
  %v10869 = vpack.c.b16 %v9588, %v9581
  %v10870 = vpack.c.b16 %v9589, %v9582
  %v10871 = vpack.c.b16 %v9590, %v9583
  %v10872 = vpack.c.b16 %v9591, %v9584
  %v10873 = vpack.c.b16 %v9592, %v9585
  %v10874 = vpack.c.b16 %v9593, %v9586
  %v10875 = vpack.c.b16 %v9594, %v9587
  %v10876 = vpack.c.b16 %v9602, %v9595
  %v10877 = vpack.c.b16 %v9603, %v9596
  %v10878 = vpack.c.b16 %v9604, %v9597
  %v10879 = vpack.c.b16 %v9605, %v9598
  %v10880 = vpack.c.b16 %v9606, %v9599
  %v10881 = vpack.c.b16 %v9607, %v9600
  %v10882 = vpack.c.b16 %v9608, %v9601
  %v10883 = vpack.c.b16 %v9616, %v9609
  %v10884 = vpack.c.b16 %v9617, %v9610
  %v10885 = vpack.c.b16 %v9618, %v9611
  %v10886 = vpack.c.b16 %v9619, %v9612
  %v10887 = vpack.c.b16 %v9620, %v9613
  %v10888 = vpack.c.b16 %v9621, %v9614
  %v10889 = vpack.c.b16 %v9622, %v9615
  %v10890 = vpack.c.b16 %v9630, %v9623
  %v10891 = vpack.c.b16 %v9631, %v9624
  %v10892 = vpack.c.b16 %v9632, %v9625
  %v10893 = vpack.c.b16 %v9633, %v9626
  %v10894 = vpack.c.b16 %v9634, %v9627
  %v10895 = vpack.c.b16 %v9635, %v9628
  %v10896 = vpack.c.b16 %v9636, %v9629
  %v10897 = vpack.c.b16 %v9644, %v9637
  %v10898 = vpack.c.b16 %v9645, %v9638
  %v10899 = vpack.c.b16 %v9646, %v9639
  %v10900 = vpack.c.b16 %v9647, %v9640
  %v10901 = vpack.c.b16 %v9648, %v9641
  %v10902 = vpack.c.b16 %v9649, %v9642
  %v10903 = vpack.c.b16 %v9650, %v9643
  %v10904 = vpack.c.b16 %v9658, %v9651
  %v10905 = vpack.c.b16 %v9659, %v9652
  %v10906 = vpack.c.b16 %v9660, %v9653
  %v10907 = vpack.c.b16 %v9661, %v9654
  %v10908 = vpack.c.b16 %v9662, %v9655
  %v10909 = vpack.c.b16 %v9663, %v9656
  %v10910 = vpack.c.b16 %v9664, %v9657
  %v10911 = vpack.c.b16 %v9672, %v9665
  %v10912 = vpack.c.b16 %v9673, %v9666
  %v10913 = vpack.c.b16 %v9674, %v9667
  %v10914 = vpack.c.b16 %v9675, %v9668
  %v10915 = vpack.c.b16 %v9676, %v9669
  %v10916 = vpack.c.b16 %v9677, %v9670
  %v10917 = vpack.c.b16 %v9678, %v9671
  %v10918 = vpack.c.b16 %v9686, %v9679
  %v10919 = vpack.c.b16 %v9687, %v9680
  %v10920 = vpack.c.b16 %v9688, %v9681
  %v10921 = vpack.c.b16 %v9689, %v9682
  %v10922 = vpack.c.b16 %v9690, %v9683
  %v10923 = vpack.c.b16 %v9691, %v9684
  %v10924 = vpack.c.b16 %v9692, %v9685
  %v10925 = vpack.c.b16 %v9700, %v9693
  %v10926 = vpack.c.b16 %v9701, %v9694
  %v10927 = vpack.c.b16 %v9702, %v9695
  %v10928 = vpack.c.b16 %v9703, %v9696
  %v10929 = vpack.c.b16 %v9704, %v9697
  %v10930 = vpack.c.b16 %v9705, %v9698
  %v10931 = vpack.c.b16 %v9706, %v9699
  %v10932 = vpack.c.b16 %v9714, %v9707
  %v10933 = vpack.c.b16 %v9715, %v9708
  %v10934 = vpack.c.b16 %v9716, %v9709
  %v10935 = vpack.c.b16 %v9717, %v9710
  %v10936 = vpack.c.b16 %v9718, %v9711
  %v10937 = vpack.c.b16 %v9719, %v9712
  %v10938 = vpack.c.b16 %v9720, %v9713
  %v10939 = vpack.c.b16 %v9728, %v9721
  %v10940 = vpack.c.b16 %v9729, %v9722
  %v10941 = vpack.c.b16 %v9730, %v9723
  %v10942 = vpack.c.b16 %v9731, %v9724
  %v10943 = vpack.c.b16 %v9732, %v9725
  %v10944 = vpack.c.b16 %v9733, %v9726
  %v10945 = vpack.c.b16 %v9734, %v9727
  %v10946 = vpack.c.b16 %v9742, %v9735
  %v10947 = vpack.c.b16 %v9743, %v9736
  %v10948 = vpack.c.b16 %v9744, %v9737
  %v10949 = vpack.c.b16 %v9745, %v9738
  %v10950 = vpack.c.b16 %v9746, %v9739
  %v10951 = vpack.c.b16 %v9747, %v9740
  %v10952 = vpack.c.b16 %v9748, %v9741
  %v10953 = vpack.c.b16 %v9756, %v9749
  %v10954 = vpack.c.b16 %v9757, %v9750
  %v10955 = vpack.c.b16 %v9758, %v9751
  %v10956 = vpack.c.b16 %v9759, %v9752
  %v10957 = vpack.c.b16 %v9760, %v9753
  %v10958 = vpack.c.b16 %v9761, %v9754
  %v10959 = vpack.c.b16 %v9762, %v9755
  %v10960 = vpack.c.b16 %v9770, %v9763
  %v10961 = vpack.c.b16 %v9771, %v9764
  %v10962 = vpack.c.b16 %v9772, %v9765
  %v10963 = vpack.c.b16 %v9773, %v9766
  %v10964 = vpack.c.b16 %v9774, %v9767
  %v10965 = vpack.c.b16 %v9775, %v9768
  %v10966 = vpack.c.b16 %v9776, %v9769
  %v10967 = vpack.c.b16 %v9784, %v9777
  %v10968 = vpack.c.b16 %v9785, %v9778
  %v10969 = vpack.c.b16 %v9786, %v9779
  %v10970 = vpack.c.b16 %v9787, %v9780
  %v10971 = vpack.c.b16 %v9788, %v9781
  %v10972 = vpack.c.b16 %v9789, %v9782
  %v10973 = vpack.c.b16 %v9790, %v9783
  %v10974 = vpack.c.b16 %v9798, %v9791
  %v10975 = vpack.c.b16 %v9799, %v9792
  %v10976 = vpack.c.b16 %v9800, %v9793
  %v10977 = vpack.c.b16 %v9801, %v9794
  %v10978 = vpack.c.b16 %v9802, %v9795
  %v10979 = vpack.c.b16 %v9803, %v9796
  %v10980 = vpack.c.b16 %v9804, %v9797
  %v10981 = vpack.c.b16 %v9812, %v9805
  %v10982 = vpack.c.b16 %v9813, %v9806
  %v10983 = vpack.c.b16 %v9814, %v9807
  %v10984 = vpack.c.b16 %v9815, %v9808
  %v10985 = vpack.c.b16 %v9816, %v9809
  %v10986 = vpack.c.b16 %v9817, %v9810
  %v10987 = vpack.c.b16 %v9818, %v9811
  %v10988 = vpack.c.b16 %v9826, %v9819
  %v10989 = vpack.c.b16 %v9827, %v9820
  %v10990 = vpack.c.b16 %v9828, %v9821
  %v10991 = vpack.c.b16 %v9829, %v9822
  %v10992 = vpack.c.b16 %v9830, %v9823
  %v10993 = vpack.c.b16 %v9831, %v9824
  %v10994 = vpack.c.b16 %v9832, %v9825
  %v10995 = vpack.c.b16 %v9840, %v9833
  %v10996 = vpack.c.b16 %v9841, %v9834
  %v10997 = vpack.c.b16 %v9842, %v9835
  %v10998 = vpack.c.b16 %v9843, %v9836
  %v10999 = vpack.c.b16 %v9844, %v9837
  %v11000 = vpack.c.b16 %v9845, %v9838
  %v11001 = vpack.c.b16 %v9846, %v9839
  %v11002 = vpack.c.b16 %v9854, %v9847
  %v11003 = vpack.c.b16 %v9855, %v9848
  %v11004 = vpack.c.b16 %v9856, %v9849
  %v11005 = vpack.c.b16 %v9857, %v9850
  %v11006 = vpack.c.b16 %v9858, %v9851
  %v11007 = vpack.c.b16 %v9859, %v9852
  %v11008 = vpack.c.b16 %v9860, %v9853
  %v11009 = vpack.c.b16 %v9868, %v9861
  %v11010 = vpack.c.b16 %v9869, %v9862
  %v11011 = vpack.c.b16 %v9870, %v9863
  %v11012 = vpack.c.b16 %v9871, %v9864
  %v11013 = vpack.c.b16 %v9872, %v9865
  %v11014 = vpack.c.b16 %v9873, %v9866
  %v11015 = vpack.c.b16 %v9874, %v9867
  %v11016 = vpack.c.b16 %v9882, %v9875
  %v11017 = vpack.c.b16 %v9883, %v9876
  %v11018 = vpack.c.b16 %v9884, %v9877
  %v11019 = vpack.c.b16 %v9885, %v9878
  %v11020 = vpack.c.b16 %v9886, %v9879
  %v11021 = vpack.c.b16 %v9887, %v9880
  %v11022 = vpack.c.b16 %v9888, %v9881
  %v11023 = vpack.c.b16 %v9896, %v9889
  %v11024 = vpack.c.b16 %v9897, %v9890
  %v11025 = vpack.c.b16 %v9898, %v9891
  %v11026 = vpack.c.b16 %v9899, %v9892
  %v11027 = vpack.c.b16 %v9900, %v9893
  %v11028 = vpack.c.b16 %v9901, %v9894
  %v11029 = vpack.c.b16 %v9902, %v9895
  %v11030 = vpack.c.b16 %v9910, %v9903
  %v11031 = vpack.c.b16 %v9911, %v9904
  %v11032 = vpack.c.b16 %v9912, %v9905
  %v11033 = vpack.c.b16 %v9913, %v9906
  %v11034 = vpack.c.b16 %v9914, %v9907
  %v11035 = vpack.c.b16 %v9915, %v9908
  %v11036 = vpack.c.b16 %v9916, %v9909
  %v11037 = vpack.c.b16 %v9924, %v9917
  %v11038 = vpack.c.b16 %v9925, %v9918
  %v11039 = vpack.c.b16 %v9926, %v9919
  %v11040 = vpack.c.b16 %v9927, %v9920
  %v11041 = vpack.c.b16 %v9928, %v9921
  %v11042 = vpack.c.b16 %v9929, %v9922
  %v11043 = vpack.c.b16 %v9930, %v9923
  %v11044 = vpack.c.b16 %v9938, %v9931
  %v11045 = vpack.c.b16 %v9939, %v9932
  %v11046 = vpack.c.b16 %v9940, %v9933
  %v11047 = vpack.c.b16 %v9941, %v9934
  %v11048 = vpack.c.b16 %v9942, %v9935
  %v11049 = vpack.c.b16 %v9943, %v9936
  %v11050 = vpack.c.b16 %v9944, %v9937
  %v11051 = vpack.c.b16 %v9952, %v9945
  %v11052 = vpack.c.b16 %v9953, %v9946
  %v11053 = vpack.c.b16 %v9954, %v9947
  %v11054 = vpack.c.b16 %v9955, %v9948
  %v11055 = vpack.c.b16 %v9956, %v9949
  %v11056 = vpack.c.b16 %v9957, %v9950
  %v11057 = vpack.c.b16 %v9958, %v9951
  %v11058 = vpack.c.b16 %v9966, %v9959
  %v11059 = vpack.c.b16 %v9967, %v9960
  %v11060 = vpack.c.b16 %v9968, %v9961
  %v11061 = vpack.c.b16 %v9969, %v9962
  %v11062 = vpack.c.b16 %v9970, %v9963
  %v11063 = vpack.c.b16 %v9971, %v9964
  %v11064 = vpack.c.b16 %v9972, %v9965
  %v11065 = vpack.c.b16 %v9980, %v9973
  %v11066 = vpack.c.b16 %v9981, %v9974
  %v11067 = vpack.c.b16 %v9982, %v9975
  %v11068 = vpack.c.b16 %v9983, %v9976
  %v11069 = vpack.c.b16 %v9984, %v9977
  %v11070 = vpack.c.b16 %v9985, %v9978
  %v11071 = vpack.c.b16 %v9986, %v9979
  %v11072 = vpack.c.b16 %v9994, %v9987
  %v11073 = vpack.c.b16 %v9995, %v9988
  %v11074 = vpack.c.b16 %v9996, %v9989
  %v11075 = vpack.c.b16 %v9997, %v9990
  %v11076 = vpack.c.b16 %v9998, %v9991
  %v11077 = vpack.c.b16 %v9999, %v9992
  %v11078 = vpack.c.b16 %v10000, %v9993
  %v11079 = vpack.c.b16 %v10008, %v10001
  %v11080 = vpack.c.b16 %v10009, %v10002
  %v11081 = vpack.c.b16 %v10010, %v10003
  %v11082 = vpack.c.b16 %v10011, %v10004
  %v11083 = vpack.c.b16 %v10012, %v10005
  %v11084 = vpack.c.b16 %v10013, %v10006
  %v11085 = vpack.c.b16 %v10014, %v10007
  %v11086 = vpack.c.b16 %v10022, %v10015
  %v11087 = vpack.c.b16 %v10023, %v10016
  %v11088 = vpack.c.b16 %v10024, %v10017
  %v11089 = vpack.c.b16 %v10025, %v10018
  %v11090 = vpack.c.b16 %v10026, %v10019
  %v11091 = vpack.c.b16 %v10027, %v10020
  %v11092 = vpack.c.b16 %v10028, %v10021
  %v11093 = vpack.c.b16 %v10036, %v10029
  %v11094 = vpack.c.b16 %v10037, %v10030
  %v11095 = vpack.c.b16 %v10038, %v10031
  %v11096 = vpack.c.b16 %v10039, %v10032
  %v11097 = vpack.c.b16 %v10040, %v10033
  %v11098 = vpack.c.b16 %v10041, %v10034
  %v11099 = vpack.c.b16 %v10042, %v10035
  %v11100 = vpack.c.b16 %v10050, %v10043
  %v11101 = vpack.c.b16 %v10051, %v10044
  %v11102 = vpack.c.b16 %v10052, %v10045
  %v11103 = vpack.c.b16 %v10053, %v10046
  %v11104 = vpack.c.b16 %v10054, %v10047
  %v11105 = vpack.c.b16 %v10055, %v10048
  %v11106 = vpack.c.b16 %v10056, %v10049
  %v11107 = vpack.c.b16 %v10064, %v10057
  %v11108 = vpack.c.b16 %v10065, %v10058
  %v11109 = vpack.c.b16 %v10066, %v10059
  %v11110 = vpack.c.b16 %v10067, %v10060
  %v11111 = vpack.c.b16 %v10068, %v10061
  %v11112 = vpack.c.b16 %v10069, %v10062
  %v11113 = vpack.c.b16 %v10070, %v10063
  %v11114 = vpack.c.b16 %v10078, %v10071
  %v11115 = vpack.c.b16 %v10079, %v10072
  %v11116 = vpack.c.b16 %v10080, %v10073
  %v11117 = vpack.c.b16 %v10081, %v10074
  %v11118 = vpack.c.b16 %v10082, %v10075
  %v11119 = vpack.c.b16 %v10083, %v10076
  %v11120 = vpack.c.b16 %v10084, %v10077
  %v11121 = vpack.c.b16 %v10092, %v10085
  %v11122 = vpack.c.b16 %v10093, %v10086
  %v11123 = vpack.c.b16 %v10094, %v10087
  %v11124 = vpack.c.b16 %v10095, %v10088
  %v11125 = vpack.c.b16 %v10096, %v10089
  %v11126 = vpack.c.b16 %v10097, %v10090
  %v11127 = vpack.c.b16 %v10098, %v10091
  %v11128 = vpack.c.b16 %v10106, %v10099
  %v11129 = vpack.c.b16 %v10107, %v10100
  %v11130 = vpack.c.b16 %v10108, %v10101
  %v11131 = vpack.c.b16 %v10109, %v10102
  %v11132 = vpack.c.b16 %v10110, %v10103
  %v11133 = vpack.c.b16 %v10111, %v10104
  %v11134 = vpack.c.b16 %v10112, %v10105
  %v11135 = vpack.c.b16 %v10120, %v10113
  %v11136 = vpack.c.b16 %v10121, %v10114
  %v11137 = vpack.c.b16 %v10122, %v10115
  %v11138 = vpack.c.b16 %v10123, %v10116
  %v11139 = vpack.c.b16 %v10124, %v10117
  %v11140 = vpack.c.b16 %v10125, %v10118
  %v11141 = vpack.c.b16 %v10126, %v10119
  %v11142 = vpack.c.b16 %v10134, %v10127
  %v11143 = vpack.c.b16 %v10135, %v10128
  %v11144 = vpack.c.b16 %v10136, %v10129
  %v11145 = vpack.c.b16 %v10137, %v10130
  %v11146 = vpack.c.b16 %v10138, %v10131
  %v11147 = vpack.c.b16 %v10139, %v10132
  %v11148 = vpack.c.b16 %v10140, %v10133
  %v11149 = vpack.c.b16 %v10148, %v10141
  %v11150 = vpack.c.b16 %v10149, %v10142
  %v11151 = vpack.c.b16 %v10150, %v10143
  %v11152 = vpack.c.b16 %v10151, %v10144
  %v11153 = vpack.c.b16 %v10152, %v10145
  %v11154 = vpack.c.b16 %v10153, %v10146
  %v11155 = vpack.c.b16 %v10154, %v10147
  %v11156 = vpack.c.b16 %v10162, %v10155
  %v11157 = vpack.c.b16 %v10163, %v10156
  %v11158 = vpack.c.b16 %v10164, %v10157
  %v11159 = vpack.c.b16 %v10165, %v10158
  %v11160 = vpack.c.b16 %v10166, %v10159
  %v11161 = vpack.c.b16 %v10167, %v10160
  %v11162 = vpack.c.b16 %v10168, %v10161
  %v11163 = vpack.c.b16 %v10176, %v10169
  %v11164 = vpack.c.b16 %v10177, %v10170
  %v11165 = vpack.c.b16 %v10178, %v10171
  %v11166 = vpack.c.b16 %v10179, %v10172
  %v11167 = vpack.c.b16 %v10180, %v10173
  %v11168 = vpack.c.b16 %v10181, %v10174
  %v11169 = vpack.c.b16 %v10182, %v10175
  %v11170 = vpack.c.b16 %v10190, %v10183
  %v11171 = vpack.c.b16 %v10191, %v10184
  %v11172 = vpack.c.b16 %v10192, %v10185
  %v11173 = vpack.c.b16 %v10193, %v10186
  %v11174 = vpack.c.b16 %v10194, %v10187
  %v11175 = vpack.c.b16 %v10195, %v10188
  %v11176 = vpack.c.b16 %v10196, %v10189
  %v11177 = vpack.c.b16 %v10204, %v10197
  %v11178 = vpack.c.b16 %v10205, %v10198
  %v11179 = vpack.c.b16 %v10206, %v10199
  %v11180 = vpack.c.b16 %v10207, %v10200
  %v11181 = vpack.c.b16 %v10208, %v10201
  %v11182 = vpack.c.b16 %v10209, %v10202
  %v11183 = vpack.c.b16 %v10210, %v10203
  %v11184 = vpack.c.b16 %v10218, %v10211
  %v11185 = vpack.c.b16 %v10219, %v10212
  %v11186 = vpack.c.b16 %v10220, %v10213
  %v11187 = vpack.c.b16 %v10221, %v10214
  %v11188 = vpack.c.b16 %v10222, %v10215
  %v11189 = vpack.c.b16 %v10223, %v10216
  %v11190 = vpack.c.b16 %v10224, %v10217
  %v11191 = vpack.c.b16 %v10232, %v10225
  %v11192 = vpack.c.b16 %v10233, %v10226
  %v11193 = vpack.c.b16 %v10234, %v10227
  %v11194 = vpack.c.b16 %v10235, %v10228
  %v11195 = vpack.c.b16 %v10236, %v10229
  %v11196 = vpack.c.b16 %v10237, %v10230
  %v11197 = vpack.c.b16 %v10238, %v10231
  %v11198 = vpack.c.b16 %v10246, %v10239
  %v11199 = vpack.c.b16 %v10247, %v10240
  %v11200 = vpack.c.b16 %v10248, %v10241
  %v11201 = vpack.c.b16 %v10249, %v10242
  %v11202 = vpack.c.b16 %v10250, %v10243
  %v11203 = vpack.c.b16 %v10251, %v10244
  %v11204 = vpack.c.b16 %v10252, %v10245
  %v11205 = vpack.c.b16 %v10260, %v10253
  %v11206 = vpack.c.b16 %v10261, %v10254
  %v11207 = vpack.c.b16 %v10262, %v10255
  %v11208 = vpack.c.b16 %v10263, %v10256
  %v11209 = vpack.c.b16 %v10264, %v10257
  %v11210 = vpack.c.b16 %v10265, %v10258
  %v11211 = vpack.c.b16 %v10266, %v10259
  %v11212 = vpack.c.b16 %v10274, %v10267
  %v11213 = vpack.c.b16 %v10275, %v10268
  %v11214 = vpack.c.b16 %v10276, %v10269
  %v11215 = vpack.c.b16 %v10277, %v10270
  %v11216 = vpack.c.b16 %v10278, %v10271
  %v11217 = vpack.c.b16 %v10279, %v10272
  %v11218 = vpack.c.b16 %v10280, %v10273
  %v11219 = vpack.c.b16 %v10288, %v10281
  %v11220 = vpack.c.b16 %v10289, %v10282
  %v11221 = vpack.c.b16 %v10290, %v10283
  %v11222 = vpack.c.b16 %v10291, %v10284
  %v11223 = vpack.c.b16 %v10292, %v10285
  %v11224 = vpack.c.b16 %v10293, %v10286
  %v11225 = vpack.c.b16 %v10294, %v10287
  %v11226 = vpack.c.b16 %v10302, %v10295
  %v11227 = vpack.c.b16 %v10303, %v10296
  %v11228 = vpack.c.b16 %v10304, %v10297
  %v11229 = vpack.c.b16 %v10305, %v10298
  %v11230 = vpack.c.b16 %v10306, %v10299
  %v11231 = vpack.c.b16 %v10307, %v10300
  %v11232 = vpack.c.b16 %v10308, %v10301
  %v11233 = vpack.c.b16 %v10316, %v10309
  %v11234 = vpack.c.b16 %v10317, %v10310
  %v11235 = vpack.c.b16 %v10318, %v10311
  %v11236 = vpack.c.b16 %v10319, %v10312
  %v11237 = vpack.c.b16 %v10320, %v10313
  %v11238 = vpack.c.b16 %v10321, %v10314
  %v11239 = vpack.c.b16 %v10322, %v10315
  %v11240 = vpack.c.b16 %v10330, %v10323
  %v11241 = vpack.c.b16 %v10331, %v10324
  %v11242 = vpack.c.b16 %v10332, %v10325
  %v11243 = vpack.c.b16 %v10333, %v10326
  %v11244 = vpack.c.b16 %v10334, %v10327
  %v11245 = vpack.c.b16 %v10335, %v10328
  %v11246 = vpack.c.b16 %v10336, %v10329
  %v11247 = vpack.c.b16 %v10344, %v10337
  %v11248 = vpack.c.b16 %v10345, %v10338
  %v11249 = vpack.c.b16 %v10346, %v10339
  %v11250 = vpack.c.b16 %v10347, %v10340
  %v11251 = vpack.c.b16 %v10348, %v10341
  %v11252 = vpack.c.b16 %v10349, %v10342
  %v11253 = vpack.c.b16 %v10350, %v10343
  %v11254 = vpack.c.b16 %v10358, %v10351
  %v11255 = vpack.c.b16 %v10359, %v10352
  %v11256 = vpack.c.b16 %v10360, %v10353
  %v11257 = vpack.c.b16 %v10361, %v10354
  %v11258 = vpack.c.b16 %v10362, %v10355
  %v11259 = vpack.c.b16 %v10363, %v10356
  %v11260 = vpack.c.b16 %v10364, %v10357
  %v11261 = vpack.c.b16 %v10372, %v10365
  %v11262 = vpack.c.b16 %v10373, %v10366
  %v11263 = vpack.c.b16 %v10374, %v10367
  %v11264 = vpack.c.b16 %v10375, %v10368
  %v11265 = vpack.c.b16 %v10376, %v10369
  %v11266 = vpack.c.b16 %v10377, %v10370
  %v11267 = vpack.c.b16 %v10378, %v10371
  %v11268 = vpack.c.b16 %v10386, %v10379
  %v11269 = vpack.c.b16 %v10387, %v10380
  %v11270 = vpack.c.b16 %v10388, %v10381
  %v11271 = vpack.c.b16 %v10389, %v10382
  %v11272 = vpack.c.b16 %v10390, %v10383
  %v11273 = vpack.c.b16 %v10391, %v10384
  %v11274 = vpack.c.b16 %v10392, %v10385
  %v11275 = vpack.c.b16 %v10400, %v10393
  %v11276 = vpack.c.b16 %v10401, %v10394
  %v11277 = vpack.c.b16 %v10402, %v10395
  %v11278 = vpack.c.b16 %v10403, %v10396
  %v11279 = vpack.c.b16 %v10404, %v10397
  %v11280 = vpack.c.b16 %v10405, %v10398
  %v11281 = vpack.c.b16 %v10406, %v10399
  %v11282 = vpack.c.b16 %v10414, %v10407
  %v11283 = vpack.c.b16 %v10415, %v10408
  %v11284 = vpack.c.b16 %v10416, %v10409
  %v11285 = vpack.c.b16 %v10417, %v10410
  %v11286 = vpack.c.b16 %v10418, %v10411
  %v11287 = vpack.c.b16 %v10419, %v10412
  %v11288 = vpack.c.b16 %v10420, %v10413
  %v11289 = vpack.c.b16 %v10428, %v10421
  %v11290 = vpack.c.b16 %v10429, %v10422
  %v11291 = vpack.c.b16 %v10430, %v10423
  %v11292 = vpack.c.b16 %v10431, %v10424
  %v11293 = vpack.c.b16 %v10432, %v10425
  %v11294 = vpack.c.b16 %v10433, %v10426
  %v11295 = vpack.c.b16 %v10434, %v10427
  %v11296 = vpack.c.b16 %v10442, %v10435
  %v11297 = vpack.c.b16 %v10443, %v10436
  %v11298 = vpack.c.b16 %v10444, %v10437
  %v11299 = vpack.c.b16 %v10445, %v10438
  %v11300 = vpack.c.b16 %v10446, %v10439
  %v11301 = vpack.c.b16 %v10447, %v10440
  %v11302 = vpack.c.b16 %v10448, %v10441
  %v11303 = vpack.c.b16 %v10456, %v10449
  %v11304 = vpack.c.b16 %v10457, %v10450
  %v11305 = vpack.c.b16 %v10458, %v10451
  %v11306 = vpack.c.b16 %v10459, %v10452
  %v11307 = vpack.c.b16 %v10460, %v10453
  %v11308 = vpack.c.b16 %v10461, %v10454
  %v11309 = vpack.c.b16 %v10462, %v10455
  %v11310 = vpack.c.b16 %v10470, %v10463
  %v11311 = vpack.c.b16 %v10471, %v10464
  %v11312 = vpack.c.b16 %v10472, %v10465
  %v11313 = vpack.c.b16 %v10473, %v10466
  %v11314 = vpack.c.b16 %v10474, %v10467
  %v11315 = vpack.c.b16 %v10475, %v10468
  %v11316 = vpack.c.b16 %v10476, %v10469
  %v11317 = vpack.c.b16 %v10484, %v10477
  %v11318 = vpack.c.b16 %v10485, %v10478
  %v11319 = vpack.c.b16 %v10486, %v10479
  %v11320 = vpack.c.b16 %v10487, %v10480
  %v11321 = vpack.c.b16 %v10488, %v10481
  %v11322 = vpack.c.b16 %v10489, %v10482
  %v11323 = vpack.c.b16 %v10490, %v10483
  %v11324 = vpack.c.b16 %v10498, %v10491
  %v11325 = vpack.c.b16 %v10499, %v10492
  %v11326 = vpack.c.b16 %v10500, %v10493
  %v11327 = vpack.c.b16 %v10501, %v10494
  %v11328 = vpack.c.b16 %v10502, %v10495
  %v11329 = vpack.c.b16 %v10503, %v10496
  %v11330 = vpack.c.b16 %v10504, %v10497
  %v11331 = vpack.c.b16 %v10512, %v10505
  %v11332 = vpack.c.b16 %v10513, %v10506
  %v11333 = vpack.c.b16 %v10514, %v10507
  %v11334 = vpack.c.b16 %v10515, %v10508
  %v11335 = vpack.c.b16 %v10516, %v10509
  %v11336 = vpack.c.b16 %v10517, %v10510
  %v11337 = vpack.c.b16 %v10518, %v10511
  %v11338 = vpack.c.b16 %v10526, %v10519
  %v11339 = vpack.c.b16 %v10527, %v10520
  %v11340 = vpack.c.b16 %v10528, %v10521
  %v11341 = vpack.c.b16 %v10529, %v10522
  %v11342 = vpack.c.b16 %v10530, %v10523
  %v11343 = vpack.c.b16 %v10531, %v10524
  %v11344 = vpack.c.b16 %v10532, %v10525
  %v11345 = vpack.c.b16 %v10540, %v10533
  %v11346 = vpack.c.b16 %v10541, %v10534
  %v11347 = vpack.c.b16 %v10542, %v10535
  %v11348 = vpack.c.b16 %v10543, %v10536
  %v11349 = vpack.c.b16 %v10544, %v10537
  %v11350 = vpack.c.b16 %v10545, %v10538
  %v11351 = vpack.c.b16 %v10546, %v10539
  %v11352 = vpack.c.b16 %v10554, %v10547
  %v11353 = vpack.c.b16 %v10555, %v10548
  %v11354 = vpack.c.b16 %v10556, %v10549
  %v11355 = vpack.c.b16 %v10557, %v10550
  %v11356 = vpack.c.b16 %v10558, %v10551
  %v11357 = vpack.c.b16 %v10559, %v10552
  %v11358 = vpack.c.b16 %v10560, %v10553
  %v11359 = vpack.c.b16 %v10568, %v10561
  %v11360 = vpack.c.b16 %v10569, %v10562
  %v11361 = vpack.c.b16 %v10570, %v10563
  %v11362 = vpack.c.b16 %v10571, %v10564
  %v11363 = vpack.c.b16 %v10572, %v10565
  %v11364 = vpack.c.b16 %v10573, %v10566
  %v11365 = vpack.c.b16 %v10574, %v10567
  %v11366 = vpack.c.b16 %v10582, %v10575
  %v11367 = vpack.c.b16 %v10583, %v10576
  %v11368 = vpack.c.b16 %v10584, %v10577
  %v11369 = vpack.c.b16 %v10585, %v10578
  %v11370 = vpack.c.b16 %v10586, %v10579
  %v11371 = vpack.c.b16 %v10587, %v10580
  %v11372 = vpack.c.b16 %v10588, %v10581
  %v11373 = vpack.c.b16 %v10596, %v10589
  %v11374 = vpack.c.b16 %v10597, %v10590
  %v11375 = vpack.c.b16 %v10598, %v10591
  %v11376 = vpack.c.b16 %v10599, %v10592
  %v11377 = vpack.c.b16 %v10600, %v10593
  %v11378 = vpack.c.b16 %v10601, %v10594
  %v11379 = vpack.c.b16 %v10602, %v10595
  %v11380 = vpack.c.b16 %v10610, %v10603
  %v11381 = vpack.c.b16 %v10611, %v10604
  %v11382 = vpack.c.b16 %v10612, %v10605
  %v11383 = vpack.c.b16 %v10613, %v10606
  %v11384 = vpack.c.b16 %v10614, %v10607
  %v11385 = vpack.c.b16 %v10615, %v10608
  %v11386 = vpack.c.b16 %v10616, %v10609
  %v11387 = vpack.c.b16 %v10624, %v10617
  %v11388 = vpack.c.b16 %v10625, %v10618
  %v11389 = vpack.c.b16 %v10626, %v10619
  %v11390 = vpack.c.b16 %v10627, %v10620
  %v11391 = vpack.c.b16 %v10628, %v10621
  %v11392 = vpack.c.b16 %v10629, %v10622
  %v11393 = vpack.c.b16 %v10630, %v10623
  %v11394 = vpack.c.b16 %v10638, %v10631
  %v11395 = vpack.c.b16 %v10639, %v10632
  %v11396 = vpack.c.b16 %v10640, %v10633
  %v11397 = vpack.c.b16 %v10641, %v10634
  %v11398 = vpack.c.b16 %v10642, %v10635
  %v11399 = vpack.c.b16 %v10643, %v10636
  %v11400 = vpack.c.b16 %v10644, %v10637
  %v11401 = vpack.c.b16 %v10652, %v10645
  %v11402 = vpack.c.b16 %v10653, %v10646
  %v11403 = vpack.c.b16 %v10654, %v10647
  %v11404 = vpack.c.b16 %v10655, %v10648
  %v11405 = vpack.c.b16 %v10656, %v10649
  %v11406 = vpack.c.b16 %v10657, %v10650
  %v11407 = vpack.c.b16 %v10658, %v10651
  %v11408 = vpack.c.b16 %v10666, %v10659
  %v11409 = vpack.c.b16 %v10667, %v10660
  %v11410 = vpack.c.b16 %v10668, %v10661
  %v11411 = vpack.c.b16 %v10669, %v10662
  %v11412 = vpack.c.b16 %v10670, %v10663
  %v11413 = vpack.c.b16 %v10671, %v10664
  %v11414 = vpack.c.b16 %v10672, %v10665
  %v11415 = vpack.c.b16 %v10680, %v10673
  %v11416 = vpack.c.b16 %v10681, %v10674
  %v11417 = vpack.c.b16 %v10682, %v10675
  %v11418 = vpack.c.b16 %v10683, %v10676
  %v11419 = vpack.c.b16 %v10684, %v10677
  %v11420 = vpack.c.b16 %v10685, %v10678
  %v11421 = vpack.c.b16 %v10686, %v10679
  %v11422 = vpack.c.b16 %v10694, %v10687
  %v11423 = vpack.c.b16 %v10695, %v10688
  %v11424 = vpack.c.b16 %v10696, %v10689
  %v11425 = vpack.c.b16 %v10697, %v10690
  %v11426 = vpack.c.b16 %v10698, %v10691
  %v11427 = vpack.c.b16 %v10699, %v10692
  %v11428 = vpack.c.b16 %v10700, %v10693
  %12157 = vmatprep.subr.bf16.mxu0 %v10702
  %12158 = vmatpush1.bf16.msra.mxu0 %v10701
  %12159 = vmatprep.subr.bf16.mxu0 %v10709
  %12160 = vmatpush1.bf16.msra.mxu0 %v10708
  %12161 = vmatprep.subr.bf16.mxu0 %v10716
  %12162 = vmatpush1.bf16.msra.mxu0 %v10715
  %12163 = vmatprep.subr.bf16.mxu0 %v10723
  %12164 = vmatpush1.bf16.msra.mxu0 %v10722
  %12165 = vmatprep.subr.bf16.mxu0 %v10730
  %12166 = vmatpush1.bf16.msra.mxu0 %v10729
  %12167 = vmatprep.subr.bf16.mxu0 %v10737
  %12168 = vmatpush1.bf16.msra.mxu0 %v10736
  %12169 = vmatprep.subr.bf16.mxu0 %v10744
  %12170 = vmatpush1.bf16.msra.mxu0 %v10743
  %12171 = vmatprep.subr.bf16.mxu0 %v10751
  %12172 = vmatpush1.bf16.msra.mxu0 %v10750
  %12173 = vmatprep.subr.bf16.mxu0 %v10758
  %12174 = vmatpush1.bf16.msra.mxu0 %v10757
  %12175 = vmatprep.subr.bf16.mxu0 %v10765
  %12176 = vmatpush1.bf16.msra.mxu0 %v10764
  %12177 = vmatprep.subr.bf16.mxu0 %v10772
  %12178 = vmatpush1.bf16.msra.mxu0 %v10771
  %12179 = vmatprep.subr.bf16.mxu0 %v10779
  %12180 = vmatpush1.bf16.msra.mxu0 %v10778
  %12181 = vmatprep.subr.bf16.mxu0 %v10786
  %12182 = vmatpush1.bf16.msra.mxu0 %v10785
  %12183 = vmatprep.subr.bf16.mxu0 %v10793
  %12184 = vmatpush1.bf16.msra.mxu0 %v10792
  %12185 = vmatprep.subr.bf16.mxu0 %v10800
  %12186 = vmatpush1.bf16.msra.mxu0 %v10799
  %12187 = vmatprep.subr.bf16.mxu0 %v10807
  %12188 = vmatpush1.bf16.msra.mxu0 %v10806
  %12189 = vmatprep.mubr.bf16.mxu0 %v7532
  %12190 = vmatmul.mubr.bf16.gmra.mrb[0].mxu0 %v7531
  %v12191 = vpop.f32.mrb[0].mxu0
  %v12192 = vadd.f32 %v8381, %v12191
  %v12193 = vpop.f32.mrb[0].mxu0
  %v12194 = vadd.f32 %v8385, %v12193
  %v12195 = vpop.f32.mrb[0].mxu0
  %v12196 = vpop.f32.mrb[0].mxu0
  %12197 = vdwg.mxu0
  %12198 = vmatprep.subr.bf16.mxu0 %v10814
  %12199 = vmatpush1.bf16.msra.mxu0 %v10813
  %12200 = vmatprep.subr.bf16.mxu0 %v10821
  %12201 = vmatpush1.bf16.msra.mxu0 %v10820
  %12202 = vmatprep.subr.bf16.mxu0 %v10828
  %12203 = vmatpush1.bf16.msra.mxu0 %v10827
  %12204 = vmatprep.subr.bf16.mxu0 %v10835
  %12205 = vmatpush1.bf16.msra.mxu0 %v10834
  %12206 = vmatprep.subr.bf16.mxu0 %v10842
  %12207 = vmatpush1.bf16.msra.mxu0 %v10841
  %12208 = vmatprep.subr.bf16.mxu0 %v10849
  %12209 = vmatpush1.bf16.msra.mxu0 %v10848
  %12210 = vmatprep.subr.bf16.mxu0 %v10856
  %12211 = vmatpush1.bf16.msra.mxu0 %v10855
  %12212 = vmatprep.subr.bf16.mxu0 %v10863
  %12213 = vmatpush1.bf16.msra.mxu0 %v10862
  %12214 = vmatprep.subr.bf16.mxu0 %v10870
  %12215 = vmatpush1.bf16.msra.mxu0 %v10869
  %12216 = vmatprep.subr.bf16.mxu0 %v10877
  %12217 = vmatpush1.bf16.msra.mxu0 %v10876
  %12218 = vmatprep.subr.bf16.mxu0 %v10884
  %12219 = vmatpush1.bf16.msra.mxu0 %v10883
  %12220 = vmatprep.subr.bf16.mxu0 %v10891
  %12221 = vmatpush1.bf16.msra.mxu0 %v10890
  %12222 = vmatprep.subr.bf16.mxu0 %v10898
  %12223 = vmatpush1.bf16.msra.mxu0 %v10897
  %12224 = vmatprep.subr.bf16.mxu0 %v10905
  %12225 = vmatpush1.bf16.msra.mxu0 %v10904
  %12226 = vmatprep.subr.bf16.mxu0 %v10912
  %12227 = vmatpush1.bf16.msra.mxu0 %v10911
  %12228 = vmatprep.subr.bf16.mxu0 %v10919
  %12229 = vmatpush1.bf16.msra.mxu0 %v10918
  %12230 = vmatprep.mubr.bf16.mxu0 %v7534
  %12231 = vmatmul.mubr.bf16.gmra.mrb[0].mxu0 %v7533
  %v12232 = vpop.f32.mrb[0].mxu0
  %v12233 = vadd.f32 %v12192, %v12232
  %v12234 = vpop.f32.mrb[0].mxu0
  %v12235 = vadd.f32 %v12194, %v12234
  %v12236 = vpop.f32.mrb[0].mxu0
  %v12237 = vpop.f32.mrb[0].mxu0
  %12238 = vdwg.mxu0
  %12239 = vmatprep.subr.bf16.mxu0 %v10926
  %12240 = vmatpush1.bf16.msra.mxu0 %v10925
  %12241 = vmatprep.subr.bf16.mxu0 %v10933
  %12242 = vmatpush1.bf16.msra.mxu0 %v10932
  %12243 = vmatprep.subr.bf16.mxu0 %v10940
  %12244 = vmatpush1.bf16.msra.mxu0 %v10939
  %12245 = vmatprep.subr.bf16.mxu0 %v10947
  %12246 = vmatpush1.bf16.msra.mxu0 %v10946
  %12247 = vmatprep.subr.bf16.mxu0 %v10954
  %12248 = vmatpush1.bf16.msra.mxu0 %v10953
  %12249 = vmatprep.subr.bf16.mxu0 %v10961
  %12250 = vmatpush1.bf16.msra.mxu0 %v10960
  %12251 = vmatprep.subr.bf16.mxu0 %v10968
  %12252 = vmatpush1.bf16.msra.mxu0 %v10967
  %12253 = vmatprep.subr.bf16.mxu0 %v10975
  %12254 = vmatpush1.bf16.msra.mxu0 %v10974
  %12255 = vmatprep.subr.bf16.mxu0 %v10982
  %12256 = vmatpush1.bf16.msra.mxu0 %v10981
  %12257 = vmatprep.subr.bf16.mxu0 %v10989
  %12258 = vmatpush1.bf16.msra.mxu0 %v10988
  %12259 = vmatprep.subr.bf16.mxu0 %v10996
  %12260 = vmatpush1.bf16.msra.mxu0 %v10995
  %12261 = vmatprep.subr.bf16.mxu0 %v11003
  %12262 = vmatpush1.bf16.msra.mxu0 %v11002
  %12263 = vmatprep.subr.bf16.mxu0 %v11010
  %12264 = vmatpush1.bf16.msra.mxu0 %v11009
  %12265 = vmatprep.subr.bf16.mxu0 %v11017
  %12266 = vmatpush1.bf16.msra.mxu0 %v11016
  %12267 = vmatprep.subr.bf16.mxu0 %v11024
  %12268 = vmatpush1.bf16.msra.mxu0 %v11023
  %12269 = vmatprep.subr.bf16.mxu0 %v11031
  %12270 = vmatpush1.bf16.msra.mxu0 %v11030
  %12271 = vmatprep.mubr.bf16.mxu0 %v7536
  %12272 = vmatmul.mubr.bf16.gmra.mrb[0].mxu0 %v7535
  %v12273 = vpop.f32.mrb[0].mxu0
  %v12274 = vadd.f32 %v12233, %v12273
  %v12275 = vpop.f32.mrb[0].mxu0
  %v12276 = vadd.f32 %v12235, %v12275
  %v12277 = vpop.f32.mrb[0].mxu0
  %v12278 = vpop.f32.mrb[0].mxu0
  %12279 = vdwg.mxu0
  %12280 = vmatprep.subr.bf16.mxu0 %v11038
  %12281 = vmatpush1.bf16.msra.mxu0 %v11037
  %12282 = vmatprep.subr.bf16.mxu0 %v11045
  %12283 = vmatpush1.bf16.msra.mxu0 %v11044
  %12284 = vmatprep.subr.bf16.mxu0 %v11052
  %12285 = vmatpush1.bf16.msra.mxu0 %v11051
  %12286 = vmatprep.subr.bf16.mxu0 %v11059
  %12287 = vmatpush1.bf16.msra.mxu0 %v11058
  %12288 = vmatprep.subr.bf16.mxu0 %v11066
  %12289 = vmatpush1.bf16.msra.mxu0 %v11065
  %12290 = vmatprep.subr.bf16.mxu0 %v11073
  %12291 = vmatpush1.bf16.msra.mxu0 %v11072
  %12292 = vmatprep.subr.bf16.mxu0 %v11080
  %12293 = vmatpush1.bf16.msra.mxu0 %v11079
  %12294 = vmatprep.subr.bf16.mxu0 %v11087
  %12295 = vmatpush1.bf16.msra.mxu0 %v11086
  %12296 = vmatprep.subr.bf16.mxu0 %v11094
  %12297 = vmatpush1.bf16.msra.mxu0 %v11093
  %12298 = vmatprep.subr.bf16.mxu0 %v11101
  %12299 = vmatpush1.bf16.msra.mxu0 %v11100
  %12300 = vmatprep.subr.bf16.mxu0 %v11108
  %12301 = vmatpush1.bf16.msra.mxu0 %v11107
  %12302 = vmatprep.subr.bf16.mxu0 %v11115
  %12303 = vmatpush1.bf16.msra.mxu0 %v11114
  %12304 = vmatprep.subr.bf16.mxu0 %v11122
  %12305 = vmatpush1.bf16.msra.mxu0 %v11121
  %12306 = vmatprep.subr.bf16.mxu0 %v11129
  %12307 = vmatpush1.bf16.msra.mxu0 %v11128
  %12308 = vmatprep.subr.bf16.mxu0 %v11136
  %12309 = vmatpush1.bf16.msra.mxu0 %v11135
  %12310 = vmatprep.subr.bf16.mxu0 %v11143
  %12311 = vmatpush1.bf16.msra.mxu0 %v11142
  %12312 = vmatprep.mubr.bf16.mxu0 %v7538
  %12313 = vmatmul.mubr.bf16.gmra.mrb[0].mxu0 %v7537
  %v12314 = vpop.f32.mrb[0].mxu0
  %v12315 = vadd.f32 %v12274, %v12314
  %v12316 = vpop.f32.mrb[0].mxu0
  %v12317 = vadd.f32 %v12276, %v12316
  %v12318 = vpop.f32.mrb[0].mxu0
  %v12319 = vpop.f32.mrb[0].mxu0
  %12320 = vdwg.mxu0
  %12321 = vmatprep.subr.bf16.mxu0 %v11150
  %12322 = vmatpush1.bf16.msra.mxu0 %v11149
  %12323 = vmatprep.subr.bf16.mxu0 %v11157
  %12324 = vmatpush1.bf16.msra.mxu0 %v11156
  %12325 = vmatprep.subr.bf16.mxu0 %v11164
  %12326 = vmatpush1.bf16.msra.mxu0 %v11163
  %12327 = vmatprep.subr.bf16.mxu0 %v11171
  %12328 = vmatpush1.bf16.msra.mxu0 %v11170
  %12329 = vmatprep.subr.bf16.mxu0 %v11178
  %12330 = vmatpush1.bf16.msra.mxu0 %v11177
  %12331 = vmatprep.subr.bf16.mxu0 %v11185
  %12332 = vmatpush1.bf16.msra.mxu0 %v11184
  %12333 = vmatprep.subr.bf16.mxu0 %v11192
  %12334 = vmatpush1.bf16.msra.mxu0 %v11191
  %12335 = vmatprep.subr.bf16.mxu0 %v11199
  %12336 = vmatpush1.bf16.msra.mxu0 %v11198
  %12337 = vmatprep.subr.bf16.mxu0 %v11206
  %12338 = vmatpush1.bf16.msra.mxu0 %v11205
  %12339 = vmatprep.subr.bf16.mxu0 %v11213
  %12340 = vmatpush1.bf16.msra.mxu0 %v11212
  %12341 = vmatprep.subr.bf16.mxu0 %v11220
  %12342 = vmatpush1.bf16.msra.mxu0 %v11219
  %12343 = vmatprep.subr.bf16.mxu0 %v11227
  %12344 = vmatpush1.bf16.msra.mxu0 %v11226
  %12345 = vmatprep.subr.bf16.mxu0 %v11234
  %12346 = vmatpush1.bf16.msra.mxu0 %v11233
  %12347 = vmatprep.subr.bf16.mxu0 %v11241
  %12348 = vmatpush1.bf16.msra.mxu0 %v11240
  %12349 = vmatprep.subr.bf16.mxu0 %v11248
  %12350 = vmatpush1.bf16.msra.mxu0 %v11247
  %12351 = vmatprep.subr.bf16.mxu0 %v11255
  %12352 = vmatpush1.bf16.msra.mxu0 %v11254
  %12353 = vmatprep.mubr.bf16.mxu0 %v7540
  %12354 = vmatmul.mubr.bf16.gmra.mrb[0].mxu0 %v7539
  %v12355 = vpop.f32.mrb[0].mxu0
  %v12356 = vadd.f32 %v12315, %v12355
  %v12357 = vpop.f32.mrb[0].mxu0
  %v12358 = vadd.f32 %v12317, %v12357
  %v12359 = vpop.f32.mrb[0].mxu0
  %v12360 = vpop.f32.mrb[0].mxu0
  %12361 = vdwg.mxu0
  %12362 = vmatprep.subr.bf16.mxu0 %v11262
  %12363 = vmatpush1.bf16.msra.mxu0 %v11261
  %12364 = vmatprep.subr.bf16.mxu0 %v11269
  %12365 = vmatpush1.bf16.msra.mxu0 %v11268
  %12366 = vmatprep.subr.bf16.mxu0 %v11276
  %12367 = vmatpush1.bf16.msra.mxu0 %v11275
  %12368 = vmatprep.subr.bf16.mxu0 %v11283
  %12369 = vmatpush1.bf16.msra.mxu0 %v11282
  %12370 = vmatprep.subr.bf16.mxu0 %v11290
  %12371 = vmatpush1.bf16.msra.mxu0 %v11289
  %12372 = vmatprep.subr.bf16.mxu0 %v11297
  %12373 = vmatpush1.bf16.msra.mxu0 %v11296
  %12374 = vmatprep.subr.bf16.mxu0 %v11304
  %12375 = vmatpush1.bf16.msra.mxu0 %v11303
  %12376 = vmatprep.subr.bf16.mxu0 %v11311
  %12377 = vmatpush1.bf16.msra.mxu0 %v11310
  %12378 = vmatprep.subr.bf16.mxu0 %v11318
  %12379 = vmatpush1.bf16.msra.mxu0 %v11317
  %12380 = vmatprep.subr.bf16.mxu0 %v11325
  %12381 = vmatpush1.bf16.msra.mxu0 %v11324
  %12382 = vmatprep.subr.bf16.mxu0 %v11332
  %12383 = vmatpush1.bf16.msra.mxu0 %v11331
  %12384 = vmatprep.subr.bf16.mxu0 %v11339
  %12385 = vmatpush1.bf16.msra.mxu0 %v11338
  %12386 = vmatprep.subr.bf16.mxu0 %v11346
  %12387 = vmatpush1.bf16.msra.mxu0 %v11345
  %12388 = vmatprep.subr.bf16.mxu0 %v11353
  %12389 = vmatpush1.bf16.msra.mxu0 %v11352
  %12390 = vmatprep.subr.bf16.mxu0 %v11360
  %12391 = vmatpush1.bf16.msra.mxu0 %v11359
  %12392 = vmatprep.subr.bf16.mxu0 %v11367
  %12393 = vmatpush1.bf16.msra.mxu0 %v11366
  %12394 = vmatprep.mubr.bf16.mxu0 %v7542
  %12395 = vmatmul.mubr.bf16.gmra.mrb[0].mxu0 %v7541
  %v12396 = vpop.f32.mrb[0].mxu0
  %v12397 = vadd.f32 %v12356, %v12396
  %v12398 = vpop.f32.mrb[0].mxu0
  %v12399 = vadd.f32 %v12358, %v12398
  %v12400 = vpop.f32.mrb[0].mxu0
  %v12401 = vpop.f32.mrb[0].mxu0
  %12402 = vdwg.mxu0
  %12403 = vmatprep.subr.bf16.mxu0 %v11374
  %12404 = vmatpush1.bf16.msra.mxu0 %v11373
  %12405 = vmatprep.subr.bf16.mxu0 %v11381
  %12406 = vmatpush1.bf16.msra.mxu0 %v11380
  %12407 = vmatprep.subr.bf16.mxu0 %v11388
  %12408 = vmatpush1.bf16.msra.mxu0 %v11387
  %12409 = vmatprep.subr.bf16.mxu0 %v11395
  %12410 = vmatpush1.bf16.msra.mxu0 %v11394
  %12411 = vmatprep.subr.bf16.mxu0 %v11402
  %12412 = vmatpush1.bf16.msra.mxu0 %v11401
  %12413 = vmatprep.subr.bf16.mxu0 %v11409
  %12414 = vmatpush1.bf16.msra.mxu0 %v11408
  %12415 = vmatprep.subr.bf16.mxu0 %v11416
  %12416 = vmatpush1.bf16.msra.mxu0 %v11415
  %12417 = vmatprep.subr.bf16.mxu0 %v11423
  %12418 = vmatpush1.bf16.msra.mxu0 %v11422
  %12419 = vmatprep.subr.bf16.mxu0 0
  %12420 = vmatpush1.bf16.msra.mxu0 0
  %12421 = vmatprep.subr.bf16.mxu0 0
  %12422 = vmatpush1.bf16.msra.mxu0 0
  %12423 = vmatprep.subr.bf16.mxu0 0
  %12424 = vmatpush1.bf16.msra.mxu0 0
  %12425 = vmatprep.subr.bf16.mxu0 0
  %12426 = vmatpush1.bf16.msra.mxu0 0
  %12427 = vmatprep.subr.bf16.mxu0 0
  %12428 = vmatpush1.bf16.msra.mxu0 0
  %12429 = vmatprep.subr.bf16.mxu0 0
  %12430 = vmatpush1.bf16.msra.mxu0 0
  %12431 = vmatprep.subr.bf16.mxu0 0
  %12432 = vmatpush1.bf16.msra.mxu0 0
  %12433 = vmatprep.subr.bf16.mxu0 0
  %12434 = vmatpush1.bf16.msra.mxu0 0
  %12435 = vmatprep.mubr.bf16.mxu0 0
  %12436 = vmatmul.mubr.bf16.gmra.mrb[0].mxu0 %v7543
  %v12437 = vpop.f32.mrb[0].mxu0
  %v12438 = vadd.f32 %v12397, %v12437
  %v12439 = vpop.f32.mrb[0].mxu0
  %v12440 = vadd.f32 %v12399, %v12439
  %v12441 = vpop.f32.mrb[0].mxu0
  %v12442 = vpop.f32.mrb[0].mxu0
  %12443 = vdwg.mxu0
  %12444 = vmatprep.subr.bf16.mxu0 %v10704
  %12445 = vmatpush1.bf16.msra.mxu0 %v10703
  %12446 = vmatprep.subr.bf16.mxu0 %v10711
  %12447 = vmatpush1.bf16.msra.mxu0 %v10710
  %12448 = vmatprep.subr.bf16.mxu0 %v10718
  %12449 = vmatpush1.bf16.msra.mxu0 %v10717
  %12450 = vmatprep.subr.bf16.mxu0 %v10725
  %12451 = vmatpush1.bf16.msra.mxu0 %v10724
  %12452 = vmatprep.subr.bf16.mxu0 %v10732
  %12453 = vmatpush1.bf16.msra.mxu0 %v10731
  %12454 = vmatprep.subr.bf16.mxu0 %v10739
  %12455 = vmatpush1.bf16.msra.mxu0 %v10738
  %12456 = vmatprep.subr.bf16.mxu0 %v10746
  %12457 = vmatpush1.bf16.msra.mxu0 %v10745
  %12458 = vmatprep.subr.bf16.mxu0 %v10753
  %12459 = vmatpush1.bf16.msra.mxu0 %v10752
  %12460 = vmatprep.subr.bf16.mxu0 %v10760
  %12461 = vmatpush1.bf16.msra.mxu0 %v10759
  %12462 = vmatprep.subr.bf16.mxu0 %v10767
  %12463 = vmatpush1.bf16.msra.mxu0 %v10766
  %12464 = vmatprep.subr.bf16.mxu0 %v10774
  %12465 = vmatpush1.bf16.msra.mxu0 %v10773
  %12466 = vmatprep.subr.bf16.mxu0 %v10781
  %12467 = vmatpush1.bf16.msra.mxu0 %v10780
  %12468 = vmatprep.subr.bf16.mxu0 %v10788
  %12469 = vmatpush1.bf16.msra.mxu0 %v10787
  %12470 = vmatprep.subr.bf16.mxu0 %v10795
  %12471 = vmatpush1.bf16.msra.mxu0 %v10794
  %12472 = vmatprep.subr.bf16.mxu0 %v10802
  %12473 = vmatpush1.bf16.msra.mxu0 %v10801
  %12474 = vmatprep.subr.bf16.mxu0 %v10809
  %12475 = vmatpush1.bf16.msra.mxu0 %v10808
  %12476 = vmatprep.mubr.bf16.mxu0 %v7532
  %12477 = vmatmul.mubr.bf16.gmra.mrb[0].mxu0 %v7531
  %v12478 = vpop.f32.mrb[0].mxu0
  %v12479 = vadd.f32 %v8389, %v12478
  %v12480 = vpop.f32.mrb[0].mxu0
  %v12481 = vadd.f32 %v8393, %v12480
  %v12482 = vpop.f32.mrb[0].mxu0
  %v12483 = vpop.f32.mrb[0].mxu0
  %12484 = vdwg.mxu0
  %12485 = vmatprep.subr.bf16.mxu0 %v10816
  %12486 = vmatpush1.bf16.msra.mxu0 %v10815
  %12487 = vmatprep.subr.bf16.mxu0 %v10823
  %12488 = vmatpush1.bf16.msra.mxu0 %v10822
  %12489 = vmatprep.subr.bf16.mxu0 %v10830
  %12490 = vmatpush1.bf16.msra.mxu0 %v10829
  %12491 = vmatprep.subr.bf16.mxu0 %v10837
  %12492 = vmatpush1.bf16.msra.mxu0 %v10836
  %12493 = vmatprep.subr.bf16.mxu0 %v10844
  %12494 = vmatpush1.bf16.msra.mxu0 %v10843
  %12495 = vmatprep.subr.bf16.mxu0 %v10851
  %12496 = vmatpush1.bf16.msra.mxu0 %v10850
  %12497 = vmatprep.subr.bf16.mxu0 %v10858
  %12498 = vmatpush1.bf16.msra.mxu0 %v10857
  %12499 = vmatprep.subr.bf16.mxu0 %v10865
  %12500 = vmatpush1.bf16.msra.mxu0 %v10864
  %12501 = vmatprep.subr.bf16.mxu0 %v10872
  %12502 = vmatpush1.bf16.msra.mxu0 %v10871
  %12503 = vmatprep.subr.bf16.mxu0 %v10879
  %12504 = vmatpush1.bf16.msra.mxu0 %v10878
  %12505 = vmatprep.subr.bf16.mxu0 %v10886
  %12506 = vmatpush1.bf16.msra.mxu0 %v10885
  %12507 = vmatprep.subr.bf16.mxu0 %v10893
  %12508 = vmatpush1.bf16.msra.mxu0 %v10892
  %12509 = vmatprep.subr.bf16.mxu0 %v10900
  %12510 = vmatpush1.bf16.msra.mxu0 %v10899
  %12511 = vmatprep.subr.bf16.mxu0 %v10907
  %12512 = vmatpush1.bf16.msra.mxu0 %v10906
  %12513 = vmatprep.subr.bf16.mxu0 %v10914
  %12514 = vmatpush1.bf16.msra.mxu0 %v10913
  %12515 = vmatprep.subr.bf16.mxu0 %v10921
  %12516 = vmatpush1.bf16.msra.mxu0 %v10920
  %12517 = vmatprep.mubr.bf16.mxu0 %v7534
  %12518 = vmatmul.mubr.bf16.gmra.mrb[0].mxu0 %v7533
  %v12519 = vpop.f32.mrb[0].mxu0
  %v12520 = vadd.f32 %v12479, %v12519
  %v12521 = vpop.f32.mrb[0].mxu0
  %v12522 = vadd.f32 %v12481, %v12521
  %v12523 = vpop.f32.mrb[0].mxu0
  %v12524 = vpop.f32.mrb[0].mxu0
  %12525 = vdwg.mxu0
  %12526 = vmatprep.subr.bf16.mxu0 %v10928
  %12527 = vmatpush1.bf16.msra.mxu0 %v10927
  %12528 = vmatprep.subr.bf16.mxu0 %v10935
  %12529 = vmatpush1.bf16.msra.mxu0 %v10934
  %12530 = vmatprep.subr.bf16.mxu0 %v10942
  %12531 = vmatpush1.bf16.msra.mxu0 %v10941
  %12532 = vmatprep.subr.bf16.mxu0 %v10949
  %12533 = vmatpush1.bf16.msra.mxu0 %v10948
  %12534 = vmatprep.subr.bf16.mxu0 %v10956
  %12535 = vmatpush1.bf16.msra.mxu0 %v10955
  %12536 = vmatprep.subr.bf16.mxu0 %v10963
  %12537 = vmatpush1.bf16.msra.mxu0 %v10962
  %12538 = vmatprep.subr.bf16.mxu0 %v10970
  %12539 = vmatpush1.bf16.msra.mxu0 %v10969
  %12540 = vmatprep.subr.bf16.mxu0 %v10977
  %12541 = vmatpush1.bf16.msra.mxu0 %v10976
  %12542 = vmatprep.subr.bf16.mxu0 %v10984
  %12543 = vmatpush1.bf16.msra.mxu0 %v10983
  %12544 = vmatprep.subr.bf16.mxu0 %v10991
  %12545 = vmatpush1.bf16.msra.mxu0 %v10990
  %12546 = vmatprep.subr.bf16.mxu0 %v10998
  %12547 = vmatpush1.bf16.msra.mxu0 %v10997
  %12548 = vmatprep.subr.bf16.mxu0 %v11005
  %12549 = vmatpush1.bf16.msra.mxu0 %v11004
  %12550 = vmatprep.subr.bf16.mxu0 %v11012
  %12551 = vmatpush1.bf16.msra.mxu0 %v11011
  %12552 = vmatprep.subr.bf16.mxu0 %v11019
  %12553 = vmatpush1.bf16.msra.mxu0 %v11018
  %12554 = vmatprep.subr.bf16.mxu0 %v11026
  %12555 = vmatpush1.bf16.msra.mxu0 %v11025
  %12556 = vmatprep.subr.bf16.mxu0 %v11033
  %12557 = vmatpush1.bf16.msra.mxu0 %v11032
  %12558 = vmatprep.mubr.bf16.mxu0 %v7536
  %12559 = vmatmul.mubr.bf16.gmra.mrb[0].mxu0 %v7535
  %v12560 = vpop.f32.mrb[0].mxu0
  %v12561 = vadd.f32 %v12520, %v12560
  %v12562 = vpop.f32.mrb[0].mxu0
  %v12563 = vadd.f32 %v12522, %v12562
  %v12564 = vpop.f32.mrb[0].mxu0
  %v12565 = vpop.f32.mrb[0].mxu0
  %12566 = vdwg.mxu0
  %12567 = vmatprep.subr.bf16.mxu0 %v11040
  %12568 = vmatpush1.bf16.msra.mxu0 %v11039
  %12569 = vmatprep.subr.bf16.mxu0 %v11047
  %12570 = vmatpush1.bf16.msra.mxu0 %v11046
  %12571 = vmatprep.subr.bf16.mxu0 %v11054
  %12572 = vmatpush1.bf16.msra.mxu0 %v11053
  %12573 = vmatprep.subr.bf16.mxu0 %v11061
  %12574 = vmatpush1.bf16.msra.mxu0 %v11060
  %12575 = vmatprep.subr.bf16.mxu0 %v11068
  %12576 = vmatpush1.bf16.msra.mxu0 %v11067
  %12577 = vmatprep.subr.bf16.mxu0 %v11075
  %12578 = vmatpush1.bf16.msra.mxu0 %v11074
  %12579 = vmatprep.subr.bf16.mxu0 %v11082
  %12580 = vmatpush1.bf16.msra.mxu0 %v11081
  %12581 = vmatprep.subr.bf16.mxu0 %v11089
  %12582 = vmatpush1.bf16.msra.mxu0 %v11088
  %12583 = vmatprep.subr.bf16.mxu0 %v11096
  %12584 = vmatpush1.bf16.msra.mxu0 %v11095
  %12585 = vmatprep.subr.bf16.mxu0 %v11103
  %12586 = vmatpush1.bf16.msra.mxu0 %v11102
  %12587 = vmatprep.subr.bf16.mxu0 %v11110
  %12588 = vmatpush1.bf16.msra.mxu0 %v11109
  %12589 = vmatprep.subr.bf16.mxu0 %v11117
  %12590 = vmatpush1.bf16.msra.mxu0 %v11116
  %12591 = vmatprep.subr.bf16.mxu0 %v11124
  %12592 = vmatpush1.bf16.msra.mxu0 %v11123
  %12593 = vmatprep.subr.bf16.mxu0 %v11131
  %12594 = vmatpush1.bf16.msra.mxu0 %v11130
  %12595 = vmatprep.subr.bf16.mxu0 %v11138
  %12596 = vmatpush1.bf16.msra.mxu0 %v11137
  %12597 = vmatprep.subr.bf16.mxu0 %v11145
  %12598 = vmatpush1.bf16.msra.mxu0 %v11144
  %12599 = vmatprep.mubr.bf16.mxu0 %v7538
  %12600 = vmatmul.mubr.bf16.gmra.mrb[0].mxu0 %v7537
  %v12601 = vpop.f32.mrb[0].mxu0
  %v12602 = vadd.f32 %v12561, %v12601
  %v12603 = vpop.f32.mrb[0].mxu0
  %v12604 = vadd.f32 %v12563, %v12603
  %v12605 = vpop.f32.mrb[0].mxu0
  %v12606 = vpop.f32.mrb[0].mxu0
  %12607 = vdwg.mxu0
  %12608 = vmatprep.subr.bf16.mxu0 %v11152
  %12609 = vmatpush1.bf16.msra.mxu0 %v11151
  %12610 = vmatprep.subr.bf16.mxu0 %v11159
  %12611 = vmatpush1.bf16.msra.mxu0 %v11158
  %12612 = vmatprep.subr.bf16.mxu0 %v11166
  %12613 = vmatpush1.bf16.msra.mxu0 %v11165
  %12614 = vmatprep.subr.bf16.mxu0 %v11173
  %12615 = vmatpush1.bf16.msra.mxu0 %v11172
  %12616 = vmatprep.subr.bf16.mxu0 %v11180
  %12617 = vmatpush1.bf16.msra.mxu0 %v11179
  %12618 = vmatprep.subr.bf16.mxu0 %v11187
  %12619 = vmatpush1.bf16.msra.mxu0 %v11186
  %12620 = vmatprep.subr.bf16.mxu0 %v11194
  %12621 = vmatpush1.bf16.msra.mxu0 %v11193
  %12622 = vmatprep.subr.bf16.mxu0 %v11201
  %12623 = vmatpush1.bf16.msra.mxu0 %v11200
  %12624 = vmatprep.subr.bf16.mxu0 %v11208
  %12625 = vmatpush1.bf16.msra.mxu0 %v11207
  %12626 = vmatprep.subr.bf16.mxu0 %v11215
  %12627 = vmatpush1.bf16.msra.mxu0 %v11214
  %12628 = vmatprep.subr.bf16.mxu0 %v11222
  %12629 = vmatpush1.bf16.msra.mxu0 %v11221
  %12630 = vmatprep.subr.bf16.mxu0 %v11229
  %12631 = vmatpush1.bf16.msra.mxu0 %v11228
  %12632 = vmatprep.subr.bf16.mxu0 %v11236
  %12633 = vmatpush1.bf16.msra.mxu0 %v11235
  %12634 = vmatprep.subr.bf16.mxu0 %v11243
  %12635 = vmatpush1.bf16.msra.mxu0 %v11242
  %12636 = vmatprep.subr.bf16.mxu0 %v11250
  %12637 = vmatpush1.bf16.msra.mxu0 %v11249
  %12638 = vmatprep.subr.bf16.mxu0 %v11257
  %12639 = vmatpush1.bf16.msra.mxu0 %v11256
  %12640 = vmatprep.mubr.bf16.mxu0 %v7540
  %12641 = vmatmul.mubr.bf16.gmra.mrb[0].mxu0 %v7539
  %v12642 = vpop.f32.mrb[0].mxu0
  %v12643 = vadd.f32 %v12602, %v12642
  %v12644 = vpop.f32.mrb[0].mxu0
  %v12645 = vadd.f32 %v12604, %v12644
  %v12646 = vpop.f32.mrb[0].mxu0
  %v12647 = vpop.f32.mrb[0].mxu0
  %12648 = vdwg.mxu0
  %12649 = vmatprep.subr.bf16.mxu0 %v11264
  %12650 = vmatpush1.bf16.msra.mxu0 %v11263
  %12651 = vmatprep.subr.bf16.mxu0 %v11271
  %12652 = vmatpush1.bf16.msra.mxu0 %v11270
  %12653 = vmatprep.subr.bf16.mxu0 %v11278
  %12654 = vmatpush1.bf16.msra.mxu0 %v11277
  %12655 = vmatprep.subr.bf16.mxu0 %v11285
  %12656 = vmatpush1.bf16.msra.mxu0 %v11284
  %12657 = vmatprep.subr.bf16.mxu0 %v11292
  %12658 = vmatpush1.bf16.msra.mxu0 %v11291
  %12659 = vmatprep.subr.bf16.mxu0 %v11299
  %12660 = vmatpush1.bf16.msra.mxu0 %v11298
  %12661 = vmatprep.subr.bf16.mxu0 %v11306
  %12662 = vmatpush1.bf16.msra.mxu0 %v11305
  %12663 = vmatprep.subr.bf16.mxu0 %v11313
  %12664 = vmatpush1.bf16.msra.mxu0 %v11312
  %12665 = vmatprep.subr.bf16.mxu0 %v11320
  %12666 = vmatpush1.bf16.msra.mxu0 %v11319
  %12667 = vmatprep.subr.bf16.mxu0 %v11327
  %12668 = vmatpush1.bf16.msra.mxu0 %v11326
  %12669 = vmatprep.subr.bf16.mxu0 %v11334
  %12670 = vmatpush1.bf16.msra.mxu0 %v11333
  %12671 = vmatprep.subr.bf16.mxu0 %v11341
  %12672 = vmatpush1.bf16.msra.mxu0 %v11340
  %12673 = vmatprep.subr.bf16.mxu0 %v11348
  %12674 = vmatpush1.bf16.msra.mxu0 %v11347
  %12675 = vmatprep.subr.bf16.mxu0 %v11355
  %12676 = vmatpush1.bf16.msra.mxu0 %v11354
  %12677 = vmatprep.subr.bf16.mxu0 %v11362
  %12678 = vmatpush1.bf16.msra.mxu0 %v11361
  %12679 = vmatprep.subr.bf16.mxu0 %v11369
  %12680 = vmatpush1.bf16.msra.mxu0 %v11368
  %12681 = vmatprep.mubr.bf16.mxu0 %v7542
  %12682 = vmatmul.mubr.bf16.gmra.mrb[0].mxu0 %v7541
  %v12683 = vpop.f32.mrb[0].mxu0
  %v12684 = vadd.f32 %v12643, %v12683
  %v12685 = vpop.f32.mrb[0].mxu0
  %v12686 = vadd.f32 %v12645, %v12685
  %v12687 = vpop.f32.mrb[0].mxu0
  %v12688 = vpop.f32.mrb[0].mxu0
  %12689 = vdwg.mxu0
  %12690 = vmatprep.subr.bf16.mxu0 %v11376
  %12691 = vmatpush1.bf16.msra.mxu0 %v11375
  %12692 = vmatprep.subr.bf16.mxu0 %v11383
  %12693 = vmatpush1.bf16.msra.mxu0 %v11382
  %12694 = vmatprep.subr.bf16.mxu0 %v11390
  %12695 = vmatpush1.bf16.msra.mxu0 %v11389
  %12696 = vmatprep.subr.bf16.mxu0 %v11397
  %12697 = vmatpush1.bf16.msra.mxu0 %v11396
  %12698 = vmatprep.subr.bf16.mxu0 %v11404
  %12699 = vmatpush1.bf16.msra.mxu0 %v11403
  %12700 = vmatprep.subr.bf16.mxu0 %v11411
  %12701 = vmatpush1.bf16.msra.mxu0 %v11410
  %12702 = vmatprep.subr.bf16.mxu0 %v11418
  %12703 = vmatpush1.bf16.msra.mxu0 %v11417
  %12704 = vmatprep.subr.bf16.mxu0 %v11425
  %12705 = vmatpush1.bf16.msra.mxu0 %v11424
  %12706 = vmatprep.subr.bf16.mxu0 0
  %12707 = vmatpush1.bf16.msra.mxu0 0
  %12708 = vmatprep.subr.bf16.mxu0 0
  %12709 = vmatpush1.bf16.msra.mxu0 0
  %12710 = vmatprep.subr.bf16.mxu0 0
  %12711 = vmatpush1.bf16.msra.mxu0 0
  %12712 = vmatprep.subr.bf16.mxu0 0
  %12713 = vmatpush1.bf16.msra.mxu0 0
  %12714 = vmatprep.subr.bf16.mxu0 0
  %12715 = vmatpush1.bf16.msra.mxu0 0
  %12716 = vmatprep.subr.bf16.mxu0 0
  %12717 = vmatpush1.bf16.msra.mxu0 0
  %12718 = vmatprep.subr.bf16.mxu0 0
  %12719 = vmatpush1.bf16.msra.mxu0 0
  %12720 = vmatprep.subr.bf16.mxu0 0
  %12721 = vmatpush1.bf16.msra.mxu0 0
  %12722 = vmatprep.mubr.bf16.mxu0 0
  %12723 = vmatmul.mubr.bf16.gmra.mrb[0].mxu0 %v7543
  %v12724 = vpop.f32.mrb[0].mxu0
  %v12725 = vadd.f32 %v12684, %v12724
  %v12726 = vpop.f32.mrb[0].mxu0
  %v12727 = vadd.f32 %v12686, %v12726
  %v12728 = vpop.f32.mrb[0].mxu0
  %v12729 = vpop.f32.mrb[0].mxu0
  %12730 = vdwg.mxu0
  %12731 = vmatprep.subr.bf16.mxu0 %v10706
  %12732 = vmatpush1.bf16.msra.mxu0 %v10705
  %12733 = vmatprep.subr.bf16.mxu0 %v10713
  %12734 = vmatpush1.bf16.msra.mxu0 %v10712
  %12735 = vmatprep.subr.bf16.mxu0 %v10720
  %12736 = vmatpush1.bf16.msra.mxu0 %v10719
  %12737 = vmatprep.subr.bf16.mxu0 %v10727
  %12738 = vmatpush1.bf16.msra.mxu0 %v10726
  %12739 = vmatprep.subr.bf16.mxu0 %v10734
  %12740 = vmatpush1.bf16.msra.mxu0 %v10733
  %12741 = vmatprep.subr.bf16.mxu0 %v10741
  %12742 = vmatpush1.bf16.msra.mxu0 %v10740
  %12743 = vmatprep.subr.bf16.mxu0 %v10748
  %12744 = vmatpush1.bf16.msra.mxu0 %v10747
  %12745 = vmatprep.subr.bf16.mxu0 %v10755
  %12746 = vmatpush1.bf16.msra.mxu0 %v10754
  %12747 = vmatprep.subr.bf16.mxu0 %v10762
  %12748 = vmatpush1.bf16.msra.mxu0 %v10761
  %12749 = vmatprep.subr.bf16.mxu0 %v10769
  %12750 = vmatpush1.bf16.msra.mxu0 %v10768
  %12751 = vmatprep.subr.bf16.mxu0 %v10776
  %12752 = vmatpush1.bf16.msra.mxu0 %v10775
  %12753 = vmatprep.subr.bf16.mxu0 %v10783
  %12754 = vmatpush1.bf16.msra.mxu0 %v10782
  %12755 = vmatprep.subr.bf16.mxu0 %v10790
  %12756 = vmatpush1.bf16.msra.mxu0 %v10789
  %12757 = vmatprep.subr.bf16.mxu0 %v10797
  %12758 = vmatpush1.bf16.msra.mxu0 %v10796
  %12759 = vmatprep.subr.bf16.mxu0 %v10804
  %12760 = vmatpush1.bf16.msra.mxu0 %v10803
  %12761 = vmatprep.subr.bf16.mxu0 %v10811
  %12762 = vmatpush1.bf16.msra.mxu0 %v10810
  %12763 = vmatprep.mubr.bf16.mxu0 %v7532
  %12764 = vmatmul.mubr.bf16.gmra.mrb[0].mxu0 %v7531
  %v12765 = vpop.f32.mrb[0].mxu0
  %v12766 = vadd.f32 %v8397, %v12765
  %v12767 = vpop.f32.mrb[0].mxu0
  %v12768 = vadd.f32 %v8401, %v12767
  %v12769 = vpop.f32.mrb[0].mxu0
  %v12770 = vpop.f32.mrb[0].mxu0
  %12771 = vdwg.mxu0
  %12772 = vmatprep.subr.bf16.mxu0 %v10818
  %12773 = vmatpush1.bf16.msra.mxu0 %v10817
  %12774 = vmatprep.subr.bf16.mxu0 %v10825
  %12775 = vmatpush1.bf16.msra.mxu0 %v10824
  %12776 = vmatprep.subr.bf16.mxu0 %v10832
  %12777 = vmatpush1.bf16.msra.mxu0 %v10831
  %12778 = vmatprep.subr.bf16.mxu0 %v10839
  %12779 = vmatpush1.bf16.msra.mxu0 %v10838
  %12780 = vmatprep.subr.bf16.mxu0 %v10846
  %12781 = vmatpush1.bf16.msra.mxu0 %v10845
  %12782 = vmatprep.subr.bf16.mxu0 %v10853
  %12783 = vmatpush1.bf16.msra.mxu0 %v10852
  %12784 = vmatprep.subr.bf16.mxu0 %v10860
  %12785 = vmatpush1.bf16.msra.mxu0 %v10859
  %12786 = vmatprep.subr.bf16.mxu0 %v10867
  %12787 = vmatpush1.bf16.msra.mxu0 %v10866
  %12788 = vmatprep.subr.bf16.mxu0 %v10874
  %12789 = vmatpush1.bf16.msra.mxu0 %v10873
  %12790 = vmatprep.subr.bf16.mxu0 %v10881
  %12791 = vmatpush1.bf16.msra.mxu0 %v10880
  %12792 = vmatprep.subr.bf16.mxu0 %v10888
  %12793 = vmatpush1.bf16.msra.mxu0 %v10887
  %12794 = vmatprep.subr.bf16.mxu0 %v10895
  %12795 = vmatpush1.bf16.msra.mxu0 %v10894
  %12796 = vmatprep.subr.bf16.mxu0 %v10902
  %12797 = vmatpush1.bf16.msra.mxu0 %v10901
  %12798 = vmatprep.subr.bf16.mxu0 %v10909
  %12799 = vmatpush1.bf16.msra.mxu0 %v10908
  %12800 = vmatprep.subr.bf16.mxu0 %v10916
  %12801 = vmatpush1.bf16.msra.mxu0 %v10915
  %12802 = vmatprep.subr.bf16.mxu0 %v10923
  %12803 = vmatpush1.bf16.msra.mxu0 %v10922
  %12804 = vmatprep.mubr.bf16.mxu0 %v7534
  %12805 = vmatmul.mubr.bf16.gmra.mrb[0].mxu0 %v7533
  %v12806 = vpop.f32.mrb[0].mxu0
  %v12807 = vadd.f32 %v12766, %v12806
  %v12808 = vpop.f32.mrb[0].mxu0
  %v12809 = vadd.f32 %v12768, %v12808
  %v12810 = vpop.f32.mrb[0].mxu0
  %v12811 = vpop.f32.mrb[0].mxu0
  %12812 = vdwg.mxu0
  %12813 = vmatprep.subr.bf16.mxu0 %v10930
  %12814 = vmatpush1.bf16.msra.mxu0 %v10929
  %12815 = vmatprep.subr.bf16.mxu0 %v10937
  %12816 = vmatpush1.bf16.msra.mxu0 %v10936
  %12817 = vmatprep.subr.bf16.mxu0 %v10944
  %12818 = vmatpush1.bf16.msra.mxu0 %v10943
  %12819 = vmatprep.subr.bf16.mxu0 %v10951
  %12820 = vmatpush1.bf16.msra.mxu0 %v10950
  %12821 = vmatprep.subr.bf16.mxu0 %v10958
  %12822 = vmatpush1.bf16.msra.mxu0 %v10957
  %12823 = vmatprep.subr.bf16.mxu0 %v10965
  %12824 = vmatpush1.bf16.msra.mxu0 %v10964
  %12825 = vmatprep.subr.bf16.mxu0 %v10972
  %12826 = vmatpush1.bf16.msra.mxu0 %v10971
  %12827 = vmatprep.subr.bf16.mxu0 %v10979
  %12828 = vmatpush1.bf16.msra.mxu0 %v10978
  %12829 = vmatprep.subr.bf16.mxu0 %v10986
  %12830 = vmatpush1.bf16.msra.mxu0 %v10985
  %12831 = vmatprep.subr.bf16.mxu0 %v10993
  %12832 = vmatpush1.bf16.msra.mxu0 %v10992
  %12833 = vmatprep.subr.bf16.mxu0 %v11000
  %12834 = vmatpush1.bf16.msra.mxu0 %v10999
  %12835 = vmatprep.subr.bf16.mxu0 %v11007
  %12836 = vmatpush1.bf16.msra.mxu0 %v11006
  %12837 = vmatprep.subr.bf16.mxu0 %v11014
  %12838 = vmatpush1.bf16.msra.mxu0 %v11013
  %12839 = vmatprep.subr.bf16.mxu0 %v11021
  %12840 = vmatpush1.bf16.msra.mxu0 %v11020
  %12841 = vmatprep.subr.bf16.mxu0 %v11028
  %12842 = vmatpush1.bf16.msra.mxu0 %v11027
  %12843 = vmatprep.subr.bf16.mxu0 %v11035
  %12844 = vmatpush1.bf16.msra.mxu0 %v11034
  %12845 = vmatprep.mubr.bf16.mxu0 %v7536
  %12846 = vmatmul.mubr.bf16.gmra.mrb[0].mxu0 %v7535
  %v12847 = vpop.f32.mrb[0].mxu0
  %v12848 = vadd.f32 %v12807, %v12847
  %v12849 = vpop.f32.mrb[0].mxu0
  %v12850 = vadd.f32 %v12809, %v12849
  %v12851 = vpop.f32.mrb[0].mxu0
  %v12852 = vpop.f32.mrb[0].mxu0
  %12853 = vdwg.mxu0
  %12854 = vmatprep.subr.bf16.mxu0 %v11042
  %12855 = vmatpush1.bf16.msra.mxu0 %v11041
  %12856 = vmatprep.subr.bf16.mxu0 %v11049
  %12857 = vmatpush1.bf16.msra.mxu0 %v11048
  %12858 = vmatprep.subr.bf16.mxu0 %v11056
  %12859 = vmatpush1.bf16.msra.mxu0 %v11055
  %12860 = vmatprep.subr.bf16.mxu0 %v11063
  %12861 = vmatpush1.bf16.msra.mxu0 %v11062
  %12862 = vmatprep.subr.bf16.mxu0 %v11070
  %12863 = vmatpush1.bf16.msra.mxu0 %v11069
  %12864 = vmatprep.subr.bf16.mxu0 %v11077
  %12865 = vmatpush1.bf16.msra.mxu0 %v11076
  %12866 = vmatprep.subr.bf16.mxu0 %v11084
  %12867 = vmatpush1.bf16.msra.mxu0 %v11083
  %12868 = vmatprep.subr.bf16.mxu0 %v11091
  %12869 = vmatpush1.bf16.msra.mxu0 %v11090
  %12870 = vmatprep.subr.bf16.mxu0 %v11098
  %12871 = vmatpush1.bf16.msra.mxu0 %v11097
  %12872 = vmatprep.subr.bf16.mxu0 %v11105
  %12873 = vmatpush1.bf16.msra.mxu0 %v11104
  %12874 = vmatprep.subr.bf16.mxu0 %v11112
  %12875 = vmatpush1.bf16.msra.mxu0 %v11111
  %12876 = vmatprep.subr.bf16.mxu0 %v11119
  %12877 = vmatpush1.bf16.msra.mxu0 %v11118
  %12878 = vmatprep.subr.bf16.mxu0 %v11126
  %12879 = vmatpush1.bf16.msra.mxu0 %v11125
  %12880 = vmatprep.subr.bf16.mxu0 %v11133
  %12881 = vmatpush1.bf16.msra.mxu0 %v11132
  %12882 = vmatprep.subr.bf16.mxu0 %v11140
  %12883 = vmatpush1.bf16.msra.mxu0 %v11139
  %12884 = vmatprep.subr.bf16.mxu0 %v11147
  %12885 = vmatpush1.bf16.msra.mxu0 %v11146
  %12886 = vmatprep.mubr.bf16.mxu0 %v7538
  %12887 = vmatmul.mubr.bf16.gmra.mrb[0].mxu0 %v7537
  %v12888 = vpop.f32.mrb[0].mxu0
  %v12889 = vadd.f32 %v12848, %v12888
  %v12890 = vpop.f32.mrb[0].mxu0
  %v12891 = vadd.f32 %v12850, %v12890
  %v12892 = vpop.f32.mrb[0].mxu0
  %v12893 = vpop.f32.mrb[0].mxu0
  %12894 = vdwg.mxu0
  %12895 = vmatprep.subr.bf16.mxu0 %v11154
  %12896 = vmatpush1.bf16.msra.mxu0 %v11153
  %12897 = vmatprep.subr.bf16.mxu0 %v11161
  %12898 = vmatpush1.bf16.msra.mxu0 %v11160
  %12899 = vmatprep.subr.bf16.mxu0 %v11168
  %12900 = vmatpush1.bf16.msra.mxu0 %v11167
  %12901 = vmatprep.subr.bf16.mxu0 %v11175
  %12902 = vmatpush1.bf16.msra.mxu0 %v11174
  %12903 = vmatprep.subr.bf16.mxu0 %v11182
  %12904 = vmatpush1.bf16.msra.mxu0 %v11181
  %12905 = vmatprep.subr.bf16.mxu0 %v11189
  %12906 = vmatpush1.bf16.msra.mxu0 %v11188
  %12907 = vmatprep.subr.bf16.mxu0 %v11196
  %12908 = vmatpush1.bf16.msra.mxu0 %v11195
  %12909 = vmatprep.subr.bf16.mxu0 %v11203
  %12910 = vmatpush1.bf16.msra.mxu0 %v11202
  %12911 = vmatprep.subr.bf16.mxu0 %v11210
  %12912 = vmatpush1.bf16.msra.mxu0 %v11209
  %12913 = vmatprep.subr.bf16.mxu0 %v11217
  %12914 = vmatpush1.bf16.msra.mxu0 %v11216
  %12915 = vmatprep.subr.bf16.mxu0 %v11224
  %12916 = vmatpush1.bf16.msra.mxu0 %v11223
  %12917 = vmatprep.subr.bf16.mxu0 %v11231
  %12918 = vmatpush1.bf16.msra.mxu0 %v11230
  %12919 = vmatprep.subr.bf16.mxu0 %v11238
  %12920 = vmatpush1.bf16.msra.mxu0 %v11237
  %12921 = vmatprep.subr.bf16.mxu0 %v11245
  %12922 = vmatpush1.bf16.msra.mxu0 %v11244
  %12923 = vmatprep.subr.bf16.mxu0 %v11252
  %12924 = vmatpush1.bf16.msra.mxu0 %v11251
  %12925 = vmatprep.subr.bf16.mxu0 %v11259
  %12926 = vmatpush1.bf16.msra.mxu0 %v11258
  %12927 = vmatprep.mubr.bf16.mxu0 %v7540
  %12928 = vmatmul.mubr.bf16.gmra.mrb[0].mxu0 %v7539
  %v12929 = vpop.f32.mrb[0].mxu0
  %v12930 = vadd.f32 %v12889, %v12929
  %v12931 = vpop.f32.mrb[0].mxu0
  %v12932 = vadd.f32 %v12891, %v12931
  %v12933 = vpop.f32.mrb[0].mxu0
  %v12934 = vpop.f32.mrb[0].mxu0
  %12935 = vdwg.mxu0
  %12936 = vmatprep.subr.bf16.mxu0 %v11266
  %12937 = vmatpush1.bf16.msra.mxu0 %v11265
  %12938 = vmatprep.subr.bf16.mxu0 %v11273
  %12939 = vmatpush1.bf16.msra.mxu0 %v11272
  %12940 = vmatprep.subr.bf16.mxu0 %v11280
  %12941 = vmatpush1.bf16.msra.mxu0 %v11279
  %12942 = vmatprep.subr.bf16.mxu0 %v11287
  %12943 = vmatpush1.bf16.msra.mxu0 %v11286
  %12944 = vmatprep.subr.bf16.mxu0 %v11294
  %12945 = vmatpush1.bf16.msra.mxu0 %v11293
  %12946 = vmatprep.subr.bf16.mxu0 %v11301
  %12947 = vmatpush1.bf16.msra.mxu0 %v11300
  %12948 = vmatprep.subr.bf16.mxu0 %v11308
  %12949 = vmatpush1.bf16.msra.mxu0 %v11307
  %12950 = vmatprep.subr.bf16.mxu0 %v11315
  %12951 = vmatpush1.bf16.msra.mxu0 %v11314
  %12952 = vmatprep.subr.bf16.mxu0 %v11322
  %12953 = vmatpush1.bf16.msra.mxu0 %v11321
  %12954 = vmatprep.subr.bf16.mxu0 %v11329
  %12955 = vmatpush1.bf16.msra.mxu0 %v11328
  %12956 = vmatprep.subr.bf16.mxu0 %v11336
  %12957 = vmatpush1.bf16.msra.mxu0 %v11335
  %12958 = vmatprep.subr.bf16.mxu0 %v11343
  %12959 = vmatpush1.bf16.msra.mxu0 %v11342
  %12960 = vmatprep.subr.bf16.mxu0 %v11350
  %12961 = vmatpush1.bf16.msra.mxu0 %v11349
  %12962 = vmatprep.subr.bf16.mxu0 %v11357
  %12963 = vmatpush1.bf16.msra.mxu0 %v11356
  %12964 = vmatprep.subr.bf16.mxu0 %v11364
  %12965 = vmatpush1.bf16.msra.mxu0 %v11363
  %12966 = vmatprep.subr.bf16.mxu0 %v11371
  %12967 = vmatpush1.bf16.msra.mxu0 %v11370
  %12968 = vmatprep.mubr.bf16.mxu0 %v7542
  %12969 = vmatmul.mubr.bf16.gmra.mrb[0].mxu0 %v7541
  %v12970 = vpop.f32.mrb[0].mxu0
  %v12971 = vadd.f32 %v12930, %v12970
  %v12972 = vpop.f32.mrb[0].mxu0
  %v12973 = vadd.f32 %v12932, %v12972
  %v12974 = vpop.f32.mrb[0].mxu0
  %v12975 = vpop.f32.mrb[0].mxu0
  %12976 = vdwg.mxu0
  %12977 = vmatprep.subr.bf16.mxu0 %v11378
  %12978 = vmatpush1.bf16.msra.mxu0 %v11377
  %12979 = vmatprep.subr.bf16.mxu0 %v11385
  %12980 = vmatpush1.bf16.msra.mxu0 %v11384
  %12981 = vmatprep.subr.bf16.mxu0 %v11392
  %12982 = vmatpush1.bf16.msra.mxu0 %v11391
  %12983 = vmatprep.subr.bf16.mxu0 %v11399
  %12984 = vmatpush1.bf16.msra.mxu0 %v11398
  %12985 = vmatprep.subr.bf16.mxu0 %v11406
  %12986 = vmatpush1.bf16.msra.mxu0 %v11405
  %12987 = vmatprep.subr.bf16.mxu0 %v11413
  %12988 = vmatpush1.bf16.msra.mxu0 %v11412
  %12989 = vmatprep.subr.bf16.mxu0 %v11420
  %12990 = vmatpush1.bf16.msra.mxu0 %v11419
  %12991 = vmatprep.subr.bf16.mxu0 %v11427
  %12992 = vmatpush1.bf16.msra.mxu0 %v11426
  %12993 = vmatprep.subr.bf16.mxu0 0
  %12994 = vmatpush1.bf16.msra.mxu0 0
  %12995 = vmatprep.subr.bf16.mxu0 0
  %12996 = vmatpush1.bf16.msra.mxu0 0
  %12997 = vmatprep.subr.bf16.mxu0 0
  %12998 = vmatpush1.bf16.msra.mxu0 0
  %12999 = vmatprep.subr.bf16.mxu0 0
  %13000 = vmatpush1.bf16.msra.mxu0 0
  %13001 = vmatprep.subr.bf16.mxu0 0
  %13002 = vmatpush1.bf16.msra.mxu0 0
  %13003 = vmatprep.subr.bf16.mxu0 0
  %13004 = vmatpush1.bf16.msra.mxu0 0
  %13005 = vmatprep.subr.bf16.mxu0 0
  %13006 = vmatpush1.bf16.msra.mxu0 0
  %13007 = vmatprep.subr.bf16.mxu0 0
  %13008 = vmatpush1.bf16.msra.mxu0 0
  %13009 = vmatprep.mubr.bf16.mxu0 0
  %13010 = vmatmul.mubr.bf16.gmra.mrb[0].mxu0 %v7543
  %v13011 = vpop.f32.mrb[0].mxu0
  %v13012 = vadd.f32 %v12971, %v13011
  %v13013 = vpop.f32.mrb[0].mxu0
  %v13014 = vadd.f32 %v12973, %v13013
  %v13015 = vpop.f32.mrb[0].mxu0
  %v13016 = vpop.f32.mrb[0].mxu0
  %13017 = vdwg.mxu0
  %13018 = vmatprep.subr.bf16.mxu0 0
  %13019 = vmatpush1.bf16.msra.mxu0 %v10707
  %13020 = vmatprep.subr.bf16.mxu0 0
  %13021 = vmatpush1.bf16.msra.mxu0 %v10714
  %13022 = vmatprep.subr.bf16.mxu0 0
  %13023 = vmatpush1.bf16.msra.mxu0 %v10721
  %13024 = vmatprep.subr.bf16.mxu0 0
  %13025 = vmatpush1.bf16.msra.mxu0 %v10728
  %13026 = vmatprep.subr.bf16.mxu0 0
  %13027 = vmatpush1.bf16.msra.mxu0 %v10735
  %13028 = vmatprep.subr.bf16.mxu0 0
  %13029 = vmatpush1.bf16.msra.mxu0 %v10742
  %13030 = vmatprep.subr.bf16.mxu0 0
  %13031 = vmatpush1.bf16.msra.mxu0 %v10749
  %13032 = vmatprep.subr.bf16.mxu0 0
  %13033 = vmatpush1.bf16.msra.mxu0 %v10756
  %13034 = vmatprep.subr.bf16.mxu0 0
  %13035 = vmatpush1.bf16.msra.mxu0 %v10763
  %13036 = vmatprep.subr.bf16.mxu0 0
  %13037 = vmatpush1.bf16.msra.mxu0 %v10770
  %13038 = vmatprep.subr.bf16.mxu0 0
  %13039 = vmatpush1.bf16.msra.mxu0 %v10777
  %13040 = vmatprep.subr.bf16.mxu0 0
  %13041 = vmatpush1.bf16.msra.mxu0 %v10784
  %13042 = vmatprep.subr.bf16.mxu0 0
  %13043 = vmatpush1.bf16.msra.mxu0 %v10791
  %13044 = vmatprep.subr.bf16.mxu0 0
  %13045 = vmatpush1.bf16.msra.mxu0 %v10798
  %13046 = vmatprep.subr.bf16.mxu0 0
  %13047 = vmatpush1.bf16.msra.mxu0 %v10805
  %13048 = vmatprep.subr.bf16.mxu0 0
  %13049 = vmatpush1.bf16.msra.mxu0 %v10812
  %13050 = vmatprep.mubr.bf16.mxu0 %v7532
  %13051 = vmatmul.mubr.bf16.gmra.mrb[0].mxu0 %v7531
  %v13052 = vpop.f32.mrb[0].mxu0
  %v13053 = vadd.f32 %v8405, %v13052
  %v13054 = vpop.f32.mrb[0].mxu0
  %v13055 = vpop.f32.mrb[0].mxu0
  %v13056 = vpop.f32.mrb[0].mxu0
  %13057 = vdwg.mxu0
  %13058 = vmatprep.subr.bf16.mxu0 0
  %13059 = vmatpush1.bf16.msra.mxu0 %v10819
  %13060 = vmatprep.subr.bf16.mxu0 0
  %13061 = vmatpush1.bf16.msra.mxu0 %v10826
  %13062 = vmatprep.subr.bf16.mxu0 0
  %13063 = vmatpush1.bf16.msra.mxu0 %v10833
  %13064 = vmatprep.subr.bf16.mxu0 0
  %13065 = vmatpush1.bf16.msra.mxu0 %v10840
  %13066 = vmatprep.subr.bf16.mxu0 0
  %13067 = vmatpush1.bf16.msra.mxu0 %v10847
  %13068 = vmatprep.subr.bf16.mxu0 0
  %13069 = vmatpush1.bf16.msra.mxu0 %v10854
  %13070 = vmatprep.subr.bf16.mxu0 0
  %13071 = vmatpush1.bf16.msra.mxu0 %v10861
  %13072 = vmatprep.subr.bf16.mxu0 0
  %13073 = vmatpush1.bf16.msra.mxu0 %v10868
  %13074 = vmatprep.subr.bf16.mxu0 0
  %13075 = vmatpush1.bf16.msra.mxu0 %v10875
  %13076 = vmatprep.subr.bf16.mxu0 0
  %13077 = vmatpush1.bf16.msra.mxu0 %v10882
  %13078 = vmatprep.subr.bf16.mxu0 0
  %13079 = vmatpush1.bf16.msra.mxu0 %v10889
  %13080 = vmatprep.subr.bf16.mxu0 0
  %13081 = vmatpush1.bf16.msra.mxu0 %v10896
  %13082 = vmatprep.subr.bf16.mxu0 0
  %13083 = vmatpush1.bf16.msra.mxu0 %v10903
  %13084 = vmatprep.subr.bf16.mxu0 0
  %13085 = vmatpush1.bf16.msra.mxu0 %v10910
  %13086 = vmatprep.subr.bf16.mxu0 0
  %13087 = vmatpush1.bf16.msra.mxu0 %v10917
  %13088 = vmatprep.subr.bf16.mxu0 0
  %13089 = vmatpush1.bf16.msra.mxu0 %v10924
  %13090 = vmatprep.mubr.bf16.mxu0 %v7534
  %13091 = vmatmul.mubr.bf16.gmra.mrb[0].mxu0 %v7533
  %v13092 = vpop.f32.mrb[0].mxu0
  %v13093 = vadd.f32 %v13053, %v13092
  %v13094 = vpop.f32.mrb[0].mxu0
  %v13095 = vpop.f32.mrb[0].mxu0
  %v13096 = vpop.f32.mrb[0].mxu0
  %13097 = vdwg.mxu0
  %13098 = vmatprep.subr.bf16.mxu0 0
  %13099 = vmatpush1.bf16.msra.mxu0 %v10931
  %13100 = vmatprep.subr.bf16.mxu0 0
  %13101 = vmatpush1.bf16.msra.mxu0 %v10938
  %13102 = vmatprep.subr.bf16.mxu0 0
  %13103 = vmatpush1.bf16.msra.mxu0 %v10945
  %13104 = vmatprep.subr.bf16.mxu0 0
  %13105 = vmatpush1.bf16.msra.mxu0 %v10952
  %13106 = vmatprep.subr.bf16.mxu0 0
  %13107 = vmatpush1.bf16.msra.mxu0 %v10959
  %13108 = vmatprep.subr.bf16.mxu0 0
  %13109 = vmatpush1.bf16.msra.mxu0 %v10966
  %13110 = vmatprep.subr.bf16.mxu0 0
  %13111 = vmatpush1.bf16.msra.mxu0 %v10973
  %13112 = vmatprep.subr.bf16.mxu0 0
  %13113 = vmatpush1.bf16.msra.mxu0 %v10980
  %13114 = vmatprep.subr.bf16.mxu0 0
  %13115 = vmatpush1.bf16.msra.mxu0 %v10987
  %13116 = vmatprep.subr.bf16.mxu0 0
  %13117 = vmatpush1.bf16.msra.mxu0 %v10994
  %13118 = vmatprep.subr.bf16.mxu0 0
  %13119 = vmatpush1.bf16.msra.mxu0 %v11001
  %13120 = vmatprep.subr.bf16.mxu0 0
  %13121 = vmatpush1.bf16.msra.mxu0 %v11008
  %13122 = vmatprep.subr.bf16.mxu0 0
  %13123 = vmatpush1.bf16.msra.mxu0 %v11015
  %13124 = vmatprep.subr.bf16.mxu0 0
  %13125 = vmatpush1.bf16.msra.mxu0 %v11022
  %13126 = vmatprep.subr.bf16.mxu0 0
  %13127 = vmatpush1.bf16.msra.mxu0 %v11029
  %13128 = vmatprep.subr.bf16.mxu0 0
  %13129 = vmatpush1.bf16.msra.mxu0 %v11036
  %13130 = vmatprep.mubr.bf16.mxu0 %v7536
  %13131 = vmatmul.mubr.bf16.gmra.mrb[0].mxu0 %v7535
  %v13132 = vpop.f32.mrb[0].mxu0
  %v13133 = vadd.f32 %v13093, %v13132
  %v13134 = vpop.f32.mrb[0].mxu0
  %v13135 = vpop.f32.mrb[0].mxu0
  %v13136 = vpop.f32.mrb[0].mxu0
  %13137 = vdwg.mxu0
  %13138 = vmatprep.subr.bf16.mxu0 0
  %13139 = vmatpush1.bf16.msra.mxu0 %v11043
  %13140 = vmatprep.subr.bf16.mxu0 0
  %13141 = vmatpush1.bf16.msra.mxu0 %v11050
  %13142 = vmatprep.subr.bf16.mxu0 0
  %13143 = vmatpush1.bf16.msra.mxu0 %v11057
  %13144 = vmatprep.subr.bf16.mxu0 0
  %13145 = vmatpush1.bf16.msra.mxu0 %v11064
  %13146 = vmatprep.subr.bf16.mxu0 0
  %13147 = vmatpush1.bf16.msra.mxu0 %v11071
  %13148 = vmatprep.subr.bf16.mxu0 0
  %13149 = vmatpush1.bf16.msra.mxu0 %v11078
  %13150 = vmatprep.subr.bf16.mxu0 0
  %13151 = vmatpush1.bf16.msra.mxu0 %v11085
  %13152 = vmatprep.subr.bf16.mxu0 0
  %13153 = vmatpush1.bf16.msra.mxu0 %v11092
  %13154 = vmatprep.subr.bf16.mxu0 0
  %13155 = vmatpush1.bf16.msra.mxu0 %v11099
  %13156 = vmatprep.subr.bf16.mxu0 0
  %13157 = vmatpush1.bf16.msra.mxu0 %v11106
  %13158 = vmatprep.subr.bf16.mxu0 0
  %13159 = vmatpush1.bf16.msra.mxu0 %v11113
  %13160 = vmatprep.subr.bf16.mxu0 0
  %13161 = vmatpush1.bf16.msra.mxu0 %v11120
  %13162 = vmatprep.subr.bf16.mxu0 0
  %13163 = vmatpush1.bf16.msra.mxu0 %v11127
  %13164 = vmatprep.subr.bf16.mxu0 0
  %13165 = vmatpush1.bf16.msra.mxu0 %v11134
  %13166 = vmatprep.subr.bf16.mxu0 0
  %13167 = vmatpush1.bf16.msra.mxu0 %v11141
  %13168 = vmatprep.subr.bf16.mxu0 0
  %13169 = vmatpush1.bf16.msra.mxu0 %v11148
  %13170 = vmatprep.mubr.bf16.mxu0 %v7538
  %13171 = vmatmul.mubr.bf16.gmra.mrb[0].mxu0 %v7537
  %v13172 = vpop.f32.mrb[0].mxu0
  %v13173 = vadd.f32 %v13133, %v13172
  %v13174 = vpop.f32.mrb[0].mxu0
  %v13175 = vpop.f32.mrb[0].mxu0
  %v13176 = vpop.f32.mrb[0].mxu0
  %13177 = vdwg.mxu0
  %13178 = vmatprep.subr.bf16.mxu0 0
  %13179 = vmatpush1.bf16.msra.mxu0 %v11155
  %13180 = vmatprep.subr.bf16.mxu0 0
  %13181 = vmatpush1.bf16.msra.mxu0 %v11162
  %13182 = vmatprep.subr.bf16.mxu0 0
  %13183 = vmatpush1.bf16.msra.mxu0 %v11169
  %13184 = vmatprep.subr.bf16.mxu0 0
  %13185 = vmatpush1.bf16.msra.mxu0 %v11176
  %13186 = vmatprep.subr.bf16.mxu0 0
  %13187 = vmatpush1.bf16.msra.mxu0 %v11183
  %13188 = vmatprep.subr.bf16.mxu0 0
  %13189 = vmatpush1.bf16.msra.mxu0 %v11190
  %13190 = vmatprep.subr.bf16.mxu0 0
  %13191 = vmatpush1.bf16.msra.mxu0 %v11197
  %13192 = vmatprep.subr.bf16.mxu0 0
  %13193 = vmatpush1.bf16.msra.mxu0 %v11204
  %13194 = vmatprep.subr.bf16.mxu0 0
  %13195 = vmatpush1.bf16.msra.mxu0 %v11211
  %13196 = vmatprep.subr.bf16.mxu0 0
  %13197 = vmatpush1.bf16.msra.mxu0 %v11218
  %13198 = vmatprep.subr.bf16.mxu0 0
  %13199 = vmatpush1.bf16.msra.mxu0 %v11225
  %13200 = vmatprep.subr.bf16.mxu0 0
  %13201 = vmatpush1.bf16.msra.mxu0 %v11232
  %13202 = vmatprep.subr.bf16.mxu0 0
  %13203 = vmatpush1.bf16.msra.mxu0 %v11239
  %13204 = vmatprep.subr.bf16.mxu0 0
  %13205 = vmatpush1.bf16.msra.mxu0 %v11246
  %13206 = vmatprep.subr.bf16.mxu0 0
  %13207 = vmatpush1.bf16.msra.mxu0 %v11253
  %13208 = vmatprep.subr.bf16.mxu0 0
  %13209 = vmatpush1.bf16.msra.mxu0 %v11260
  %13210 = vmatprep.mubr.bf16.mxu0 %v7540
  %13211 = vmatmul.mubr.bf16.gmra.mrb[0].mxu0 %v7539
  %v13212 = vpop.f32.mrb[0].mxu0
  %v13213 = vadd.f32 %v13173, %v13212
  %v13214 = vpop.f32.mrb[0].mxu0
  %v13215 = vpop.f32.mrb[0].mxu0
  %v13216 = vpop.f32.mrb[0].mxu0
  %13217 = vdwg.mxu0
  %13218 = vmatprep.subr.bf16.mxu0 0
  %13219 = vmatpush1.bf16.msra.mxu0 %v11267
  %13220 = vmatprep.subr.bf16.mxu0 0
  %13221 = vmatpush1.bf16.msra.mxu0 %v11274
  %13222 = vmatprep.subr.bf16.mxu0 0
  %13223 = vmatpush1.bf16.msra.mxu0 %v11281
  %13224 = vmatprep.subr.bf16.mxu0 0
  %13225 = vmatpush1.bf16.msra.mxu0 %v11288
  %13226 = vmatprep.subr.bf16.mxu0 0
  %13227 = vmatpush1.bf16.msra.mxu0 %v11295
  %13228 = vmatprep.subr.bf16.mxu0 0
  %13229 = vmatpush1.bf16.msra.mxu0 %v11302
  %13230 = vmatprep.subr.bf16.mxu0 0
  %13231 = vmatpush1.bf16.msra.mxu0 %v11309
  %13232 = vmatprep.subr.bf16.mxu0 0
  %13233 = vmatpush1.bf16.msra.mxu0 %v11316
  %13234 = vmatprep.subr.bf16.mxu0 0
  %13235 = vmatpush1.bf16.msra.mxu0 %v11323
  %13236 = vmatprep.subr.bf16.mxu0 0
  %13237 = vmatpush1.bf16.msra.mxu0 %v11330
  %13238 = vmatprep.subr.bf16.mxu0 0
  %13239 = vmatpush1.bf16.msra.mxu0 %v11337
  %13240 = vmatprep.subr.bf16.mxu0 0
  %13241 = vmatpush1.bf16.msra.mxu0 %v11344
  %13242 = vmatprep.subr.bf16.mxu0 0
  %13243 = vmatpush1.bf16.msra.mxu0 %v11351
  %13244 = vmatprep.subr.bf16.mxu0 0
  %13245 = vmatpush1.bf16.msra.mxu0 %v11358
  %13246 = vmatprep.subr.bf16.mxu0 0
  %13247 = vmatpush1.bf16.msra.mxu0 %v11365
  %13248 = vmatprep.subr.bf16.mxu0 0
  %13249 = vmatpush1.bf16.msra.mxu0 %v11372
  %13250 = vmatprep.mubr.bf16.mxu0 %v7542
  %13251 = vmatmul.mubr.bf16.gmra.mrb[0].mxu0 %v7541
  %v13252 = vpop.f32.mrb[0].mxu0
  %v13253 = vadd.f32 %v13213, %v13252
  %v13254 = vpop.f32.mrb[0].mxu0
  %v13255 = vpop.f32.mrb[0].mxu0
  %v13256 = vpop.f32.mrb[0].mxu0
  %13257 = vdwg.mxu0
  %13258 = vmatprep.subr.bf16.mxu0 0
  %13259 = vmatpush1.bf16.msra.mxu0 %v11379
  %13260 = vmatprep.subr.bf16.mxu0 0
  %13261 = vmatpush1.bf16.msra.mxu0 %v11386
  %13262 = vmatprep.subr.bf16.mxu0 0
  %13263 = vmatpush1.bf16.msra.mxu0 %v11393
  %13264 = vmatprep.subr.bf16.mxu0 0
  %13265 = vmatpush1.bf16.msra.mxu0 %v11400
  %13266 = vmatprep.subr.bf16.mxu0 0
  %13267 = vmatpush1.bf16.msra.mxu0 %v11407
  %13268 = vmatprep.subr.bf16.mxu0 0
  %13269 = vmatpush1.bf16.msra.mxu0 %v11414
  %13270 = vmatprep.subr.bf16.mxu0 0
  %13271 = vmatpush1.bf16.msra.mxu0 %v11421
  %13272 = vmatprep.subr.bf16.mxu0 0
  %13273 = vmatpush1.bf16.msra.mxu0 %v11428
  %13274 = vmatprep.subr.bf16.mxu0 0
  %13275 = vmatpush1.bf16.msra.mxu0 0
  %13276 = vmatprep.subr.bf16.mxu0 0
  %13277 = vmatpush1.bf16.msra.mxu0 0
  %13278 = vmatprep.subr.bf16.mxu0 0
  %13279 = vmatpush1.bf16.msra.mxu0 0
  %13280 = vmatprep.subr.bf16.mxu0 0
  %13281 = vmatpush1.bf16.msra.mxu0 0
  %13282 = vmatprep.subr.bf16.mxu0 0
  %13283 = vmatpush1.bf16.msra.mxu0 0
  %13284 = vmatprep.subr.bf16.mxu0 0
  %13285 = vmatpush1.bf16.msra.mxu0 0
  %13286 = vmatprep.subr.bf16.mxu0 0
  %13287 = vmatpush1.bf16.msra.mxu0 0
  %13288 = vmatprep.subr.bf16.mxu0 0
  %13289 = vmatpush1.bf16.msra.mxu0 0
  %13290 = vmatprep.mubr.bf16.mxu0 0
  %13291 = vmatmul.mubr.bf16.gmra.mrb[0].mxu0 %v7543
  %v13292 = vpop.f32.mrb[0].mxu0
  %v13293 = vadd.f32 %v13253, %v13292
  %v13294 = vpop.f32.mrb[0].mxu0
  %v13295 = vpop.f32.mrb[0].mxu0
  %v13296 = vpop.f32.mrb[0].mxu0
  %13297 = vdwg.mxu0
  %v13298 = vtanh.pop %v12438
  %v13299 = vtanh.pop %v12440
  %v13300 = vtanh.pop %v12725
  %v13301 = vtanh.pop %v12727
  %v13302 = vtanh.pop %v13012
  %v13303 = vtanh.pop %v13014
  %v13304 = vtanh.pop %v13293
  %13305 = vst [vmem:[%s11] sm:$0xff] %v13298
  %13306 = vst [vmem:[%s11 + $0x8] sm:$0xff] %v13299
  %13307 = vst [vmem:[%s11 + $0x10] sm:$0xff] %v13300
  %13308 = vst [vmem:[%s11 + $0x18] sm:$0xff] %v13301
  %13309 = vst [vmem:[%s11 + $0x20] sm:$0xff] %v13302
  %13310 = vst [vmem:[%s11 + $0x28] sm:$0xff] %v13303
  %13311 = vst [vmem:[%s11 + $0x30] sm:$0xff] %v13304
  // Predicated region
  $region46: #{forward.1} parent=0 // pred_check
    _
  $region47: #{forward.1} parent=0 // pred_check_branch
    %13313 = sbr.rel (0) target = $region49
  $region48: #{forward.1} parent=0 // pred_region
    _
  $region49: #{forward.1} parent=0 // pred_fallthru
    _
  // Predicated region
  $region50: #{forward.1} parent=0 // pred_check
    _
  $region51: #{forward.1} parent=0 // pred_check_branch
    %13315 = sbr.rel (0) target = $region53
  $region52: #{forward.1} parent=0 // pred_region
    _
  $region53: #{forward.1} parent=0 // pred_fallthru
    _

</llo_original>
